<compile_context>
chip_gen: v5e
topology: v5e:2x2
jax: 0.10.0
libtpu: 0.0.40
codegen_flags: <defaults>
</compile_context>

<pallas_src>
import jax
import jax.numpy as jnp
from jax.experimental import pallas as pl
from jax.experimental.pallas import tpu as pltpu

LATENT_DIM = 32
HIDDEN = (128, 256, 512, 1024)
OUT_DIM = 784
OUT_PAD = 896  # 7 * 128 — lane-dense padded output width
BN_EPS = 1e-5
LRELU_SLOPE = 0.2

# (in, out) dims of the 5 Linear layers as seen by the kernel (padded last).
_LAYER_DIMS = ((LATENT_DIM, 128), (128, 256), (256, 512), (512, 1024), (1024, OUT_PAD))


def _leaky_relu(x):
    return jnp.where(x > 0, x, LRELU_SLOPE * x)


def generator_kernel(
    z_ref,
    w1_ref, b1_ref,
    w2_ref, b2_ref, g2_ref, be2_ref,
    w3_ref, b3_ref, g3_ref, be3_ref,
    w4_ref, b4_ref, g4_ref, be4_ref,
    w5_ref, b5_ref,
    o_ref,
):
    x = z_ref[...]

    def dot32(h, w_ref):
        # Weights live in HBM/VMEM as bf16 (halves DMA bytes); upcast in vregs
        # and accumulate in f32 so activations / BN math stay full precision.
        return jnp.dot(h, w_ref[...].astype(jnp.float32),
                       preferred_element_type=jnp.float32)

    # Block 1: Linear(latent -> 128) + LeakyReLU
    h = _leaky_relu(dot32(x, w1_ref) + b1_ref[...])

    def linear_bn_lrelu(h, w_ref, b_ref, g_ref, be_ref):
        y = dot32(h, w_ref) + b_ref[...]
        # BatchNorm1d (training mode): biased stats over the batch axis.
        mean = jnp.mean(y, axis=0, keepdims=True)
        var = jnp.mean((y - mean) * (y - mean), axis=0, keepdims=True)
        y = (y - mean) * jax.lax.rsqrt(var + BN_EPS) * g_ref[...] + be_ref[...]
        return _leaky_relu(y)

    # Block 2: Linear(128 -> 256) + BN + LeakyReLU
    h = linear_bn_lrelu(h, w2_ref, b2_ref, g2_ref, be2_ref)
    # Block 3: Linear(256 -> 512) + BN + LeakyReLU
    h = linear_bn_lrelu(h, w3_ref, b3_ref, g3_ref, be3_ref)
    # Block 4: Linear(512 -> 1024) + BN + LeakyReLU
    h = linear_bn_lrelu(h, w4_ref, b4_ref, g4_ref, be4_ref)

    # Block 5: Linear(1024 -> 896[=784 padded]) + Tanh
    o_ref[...] = jnp.tanh(dot32(h, w5_ref) + b5_ref[...])


def init_params(key, latent_dim=LATENT_DIM):
    """f32 parameters matching the PyTorch module's shapes (W stored transposed)."""
    dims = [latent_dim, *HIDDEN, OUT_DIM]
    params = []
    keys = jax.random.split(key, len(dims) - 1)
    for i, (din, dout) in enumerate(zip(dims[:-1], dims[1:])):
        kw, kb = jax.random.split(keys[i])
        w = jax.random.normal(kw, (din, dout), jnp.float32) * 0.02
        b = jax.random.normal(kb, (1, dout), jnp.float32) * 0.01
        params.append((w, b))
    # BatchNorm affine params for layers 2, 3, 4 (features 256, 512, 1024)
    bn_params = []
    for feat in HIDDEN[1:]:
        bn_params.append((jnp.ones((1, feat), jnp.float32),
                          jnp.zeros((1, feat), jnp.float32)))
    return params, bn_params


def prepare_params(params, bn_params):
    """One-time prep: bf16 weights + lane-dense (896-wide) padded final layer."""
    (w1, b1), (w2, b2), (w3, b3), (w4, b4), (w5, b5) = params
    (g2, be2), (g3, be3), (g4, be4) = bn_params
    pad = OUT_PAD - OUT_DIM
    w5p = jnp.pad(w5, ((0, 0), (0, pad)))
    b5p = jnp.pad(b5, ((0, 0), (0, pad)))
    bf = lambda w: w.astype(jnp.bfloat16)
    return (
        bf(w1), b1,
        bf(w2), b2, g2, be2,
        bf(w3), b3, g3, be3,
        bf(w4), b4, g4, be4,
        bf(w5p), b5p,
    )


def generator_forward(z, kernel_params):
    B = z.shape[0]
    inputs = (z, *kernel_params)

    # Advisory cost estimate so XLA can overlap surrounding work.
    mm_terms = sum(din * dout for din, dout in _LAYER_DIMS)
    flops = 2 * B * mm_terms
    transcendentals = B * OUT_PAD + sum(HIDDEN[1:])      # tanh + BN rsqrt
    weight_bytes = 2 * mm_terms                          # bf16 weights
    small_bytes = 4 * (sum(d for _, d in _LAYER_DIMS) + 2 * sum(HIDDEN[1:]))
    io_bytes = 4 * B * (LATENT_DIM + OUT_PAD)
    cost = pl.CostEstimate(
        flops=flops,
        transcendentals=transcendentals,
        bytes_accessed=weight_bytes + small_bytes + io_bytes,
    )

    vmem_spec = pl.BlockSpec(memory_space=pltpu.MemorySpace.VMEM)
    out = pl.pallas_call(
        generator_kernel,
        out_shape=jax.ShapeDtypeStruct((B, OUT_PAD), jnp.float32),
        in_specs=[vmem_spec] * len(inputs),
        out_specs=vmem_spec,
        compiler_params=pltpu.CompilerParams(vmem_limit_bytes=24 << 20),
        cost_estimate=cost,
    )(*inputs)
    # Slice away the lane-padding columns (they are tanh(0) = 0 anyway).
    return out[:, :OUT_DIM]


def generator_ref(z, kernel_params):
    """Pure-JAX reference using the same (bf16-stored, padded) parameters."""
    (w1, b1, w2, b2, g2, be2, w3, b3, g3, be3,
     w4, b4, g4, be4, w5, b5) = kernel_params
    f32 = lambda w: w.astype(jnp.float32)

    def lrelu(x):
        return jnp.where(x > 0, x, LRELU_SLOPE * x)

    def bn(x, g, be):
        m = jnp.mean(x, axis=0, keepdims=True)
        v = jnp.mean((x - m) ** 2, axis=0, keepdims=True)
        return (x - m) * jax.lax.rsqrt(v + BN_EPS) * g + be

    h = lrelu(z @ f32(w1) + b1)
    h = lrelu(bn(h @ f32(w2) + b2, g2, be2))
    h = lrelu(bn(h @ f32(w3) + b3, g3, be3))
    h = lrelu(bn(h @ f32(w4) + b4, g4, be4))
    out = jnp.tanh(h @ f32(w5) + b5)
    return out[:, :OUT_DIM]


if __name__ == "__main__":
    key = jax.random.PRNGKey(0)
    k_param, k_z = jax.random.split(key)

    params, bn_params = init_params(k_param, LATENT_DIM)
    kernel_params = prepare_params(params, bn_params)

    # Sublane-aligned batch (multiple of 8) to keep the MXU M-rows busy and
    # amortize the (bf16) weight DMA.  BN stats span the full batch.
    B = 64
    z = jax.random.normal(k_z, (B, LATENT_DIM), jnp.float32)

    out = jax.block_until_ready(generator_forward(z, kernel_params))
    ref = jax.block_until_ready(generator_ref(z, kernel_params))

    assert out.shape == (B, OUT_DIM)
    assert jnp.allclose(out, ref, atol=1e-4, rtol=1e-4)

    print("KERNEL_OK")
</pallas_src>

<mosaic_0001>
module attributes {stable_mosaic.version = 11 : i64} {
  func.func @generator_kernel(%arg0: memref<64x32xf32, #tpu.memory_space<vmem>>, %arg1: memref<32x128xbf16, #tpu.memory_space<vmem>>, %arg2: memref<1x128xf32, #tpu.memory_space<vmem>>, %arg3: memref<128x256xbf16, #tpu.memory_space<vmem>>, %arg4: memref<1x256xf32, #tpu.memory_space<vmem>>, %arg5: memref<1x256xf32, #tpu.memory_space<vmem>>, %arg6: memref<1x256xf32, #tpu.memory_space<vmem>>, %arg7: memref<256x512xbf16, #tpu.memory_space<vmem>>, %arg8: memref<1x512xf32, #tpu.memory_space<vmem>>, %arg9: memref<1x512xf32, #tpu.memory_space<vmem>>, %arg10: memref<1x512xf32, #tpu.memory_space<vmem>>, %arg11: memref<512x1024xbf16, #tpu.memory_space<vmem>>, %arg12: memref<1x1024xf32, #tpu.memory_space<vmem>>, %arg13: memref<1x1024xf32, #tpu.memory_space<vmem>>, %arg14: memref<1x1024xf32, #tpu.memory_space<vmem>>, %arg15: memref<1024x896xbf16, #tpu.memory_space<vmem>>, %arg16: memref<1x896xf32, #tpu.memory_space<vmem>>, %arg17: memref<64x896xf32, #tpu.memory_space<vmem>>) attributes {dimension_semantics = [], scalar_prefetch = 0 : i64, scratch_operands = 0 : i64, tpu.core_type = #tpu.core_type<tc>} {
    %c0 = arith.constant 0 : index
    %c0_0 = arith.constant 0 : index
    %0 = vector.load %arg0[%c0, %c0_0] : memref<64x32xf32, #tpu.memory_space<vmem>>, vector<64x32xf32>
    %c0_1 = arith.constant 0 : index
    %c0_2 = arith.constant 0 : index
    %1 = vector.load %arg1[%c0_1, %c0_2] : memref<32x128xbf16, #tpu.memory_space<vmem>>, vector<32x128xbf16>
    %2 = arith.extf %1 : vector<32x128xbf16> to vector<32x128xf32>
    %cst = arith.constant dense<0.000000e+00> : vector<64x128xf32>
    %3 = tpu.matmul %0, %2, %cst {dimension_numbers = #tpu.dot_dimension_numbers<[1], [0], [0], [1], [0, 0, 1, 1], [], []>} : vector<64x32xf32>, vector<32x128xf32>, vector<64x128xf32> -> vector<64x128xf32>
    %c0_3 = arith.constant 0 : index
    %c0_4 = arith.constant 0 : index
    %4 = vector.load %arg2[%c0_3, %c0_4] : memref<1x128xf32, #tpu.memory_space<vmem>>, vector<1x128xf32>
    %5 = vector.broadcast %4 : vector<1x128xf32> to vector<64x128xf32>
    %6 = arith.addf %3, %5 : vector<64x128xf32>
    %cst_5 = arith.constant 0.000000e+00 : f32
    %7 = vector.broadcast %cst_5 : f32 to vector<64x128xf32>
    %8 = arith.cmpf ogt, %6, %7 : vector<64x128xf32>
    %cst_6 = arith.constant 2.000000e-01 : f32
    %9 = vector.broadcast %cst_6 : f32 to vector<64x128xf32>
    %10 = arith.mulf %9, %6 : vector<64x128xf32>
    %11 = arith.select %8, %6, %10 : vector<64x128xi1>, vector<64x128xf32>
    %c0_7 = arith.constant 0 : index
    %c0_8 = arith.constant 0 : index
    %12 = vector.load %arg3[%c0_7, %c0_8] : memref<128x256xbf16, #tpu.memory_space<vmem>>, vector<128x256xbf16>
    %13 = arith.extf %12 : vector<128x256xbf16> to vector<128x256xf32>
    %cst_9 = arith.constant dense<0.000000e+00> : vector<64x256xf32>
    %14 = tpu.matmul %11, %13, %cst_9 {dimension_numbers = #tpu.dot_dimension_numbers<[1], [0], [0], [1], [0, 0, 1, 1], [], []>} : vector<64x128xf32>, vector<128x256xf32>, vector<64x256xf32> -> vector<64x256xf32>
    %c0_10 = arith.constant 0 : index
    %c0_11 = arith.constant 0 : index
    %15 = vector.load %arg4[%c0_10, %c0_11] : memref<1x256xf32, #tpu.memory_space<vmem>>, vector<1x256xf32>
    %16 = vector.broadcast %15 : vector<1x256xf32> to vector<64x256xf32>
    %17 = arith.addf %14, %16 : vector<64x256xf32>
    %cst_12 = arith.constant dense<0.000000e+00> : vector<256xf32>
    %18 = vector.multi_reduction <add>, %17, %cst_12 [0] : vector<64x256xf32> to vector<256xf32>
    %19 = vector.shape_cast %18 : vector<256xf32> to vector<1x256xf32>
    %cst_13 = arith.constant 6.400000e+01 : f32
    %20 = vector.broadcast %cst_13 : f32 to vector<1x256xf32>
    %21 = arith.divf %19, %20 : vector<1x256xf32>
    %22 = vector.broadcast %21 : vector<1x256xf32> to vector<64x256xf32>
    %23 = arith.subf %17, %22 : vector<64x256xf32>
    %24 = vector.broadcast %21 : vector<1x256xf32> to vector<64x256xf32>
    %25 = arith.subf %17, %24 : vector<64x256xf32>
    %26 = arith.mulf %23, %25 : vector<64x256xf32>
    %cst_14 = arith.constant dense<0.000000e+00> : vector<256xf32>
    %27 = vector.multi_reduction <add>, %26, %cst_14 [0] : vector<64x256xf32> to vector<256xf32>
    %28 = vector.shape_cast %27 : vector<256xf32> to vector<1x256xf32>
    %cst_15 = arith.constant 6.400000e+01 : f32
    %29 = vector.broadcast %cst_15 : f32 to vector<1x256xf32>
    %30 = arith.divf %28, %29 : vector<1x256xf32>
    %31 = vector.broadcast %21 : vector<1x256xf32> to vector<64x256xf32>
    %32 = arith.subf %17, %31 : vector<64x256xf32>
    %cst_16 = arith.constant 9.99999974E-6 : f32
    %33 = vector.broadcast %cst_16 : f32 to vector<1x256xf32>
    %34 = arith.addf %30, %33 : vector<1x256xf32>
    %35 = math.rsqrt %34 : vector<1x256xf32>
    %36 = vector.broadcast %35 : vector<1x256xf32> to vector<64x256xf32>
    %37 = arith.mulf %32, %36 : vector<64x256xf32>
    %c0_17 = arith.constant 0 : index
    %c0_18 = arith.constant 0 : index
    %38 = vector.load %arg5[%c0_17, %c0_18] : memref<1x256xf32, #tpu.memory_space<vmem>>, vector<1x256xf32>
    %39 = vector.broadcast %38 : vector<1x256xf32> to vector<64x256xf32>
    %40 = arith.mulf %37, %39 : vector<64x256xf32>
    %c0_19 = arith.constant 0 : index
    %c0_20 = arith.constant 0 : index
    %41 = vector.load %arg6[%c0_19, %c0_20] : memref<1x256xf32, #tpu.memory_space<vmem>>, vector<1x256xf32>
    %42 = vector.broadcast %41 : vector<1x256xf32> to vector<64x256xf32>
    %43 = arith.addf %40, %42 : vector<64x256xf32>
    %cst_21 = arith.constant 0.000000e+00 : f32
    %44 = vector.broadcast %cst_21 : f32 to vector<64x256xf32>
    %45 = arith.cmpf ogt, %43, %44 : vector<64x256xf32>
    %cst_22 = arith.constant 2.000000e-01 : f32
    %46 = vector.broadcast %cst_22 : f32 to vector<64x256xf32>
    %47 = arith.mulf %46, %43 : vector<64x256xf32>
    %48 = arith.select %45, %43, %47 : vector<64x256xi1>, vector<64x256xf32>
    %c0_23 = arith.constant 0 : index
    %c0_24 = arith.constant 0 : index
    %49 = vector.load %arg7[%c0_23, %c0_24] : memref<256x512xbf16, #tpu.memory_space<vmem>>, vector<256x512xbf16>
    %50 = arith.extf %49 : vector<256x512xbf16> to vector<256x512xf32>
    %cst_25 = arith.constant dense<0.000000e+00> : vector<64x512xf32>
    %51 = tpu.matmul %48, %50, %cst_25 {dimension_numbers = #tpu.dot_dimension_numbers<[1], [0], [0], [1], [0, 0, 1, 1], [], []>} : vector<64x256xf32>, vector<256x512xf32>, vector<64x512xf32> -> vector<64x512xf32>
    %c0_26 = arith.constant 0 : index
    %c0_27 = arith.constant 0 : index
    %52 = vector.load %arg8[%c0_26, %c0_27] : memref<1x512xf32, #tpu.memory_space<vmem>>, vector<1x512xf32>
    %53 = vector.broadcast %52 : vector<1x512xf32> to vector<64x512xf32>
    %54 = arith.addf %51, %53 : vector<64x512xf32>
    %cst_28 = arith.constant dense<0.000000e+00> : vector<512xf32>
    %55 = vector.multi_reduction <add>, %54, %cst_28 [0] : vector<64x512xf32> to vector<512xf32>
    %56 = vector.shape_cast %55 : vector<512xf32> to vector<1x512xf32>
    %cst_29 = arith.constant 6.400000e+01 : f32
    %57 = vector.broadcast %cst_29 : f32 to vector<1x512xf32>
    %58 = arith.divf %56, %57 : vector<1x512xf32>
    %59 = vector.broadcast %58 : vector<1x512xf32> to vector<64x512xf32>
    %60 = arith.subf %54, %59 : vector<64x512xf32>
    %61 = vector.broadcast %58 : vector<1x512xf32> to vector<64x512xf32>
    %62 = arith.subf %54, %61 : vector<64x512xf32>
    %63 = arith.mulf %60, %62 : vector<64x512xf32>
    %cst_30 = arith.constant dense<0.000000e+00> : vector<512xf32>
    %64 = vector.multi_reduction <add>, %63, %cst_30 [0] : vector<64x512xf32> to vector<512xf32>
    %65 = vector.shape_cast %64 : vector<512xf32> to vector<1x512xf32>
    %cst_31 = arith.constant 6.400000e+01 : f32
    %66 = vector.broadcast %cst_31 : f32 to vector<1x512xf32>
    %67 = arith.divf %65, %66 : vector<1x512xf32>
    %68 = vector.broadcast %58 : vector<1x512xf32> to vector<64x512xf32>
    %69 = arith.subf %54, %68 : vector<64x512xf32>
    %cst_32 = arith.constant 9.99999974E-6 : f32
    %70 = vector.broadcast %cst_32 : f32 to vector<1x512xf32>
    %71 = arith.addf %67, %70 : vector<1x512xf32>
    %72 = math.rsqrt %71 : vector<1x512xf32>
    %73 = vector.broadcast %72 : vector<1x512xf32> to vector<64x512xf32>
    %74 = arith.mulf %69, %73 : vector<64x512xf32>
    %c0_33 = arith.constant 0 : index
    %c0_34 = arith.constant 0 : index
    %75 = vector.load %arg9[%c0_33, %c0_34] : memref<1x512xf32, #tpu.memory_space<vmem>>, vector<1x512xf32>
    %76 = vector.broadcast %75 : vector<1x512xf32> to vector<64x512xf32>
    %77 = arith.mulf %74, %76 : vector<64x512xf32>
    %c0_35 = arith.constant 0 : index
    %c0_36 = arith.constant 0 : index
    %78 = vector.load %arg10[%c0_35, %c0_36] : memref<1x512xf32, #tpu.memory_space<vmem>>, vector<1x512xf32>
    %79 = vector.broadcast %78 : vector<1x512xf32> to vector<64x512xf32>
    %80 = arith.addf %77, %79 : vector<64x512xf32>
    %cst_37 = arith.constant 0.000000e+00 : f32
    %81 = vector.broadcast %cst_37 : f32 to vector<64x512xf32>
    %82 = arith.cmpf ogt, %80, %81 : vector<64x512xf32>
    %cst_38 = arith.constant 2.000000e-01 : f32
    %83 = vector.broadcast %cst_38 : f32 to vector<64x512xf32>
    %84 = arith.mulf %83, %80 : vector<64x512xf32>
    %85 = arith.select %82, %80, %84 : vector<64x512xi1>, vector<64x512xf32>
    %c0_39 = arith.constant 0 : index
    %c0_40 = arith.constant 0 : index
    %86 = vector.load %arg11[%c0_39, %c0_40] : memref<512x1024xbf16, #tpu.memory_space<vmem>>, vector<512x1024xbf16>
    %87 = arith.extf %86 : vector<512x1024xbf16> to vector<512x1024xf32>
    %cst_41 = arith.constant dense<0.000000e+00> : vector<64x1024xf32>
    %88 = tpu.matmul %85, %87, %cst_41 {dimension_numbers = #tpu.dot_dimension_numbers<[1], [0], [0], [1], [0, 0, 1, 1], [], []>} : vector<64x512xf32>, vector<512x1024xf32>, vector<64x1024xf32> -> vector<64x1024xf32>
    %c0_42 = arith.constant 0 : index
    %c0_43 = arith.constant 0 : index
    %89 = vector.load %arg12[%c0_42, %c0_43] : memref<1x1024xf32, #tpu.memory_space<vmem>>, vector<1x1024xf32>
    %90 = vector.broadcast %89 : vector<1x1024xf32> to vector<64x1024xf32>
    %91 = arith.addf %88, %90 : vector<64x1024xf32>
    %cst_44 = arith.constant dense<0.000000e+00> : vector<1024xf32>
    %92 = vector.multi_reduction <add>, %91, %cst_44 [0] : vector<64x1024xf32> to vector<1024xf32>
    %93 = vector.shape_cast %92 : vector<1024xf32> to vector<1x1024xf32>
    %cst_45 = arith.constant 6.400000e+01 : f32
    %94 = vector.broadcast %cst_45 : f32 to vector<1x1024xf32>
    %95 = arith.divf %93, %94 : vector<1x1024xf32>
    %96 = vector.broadcast %95 : vector<1x1024xf32> to vector<64x1024xf32>
    %97 = arith.subf %91, %96 : vector<64x1024xf32>
    %98 = vector.broadcast %95 : vector<1x1024xf32> to vector<64x1024xf32>
    %99 = arith.subf %91, %98 : vector<64x1024xf32>
    %100 = arith.mulf %97, %99 : vector<64x1024xf32>
    %cst_46 = arith.constant dense<0.000000e+00> : vector<1024xf32>
    %101 = vector.multi_reduction <add>, %100, %cst_46 [0] : vector<64x1024xf32> to vector<1024xf32>
    %102 = vector.shape_cast %101 : vector<1024xf32> to vector<1x1024xf32>
    %cst_47 = arith.constant 6.400000e+01 : f32
    %103 = vector.broadcast %cst_47 : f32 to vector<1x1024xf32>
    %104 = arith.divf %102, %103 : vector<1x1024xf32>
    %105 = vector.broadcast %95 : vector<1x1024xf32> to vector<64x1024xf32>
    %106 = arith.subf %91, %105 : vector<64x1024xf32>
    %cst_48 = arith.constant 9.99999974E-6 : f32
    %107 = vector.broadcast %cst_48 : f32 to vector<1x1024xf32>
    %108 = arith.addf %104, %107 : vector<1x1024xf32>
    %109 = math.rsqrt %108 : vector<1x1024xf32>
    %110 = vector.broadcast %109 : vector<1x1024xf32> to vector<64x1024xf32>
    %111 = arith.mulf %106, %110 : vector<64x1024xf32>
    %c0_49 = arith.constant 0 : index
    %c0_50 = arith.constant 0 : index
    %112 = vector.load %arg13[%c0_49, %c0_50] : memref<1x1024xf32, #tpu.memory_space<vmem>>, vector<1x1024xf32>
    %113 = vector.broadcast %112 : vector<1x1024xf32> to vector<64x1024xf32>
    %114 = arith.mulf %111, %113 : vector<64x1024xf32>
    %c0_51 = arith.constant 0 : index
    %c0_52 = arith.constant 0 : index
    %115 = vector.load %arg14[%c0_51, %c0_52] : memref<1x1024xf32, #tpu.memory_space<vmem>>, vector<1x1024xf32>
    %116 = vector.broadcast %115 : vector<1x1024xf32> to vector<64x1024xf32>
    %117 = arith.addf %114, %116 : vector<64x1024xf32>
    %cst_53 = arith.constant 0.000000e+00 : f32
    %118 = vector.broadcast %cst_53 : f32 to vector<64x1024xf32>
    %119 = arith.cmpf ogt, %117, %118 : vector<64x1024xf32>
    %cst_54 = arith.constant 2.000000e-01 : f32
    %120 = vector.broadcast %cst_54 : f32 to vector<64x1024xf32>
    %121 = arith.mulf %120, %117 : vector<64x1024xf32>
    %122 = arith.select %119, %117, %121 : vector<64x1024xi1>, vector<64x1024xf32>
    %c0_55 = arith.constant 0 : index
    %c0_56 = arith.constant 0 : index
    %123 = vector.load %arg15[%c0_55, %c0_56] : memref<1024x896xbf16, #tpu.memory_space<vmem>>, vector<1024x896xbf16>
    %124 = arith.extf %123 : vector<1024x896xbf16> to vector<1024x896xf32>
    %cst_57 = arith.constant dense<0.000000e+00> : vector<64x896xf32>
    %125 = tpu.matmul %122, %124, %cst_57 {dimension_numbers = #tpu.dot_dimension_numbers<[1], [0], [0], [1], [0, 0, 1, 1], [], []>} : vector<64x1024xf32>, vector<1024x896xf32>, vector<64x896xf32> -> vector<64x896xf32>
    %c0_58 = arith.constant 0 : index
    %c0_59 = arith.constant 0 : index
    %126 = vector.load %arg16[%c0_58, %c0_59] : memref<1x896xf32, #tpu.memory_space<vmem>>, vector<1x896xf32>
    %127 = vector.broadcast %126 : vector<1x896xf32> to vector<64x896xf32>
    %128 = arith.addf %125, %127 : vector<64x896xf32>
    %129 = math.tanh %128 : vector<64x896xf32>
    %c0_60 = arith.constant 0 : index
    %c0_61 = arith.constant 0 : index
    %130 = vector.load %arg17[%c0_60, %c0_61] : memref<64x896xf32, #tpu.memory_space<vmem>>, vector<64x896xf32>
    tpu.vector_store %arg17[%c0_60, %c0_61], %129 {strides = array<i32>} : memref<64x896xf32, #tpu.memory_space<vmem>>, vector<64x896xf32>,
    return
  }
}

</mosaic_0001>

<llo_original>
// kernel: tpu_custom_call.1
$region0: #{tpu_custom_call.1}
  #allocation0 [shape = 'u32[]', space=smem, size = 0x4, offset = 0x4, fixed_abs, tag = 'smem constant byte address 0x4 - core index']
  #allocation1 [shape = 'u32[72,128]{1,0:T(1,128)}', space=vmem, size = 0x9000, scoped, tag = 'internal scratch']
  %s0 = inlined_call_operand.vmem [shape: f32[64,32], index: 0, kind: input, shape index: {}]
  %s1 = inlined_call_operand.hbm [shape: bf16[32,128], index: 1, kind: input, shape index: {}]
  %s2 = inlined_call_operand.hbm [shape: f32[1,128], index: 2, kind: input, shape index: {}]
  %s3 = inlined_call_operand.hbm [shape: bf16[128,256], index: 3, kind: input, shape index: {}]
  %s4 = inlined_call_operand.hbm [shape: f32[1,256], index: 4, kind: input, shape index: {}]
  %s5 = inlined_call_operand.hbm [shape: f32[1,256], index: 5, kind: input, shape index: {}]
  %s6 = inlined_call_operand.hbm [shape: f32[1,256], index: 6, kind: input, shape index: {}]
  %s7 = inlined_call_operand.hbm [shape: bf16[256,512], index: 7, kind: input, shape index: {}]
  %s8 = inlined_call_operand.hbm [shape: f32[1,512], index: 8, kind: input, shape index: {}]
  %s9 = inlined_call_operand.hbm [shape: f32[1,512], index: 9, kind: input, shape index: {}]
  %s10 = inlined_call_operand.hbm [shape: f32[1,512], index: 10, kind: input, shape index: {}]
  %s11 = inlined_call_operand.hbm [shape: bf16[512,1024], index: 11, kind: input, shape index: {}]
  %s12 = inlined_call_operand.hbm [shape: f32[1,1024], index: 12, kind: input, shape index: {}]
  %s13 = inlined_call_operand.hbm [shape: f32[1,1024], index: 13, kind: input, shape index: {}]
  %s14 = inlined_call_operand.hbm [shape: f32[1,1024], index: 14, kind: input, shape index: {}]
  %s15 = inlined_call_operand.hbm [shape: bf16[1024,896], index: 15, kind: input, shape index: {}]
  %s16 = inlined_call_operand.hbm [shape: f32[1,896], index: 16, kind: input, shape index: {}]
  %s17 = inlined_call_operand.hbm [shape: f32[64,896], index: 17, kind: output, shape index: {}]
  %s18 = sld [smem:[#allocation0]]
  $region142: #{tpu_custom_call.1} parent=0
    _
  %s20 = ssub.s32 1, %s18
  %s21 = scalar_select 0, %s20, %s18
  $region1: #{tpu_custom_call.1} parent=0
    #allocation2 [shape = 'u8[8192]{0}', space=vmem, size = 0x2000, scoped, tag = 'input window, operand 1, single buffered']
    #allocation3 [shape = 's32[1]{0}', space=sflag, size = 0x4, scoped, tag = 'scoped memory for tpu_custom_call.1']
    #allocation4 [shape = 's32[1]{0}', space=sflag, size = 0x4, scoped, tag = 'scoped memory for tpu_custom_call.1']
    #allocation5 [shape = 'u8[512]{0}', space=vmem, size = 0x400, scoped, tag = 'input window, operand 2, single buffered']
    #allocation6 [shape = 's32[1]{0}', space=sflag, size = 0x4, scoped, tag = 'scoped memory for tpu_custom_call.1']
    #allocation7 [shape = 'u8[65536]{0}', space=vmem, size = 0x10000, scoped, tag = 'input window, operand 3, single buffered']
    #allocation8 [shape = 'u8[1024]{0}', space=vmem, size = 0x400, scoped, tag = 'input window, operand 4, single buffered']
    #allocation9 [shape = 's32[1]{0}', space=sflag, size = 0x4, scoped, tag = 'scoped memory for tpu_custom_call.1']
    #allocation10 [shape = 'u8[1024]{0}', space=vmem, size = 0x400, scoped, tag = 'input window, operand 5, single buffered']
    #allocation11 [shape = 'u8[1024]{0}', space=vmem, size = 0x400, scoped, tag = 'input window, operand 6, single buffered']
    #allocation12 [shape = 's32[1]{0}', space=sflag, size = 0x4, scoped, tag = 'scoped memory for tpu_custom_call.1']
    #allocation13 [shape = 'u8[262144]{0}', space=vmem, size = 0x40000, scoped, tag = 'input window, operand 7, single buffered']
    #allocation14 [shape = 'u8[2048]{0}', space=vmem, size = 0x800, scoped, tag = 'input window, operand 8, single buffered']
    #allocation15 [shape = 's32[1]{0}', space=sflag, size = 0x4, scoped, tag = 'scoped memory for tpu_custom_call.1']
    #allocation16 [shape = 'u8[2048]{0}', space=vmem, size = 0x800, scoped, tag = 'input window, operand 9, single buffered']
    #allocation17 [shape = 'u8[2048]{0}', space=vmem, size = 0x800, scoped, tag = 'input window, operand 10, single buffered']
    #allocation18 [shape = 's32[1]{0}', space=sflag, size = 0x4, scoped, tag = 'scoped memory for tpu_custom_call.1']
    #allocation19 [shape = 'u8[1048576]{0}', space=vmem, size = 0x100000, scoped, tag = 'input window, operand 11, single buffered']
    #allocation20 [shape = 'u8[4096]{0}', space=vmem, size = 0x1000, scoped, tag = 'input window, operand 12, single buffered']
    #allocation21 [shape = 's32[1]{0}', space=sflag, size = 0x4, scoped, tag = 'scoped memory for tpu_custom_call.1']
    #allocation22 [shape = 'u8[4096]{0}', space=vmem, size = 0x1000, scoped, tag = 'input window, operand 13, single buffered']
    #allocation23 [shape = 'u8[4096]{0}', space=vmem, size = 0x1000, scoped, tag = 'input window, operand 14, single buffered']
    #allocation24 [shape = 's32[1]{0}', space=sflag, size = 0x4, scoped, tag = 'scoped memory for tpu_custom_call.1']
    #allocation25 [shape = 'u8[1835008]{0}', space=vmem, size = 0x1c0000, scoped, tag = 'input window, operand 15, single buffered']
    #allocation26 [shape = 'u8[3584]{0}', space=vmem, size = 0x1000, scoped, tag = 'input window, operand 16, single buffered']
    #allocation27 [shape = 's32[1]{0}', space=sflag, size = 0x4, scoped, tag = 'scoped memory for tpu_custom_call.1']
    #allocation28 [shape = 'u8[229376]{0}', space=vmem, size = 0x38000, scoped, tag = 'output window, operand 0, single buffered']
    %22 = vsyncpa [#allocation3], 0
    %23 = vsyncpa [#allocation6], 0
    %24 = vsyncpa [#allocation9], 0
    %25 = vsyncpa [#allocation12], 0
    %26 = vsyncpa [#allocation15], 0
    %27 = vsyncpa [#allocation18], 0
    %28 = vsyncpa [#allocation21], 0
    %29 = vsyncpa [#allocation24], 0
    %30 = vsyncpa [#allocation27], 0
    %31 = vsyncpa [#allocation4], 0
    // Predicated region
    $region2: #{tpu_custom_call.1} parent=1 // pred_check
      _
    $region3: #{tpu_custom_call.1} parent=1 // pred_check_branch
      %33 = sbr.rel (0) target = $region5
    $region4: #{tpu_custom_call.1} parent=1 // pred_region
      _
    $region5: #{tpu_custom_call.1} parent=1 // pred_fallthru
      _
    // Predicated region
    $region6: #{tpu_custom_call.1} parent=1 // pred_check
      _
    $region7: #{tpu_custom_call.1} parent=1 // pred_check_branch
      %35 = sbr.rel (0) target = $region9
    $region8: #{tpu_custom_call.1} parent=1 // pred_region
      %37 = vsyncadd [#allocation3], 0
      %s38 = sshll.u32 %s1, 4
      %s39 = int_to_ptr.hbm [resolvable:$true] %s38
      %s40 = sshll.u32 [#allocation2], 4
      %s41 = int_to_ptr.vmem [resolvable:$true] %s40
      %46 = dma.hbm_to_vmem [thread:$0]  %s39, 256, %s41, [#allocation3], 64, 64, 4
    $region9: #{tpu_custom_call.1} parent=1 // pred_fallthru
      _
    // Predicated region
    $region10: #{tpu_custom_call.1} parent=1 // pred_check
      _
    $region11: #{tpu_custom_call.1} parent=1 // pred_check_branch
      %48 = sbr.rel (0) target = $region13
    $region12: #{tpu_custom_call.1} parent=1 // pred_region
      %50 = vsyncadd [#allocation6], 0
      %s52 = sshll.u32 %s2, 4
      %s53 = int_to_ptr.hbm [resolvable:$true] %s52
      %s54 = sshll.u32 [#allocation5], 4
      %s55 = int_to_ptr.vmem [resolvable:$true] %s54
      %57 = dma.hbm_to_vmem [thread:$0]  %s53, 16, %s55, [#allocation6]
    $region13: #{tpu_custom_call.1} parent=1 // pred_fallthru
      _
    // Predicated region
    $region14: #{tpu_custom_call.1} parent=1 // pred_check
      _
    $region15: #{tpu_custom_call.1} parent=1 // pred_check_branch
      %59 = sbr.rel (0) target = $region17
    $region16: #{tpu_custom_call.1} parent=1 // pred_region
      %61 = vsyncadd [#allocation6], 0
      %s62 = sshll.u32 %s3, 4
      %s63 = int_to_ptr.hbm [resolvable:$true] %s62
      %s64 = sshll.u32 [#allocation7], 4
      %s65 = int_to_ptr.vmem [resolvable:$true] %s64
      %70 = dma.hbm_to_vmem [thread:$0]  %s63, 2048, %s65, [#allocation6], 128, 128, 8
    $region17: #{tpu_custom_call.1} parent=1 // pred_fallthru
      _
    // Predicated region
    $region18: #{tpu_custom_call.1} parent=1 // pred_check
      _
    $region19: #{tpu_custom_call.1} parent=1 // pred_check_branch
      %72 = sbr.rel (0) target = $region21
    $region20: #{tpu_custom_call.1} parent=1 // pred_region
      %74 = vsyncadd [#allocation9], 0
      %s76 = sshll.u32 %s4, 4
      %s77 = int_to_ptr.hbm [resolvable:$true] %s76
      %s78 = sshll.u32 [#allocation8], 4
      %s79 = int_to_ptr.vmem [resolvable:$true] %s78
      %81 = dma.hbm_to_vmem [thread:$0]  %s77, 32, %s79, [#allocation9]
    $region21: #{tpu_custom_call.1} parent=1 // pred_fallthru
      _
    // Predicated region
    $region22: #{tpu_custom_call.1} parent=1 // pred_check
      _
    $region23: #{tpu_custom_call.1} parent=1 // pred_check_branch
      %83 = sbr.rel (0) target = $region25
    $region24: #{tpu_custom_call.1} parent=1 // pred_region
      %85 = vsyncadd [#allocation9], 0
      %s87 = sshll.u32 %s5, 4
      %s88 = int_to_ptr.hbm [resolvable:$true] %s87
      %s89 = sshll.u32 [#allocation10], 4
      %s90 = int_to_ptr.vmem [resolvable:$true] %s89
      %92 = dma.hbm_to_vmem [thread:$0]  %s88, 32, %s90, [#allocation9]
    $region25: #{tpu_custom_call.1} parent=1 // pred_fallthru
      _
    // Predicated region
    $region26: #{tpu_custom_call.1} parent=1 // pred_check
      _
    $region27: #{tpu_custom_call.1} parent=1 // pred_check_branch
      %94 = sbr.rel (0) target = $region29
    $region28: #{tpu_custom_call.1} parent=1 // pred_region
      %96 = vsyncadd [#allocation12], 0
      %s98 = sshll.u32 %s6, 4
      %s99 = int_to_ptr.hbm [resolvable:$true] %s98
      %s100 = sshll.u32 [#allocation11], 4
      %s101 = int_to_ptr.vmem [resolvable:$true] %s100
      %103 = dma.hbm_to_vmem [thread:$0]  %s99, 32, %s101, [#allocation12]
    $region29: #{tpu_custom_call.1} parent=1 // pred_fallthru
      _
    // Predicated region
    $region30: #{tpu_custom_call.1} parent=1 // pred_check
      _
    $region31: #{tpu_custom_call.1} parent=1 // pred_check_branch
      %105 = sbr.rel (0) target = $region33
    $region32: #{tpu_custom_call.1} parent=1 // pred_region
      %107 = vsyncadd [#allocation12], 0
      %s108 = sshll.u32 %s7, 4
      %s109 = int_to_ptr.hbm [resolvable:$true] %s108
      %s110 = sshll.u32 [#allocation13], 4
      %s111 = int_to_ptr.vmem [resolvable:$true] %s110
      %116 = dma.hbm_to_vmem [thread:$0]  %s109, 8192, %s111, [#allocation12], 256, 256, 16
    $region33: #{tpu_custom_call.1} parent=1 // pred_fallthru
      _
    // Predicated region
    $region34: #{tpu_custom_call.1} parent=1 // pred_check
      _
    $region35: #{tpu_custom_call.1} parent=1 // pred_check_branch
      %118 = sbr.rel (0) target = $region37
    $region36: #{tpu_custom_call.1} parent=1 // pred_region
      %120 = vsyncadd [#allocation15], 0
      %s122 = sshll.u32 %s8, 4
      %s123 = int_to_ptr.hbm [resolvable:$true] %s122
      %s124 = sshll.u32 [#allocation14], 4
      %s125 = int_to_ptr.vmem [resolvable:$true] %s124
      %127 = dma.hbm_to_vmem [thread:$0]  %s123, 64, %s125, [#allocation15]
    $region37: #{tpu_custom_call.1} parent=1 // pred_fallthru
      _
    // Predicated region
    $region38: #{tpu_custom_call.1} parent=1 // pred_check
      _
    $region39: #{tpu_custom_call.1} parent=1 // pred_check_branch
      %129 = sbr.rel (0) target = $region41
    $region40: #{tpu_custom_call.1} parent=1 // pred_region
      %131 = vsyncadd [#allocation15], 0
      %s133 = sshll.u32 %s9, 4
      %s134 = int_to_ptr.hbm [resolvable:$true] %s133
      %s135 = sshll.u32 [#allocation16], 4
      %s136 = int_to_ptr.vmem [resolvable:$true] %s135
      %138 = dma.hbm_to_vmem [thread:$0]  %s134, 64, %s136, [#allocation15]
    $region41: #{tpu_custom_call.1} parent=1 // pred_fallthru
      _
    // Predicated region
    $region42: #{tpu_custom_call.1} parent=1 // pred_check
      _
    $region43: #{tpu_custom_call.1} parent=1 // pred_check_branch
      %140 = sbr.rel (0) target = $region45
    $region44: #{tpu_custom_call.1} parent=1 // pred_region
      %142 = vsyncadd [#allocation18], 0
      %s144 = sshll.u32 %s10, 4
      %s145 = int_to_ptr.hbm [resolvable:$true] %s144
      %s146 = sshll.u32 [#allocation17], 4
      %s147 = int_to_ptr.vmem [resolvable:$true] %s146
      %149 = dma.hbm_to_vmem [thread:$0]  %s145, 64, %s147, [#allocation18]
    $region45: #{tpu_custom_call.1} parent=1 // pred_fallthru
      _
    // Predicated region
    $region46: #{tpu_custom_call.1} parent=1 // pred_check
      _
    $region47: #{tpu_custom_call.1} parent=1 // pred_check_branch
      %151 = sbr.rel (0) target = $region49
    $region48: #{tpu_custom_call.1} parent=1 // pred_region
      %153 = vsyncadd [#allocation18], 0
      %s154 = sshll.u32 %s11, 4
      %s155 = int_to_ptr.hbm [resolvable:$true] %s154
      %s156 = sshll.u32 [#allocation19], 4
      %s157 = int_to_ptr.vmem [resolvable:$true] %s156
      %162 = dma.hbm_to_vmem [thread:$0]  %s155, 32768, %s157, [#allocation18], 512, 512, 32
    $region49: #{tpu_custom_call.1} parent=1 // pred_fallthru
      _
    // Predicated region
    $region50: #{tpu_custom_call.1} parent=1 // pred_check
      _
    $region51: #{tpu_custom_call.1} parent=1 // pred_check_branch
      %164 = sbr.rel (0) target = $region53
    $region52: #{tpu_custom_call.1} parent=1 // pred_region
      %166 = vsyncadd [#allocation21], 0
      %s168 = sshll.u32 %s12, 4
      %s169 = int_to_ptr.hbm [resolvable:$true] %s168
      %s170 = sshll.u32 [#allocation20], 4
      %s171 = int_to_ptr.vmem [resolvable:$true] %s170
      %173 = dma.hbm_to_vmem [thread:$0]  %s169, 128, %s171, [#allocation21]
    $region53: #{tpu_custom_call.1} parent=1 // pred_fallthru
      _
    // Predicated region
    $region54: #{tpu_custom_call.1} parent=1 // pred_check
      _
    $region55: #{tpu_custom_call.1} parent=1 // pred_check_branch
      %175 = sbr.rel (0) target = $region57
    $region56: #{tpu_custom_call.1} parent=1 // pred_region
      %177 = vsyncadd [#allocation21], 0
      %s179 = sshll.u32 %s13, 4
      %s180 = int_to_ptr.hbm [resolvable:$true] %s179
      %s181 = sshll.u32 [#allocation22], 4
      %s182 = int_to_ptr.vmem [resolvable:$true] %s181
      %184 = dma.hbm_to_vmem [thread:$0]  %s180, 128, %s182, [#allocation21]
    $region57: #{tpu_custom_call.1} parent=1 // pred_fallthru
      _
    // Predicated region
    $region58: #{tpu_custom_call.1} parent=1 // pred_check
      _
    $region59: #{tpu_custom_call.1} parent=1 // pred_check_branch
      %186 = sbr.rel (0) target = $region61
    $region60: #{tpu_custom_call.1} parent=1 // pred_region
      %188 = vsyncadd [#allocation24], 0
      %s190 = sshll.u32 %s14, 4
      %s191 = int_to_ptr.hbm [resolvable:$true] %s190
      %s192 = sshll.u32 [#allocation23], 4
      %s193 = int_to_ptr.vmem [resolvable:$true] %s192
      %195 = dma.hbm_to_vmem [thread:$0]  %s191, 128, %s193, [#allocation24]
    $region61: #{tpu_custom_call.1} parent=1 // pred_fallthru
      _
    // Predicated region
    $region62: #{tpu_custom_call.1} parent=1 // pred_check
      _
    $region63: #{tpu_custom_call.1} parent=1 // pred_check_branch
      %197 = sbr.rel (0) target = $region65
    $region64: #{tpu_custom_call.1} parent=1 // pred_region
      %199 = vsyncadd [#allocation24], 0
      %s200 = sshll.u32 %s15, 4
      %s201 = int_to_ptr.hbm [resolvable:$true] %s200
      %s202 = sshll.u32 [#allocation25], 4
      %s203 = int_to_ptr.vmem [resolvable:$true] %s202
      %208 = dma.hbm_to_vmem [thread:$0]  %s201, 57344, %s203, [#allocation24], 448, 448, 28
    $region65: #{tpu_custom_call.1} parent=1 // pred_fallthru
      _
    // Predicated region
    $region66: #{tpu_custom_call.1} parent=1 // pred_check
      _
    $region67: #{tpu_custom_call.1} parent=1 // pred_check_branch
      %210 = sbr.rel (0) target = $region69
    $region68: #{tpu_custom_call.1} parent=1 // pred_region
      %212 = vsyncadd [#allocation27], 0
      %s214 = sshll.u32 %s16, 4
      %s215 = int_to_ptr.hbm [resolvable:$true] %s214
      %s216 = sshll.u32 [#allocation26], 4
      %s217 = int_to_ptr.vmem [resolvable:$true] %s216
      %219 = dma.hbm_to_vmem [thread:$0]  %s215, 112, %s217, [#allocation27]
    $region69: #{tpu_custom_call.1} parent=1 // pred_fallthru
      _
    // Predicated region
    $region70: #{tpu_custom_call.1} parent=1 // pred_check
      _
    $region71: #{tpu_custom_call.1} parent=1 // pred_check_branch
      %221 = sbr.rel (0) target = $region73
    $region72: #{tpu_custom_call.1} parent=1 // pred_region
      %223 = dma.done [#allocation3], 256
    $region73: #{tpu_custom_call.1} parent=1 // pred_fallthru
      _
    // Predicated region
    $region74: #{tpu_custom_call.1} parent=1 // pred_check
      _
    $region75: #{tpu_custom_call.1} parent=1 // pred_check_branch
      %225 = sbr.rel (0) target = $region77
    $region76: #{tpu_custom_call.1} parent=1 // pred_region
      %227 = dma.done [#allocation6], 16
    $region77: #{tpu_custom_call.1} parent=1 // pred_fallthru
      _
    // Predicated region
    $region78: #{tpu_custom_call.1} parent=1 // pred_check
      _
    $region79: #{tpu_custom_call.1} parent=1 // pred_check_branch
      %229 = sbr.rel (0) target = $region81
    $region80: #{tpu_custom_call.1} parent=1 // pred_region
      %231 = dma.done [#allocation6], 2048
    $region81: #{tpu_custom_call.1} parent=1 // pred_fallthru
      _
    // Predicated region
    $region82: #{tpu_custom_call.1} parent=1 // pred_check
      _
    $region83: #{tpu_custom_call.1} parent=1 // pred_check_branch
      %233 = sbr.rel (0) target = $region85
    $region84: #{tpu_custom_call.1} parent=1 // pred_region
      %235 = dma.done [#allocation9], 32
    $region85: #{tpu_custom_call.1} parent=1 // pred_fallthru
      _
    // Predicated region
    $region86: #{tpu_custom_call.1} parent=1 // pred_check
      _
    $region87: #{tpu_custom_call.1} parent=1 // pred_check_branch
      %237 = sbr.rel (0) target = $region89
    $region88: #{tpu_custom_call.1} parent=1 // pred_region
      %239 = dma.done [#allocation9], 32
    $region89: #{tpu_custom_call.1} parent=1 // pred_fallthru
      _
    // Predicated region
    $region90: #{tpu_custom_call.1} parent=1 // pred_check
      _
    $region91: #{tpu_custom_call.1} parent=1 // pred_check_branch
      %241 = sbr.rel (0) target = $region93
    $region92: #{tpu_custom_call.1} parent=1 // pred_region
      %243 = dma.done [#allocation12], 32
    $region93: #{tpu_custom_call.1} parent=1 // pred_fallthru
      _
    // Predicated region
    $region94: #{tpu_custom_call.1} parent=1 // pred_check
      _
    $region95: #{tpu_custom_call.1} parent=1 // pred_check_branch
      %245 = sbr.rel (0) target = $region97
    $region96: #{tpu_custom_call.1} parent=1 // pred_region
      %247 = dma.done [#allocation12], 8192
    $region97: #{tpu_custom_call.1} parent=1 // pred_fallthru
      _
    // Predicated region
    $region98: #{tpu_custom_call.1} parent=1 // pred_check
      _
    $region99: #{tpu_custom_call.1} parent=1 // pred_check_branch
      %249 = sbr.rel (0) target = $region101
    $region100: #{tpu_custom_call.1} parent=1 // pred_region
      %251 = dma.done [#allocation15], 64
    $region101: #{tpu_custom_call.1} parent=1 // pred_fallthru
      _
    // Predicated region
    $region102: #{tpu_custom_call.1} parent=1 // pred_check
      _
    $region103: #{tpu_custom_call.1} parent=1 // pred_check_branch
      %253 = sbr.rel (0) target = $region105
    $region104: #{tpu_custom_call.1} parent=1 // pred_region
      %255 = dma.done [#allocation15], 64
    $region105: #{tpu_custom_call.1} parent=1 // pred_fallthru
      _
    // Predicated region
    $region106: #{tpu_custom_call.1} parent=1 // pred_check
      _
    $region107: #{tpu_custom_call.1} parent=1 // pred_check_branch
      %257 = sbr.rel (0) target = $region109
    $region108: #{tpu_custom_call.1} parent=1 // pred_region
      %259 = dma.done [#allocation18], 64
    $region109: #{tpu_custom_call.1} parent=1 // pred_fallthru
      _
    // Predicated region
    $region110: #{tpu_custom_call.1} parent=1 // pred_check
      _
    $region111: #{tpu_custom_call.1} parent=1 // pred_check_branch
      %261 = sbr.rel (0) target = $region113
    $region112: #{tpu_custom_call.1} parent=1 // pred_region
      %263 = dma.done [#allocation18], 32768
    $region113: #{tpu_custom_call.1} parent=1 // pred_fallthru
      _
    // Predicated region
    $region114: #{tpu_custom_call.1} parent=1 // pred_check
      _
    $region115: #{tpu_custom_call.1} parent=1 // pred_check_branch
      %265 = sbr.rel (0) target = $region117
    $region116: #{tpu_custom_call.1} parent=1 // pred_region
      %267 = dma.done [#allocation21], 128
    $region117: #{tpu_custom_call.1} parent=1 // pred_fallthru
      _
    // Predicated region
    $region118: #{tpu_custom_call.1} parent=1 // pred_check
      _
    $region119: #{tpu_custom_call.1} parent=1 // pred_check_branch
      %269 = sbr.rel (0) target = $region121
    $region120: #{tpu_custom_call.1} parent=1 // pred_region
      %271 = dma.done [#allocation21], 128
    $region121: #{tpu_custom_call.1} parent=1 // pred_fallthru
      _
    // Predicated region
    $region122: #{tpu_custom_call.1} parent=1 // pred_check
      _
    $region123: #{tpu_custom_call.1} parent=1 // pred_check_branch
      %273 = sbr.rel (0) target = $region125
    $region124: #{tpu_custom_call.1} parent=1 // pred_region
      %275 = dma.done [#allocation24], 128
    $region125: #{tpu_custom_call.1} parent=1 // pred_fallthru
      _
    // Predicated region
    $region126: #{tpu_custom_call.1} parent=1 // pred_check
      _
    $region127: #{tpu_custom_call.1} parent=1 // pred_check_branch
      %277 = sbr.rel (0) target = $region129
    $region128: #{tpu_custom_call.1} parent=1 // pred_region
      %279 = dma.done [#allocation24], 57344
    $region129: #{tpu_custom_call.1} parent=1 // pred_fallthru
      _
    // Predicated region
    $region130: #{tpu_custom_call.1} parent=1 // pred_check
      _
    $region131: #{tpu_custom_call.1} parent=1 // pred_check_branch
      %281 = sbr.rel (0) target = $region133
    $region132: #{tpu_custom_call.1} parent=1 // pred_region
      %283 = dma.done [#allocation27], 112
    $region133: #{tpu_custom_call.1} parent=1 // pred_fallthru
      _
    %v284 = vld [vmem:[%s0] sm:$0xff]
    %v285 = vld [vmem:[%s0 + $0x8] sm:$0xff]
    %v286 = vld [vmem:[%s0 + $0x10] sm:$0xff]
    %v287 = vld [vmem:[%s0 + $0x18] sm:$0xff]
    %v288 = vld [vmem:[%s0 + $0x20] sm:$0xff]
    %v289 = vld [vmem:[%s0 + $0x28] sm:$0xff]
    %v290 = vld [vmem:[%s0 + $0x30] sm:$0xff]
    %v291 = vld [vmem:[%s0 + $0x38] sm:$0xff]
    %v292 = vld [vmem:[#allocation2] sm:$0xf]
    %v293 = vld [vmem:[#allocation2 + $0x4] sm:$0xf]
    %v294 = vld [vmem:[#allocation2 + $0x8] sm:$0xf]
    %v295 = vld [vmem:[#allocation2 + $0xc] sm:$0xf]
    %v296 = vunpack.c.l.bf16 %v292
    %v297 = vunpack.c.l.bf16 %v293
    %v298 = vunpack.c.l.bf16 %v294
    %v299 = vunpack.c.l.bf16 %v295
    %v300 = vld [vmem:[#allocation5] sm:$0x1]
    %v302 = vperm.slane %v300, 0
    %vm304 = vcmask 261120
    %v306 = vsel %vm304, %v284, 0
    %v309 = vsel %vm304, %v285, 0
    %v312 = vsel %vm304, %v286, 0
    %v315 = vsel %vm304, %v287, 0
    %v318 = vsel %vm304, %v288, 0
    %v321 = vsel %vm304, %v289, 0
    %v324 = vsel %vm304, %v290, 0
    %v327 = vsel %vm304, %v291, 0
    %329 = vmatpush.msra.mxu0 0.0
    %330 = vmatpush.msra.mxu0 0.0
    %331 = vmatpush.msra.mxu0 0.0
    %332 = vmatpush.msra.mxu0 0.0
    %333 = vmatpush.msra.mxu0 0.0
    %334 = vmatpush.msra.mxu0 0.0
    %335 = vmatpush.msra.mxu0 0.0
    %336 = vmatpush.msra.mxu0 0.0
    %337 = vmatpush.msra.mxu0 0.0
    %338 = vmatpush.msra.mxu0 0.0
    %339 = vmatpush.msra.mxu0 0.0
    %340 = vmatpush.msra.mxu0 0.0
    %341 = vmatpush.msra.mxu0 %v299
    %342 = vmatpush.msra.mxu0 %v298
    %343 = vmatpush.msra.mxu0 %v297
    %344 = vmatpush.msra.mxu0 %v296
    %345 = vmatmul.f32.gmra.mxu0 %v306
    %v346 = vpop.f32.mrf.mxu0
    %v347 = vadd.f32 %v302, %v346
    %348 = vmatmul.f32.gmra.mxu0 %v309
    %v349 = vpop.f32.mrf.mxu0
    %v350 = vadd.f32 %v302, %v349
    %351 = vmatmul.f32.gmra.mxu0 %v312
    %v352 = vpop.f32.mrf.mxu0
    %v353 = vadd.f32 %v302, %v352
    %354 = vmatmul.f32.gmra.mxu0 %v315
    %v355 = vpop.f32.mrf.mxu0
    %v356 = vadd.f32 %v302, %v355
    %357 = vmatmul.f32.gmra.mxu0 %v318
    %v358 = vpop.f32.mrf.mxu0
    %v359 = vadd.f32 %v302, %v358
    %360 = vmatmul.f32.gmra.mxu0 %v321
    %v361 = vpop.f32.mrf.mxu0
    %v362 = vadd.f32 %v302, %v361
    %363 = vmatmul.f32.gmra.mxu0 %v324
    %v364 = vpop.f32.mrf.mxu0
    %v365 = vadd.f32 %v302, %v364
    %366 = vmatmul.f32.gmra.mxu0 %v327
    %v367 = vpop.f32.mrf.mxu0
    %v368 = vadd.f32 %v302, %v367
    %369 = vdwg.mxu0
    %vm370 = vcmp.gt.f32.partialorder %v347, 0.0
    %vm371 = vcmp.gt.f32.partialorder %v350, 0.0
    %vm372 = vcmp.gt.f32.partialorder %v353, 0.0
    %vm373 = vcmp.gt.f32.partialorder %v356, 0.0
    %vm374 = vcmp.gt.f32.partialorder %v359, 0.0
    %vm375 = vcmp.gt.f32.partialorder %v362, 0.0
    %vm376 = vcmp.gt.f32.partialorder %v365, 0.0
    %vm377 = vcmp.gt.f32.partialorder %v368, 0.0
    %v378 = vmul.f32 %v347, 0.2
    %v379 = vmul.f32 %v350, 0.2
    %v380 = vmul.f32 %v353, 0.2
    %v381 = vmul.f32 %v356, 0.2
    %v382 = vmul.f32 %v359, 0.2
    %v383 = vmul.f32 %v362, 0.2
    %v384 = vmul.f32 %v365, 0.2
    %v385 = vmul.f32 %v368, 0.2
    %v386 = vsel %vm370, %v347, %v378
    %v387 = vsel %vm371, %v350, %v379
    %v388 = vsel %vm372, %v353, %v380
    %v389 = vsel %vm373, %v356, %v381
    %v390 = vsel %vm374, %v359, %v382
    %v391 = vsel %vm375, %v362, %v383
    %v392 = vsel %vm376, %v365, %v384
    %v393 = vsel %vm377, %v368, %v385
    %v394 = vld [vmem:[#allocation7] sm:$0xff]
    %v395 = vld [vmem:[#allocation7 + $0x8] sm:$0xff]
    %v396 = vld [vmem:[#allocation7 + $0x10] sm:$0xff]
    %v397 = vld [vmem:[#allocation7 + $0x18] sm:$0xff]
    %v398 = vld [vmem:[#allocation7 + $0x20] sm:$0xff]
    %v399 = vld [vmem:[#allocation7 + $0x28] sm:$0xff]
    %v400 = vld [vmem:[#allocation7 + $0x30] sm:$0xff]
    %v401 = vld [vmem:[#allocation7 + $0x38] sm:$0xff]
    %v402 = vld [vmem:[#allocation7 + $0x40] sm:$0xff]
    %v403 = vld [vmem:[#allocation7 + $0x48] sm:$0xff]
    %v404 = vld [vmem:[#allocation7 + $0x50] sm:$0xff]
    %v405 = vld [vmem:[#allocation7 + $0x58] sm:$0xff]
    %v406 = vld [vmem:[#allocation7 + $0x60] sm:$0xff]
    %v407 = vld [vmem:[#allocation7 + $0x68] sm:$0xff]
    %v408 = vld [vmem:[#allocation7 + $0x70] sm:$0xff]
    %v409 = vld [vmem:[#allocation7 + $0x78] sm:$0xff]
    %v410 = vunpack.c.l.bf16 %v394
    %v411 = vunpack.c.h.bf16 %v394
    %v412 = vunpack.c.l.bf16 %v395
    %v413 = vunpack.c.h.bf16 %v395
    %v414 = vunpack.c.l.bf16 %v396
    %v415 = vunpack.c.h.bf16 %v396
    %v416 = vunpack.c.l.bf16 %v397
    %v417 = vunpack.c.h.bf16 %v397
    %v418 = vunpack.c.l.bf16 %v398
    %v419 = vunpack.c.h.bf16 %v398
    %v420 = vunpack.c.l.bf16 %v399
    %v421 = vunpack.c.h.bf16 %v399
    %v422 = vunpack.c.l.bf16 %v400
    %v423 = vunpack.c.h.bf16 %v400
    %v424 = vunpack.c.l.bf16 %v401
    %v425 = vunpack.c.h.bf16 %v401
    %v426 = vunpack.c.l.bf16 %v402
    %v427 = vunpack.c.h.bf16 %v402
    %v428 = vunpack.c.l.bf16 %v403
    %v429 = vunpack.c.h.bf16 %v403
    %v430 = vunpack.c.l.bf16 %v404
    %v431 = vunpack.c.h.bf16 %v404
    %v432 = vunpack.c.l.bf16 %v405
    %v433 = vunpack.c.h.bf16 %v405
    %v434 = vunpack.c.l.bf16 %v406
    %v435 = vunpack.c.h.bf16 %v406
    %v436 = vunpack.c.l.bf16 %v407
    %v437 = vunpack.c.h.bf16 %v407
    %v438 = vunpack.c.l.bf16 %v408
    %v439 = vunpack.c.h.bf16 %v408
    %v440 = vunpack.c.l.bf16 %v409
    %v441 = vunpack.c.h.bf16 %v409
    %v442 = vld [vmem:[#allocation8] sm:$0x3]
    %v444 = vperm.slane %v442, 0
    %v445 = vperm.slane %v442, 1
    %448 = vmatpush.msra.mxu0 %v440
    %449 = vmatpush.msra.mxu0 %v438
    %450 = vmatpush.msra.mxu0 %v436
    %451 = vmatpush.msra.mxu0 %v434
    %452 = vmatpush.msra.mxu0 %v432
    %453 = vmatpush.msra.mxu0 %v430
    %454 = vmatpush.msra.mxu0 %v428
    %455 = vmatpush.msra.mxu0 %v426
    %456 = vmatpush.msra.mxu0 %v424
    %457 = vmatpush.msra.mxu0 %v422
    %458 = vmatpush.msra.mxu0 %v420
    %459 = vmatpush.msra.mxu0 %v418
    %460 = vmatpush.msra.mxu0 %v416
    %461 = vmatpush.msra.mxu0 %v414
    %462 = vmatpush.msra.mxu0 %v412
    %463 = vmatpush.msra.mxu0 %v410
    %464 = vmatmul.f32.gmra.mxu0 %v386
    %v465 = vpop.f32.mrf.mxu0
    %v466 = vadd.f32 %v444, %v465
    %467 = vmatmul.f32.gmra.mxu0 %v387
    %v468 = vpop.f32.mrf.mxu0
    %v469 = vadd.f32 %v444, %v468
    %470 = vmatmul.f32.gmra.mxu0 %v388
    %v471 = vpop.f32.mrf.mxu0
    %v472 = vadd.f32 %v444, %v471
    %473 = vmatmul.f32.gmra.mxu0 %v389
    %v474 = vpop.f32.mrf.mxu0
    %v475 = vadd.f32 %v444, %v474
    %476 = vmatmul.f32.gmra.mxu0 %v390
    %v477 = vpop.f32.mrf.mxu0
    %v478 = vadd.f32 %v444, %v477
    %479 = vmatmul.f32.gmra.mxu0 %v391
    %v480 = vpop.f32.mrf.mxu0
    %v481 = vadd.f32 %v444, %v480
    %482 = vmatmul.f32.gmra.mxu0 %v392
    %v483 = vpop.f32.mrf.mxu0
    %v484 = vadd.f32 %v444, %v483
    %485 = vmatmul.f32.gmra.mxu0 %v393
    %v486 = vpop.f32.mrf.mxu0
    %v487 = vadd.f32 %v444, %v486
    %488 = vdwg.mxu0
    %489 = vmatpush.msra.mxu0 %v441
    %490 = vmatpush.msra.mxu0 %v439
    %491 = vmatpush.msra.mxu0 %v437
    %492 = vmatpush.msra.mxu0 %v435
    %493 = vmatpush.msra.mxu0 %v433
    %494 = vmatpush.msra.mxu0 %v431
    %495 = vmatpush.msra.mxu0 %v429
    %496 = vmatpush.msra.mxu0 %v427
    %497 = vmatpush.msra.mxu0 %v425
    %498 = vmatpush.msra.mxu0 %v423
    %499 = vmatpush.msra.mxu0 %v421
    %500 = vmatpush.msra.mxu0 %v419
    %501 = vmatpush.msra.mxu0 %v417
    %502 = vmatpush.msra.mxu0 %v415
    %503 = vmatpush.msra.mxu0 %v413
    %504 = vmatpush.msra.mxu0 %v411
    %505 = vmatmul.f32.gmra.mxu0 %v386
    %v506 = vpop.f32.mrf.mxu0
    %v507 = vadd.f32 %v445, %v506
    %508 = vmatmul.f32.gmra.mxu0 %v387
    %v509 = vpop.f32.mrf.mxu0
    %v510 = vadd.f32 %v445, %v509
    %511 = vmatmul.f32.gmra.mxu0 %v388
    %v512 = vpop.f32.mrf.mxu0
    %v513 = vadd.f32 %v445, %v512
    %514 = vmatmul.f32.gmra.mxu0 %v389
    %v515 = vpop.f32.mrf.mxu0
    %v516 = vadd.f32 %v445, %v515
    %517 = vmatmul.f32.gmra.mxu0 %v390
    %v518 = vpop.f32.mrf.mxu0
    %v519 = vadd.f32 %v445, %v518
    %520 = vmatmul.f32.gmra.mxu0 %v391
    %v521 = vpop.f32.mrf.mxu0
    %v522 = vadd.f32 %v445, %v521
    %523 = vmatmul.f32.gmra.mxu0 %v392
    %v524 = vpop.f32.mrf.mxu0
    %v525 = vadd.f32 %v445, %v524
    %526 = vmatmul.f32.gmra.mxu0 %v393
    %v527 = vpop.f32.mrf.mxu0
    %v528 = vadd.f32 %v445, %v527
    %529 = vdwg.mxu0
    %v530 = vadd.f32 %v466, %v469
    %v531 = vadd.f32 %v530, %v472
    %v532 = vadd.f32 %v531, %v475
    %v533 = vadd.f32 %v532, %v478
    %v534 = vadd.f32 %v533, %v481
    %v535 = vadd.f32 %v534, %v484
    %v536 = vadd.f32 %v535, %v487
    %v537 = vrot.slane %v536, 4
    %v538 = vadd.f32 %v536, %v537
    %v539 = vrot.slane %v538, 2
    %v540 = vadd.f32 %v538, %v539
    %v541 = vrot.slane %v540, 1
    %v542 = vadd.f32 %v540, %v541
    %v543 = vadd.f32 %v507, %v510
    %v544 = vadd.f32 %v543, %v513
    %v545 = vadd.f32 %v544, %v516
    %v546 = vadd.f32 %v545, %v519
    %v547 = vadd.f32 %v546, %v522
    %v548 = vadd.f32 %v547, %v525
    %v549 = vadd.f32 %v548, %v528
    %v550 = vrot.slane %v549, 4
    %v551 = vadd.f32 %v549, %v550
    %v552 = vrot.slane %v551, 2
    %v553 = vadd.f32 %v551, %v552
    %v554 = vrot.slane %v553, 1
    %v555 = vadd.f32 %v553, %v554
    %v556 = vrcp.pop 64.0
    %v557 = vmul.f32 64.0, %v556
    %v558 = vsub.f32 1.0, %v557
    %v559 = vmul.f32 %v556, %v558
    %v560 = vadd.f32 %v556, %v559
    %vm561 = vweird.f32 %v556
    %v562 = vsel %vm561, %v556, %v560
    %v563 = vmul.f32 %v542, %v562
    %v564 = vmul.f32 %v555, %v562
    %v565 = vsub.f32 %v466, %v563
    %v566 = vsub.f32 %v507, %v564
    %v567 = vsub.f32 %v469, %v563
    %v568 = vsub.f32 %v510, %v564
    %v569 = vsub.f32 %v472, %v563
    %v570 = vsub.f32 %v513, %v564
    %v571 = vsub.f32 %v475, %v563
    %v572 = vsub.f32 %v516, %v564
    %v573 = vsub.f32 %v478, %v563
    %v574 = vsub.f32 %v519, %v564
    %v575 = vsub.f32 %v481, %v563
    %v576 = vsub.f32 %v522, %v564
    %v577 = vsub.f32 %v484, %v563
    %v578 = vsub.f32 %v525, %v564
    %v579 = vsub.f32 %v487, %v563
    %v580 = vsub.f32 %v528, %v564
    %v581 = vmul.f32 %v565, %v565
    %v582 = vmul.f32 %v566, %v566
    %v583 = vmul.f32 %v567, %v567
    %v584 = vmul.f32 %v568, %v568
    %v585 = vmul.f32 %v569, %v569
    %v586 = vmul.f32 %v570, %v570
    %v587 = vmul.f32 %v571, %v571
    %v588 = vmul.f32 %v572, %v572
    %v589 = vmul.f32 %v573, %v573
    %v590 = vmul.f32 %v574, %v574
    %v591 = vmul.f32 %v575, %v575
    %v592 = vmul.f32 %v576, %v576
    %v593 = vmul.f32 %v577, %v577
    %v594 = vmul.f32 %v578, %v578
    %v595 = vmul.f32 %v579, %v579
    %v596 = vmul.f32 %v580, %v580
    %v597 = vadd.f32 %v581, %v583
    %v598 = vadd.f32 %v597, %v585
    %v599 = vadd.f32 %v598, %v587
    %v600 = vadd.f32 %v599, %v589
    %v601 = vadd.f32 %v600, %v591
    %v602 = vadd.f32 %v601, %v593
    %v603 = vadd.f32 %v602, %v595
    %v604 = vrot.slane %v603, 4
    %v605 = vadd.f32 %v603, %v604
    %v606 = vrot.slane %v605, 2
    %v607 = vadd.f32 %v605, %v606
    %v608 = vrot.slane %v607, 1
    %v609 = vadd.f32 %v607, %v608
    %v610 = vadd.f32 %v582, %v584
    %v611 = vadd.f32 %v610, %v586
    %v612 = vadd.f32 %v611, %v588
    %v613 = vadd.f32 %v612, %v590
    %v614 = vadd.f32 %v613, %v592
    %v615 = vadd.f32 %v614, %v594
    %v616 = vadd.f32 %v615, %v596
    %v617 = vrot.slane %v616, 4
    %v618 = vadd.f32 %v616, %v617
    %v619 = vrot.slane %v618, 2
    %v620 = vadd.f32 %v618, %v619
    %v621 = vrot.slane %v620, 1
    %v622 = vadd.f32 %v620, %v621
    %v623 = vmul.f32 %v609, %v562
    %v624 = vmul.f32 %v622, %v562
    %v625 = vadd.f32 %v623, 1e-05
    %v626 = vadd.f32 %v624, 1e-05
    %v627 = vrsqrt.pop %v625
    %v628 = vmul.f32 %v627, %v625
    %v629 = vmul.f32 %v628, %v627
    %v630 = vmul.f32 0.5, %v629
    %v631 = vsub.f32 1.5, %v630
    %v632 = vmul.f32 %v627, %v631
    %vm633 = vweird.f32 %v625
    %vm634 = vweird.f32 %v627
    %vm635 = vmor %vm633, %vm634
    %v636 = vsel %vm635, %v627, %v632
    %v637 = vrsqrt.pop %v626
    %v638 = vmul.f32 %v637, %v626
    %v639 = vmul.f32 %v638, %v637
    %v640 = vmul.f32 0.5, %v639
    %v641 = vsub.f32 1.5, %v640
    %v642 = vmul.f32 %v637, %v641
    %vm643 = vweird.f32 %v626
    %vm644 = vweird.f32 %v637
    %vm645 = vmor %vm643, %vm644
    %v646 = vsel %vm645, %v637, %v642
    %v647 = vmul.f32 %v565, %v636
    %v648 = vmul.f32 %v566, %v646
    %v649 = vmul.f32 %v567, %v636
    %v650 = vmul.f32 %v568, %v646
    %v651 = vmul.f32 %v569, %v636
    %v652 = vmul.f32 %v570, %v646
    %v653 = vmul.f32 %v571, %v636
    %v654 = vmul.f32 %v572, %v646
    %v655 = vmul.f32 %v573, %v636
    %v656 = vmul.f32 %v574, %v646
    %v657 = vmul.f32 %v575, %v636
    %v658 = vmul.f32 %v576, %v646
    %v659 = vmul.f32 %v577, %v636
    %v660 = vmul.f32 %v578, %v646
    %v661 = vmul.f32 %v579, %v636
    %v662 = vmul.f32 %v580, %v646
    %v663 = vld [vmem:[#allocation10] sm:$0x3]
    %v665 = vperm.slane %v663, 0
    %v666 = vperm.slane %v663, 1
    %v669 = vmul.f32 %v647, %v665
    %v670 = vmul.f32 %v648, %v666
    %v671 = vmul.f32 %v649, %v665
    %v672 = vmul.f32 %v650, %v666
    %v673 = vmul.f32 %v651, %v665
    %v674 = vmul.f32 %v652, %v666
    %v675 = vmul.f32 %v653, %v665
    %v676 = vmul.f32 %v654, %v666
    %v677 = vmul.f32 %v655, %v665
    %v678 = vmul.f32 %v656, %v666
    %v679 = vmul.f32 %v657, %v665
    %v680 = vmul.f32 %v658, %v666
    %v681 = vmul.f32 %v659, %v665
    %v682 = vmul.f32 %v660, %v666
    %v683 = vmul.f32 %v661, %v665
    %v684 = vmul.f32 %v662, %v666
    %v685 = vld [vmem:[#allocation11] sm:$0x3]
    %v687 = vperm.slane %v685, 0
    %v688 = vperm.slane %v685, 1
    %v691 = vadd.f32 %v669, %v687
    %v692 = vadd.f32 %v670, %v688
    %v693 = vadd.f32 %v671, %v687
    %v694 = vadd.f32 %v672, %v688
    %v695 = vadd.f32 %v673, %v687
    %v696 = vadd.f32 %v674, %v688
    %v697 = vadd.f32 %v675, %v687
    %v698 = vadd.f32 %v676, %v688
    %v699 = vadd.f32 %v677, %v687
    %v700 = vadd.f32 %v678, %v688
    %v701 = vadd.f32 %v679, %v687
    %v702 = vadd.f32 %v680, %v688
    %v703 = vadd.f32 %v681, %v687
    %v704 = vadd.f32 %v682, %v688
    %v705 = vadd.f32 %v683, %v687
    %v706 = vadd.f32 %v684, %v688
    %vm707 = vcmp.gt.f32.partialorder %v691, 0.0
    %vm708 = vcmp.gt.f32.partialorder %v692, 0.0
    %vm709 = vcmp.gt.f32.partialorder %v693, 0.0
    %vm710 = vcmp.gt.f32.partialorder %v694, 0.0
    %vm711 = vcmp.gt.f32.partialorder %v695, 0.0
    %vm712 = vcmp.gt.f32.partialorder %v696, 0.0
    %vm713 = vcmp.gt.f32.partialorder %v697, 0.0
    %vm714 = vcmp.gt.f32.partialorder %v698, 0.0
    %vm715 = vcmp.gt.f32.partialorder %v699, 0.0
    %vm716 = vcmp.gt.f32.partialorder %v700, 0.0
    %vm717 = vcmp.gt.f32.partialorder %v701, 0.0
    %vm718 = vcmp.gt.f32.partialorder %v702, 0.0
    %vm719 = vcmp.gt.f32.partialorder %v703, 0.0
    %vm720 = vcmp.gt.f32.partialorder %v704, 0.0
    %vm721 = vcmp.gt.f32.partialorder %v705, 0.0
    %vm722 = vcmp.gt.f32.partialorder %v706, 0.0
    %v723 = vmul.f32 %v691, 0.2
    %v724 = vmul.f32 %v692, 0.2
    %v725 = vmul.f32 %v693, 0.2
    %v726 = vmul.f32 %v694, 0.2
    %v727 = vmul.f32 %v695, 0.2
    %v728 = vmul.f32 %v696, 0.2
    %v729 = vmul.f32 %v697, 0.2
    %v730 = vmul.f32 %v698, 0.2
    %v731 = vmul.f32 %v699, 0.2
    %v732 = vmul.f32 %v700, 0.2
    %v733 = vmul.f32 %v701, 0.2
    %v734 = vmul.f32 %v702, 0.2
    %v735 = vmul.f32 %v703, 0.2
    %v736 = vmul.f32 %v704, 0.2
    %v737 = vmul.f32 %v705, 0.2
    %v738 = vmul.f32 %v706, 0.2
    %v739 = vsel %vm707, %v691, %v723
    %v740 = vsel %vm708, %v692, %v724
    %v741 = vsel %vm709, %v693, %v725
    %v742 = vsel %vm710, %v694, %v726
    %v743 = vsel %vm711, %v695, %v727
    %v744 = vsel %vm712, %v696, %v728
    %v745 = vsel %vm713, %v697, %v729
    %v746 = vsel %vm714, %v698, %v730
    %v747 = vsel %vm715, %v699, %v731
    %v748 = vsel %vm716, %v700, %v732
    %v749 = vsel %vm717, %v701, %v733
    %v750 = vsel %vm718, %v702, %v734
    %v751 = vsel %vm719, %v703, %v735
    %v752 = vsel %vm720, %v704, %v736
    %v753 = vsel %vm721, %v705, %v737
    %v754 = vsel %vm722, %v706, %v738
    %v755 = vld [vmem:[#allocation13] sm:$0xff]
    %v756 = vld [vmem:[#allocation13 + $0x8] sm:$0xff]
    %v757 = vld [vmem:[#allocation13 + $0x10] sm:$0xff]
    %v758 = vld [vmem:[#allocation13 + $0x18] sm:$0xff]
    %v759 = vld [vmem:[#allocation13 + $0x20] sm:$0xff]
    %v760 = vld [vmem:[#allocation13 + $0x28] sm:$0xff]
    %v761 = vld [vmem:[#allocation13 + $0x30] sm:$0xff]
    %v762 = vld [vmem:[#allocation13 + $0x38] sm:$0xff]
    %v763 = vld [vmem:[#allocation13 + $0x40] sm:$0xff]
    %v764 = vld [vmem:[#allocation13 + $0x48] sm:$0xff]
    %v765 = vld [vmem:[#allocation13 + $0x50] sm:$0xff]
    %v766 = vld [vmem:[#allocation13 + $0x58] sm:$0xff]
    %v767 = vld [vmem:[#allocation13 + $0x60] sm:$0xff]
    %v768 = vld [vmem:[#allocation13 + $0x68] sm:$0xff]
    %v769 = vld [vmem:[#allocation13 + $0x70] sm:$0xff]
    %v770 = vld [vmem:[#allocation13 + $0x78] sm:$0xff]
    %v771 = vld [vmem:[#allocation13 + $0x80] sm:$0xff]
    %v772 = vld [vmem:[#allocation13 + $0x88] sm:$0xff]
    %v773 = vld [vmem:[#allocation13 + $0x90] sm:$0xff]
    %v774 = vld [vmem:[#allocation13 + $0x98] sm:$0xff]
    %v775 = vld [vmem:[#allocation13 + $0xa0] sm:$0xff]
    %v776 = vld [vmem:[#allocation13 + $0xa8] sm:$0xff]
    %v777 = vld [vmem:[#allocation13 + $0xb0] sm:$0xff]
    %v778 = vld [vmem:[#allocation13 + $0xb8] sm:$0xff]
    %v779 = vld [vmem:[#allocation13 + $0xc0] sm:$0xff]
    %v780 = vld [vmem:[#allocation13 + $0xc8] sm:$0xff]
    %v781 = vld [vmem:[#allocation13 + $0xd0] sm:$0xff]
    %v782 = vld [vmem:[#allocation13 + $0xd8] sm:$0xff]
    %v783 = vld [vmem:[#allocation13 + $0xe0] sm:$0xff]
    %v784 = vld [vmem:[#allocation13 + $0xe8] sm:$0xff]
    %v785 = vld [vmem:[#allocation13 + $0xf0] sm:$0xff]
    %v786 = vld [vmem:[#allocation13 + $0xf8] sm:$0xff]
    %v787 = vld [vmem:[#allocation13 + $0x100] sm:$0xff]
    %v788 = vld [vmem:[#allocation13 + $0x108] sm:$0xff]
    %v789 = vld [vmem:[#allocation13 + $0x110] sm:$0xff]
    %v790 = vld [vmem:[#allocation13 + $0x118] sm:$0xff]
    %v791 = vld [vmem:[#allocation13 + $0x120] sm:$0xff]
    %v792 = vld [vmem:[#allocation13 + $0x128] sm:$0xff]
    %v793 = vld [vmem:[#allocation13 + $0x130] sm:$0xff]
    %v794 = vld [vmem:[#allocation13 + $0x138] sm:$0xff]
    %v795 = vld [vmem:[#allocation13 + $0x140] sm:$0xff]
    %v796 = vld [vmem:[#allocation13 + $0x148] sm:$0xff]
    %v797 = vld [vmem:[#allocation13 + $0x150] sm:$0xff]
    %v798 = vld [vmem:[#allocation13 + $0x158] sm:$0xff]
    %v799 = vld [vmem:[#allocation13 + $0x160] sm:$0xff]
    %v800 = vld [vmem:[#allocation13 + $0x168] sm:$0xff]
    %v801 = vld [vmem:[#allocation13 + $0x170] sm:$0xff]
    %v802 = vld [vmem:[#allocation13 + $0x178] sm:$0xff]
    %v803 = vld [vmem:[#allocation13 + $0x180] sm:$0xff]
    %v804 = vld [vmem:[#allocation13 + $0x188] sm:$0xff]
    %v805 = vld [vmem:[#allocation13 + $0x190] sm:$0xff]
    %v806 = vld [vmem:[#allocation13 + $0x198] sm:$0xff]
    %v807 = vld [vmem:[#allocation13 + $0x1a0] sm:$0xff]
    %v808 = vld [vmem:[#allocation13 + $0x1a8] sm:$0xff]
    %v809 = vld [vmem:[#allocation13 + $0x1b0] sm:$0xff]
    %v810 = vld [vmem:[#allocation13 + $0x1b8] sm:$0xff]
    %v811 = vld [vmem:[#allocation13 + $0x1c0] sm:$0xff]
    %v812 = vld [vmem:[#allocation13 + $0x1c8] sm:$0xff]
    %v813 = vld [vmem:[#allocation13 + $0x1d0] sm:$0xff]
    %v814 = vld [vmem:[#allocation13 + $0x1d8] sm:$0xff]
    %v815 = vld [vmem:[#allocation13 + $0x1e0] sm:$0xff]
    %v816 = vld [vmem:[#allocation13 + $0x1e8] sm:$0xff]
    %v817 = vld [vmem:[#allocation13 + $0x1f0] sm:$0xff]
    %v818 = vld [vmem:[#allocation13 + $0x1f8] sm:$0xff]
    %v819 = vunpack.c.l.bf16 %v755
    %v820 = vunpack.c.h.bf16 %v755
    %v821 = vunpack.c.l.bf16 %v756
    %v822 = vunpack.c.h.bf16 %v756
    %v823 = vunpack.c.l.bf16 %v757
    %v824 = vunpack.c.h.bf16 %v757
    %v825 = vunpack.c.l.bf16 %v758
    %v826 = vunpack.c.h.bf16 %v758
    %v827 = vunpack.c.l.bf16 %v759
    %v828 = vunpack.c.h.bf16 %v759
    %v829 = vunpack.c.l.bf16 %v760
    %v830 = vunpack.c.h.bf16 %v760
    %v831 = vunpack.c.l.bf16 %v761
    %v832 = vunpack.c.h.bf16 %v761
    %v833 = vunpack.c.l.bf16 %v762
    %v834 = vunpack.c.h.bf16 %v762
    %v835 = vunpack.c.l.bf16 %v763
    %v836 = vunpack.c.h.bf16 %v763
    %v837 = vunpack.c.l.bf16 %v764
    %v838 = vunpack.c.h.bf16 %v764
    %v839 = vunpack.c.l.bf16 %v765
    %v840 = vunpack.c.h.bf16 %v765
    %v841 = vunpack.c.l.bf16 %v766
    %v842 = vunpack.c.h.bf16 %v766
    %v843 = vunpack.c.l.bf16 %v767
    %v844 = vunpack.c.h.bf16 %v767
    %v845 = vunpack.c.l.bf16 %v768
    %v846 = vunpack.c.h.bf16 %v768
    %v847 = vunpack.c.l.bf16 %v769
    %v848 = vunpack.c.h.bf16 %v769
    %v849 = vunpack.c.l.bf16 %v770
    %v850 = vunpack.c.h.bf16 %v770
    %v851 = vunpack.c.l.bf16 %v771
    %v852 = vunpack.c.h.bf16 %v771
    %v853 = vunpack.c.l.bf16 %v772
    %v854 = vunpack.c.h.bf16 %v772
    %v855 = vunpack.c.l.bf16 %v773
    %v856 = vunpack.c.h.bf16 %v773
    %v857 = vunpack.c.l.bf16 %v774
    %v858 = vunpack.c.h.bf16 %v774
    %v859 = vunpack.c.l.bf16 %v775
    %v860 = vunpack.c.h.bf16 %v775
    %v861 = vunpack.c.l.bf16 %v776
    %v862 = vunpack.c.h.bf16 %v776
    %v863 = vunpack.c.l.bf16 %v777
    %v864 = vunpack.c.h.bf16 %v777
    %v865 = vunpack.c.l.bf16 %v778
    %v866 = vunpack.c.h.bf16 %v778
    %v867 = vunpack.c.l.bf16 %v779
    %v868 = vunpack.c.h.bf16 %v779
    %v869 = vunpack.c.l.bf16 %v780
    %v870 = vunpack.c.h.bf16 %v780
    %v871 = vunpack.c.l.bf16 %v781
    %v872 = vunpack.c.h.bf16 %v781
    %v873 = vunpack.c.l.bf16 %v782
    %v874 = vunpack.c.h.bf16 %v782
    %v875 = vunpack.c.l.bf16 %v783
    %v876 = vunpack.c.h.bf16 %v783
    %v877 = vunpack.c.l.bf16 %v784
    %v878 = vunpack.c.h.bf16 %v784
    %v879 = vunpack.c.l.bf16 %v785
    %v880 = vunpack.c.h.bf16 %v785
    %v881 = vunpack.c.l.bf16 %v786
    %v882 = vunpack.c.h.bf16 %v786
    %v883 = vunpack.c.l.bf16 %v787
    %v884 = vunpack.c.h.bf16 %v787
    %v885 = vunpack.c.l.bf16 %v788
    %v886 = vunpack.c.h.bf16 %v788
    %v887 = vunpack.c.l.bf16 %v789
    %v888 = vunpack.c.h.bf16 %v789
    %v889 = vunpack.c.l.bf16 %v790
    %v890 = vunpack.c.h.bf16 %v790
    %v891 = vunpack.c.l.bf16 %v791
    %v892 = vunpack.c.h.bf16 %v791
    %v893 = vunpack.c.l.bf16 %v792
    %v894 = vunpack.c.h.bf16 %v792
    %v895 = vunpack.c.l.bf16 %v793
    %v896 = vunpack.c.h.bf16 %v793
    %v897 = vunpack.c.l.bf16 %v794
    %v898 = vunpack.c.h.bf16 %v794
    %v899 = vunpack.c.l.bf16 %v795
    %v900 = vunpack.c.h.bf16 %v795
    %v901 = vunpack.c.l.bf16 %v796
    %v902 = vunpack.c.h.bf16 %v796
    %v903 = vunpack.c.l.bf16 %v797
    %v904 = vunpack.c.h.bf16 %v797
    %v905 = vunpack.c.l.bf16 %v798
    %v906 = vunpack.c.h.bf16 %v798
    %v907 = vunpack.c.l.bf16 %v799
    %v908 = vunpack.c.h.bf16 %v799
    %v909 = vunpack.c.l.bf16 %v800
    %v910 = vunpack.c.h.bf16 %v800
    %v911 = vunpack.c.l.bf16 %v801
    %v912 = vunpack.c.h.bf16 %v801
    %v913 = vunpack.c.l.bf16 %v802
    %v914 = vunpack.c.h.bf16 %v802
    %v915 = vunpack.c.l.bf16 %v803
    %v916 = vunpack.c.h.bf16 %v803
    %v917 = vunpack.c.l.bf16 %v804
    %v918 = vunpack.c.h.bf16 %v804
    %v919 = vunpack.c.l.bf16 %v805
    %v920 = vunpack.c.h.bf16 %v805
    %v921 = vunpack.c.l.bf16 %v806
    %v922 = vunpack.c.h.bf16 %v806
    %v923 = vunpack.c.l.bf16 %v807
    %v924 = vunpack.c.h.bf16 %v807
    %v925 = vunpack.c.l.bf16 %v808
    %v926 = vunpack.c.h.bf16 %v808
    %v927 = vunpack.c.l.bf16 %v809
    %v928 = vunpack.c.h.bf16 %v809
    %v929 = vunpack.c.l.bf16 %v810
    %v930 = vunpack.c.h.bf16 %v810
    %v931 = vunpack.c.l.bf16 %v811
    %v932 = vunpack.c.h.bf16 %v811
    %v933 = vunpack.c.l.bf16 %v812
    %v934 = vunpack.c.h.bf16 %v812
    %v935 = vunpack.c.l.bf16 %v813
    %v936 = vunpack.c.h.bf16 %v813
    %v937 = vunpack.c.l.bf16 %v814
    %v938 = vunpack.c.h.bf16 %v814
    %v939 = vunpack.c.l.bf16 %v815
    %v940 = vunpack.c.h.bf16 %v815
    %v941 = vunpack.c.l.bf16 %v816
    %v942 = vunpack.c.h.bf16 %v816
    %v943 = vunpack.c.l.bf16 %v817
    %v944 = vunpack.c.h.bf16 %v817
    %v945 = vunpack.c.l.bf16 %v818
    %v946 = vunpack.c.h.bf16 %v818
    %v947 = vld [vmem:[#allocation14] sm:$0xf]
    %v949 = vperm.slane %v947, 0
    %v950 = vperm.slane %v947, 1
    %v951 = vperm.slane %v947, 2
    %v952 = vperm.slane %v947, 3
    %957 = vmatpush.msra.mxu0 %v879
    %958 = vmatpush.msra.mxu0 %v875
    %959 = vmatpush.msra.mxu0 %v871
    %960 = vmatpush.msra.mxu0 %v867
    %961 = vmatpush.msra.mxu0 %v863
    %962 = vmatpush.msra.mxu0 %v859
    %963 = vmatpush.msra.mxu0 %v855
    %964 = vmatpush.msra.mxu0 %v851
    %965 = vmatpush.msra.mxu0 %v847
    %966 = vmatpush.msra.mxu0 %v843
    %967 = vmatpush.msra.mxu0 %v839
    %968 = vmatpush.msra.mxu0 %v835
    %969 = vmatpush.msra.mxu0 %v831
    %970 = vmatpush.msra.mxu0 %v827
    %971 = vmatpush.msra.mxu0 %v823
    %972 = vmatpush.msra.mxu0 %v819
    %973 = vmatmul.f32.gmra.mxu0 %v739
    %v974 = vpop.f32.mrf.mxu0
    %v975 = vadd.f32 %v949, %v974
    %976 = vmatmul.f32.gmra.mxu0 %v741
    %v977 = vpop.f32.mrf.mxu0
    %v978 = vadd.f32 %v949, %v977
    %979 = vmatmul.f32.gmra.mxu0 %v743
    %v980 = vpop.f32.mrf.mxu0
    %v981 = vadd.f32 %v949, %v980
    %982 = vmatmul.f32.gmra.mxu0 %v745
    %v983 = vpop.f32.mrf.mxu0
    %v984 = vadd.f32 %v949, %v983
    %985 = vmatmul.f32.gmra.mxu0 %v747
    %v986 = vpop.f32.mrf.mxu0
    %v987 = vadd.f32 %v949, %v986
    %988 = vmatmul.f32.gmra.mxu0 %v749
    %v989 = vpop.f32.mrf.mxu0
    %v990 = vadd.f32 %v949, %v989
    %991 = vmatmul.f32.gmra.mxu0 %v751
    %v992 = vpop.f32.mrf.mxu0
    %v993 = vadd.f32 %v949, %v992
    %994 = vmatmul.f32.gmra.mxu0 %v753
    %v995 = vpop.f32.mrf.mxu0
    %v996 = vadd.f32 %v949, %v995
    %997 = vdwg.mxu0
    %998 = vmatpush.msra.mxu0 %v943
    %999 = vmatpush.msra.mxu0 %v939
    %1000 = vmatpush.msra.mxu0 %v935
    %1001 = vmatpush.msra.mxu0 %v931
    %1002 = vmatpush.msra.mxu0 %v927
    %1003 = vmatpush.msra.mxu0 %v923
    %1004 = vmatpush.msra.mxu0 %v919
    %1005 = vmatpush.msra.mxu0 %v915
    %1006 = vmatpush.msra.mxu0 %v911
    %1007 = vmatpush.msra.mxu0 %v907
    %1008 = vmatpush.msra.mxu0 %v903
    %1009 = vmatpush.msra.mxu0 %v899
    %1010 = vmatpush.msra.mxu0 %v895
    %1011 = vmatpush.msra.mxu0 %v891
    %1012 = vmatpush.msra.mxu0 %v887
    %1013 = vmatpush.msra.mxu0 %v883
    %1014 = vmatmul.f32.gmra.mxu0 %v740
    %v1015 = vpop.f32.mrf.mxu0
    %v1016 = vadd.f32 %v975, %v1015
    %1017 = vmatmul.f32.gmra.mxu0 %v742
    %v1018 = vpop.f32.mrf.mxu0
    %v1019 = vadd.f32 %v978, %v1018
    %1020 = vmatmul.f32.gmra.mxu0 %v744
    %v1021 = vpop.f32.mrf.mxu0
    %v1022 = vadd.f32 %v981, %v1021
    %1023 = vmatmul.f32.gmra.mxu0 %v746
    %v1024 = vpop.f32.mrf.mxu0
    %v1025 = vadd.f32 %v984, %v1024
    %1026 = vmatmul.f32.gmra.mxu0 %v748
    %v1027 = vpop.f32.mrf.mxu0
    %v1028 = vadd.f32 %v987, %v1027
    %1029 = vmatmul.f32.gmra.mxu0 %v750
    %v1030 = vpop.f32.mrf.mxu0
    %v1031 = vadd.f32 %v990, %v1030
    %1032 = vmatmul.f32.gmra.mxu0 %v752
    %v1033 = vpop.f32.mrf.mxu0
    %v1034 = vadd.f32 %v993, %v1033
    %1035 = vmatmul.f32.gmra.mxu0 %v754
    %v1036 = vpop.f32.mrf.mxu0
    %v1037 = vadd.f32 %v996, %v1036
    %1038 = vdwg.mxu0
    %1039 = vmatpush.msra.mxu0 %v880
    %1040 = vmatpush.msra.mxu0 %v876
    %1041 = vmatpush.msra.mxu0 %v872
    %1042 = vmatpush.msra.mxu0 %v868
    %1043 = vmatpush.msra.mxu0 %v864
    %1044 = vmatpush.msra.mxu0 %v860
    %1045 = vmatpush.msra.mxu0 %v856
    %1046 = vmatpush.msra.mxu0 %v852
    %1047 = vmatpush.msra.mxu0 %v848
    %1048 = vmatpush.msra.mxu0 %v844
    %1049 = vmatpush.msra.mxu0 %v840
    %1050 = vmatpush.msra.mxu0 %v836
    %1051 = vmatpush.msra.mxu0 %v832
    %1052 = vmatpush.msra.mxu0 %v828
    %1053 = vmatpush.msra.mxu0 %v824
    %1054 = vmatpush.msra.mxu0 %v820
    %1055 = vmatmul.f32.gmra.mxu0 %v739
    %v1056 = vpop.f32.mrf.mxu0
    %v1057 = vadd.f32 %v950, %v1056
    %1058 = vmatmul.f32.gmra.mxu0 %v741
    %v1059 = vpop.f32.mrf.mxu0
    %v1060 = vadd.f32 %v950, %v1059
    %1061 = vmatmul.f32.gmra.mxu0 %v743
    %v1062 = vpop.f32.mrf.mxu0
    %v1063 = vadd.f32 %v950, %v1062
    %1064 = vmatmul.f32.gmra.mxu0 %v745
    %v1065 = vpop.f32.mrf.mxu0
    %v1066 = vadd.f32 %v950, %v1065
    %1067 = vmatmul.f32.gmra.mxu0 %v747
    %v1068 = vpop.f32.mrf.mxu0
    %v1069 = vadd.f32 %v950, %v1068
    %1070 = vmatmul.f32.gmra.mxu0 %v749
    %v1071 = vpop.f32.mrf.mxu0
    %v1072 = vadd.f32 %v950, %v1071
    %1073 = vmatmul.f32.gmra.mxu0 %v751
    %v1074 = vpop.f32.mrf.mxu0
    %v1075 = vadd.f32 %v950, %v1074
    %1076 = vmatmul.f32.gmra.mxu0 %v753
    %v1077 = vpop.f32.mrf.mxu0
    %v1078 = vadd.f32 %v950, %v1077
    %1079 = vdwg.mxu0
    %1080 = vmatpush.msra.mxu0 %v944
    %1081 = vmatpush.msra.mxu0 %v940
    %1082 = vmatpush.msra.mxu0 %v936
    %1083 = vmatpush.msra.mxu0 %v932
    %1084 = vmatpush.msra.mxu0 %v928
    %1085 = vmatpush.msra.mxu0 %v924
    %1086 = vmatpush.msra.mxu0 %v920
    %1087 = vmatpush.msra.mxu0 %v916
    %1088 = vmatpush.msra.mxu0 %v912
    %1089 = vmatpush.msra.mxu0 %v908
    %1090 = vmatpush.msra.mxu0 %v904
    %1091 = vmatpush.msra.mxu0 %v900
    %1092 = vmatpush.msra.mxu0 %v896
    %1093 = vmatpush.msra.mxu0 %v892
    %1094 = vmatpush.msra.mxu0 %v888
    %1095 = vmatpush.msra.mxu0 %v884
    %1096 = vmatmul.f32.gmra.mxu0 %v740
    %v1097 = vpop.f32.mrf.mxu0
    %v1098 = vadd.f32 %v1057, %v1097
    %1099 = vmatmul.f32.gmra.mxu0 %v742
    %v1100 = vpop.f32.mrf.mxu0
    %v1101 = vadd.f32 %v1060, %v1100
    %1102 = vmatmul.f32.gmra.mxu0 %v744
    %v1103 = vpop.f32.mrf.mxu0
    %v1104 = vadd.f32 %v1063, %v1103
    %1105 = vmatmul.f32.gmra.mxu0 %v746
    %v1106 = vpop.f32.mrf.mxu0
    %v1107 = vadd.f32 %v1066, %v1106
    %1108 = vmatmul.f32.gmra.mxu0 %v748
    %v1109 = vpop.f32.mrf.mxu0
    %v1110 = vadd.f32 %v1069, %v1109
    %1111 = vmatmul.f32.gmra.mxu0 %v750
    %v1112 = vpop.f32.mrf.mxu0
    %v1113 = vadd.f32 %v1072, %v1112
    %1114 = vmatmul.f32.gmra.mxu0 %v752
    %v1115 = vpop.f32.mrf.mxu0
    %v1116 = vadd.f32 %v1075, %v1115
    %1117 = vmatmul.f32.gmra.mxu0 %v754
    %v1118 = vpop.f32.mrf.mxu0
    %v1119 = vadd.f32 %v1078, %v1118
    %1120 = vdwg.mxu0
    %1121 = vmatpush.msra.mxu0 %v881
    %1122 = vmatpush.msra.mxu0 %v877
    %1123 = vmatpush.msra.mxu0 %v873
    %1124 = vmatpush.msra.mxu0 %v869
    %1125 = vmatpush.msra.mxu0 %v865
    %1126 = vmatpush.msra.mxu0 %v861
    %1127 = vmatpush.msra.mxu0 %v857
    %1128 = vmatpush.msra.mxu0 %v853
    %1129 = vmatpush.msra.mxu0 %v849
    %1130 = vmatpush.msra.mxu0 %v845
    %1131 = vmatpush.msra.mxu0 %v841
    %1132 = vmatpush.msra.mxu0 %v837
    %1133 = vmatpush.msra.mxu0 %v833
    %1134 = vmatpush.msra.mxu0 %v829
    %1135 = vmatpush.msra.mxu0 %v825
    %1136 = vmatpush.msra.mxu0 %v821
    %1137 = vmatmul.f32.gmra.mxu0 %v739
    %v1138 = vpop.f32.mrf.mxu0
    %v1139 = vadd.f32 %v951, %v1138
    %1140 = vmatmul.f32.gmra.mxu0 %v741
    %v1141 = vpop.f32.mrf.mxu0
    %v1142 = vadd.f32 %v951, %v1141
    %1143 = vmatmul.f32.gmra.mxu0 %v743
    %v1144 = vpop.f32.mrf.mxu0
    %v1145 = vadd.f32 %v951, %v1144
    %1146 = vmatmul.f32.gmra.mxu0 %v745
    %v1147 = vpop.f32.mrf.mxu0
    %v1148 = vadd.f32 %v951, %v1147
    %1149 = vmatmul.f32.gmra.mxu0 %v747
    %v1150 = vpop.f32.mrf.mxu0
    %v1151 = vadd.f32 %v951, %v1150
    %1152 = vmatmul.f32.gmra.mxu0 %v749
    %v1153 = vpop.f32.mrf.mxu0
    %v1154 = vadd.f32 %v951, %v1153
    %1155 = vmatmul.f32.gmra.mxu0 %v751
    %v1156 = vpop.f32.mrf.mxu0
    %v1157 = vadd.f32 %v951, %v1156
    %1158 = vmatmul.f32.gmra.mxu0 %v753
    %v1159 = vpop.f32.mrf.mxu0
    %v1160 = vadd.f32 %v951, %v1159
    %1161 = vdwg.mxu0
    %1162 = vmatpush.msra.mxu0 %v945
    %1163 = vmatpush.msra.mxu0 %v941
    %1164 = vmatpush.msra.mxu0 %v937
    %1165 = vmatpush.msra.mxu0 %v933
    %1166 = vmatpush.msra.mxu0 %v929
    %1167 = vmatpush.msra.mxu0 %v925
    %1168 = vmatpush.msra.mxu0 %v921
    %1169 = vmatpush.msra.mxu0 %v917
    %1170 = vmatpush.msra.mxu0 %v913
    %1171 = vmatpush.msra.mxu0 %v909
    %1172 = vmatpush.msra.mxu0 %v905
    %1173 = vmatpush.msra.mxu0 %v901
    %1174 = vmatpush.msra.mxu0 %v897
    %1175 = vmatpush.msra.mxu0 %v893
    %1176 = vmatpush.msra.mxu0 %v889
    %1177 = vmatpush.msra.mxu0 %v885
    %1178 = vmatmul.f32.gmra.mxu0 %v740
    %v1179 = vpop.f32.mrf.mxu0
    %v1180 = vadd.f32 %v1139, %v1179
    %1181 = vmatmul.f32.gmra.mxu0 %v742
    %v1182 = vpop.f32.mrf.mxu0
    %v1183 = vadd.f32 %v1142, %v1182
    %1184 = vmatmul.f32.gmra.mxu0 %v744
    %v1185 = vpop.f32.mrf.mxu0
    %v1186 = vadd.f32 %v1145, %v1185
    %1187 = vmatmul.f32.gmra.mxu0 %v746
    %v1188 = vpop.f32.mrf.mxu0
    %v1189 = vadd.f32 %v1148, %v1188
    %1190 = vmatmul.f32.gmra.mxu0 %v748
    %v1191 = vpop.f32.mrf.mxu0
    %v1192 = vadd.f32 %v1151, %v1191
    %1193 = vmatmul.f32.gmra.mxu0 %v750
    %v1194 = vpop.f32.mrf.mxu0
    %v1195 = vadd.f32 %v1154, %v1194
    %1196 = vmatmul.f32.gmra.mxu0 %v752
    %v1197 = vpop.f32.mrf.mxu0
    %v1198 = vadd.f32 %v1157, %v1197
    %1199 = vmatmul.f32.gmra.mxu0 %v754
    %v1200 = vpop.f32.mrf.mxu0
    %v1201 = vadd.f32 %v1160, %v1200
    %1202 = vdwg.mxu0
    %1203 = vmatpush.msra.mxu0 %v882
    %1204 = vmatpush.msra.mxu0 %v878
    %1205 = vmatpush.msra.mxu0 %v874
    %1206 = vmatpush.msra.mxu0 %v870
    %1207 = vmatpush.msra.mxu0 %v866
    %1208 = vmatpush.msra.mxu0 %v862
    %1209 = vmatpush.msra.mxu0 %v858
    %1210 = vmatpush.msra.mxu0 %v854
    %1211 = vmatpush.msra.mxu0 %v850
    %1212 = vmatpush.msra.mxu0 %v846
    %1213 = vmatpush.msra.mxu0 %v842
    %1214 = vmatpush.msra.mxu0 %v838
    %1215 = vmatpush.msra.mxu0 %v834
    %1216 = vmatpush.msra.mxu0 %v830
    %1217 = vmatpush.msra.mxu0 %v826
    %1218 = vmatpush.msra.mxu0 %v822
    %1219 = vmatmul.f32.gmra.mxu0 %v739
    %v1220 = vpop.f32.mrf.mxu0
    %v1221 = vadd.f32 %v952, %v1220
    %1222 = vmatmul.f32.gmra.mxu0 %v741
    %v1223 = vpop.f32.mrf.mxu0
    %v1224 = vadd.f32 %v952, %v1223
    %1225 = vmatmul.f32.gmra.mxu0 %v743
    %v1226 = vpop.f32.mrf.mxu0
    %v1227 = vadd.f32 %v952, %v1226
    %1228 = vmatmul.f32.gmra.mxu0 %v745
    %v1229 = vpop.f32.mrf.mxu0
    %v1230 = vadd.f32 %v952, %v1229
    %1231 = vmatmul.f32.gmra.mxu0 %v747
    %v1232 = vpop.f32.mrf.mxu0
    %v1233 = vadd.f32 %v952, %v1232
    %1234 = vmatmul.f32.gmra.mxu0 %v749
    %v1235 = vpop.f32.mrf.mxu0
    %v1236 = vadd.f32 %v952, %v1235
    %1237 = vmatmul.f32.gmra.mxu0 %v751
    %v1238 = vpop.f32.mrf.mxu0
    %v1239 = vadd.f32 %v952, %v1238
    %1240 = vmatmul.f32.gmra.mxu0 %v753
    %v1241 = vpop.f32.mrf.mxu0
    %v1242 = vadd.f32 %v952, %v1241
    %1243 = vdwg.mxu0
    %1244 = vmatpush.msra.mxu0 %v946
    %1245 = vmatpush.msra.mxu0 %v942
    %1246 = vmatpush.msra.mxu0 %v938
    %1247 = vmatpush.msra.mxu0 %v934
    %1248 = vmatpush.msra.mxu0 %v930
    %1249 = vmatpush.msra.mxu0 %v926
    %1250 = vmatpush.msra.mxu0 %v922
    %1251 = vmatpush.msra.mxu0 %v918
    %1252 = vmatpush.msra.mxu0 %v914
    %1253 = vmatpush.msra.mxu0 %v910
    %1254 = vmatpush.msra.mxu0 %v906
    %1255 = vmatpush.msra.mxu0 %v902
    %1256 = vmatpush.msra.mxu0 %v898
    %1257 = vmatpush.msra.mxu0 %v894
    %1258 = vmatpush.msra.mxu0 %v890
    %1259 = vmatpush.msra.mxu0 %v886
    %1260 = vmatmul.f32.gmra.mxu0 %v740
    %v1261 = vpop.f32.mrf.mxu0
    %v1262 = vadd.f32 %v1221, %v1261
    %1263 = vmatmul.f32.gmra.mxu0 %v742
    %v1264 = vpop.f32.mrf.mxu0
    %v1265 = vadd.f32 %v1224, %v1264
    %1266 = vmatmul.f32.gmra.mxu0 %v744
    %v1267 = vpop.f32.mrf.mxu0
    %v1268 = vadd.f32 %v1227, %v1267
    %1269 = vmatmul.f32.gmra.mxu0 %v746
    %v1270 = vpop.f32.mrf.mxu0
    %v1271 = vadd.f32 %v1230, %v1270
    %1272 = vmatmul.f32.gmra.mxu0 %v748
    %v1273 = vpop.f32.mrf.mxu0
    %v1274 = vadd.f32 %v1233, %v1273
    %1275 = vmatmul.f32.gmra.mxu0 %v750
    %v1276 = vpop.f32.mrf.mxu0
    %v1277 = vadd.f32 %v1236, %v1276
    %1278 = vmatmul.f32.gmra.mxu0 %v752
    %v1279 = vpop.f32.mrf.mxu0
    %v1280 = vadd.f32 %v1239, %v1279
    %1281 = vmatmul.f32.gmra.mxu0 %v754
    %v1282 = vpop.f32.mrf.mxu0
    %v1283 = vadd.f32 %v1242, %v1282
    %1284 = vdwg.mxu0
    %v1285 = vadd.f32 %v1016, %v1019
    %v1286 = vadd.f32 %v1285, %v1022
    %v1287 = vadd.f32 %v1286, %v1025
    %v1288 = vadd.f32 %v1287, %v1028
    %v1289 = vadd.f32 %v1288, %v1031
    %v1290 = vadd.f32 %v1289, %v1034
    %v1291 = vadd.f32 %v1290, %v1037
    %v1292 = vrot.slane %v1291, 4
    %v1293 = vadd.f32 %v1291, %v1292
    %v1294 = vrot.slane %v1293, 2
    %v1295 = vadd.f32 %v1293, %v1294
    %v1296 = vrot.slane %v1295, 1
    %v1297 = vadd.f32 %v1295, %v1296
    %v1298 = vadd.f32 %v1098, %v1101
    %v1299 = vadd.f32 %v1298, %v1104
    %v1300 = vadd.f32 %v1299, %v1107
    %v1301 = vadd.f32 %v1300, %v1110
    %v1302 = vadd.f32 %v1301, %v1113
    %v1303 = vadd.f32 %v1302, %v1116
    %v1304 = vadd.f32 %v1303, %v1119
    %v1305 = vrot.slane %v1304, 4
    %v1306 = vadd.f32 %v1304, %v1305
    %v1307 = vrot.slane %v1306, 2
    %v1308 = vadd.f32 %v1306, %v1307
    %v1309 = vrot.slane %v1308, 1
    %v1310 = vadd.f32 %v1308, %v1309
    %v1311 = vadd.f32 %v1180, %v1183
    %v1312 = vadd.f32 %v1311, %v1186
    %v1313 = vadd.f32 %v1312, %v1189
    %v1314 = vadd.f32 %v1313, %v1192
    %v1315 = vadd.f32 %v1314, %v1195
    %v1316 = vadd.f32 %v1315, %v1198
    %v1317 = vadd.f32 %v1316, %v1201
    %v1318 = vrot.slane %v1317, 4
    %v1319 = vadd.f32 %v1317, %v1318
    %v1320 = vrot.slane %v1319, 2
    %v1321 = vadd.f32 %v1319, %v1320
    %v1322 = vrot.slane %v1321, 1
    %v1323 = vadd.f32 %v1321, %v1322
    %v1324 = vadd.f32 %v1262, %v1265
    %v1325 = vadd.f32 %v1324, %v1268
    %v1326 = vadd.f32 %v1325, %v1271
    %v1327 = vadd.f32 %v1326, %v1274
    %v1328 = vadd.f32 %v1327, %v1277
    %v1329 = vadd.f32 %v1328, %v1280
    %v1330 = vadd.f32 %v1329, %v1283
    %v1331 = vrot.slane %v1330, 4
    %v1332 = vadd.f32 %v1330, %v1331
    %v1333 = vrot.slane %v1332, 2
    %v1334 = vadd.f32 %v1332, %v1333
    %v1335 = vrot.slane %v1334, 1
    %v1336 = vadd.f32 %v1334, %v1335
    %v1337 = vmul.f32 %v1297, %v562
    %v1338 = vmul.f32 %v1310, %v562
    %v1339 = vmul.f32 %v1323, %v562
    %v1340 = vmul.f32 %v1336, %v562
    %v1341 = vsub.f32 %v1016, %v1337
    %v1342 = vsub.f32 %v1098, %v1338
    %v1343 = vsub.f32 %v1180, %v1339
    %v1344 = vsub.f32 %v1262, %v1340
    %v1345 = vsub.f32 %v1019, %v1337
    %v1346 = vsub.f32 %v1101, %v1338
    %v1347 = vsub.f32 %v1183, %v1339
    %v1348 = vsub.f32 %v1265, %v1340
    %v1349 = vsub.f32 %v1022, %v1337
    %v1350 = vsub.f32 %v1104, %v1338
    %v1351 = vsub.f32 %v1186, %v1339
    %v1352 = vsub.f32 %v1268, %v1340
    %v1353 = vsub.f32 %v1025, %v1337
    %v1354 = vsub.f32 %v1107, %v1338
    %v1355 = vsub.f32 %v1189, %v1339
    %v1356 = vsub.f32 %v1271, %v1340
    %v1357 = vsub.f32 %v1028, %v1337
    %v1358 = vsub.f32 %v1110, %v1338
    %v1359 = vsub.f32 %v1192, %v1339
    %v1360 = vsub.f32 %v1274, %v1340
    %v1361 = vsub.f32 %v1031, %v1337
    %v1362 = vsub.f32 %v1113, %v1338
    %v1363 = vsub.f32 %v1195, %v1339
    %v1364 = vsub.f32 %v1277, %v1340
    %v1365 = vsub.f32 %v1034, %v1337
    %v1366 = vsub.f32 %v1116, %v1338
    %v1367 = vsub.f32 %v1198, %v1339
    %v1368 = vsub.f32 %v1280, %v1340
    %v1369 = vsub.f32 %v1037, %v1337
    %v1370 = vsub.f32 %v1119, %v1338
    %v1371 = vsub.f32 %v1201, %v1339
    %v1372 = vsub.f32 %v1283, %v1340
    %v1373 = vmul.f32 %v1341, %v1341
    %v1374 = vmul.f32 %v1342, %v1342
    %v1375 = vmul.f32 %v1343, %v1343
    %v1376 = vmul.f32 %v1344, %v1344
    %v1377 = vmul.f32 %v1345, %v1345
    %v1378 = vmul.f32 %v1346, %v1346
    %v1379 = vmul.f32 %v1347, %v1347
    %v1380 = vmul.f32 %v1348, %v1348
    %v1381 = vmul.f32 %v1349, %v1349
    %v1382 = vmul.f32 %v1350, %v1350
    %v1383 = vmul.f32 %v1351, %v1351
    %v1384 = vmul.f32 %v1352, %v1352
    %v1385 = vmul.f32 %v1353, %v1353
    %v1386 = vmul.f32 %v1354, %v1354
    %v1387 = vmul.f32 %v1355, %v1355
    %v1388 = vmul.f32 %v1356, %v1356
    %v1389 = vmul.f32 %v1357, %v1357
    %v1390 = vmul.f32 %v1358, %v1358
    %v1391 = vmul.f32 %v1359, %v1359
    %v1392 = vmul.f32 %v1360, %v1360
    %v1393 = vmul.f32 %v1361, %v1361
    %v1394 = vmul.f32 %v1362, %v1362
    %v1395 = vmul.f32 %v1363, %v1363
    %v1396 = vmul.f32 %v1364, %v1364
    %v1397 = vmul.f32 %v1365, %v1365
    %v1398 = vmul.f32 %v1366, %v1366
    %v1399 = vmul.f32 %v1367, %v1367
    %v1400 = vmul.f32 %v1368, %v1368
    %v1401 = vmul.f32 %v1369, %v1369
    %v1402 = vmul.f32 %v1370, %v1370
    %v1403 = vmul.f32 %v1371, %v1371
    %v1404 = vmul.f32 %v1372, %v1372
    %v1405 = vadd.f32 %v1373, %v1377
    %v1406 = vadd.f32 %v1405, %v1381
    %v1407 = vadd.f32 %v1406, %v1385
    %v1408 = vadd.f32 %v1407, %v1389
    %v1409 = vadd.f32 %v1408, %v1393
    %v1410 = vadd.f32 %v1409, %v1397
    %v1411 = vadd.f32 %v1410, %v1401
    %v1412 = vrot.slane %v1411, 4
    %v1413 = vadd.f32 %v1411, %v1412
    %v1414 = vrot.slane %v1413, 2
    %v1415 = vadd.f32 %v1413, %v1414
    %v1416 = vrot.slane %v1415, 1
    %v1417 = vadd.f32 %v1415, %v1416
    %v1418 = vadd.f32 %v1374, %v1378
    %v1419 = vadd.f32 %v1418, %v1382
    %v1420 = vadd.f32 %v1419, %v1386
    %v1421 = vadd.f32 %v1420, %v1390
    %v1422 = vadd.f32 %v1421, %v1394
    %v1423 = vadd.f32 %v1422, %v1398
    %v1424 = vadd.f32 %v1423, %v1402
    %v1425 = vrot.slane %v1424, 4
    %v1426 = vadd.f32 %v1424, %v1425
    %v1427 = vrot.slane %v1426, 2
    %v1428 = vadd.f32 %v1426, %v1427
    %v1429 = vrot.slane %v1428, 1
    %v1430 = vadd.f32 %v1428, %v1429
    %v1431 = vadd.f32 %v1375, %v1379
    %v1432 = vadd.f32 %v1431, %v1383
    %v1433 = vadd.f32 %v1432, %v1387
    %v1434 = vadd.f32 %v1433, %v1391
    %v1435 = vadd.f32 %v1434, %v1395
    %v1436 = vadd.f32 %v1435, %v1399
    %v1437 = vadd.f32 %v1436, %v1403
    %v1438 = vrot.slane %v1437, 4
    %v1439 = vadd.f32 %v1437, %v1438
    %v1440 = vrot.slane %v1439, 2
    %v1441 = vadd.f32 %v1439, %v1440
    %v1442 = vrot.slane %v1441, 1
    %v1443 = vadd.f32 %v1441, %v1442
    %v1444 = vadd.f32 %v1376, %v1380
    %v1445 = vadd.f32 %v1444, %v1384
    %v1446 = vadd.f32 %v1445, %v1388
    %v1447 = vadd.f32 %v1446, %v1392
    %v1448 = vadd.f32 %v1447, %v1396
    %v1449 = vadd.f32 %v1448, %v1400
    %v1450 = vadd.f32 %v1449, %v1404
    %v1451 = vrot.slane %v1450, 4
    %v1452 = vadd.f32 %v1450, %v1451
    %v1453 = vrot.slane %v1452, 2
    %v1454 = vadd.f32 %v1452, %v1453
    %v1455 = vrot.slane %v1454, 1
    %v1456 = vadd.f32 %v1454, %v1455
    %v1457 = vmul.f32 %v1417, %v562
    %v1458 = vmul.f32 %v1430, %v562
    %v1459 = vmul.f32 %v1443, %v562
    %v1460 = vmul.f32 %v1456, %v562
    %v1461 = vadd.f32 %v1457, 1e-05
    %v1462 = vadd.f32 %v1458, 1e-05
    %v1463 = vadd.f32 %v1459, 1e-05
    %v1464 = vadd.f32 %v1460, 1e-05
    %v1465 = vrsqrt.pop %v1461
    %v1466 = vmul.f32 %v1465, %v1461
    %v1467 = vmul.f32 %v1466, %v1465
    %v1468 = vmul.f32 0.5, %v1467
    %v1469 = vsub.f32 1.5, %v1468
    %v1470 = vmul.f32 %v1465, %v1469
    %vm1471 = vweird.f32 %v1461
    %vm1472 = vweird.f32 %v1465
    %vm1473 = vmor %vm1471, %vm1472
    %v1474 = vsel %vm1473, %v1465, %v1470
    %v1475 = vrsqrt.pop %v1462
    %v1476 = vmul.f32 %v1475, %v1462
    %v1477 = vmul.f32 %v1476, %v1475
    %v1478 = vmul.f32 0.5, %v1477
    %v1479 = vsub.f32 1.5, %v1478
    %v1480 = vmul.f32 %v1475, %v1479
    %vm1481 = vweird.f32 %v1462
    %vm1482 = vweird.f32 %v1475
    %vm1483 = vmor %vm1481, %vm1482
    %v1484 = vsel %vm1483, %v1475, %v1480
    %v1485 = vrsqrt.pop %v1463
    %v1486 = vmul.f32 %v1485, %v1463
    %v1487 = vmul.f32 %v1486, %v1485
    %v1488 = vmul.f32 0.5, %v1487
    %v1489 = vsub.f32 1.5, %v1488
    %v1490 = vmul.f32 %v1485, %v1489
    %vm1491 = vweird.f32 %v1463
    %vm1492 = vweird.f32 %v1485
    %vm1493 = vmor %vm1491, %vm1492
    %v1494 = vsel %vm1493, %v1485, %v1490
    %v1495 = vrsqrt.pop %v1464
    %v1496 = vmul.f32 %v1495, %v1464
    %v1497 = vmul.f32 %v1496, %v1495
    %v1498 = vmul.f32 0.5, %v1497
    %v1499 = vsub.f32 1.5, %v1498
    %v1500 = vmul.f32 %v1495, %v1499
    %vm1501 = vweird.f32 %v1464
    %vm1502 = vweird.f32 %v1495
    %vm1503 = vmor %vm1501, %vm1502
    %v1504 = vsel %vm1503, %v1495, %v1500
    %v1505 = vmul.f32 %v1341, %v1474
    %v1506 = vmul.f32 %v1342, %v1484
    %v1507 = vmul.f32 %v1343, %v1494
    %v1508 = vmul.f32 %v1344, %v1504
    %v1509 = vmul.f32 %v1345, %v1474
    %v1510 = vmul.f32 %v1346, %v1484
    %v1511 = vmul.f32 %v1347, %v1494
    %v1512 = vmul.f32 %v1348, %v1504
    %v1513 = vmul.f32 %v1349, %v1474
    %v1514 = vmul.f32 %v1350, %v1484
    %v1515 = vmul.f32 %v1351, %v1494
    %v1516 = vmul.f32 %v1352, %v1504
    %v1517 = vmul.f32 %v1353, %v1474
    %v1518 = vmul.f32 %v1354, %v1484
    %v1519 = vmul.f32 %v1355, %v1494
    %v1520 = vmul.f32 %v1356, %v1504
    %v1521 = vmul.f32 %v1357, %v1474
    %v1522 = vmul.f32 %v1358, %v1484
    %v1523 = vmul.f32 %v1359, %v1494
    %v1524 = vmul.f32 %v1360, %v1504
    %v1525 = vmul.f32 %v1361, %v1474
    %v1526 = vmul.f32 %v1362, %v1484
    %v1527 = vmul.f32 %v1363, %v1494
    %v1528 = vmul.f32 %v1364, %v1504
    %v1529 = vmul.f32 %v1365, %v1474
    %v1530 = vmul.f32 %v1366, %v1484
    %v1531 = vmul.f32 %v1367, %v1494
    %v1532 = vmul.f32 %v1368, %v1504
    %v1533 = vmul.f32 %v1369, %v1474
    %v1534 = vmul.f32 %v1370, %v1484
    %v1535 = vmul.f32 %v1371, %v1494
    %v1536 = vmul.f32 %v1372, %v1504
    %v1537 = vld [vmem:[#allocation16] sm:$0xf]
    %v1539 = vperm.slane %v1537, 0
    %v1540 = vperm.slane %v1537, 1
    %v1541 = vperm.slane %v1537, 2
    %v1542 = vperm.slane %v1537, 3
    %v1547 = vmul.f32 %v1505, %v1539
    %v1548 = vmul.f32 %v1506, %v1540
    %v1549 = vmul.f32 %v1507, %v1541
    %v1550 = vmul.f32 %v1508, %v1542
    %v1551 = vmul.f32 %v1509, %v1539
    %v1552 = vmul.f32 %v1510, %v1540
    %v1553 = vmul.f32 %v1511, %v1541
    %v1554 = vmul.f32 %v1512, %v1542
    %v1555 = vmul.f32 %v1513, %v1539
    %v1556 = vmul.f32 %v1514, %v1540
    %v1557 = vmul.f32 %v1515, %v1541
    %v1558 = vmul.f32 %v1516, %v1542
    %v1559 = vmul.f32 %v1517, %v1539
    %v1560 = vmul.f32 %v1518, %v1540
    %v1561 = vmul.f32 %v1519, %v1541
    %v1562 = vmul.f32 %v1520, %v1542
    %v1563 = vmul.f32 %v1521, %v1539
    %v1564 = vmul.f32 %v1522, %v1540
    %v1565 = vmul.f32 %v1523, %v1541
    %v1566 = vmul.f32 %v1524, %v1542
    %v1567 = vmul.f32 %v1525, %v1539
    %v1568 = vmul.f32 %v1526, %v1540
    %v1569 = vmul.f32 %v1527, %v1541
    %v1570 = vmul.f32 %v1528, %v1542
    %v1571 = vmul.f32 %v1529, %v1539
    %v1572 = vmul.f32 %v1530, %v1540
    %v1573 = vmul.f32 %v1531, %v1541
    %v1574 = vmul.f32 %v1532, %v1542
    %v1575 = vmul.f32 %v1533, %v1539
    %v1576 = vmul.f32 %v1534, %v1540
    %v1577 = vmul.f32 %v1535, %v1541
    %v1578 = vmul.f32 %v1536, %v1542
    %v1579 = vld [vmem:[#allocation17] sm:$0xf]
    %v1581 = vperm.slane %v1579, 0
    %v1582 = vperm.slane %v1579, 1
    %v1583 = vperm.slane %v1579, 2
    %v1584 = vperm.slane %v1579, 3
    %v1589 = vadd.f32 %v1547, %v1581
    %v1590 = vadd.f32 %v1548, %v1582
    %v1591 = vadd.f32 %v1549, %v1583
    %v1592 = vadd.f32 %v1550, %v1584
    %v1593 = vadd.f32 %v1551, %v1581
    %v1594 = vadd.f32 %v1552, %v1582
    %v1595 = vadd.f32 %v1553, %v1583
    %v1596 = vadd.f32 %v1554, %v1584
    %v1597 = vadd.f32 %v1555, %v1581
    %v1598 = vadd.f32 %v1556, %v1582
    %v1599 = vadd.f32 %v1557, %v1583
    %v1600 = vadd.f32 %v1558, %v1584
    %v1601 = vadd.f32 %v1559, %v1581
    %v1602 = vadd.f32 %v1560, %v1582
    %v1603 = vadd.f32 %v1561, %v1583
    %v1604 = vadd.f32 %v1562, %v1584
    %v1605 = vadd.f32 %v1563, %v1581
    %v1606 = vadd.f32 %v1564, %v1582
    %v1607 = vadd.f32 %v1565, %v1583
    %v1608 = vadd.f32 %v1566, %v1584
    %v1609 = vadd.f32 %v1567, %v1581
    %v1610 = vadd.f32 %v1568, %v1582
    %v1611 = vadd.f32 %v1569, %v1583
    %v1612 = vadd.f32 %v1570, %v1584
    %v1613 = vadd.f32 %v1571, %v1581
    %v1614 = vadd.f32 %v1572, %v1582
    %v1615 = vadd.f32 %v1573, %v1583
    %v1616 = vadd.f32 %v1574, %v1584
    %v1617 = vadd.f32 %v1575, %v1581
    %v1618 = vadd.f32 %v1576, %v1582
    %v1619 = vadd.f32 %v1577, %v1583
    %v1620 = vadd.f32 %v1578, %v1584
    %vm1621 = vcmp.gt.f32.partialorder %v1589, 0.0
    %vm1622 = vcmp.gt.f32.partialorder %v1590, 0.0
    %vm1623 = vcmp.gt.f32.partialorder %v1591, 0.0
    %vm1624 = vcmp.gt.f32.partialorder %v1592, 0.0
    %vm1625 = vcmp.gt.f32.partialorder %v1593, 0.0
    %vm1626 = vcmp.gt.f32.partialorder %v1594, 0.0
    %vm1627 = vcmp.gt.f32.partialorder %v1595, 0.0
    %vm1628 = vcmp.gt.f32.partialorder %v1596, 0.0
    %vm1629 = vcmp.gt.f32.partialorder %v1597, 0.0
    %vm1630 = vcmp.gt.f32.partialorder %v1598, 0.0
    %vm1631 = vcmp.gt.f32.partialorder %v1599, 0.0
    %vm1632 = vcmp.gt.f32.partialorder %v1600, 0.0
    %vm1633 = vcmp.gt.f32.partialorder %v1601, 0.0
    %vm1634 = vcmp.gt.f32.partialorder %v1602, 0.0
    %vm1635 = vcmp.gt.f32.partialorder %v1603, 0.0
    %vm1636 = vcmp.gt.f32.partialorder %v1604, 0.0
    %vm1637 = vcmp.gt.f32.partialorder %v1605, 0.0
    %vm1638 = vcmp.gt.f32.partialorder %v1606, 0.0
    %vm1639 = vcmp.gt.f32.partialorder %v1607, 0.0
    %vm1640 = vcmp.gt.f32.partialorder %v1608, 0.0
    %vm1641 = vcmp.gt.f32.partialorder %v1609, 0.0
    %vm1642 = vcmp.gt.f32.partialorder %v1610, 0.0
    %vm1643 = vcmp.gt.f32.partialorder %v1611, 0.0
    %vm1644 = vcmp.gt.f32.partialorder %v1612, 0.0
    %vm1645 = vcmp.gt.f32.partialorder %v1613, 0.0
    %vm1646 = vcmp.gt.f32.partialorder %v1614, 0.0
    %vm1647 = vcmp.gt.f32.partialorder %v1615, 0.0
    %vm1648 = vcmp.gt.f32.partialorder %v1616, 0.0
    %vm1649 = vcmp.gt.f32.partialorder %v1617, 0.0
    %vm1650 = vcmp.gt.f32.partialorder %v1618, 0.0
    %vm1651 = vcmp.gt.f32.partialorder %v1619, 0.0
    %vm1652 = vcmp.gt.f32.partialorder %v1620, 0.0
    %v1653 = vmul.f32 %v1589, 0.2
    %v1654 = vmul.f32 %v1590, 0.2
    %v1655 = vmul.f32 %v1591, 0.2
    %v1656 = vmul.f32 %v1592, 0.2
    %v1657 = vmul.f32 %v1593, 0.2
    %v1658 = vmul.f32 %v1594, 0.2
    %v1659 = vmul.f32 %v1595, 0.2
    %v1660 = vmul.f32 %v1596, 0.2
    %v1661 = vmul.f32 %v1597, 0.2
    %v1662 = vmul.f32 %v1598, 0.2
    %v1663 = vmul.f32 %v1599, 0.2
    %v1664 = vmul.f32 %v1600, 0.2
    %v1665 = vmul.f32 %v1601, 0.2
    %v1666 = vmul.f32 %v1602, 0.2
    %v1667 = vmul.f32 %v1603, 0.2
    %v1668 = vmul.f32 %v1604, 0.2
    %v1669 = vmul.f32 %v1605, 0.2
    %v1670 = vmul.f32 %v1606, 0.2
    %v1671 = vmul.f32 %v1607, 0.2
    %v1672 = vmul.f32 %v1608, 0.2
    %v1673 = vmul.f32 %v1609, 0.2
    %v1674 = vmul.f32 %v1610, 0.2
    %v1675 = vmul.f32 %v1611, 0.2
    %v1676 = vmul.f32 %v1612, 0.2
    %v1677 = vmul.f32 %v1613, 0.2
    %v1678 = vmul.f32 %v1614, 0.2
    %v1679 = vmul.f32 %v1615, 0.2
    %v1680 = vmul.f32 %v1616, 0.2
    %v1681 = vmul.f32 %v1617, 0.2
    %v1682 = vmul.f32 %v1618, 0.2
    %v1683 = vmul.f32 %v1619, 0.2
    %v1684 = vmul.f32 %v1620, 0.2
    %v1685 = vsel %vm1621, %v1589, %v1653
    %v1686 = vsel %vm1622, %v1590, %v1654
    %v1687 = vsel %vm1623, %v1591, %v1655
    %v1688 = vsel %vm1624, %v1592, %v1656
    %v1689 = vsel %vm1625, %v1593, %v1657
    %v1690 = vsel %vm1626, %v1594, %v1658
    %v1691 = vsel %vm1627, %v1595, %v1659
    %v1692 = vsel %vm1628, %v1596, %v1660
    %v1693 = vsel %vm1629, %v1597, %v1661
    %v1694 = vsel %vm1630, %v1598, %v1662
    %v1695 = vsel %vm1631, %v1599, %v1663
    %v1696 = vsel %vm1632, %v1600, %v1664
    %v1697 = vsel %vm1633, %v1601, %v1665
    %v1698 = vsel %vm1634, %v1602, %v1666
    %v1699 = vsel %vm1635, %v1603, %v1667
    %v1700 = vsel %vm1636, %v1604, %v1668
    %v1701 = vsel %vm1637, %v1605, %v1669
    %v1702 = vsel %vm1638, %v1606, %v1670
    %v1703 = vsel %vm1639, %v1607, %v1671
    %v1704 = vsel %vm1640, %v1608, %v1672
    %v1705 = vsel %vm1641, %v1609, %v1673
    %v1706 = vsel %vm1642, %v1610, %v1674
    %v1707 = vsel %vm1643, %v1611, %v1675
    %v1708 = vsel %vm1644, %v1612, %v1676
    %v1709 = vsel %vm1645, %v1613, %v1677
    %v1710 = vsel %vm1646, %v1614, %v1678
    %v1711 = vsel %vm1647, %v1615, %v1679
    %v1712 = vsel %vm1648, %v1616, %v1680
    %v1713 = vsel %vm1649, %v1617, %v1681
    %v1714 = vsel %vm1650, %v1618, %v1682
    %v1715 = vsel %vm1651, %v1619, %v1683
    %v1716 = vsel %vm1652, %v1620, %v1684
    %v1717 = vld [vmem:[#allocation19] sm:$0xff]
    %v1718 = vld [vmem:[#allocation19 + $0x8] sm:$0xff]
    %v1719 = vld [vmem:[#allocation19 + $0x10] sm:$0xff]
    %v1720 = vld [vmem:[#allocation19 + $0x18] sm:$0xff]
    %v1721 = vld [vmem:[#allocation19 + $0x20] sm:$0xff]
    %v1722 = vld [vmem:[#allocation19 + $0x28] sm:$0xff]
    %v1723 = vld [vmem:[#allocation19 + $0x30] sm:$0xff]
    %v1724 = vld [vmem:[#allocation19 + $0x38] sm:$0xff]
    %v1725 = vld [vmem:[#allocation19 + $0x40] sm:$0xff]
    %v1726 = vld [vmem:[#allocation19 + $0x48] sm:$0xff]
    %v1727 = vld [vmem:[#allocation19 + $0x50] sm:$0xff]
    %v1728 = vld [vmem:[#allocation19 + $0x58] sm:$0xff]
    %v1729 = vld [vmem:[#allocation19 + $0x60] sm:$0xff]
    %v1730 = vld [vmem:[#allocation19 + $0x68] sm:$0xff]
    %v1731 = vld [vmem:[#allocation19 + $0x70] sm:$0xff]
    %v1732 = vld [vmem:[#allocation19 + $0x78] sm:$0xff]
    %v1733 = vld [vmem:[#allocation19 + $0x80] sm:$0xff]
    %v1734 = vld [vmem:[#allocation19 + $0x88] sm:$0xff]
    %v1735 = vld [vmem:[#allocation19 + $0x90] sm:$0xff]
    %v1736 = vld [vmem:[#allocation19 + $0x98] sm:$0xff]
    %v1737 = vld [vmem:[#allocation19 + $0xa0] sm:$0xff]
    %v1738 = vld [vmem:[#allocation19 + $0xa8] sm:$0xff]
    %v1739 = vld [vmem:[#allocation19 + $0xb0] sm:$0xff]
    %v1740 = vld [vmem:[#allocation19 + $0xb8] sm:$0xff]
    %v1741 = vld [vmem:[#allocation19 + $0xc0] sm:$0xff]
    %v1742 = vld [vmem:[#allocation19 + $0xc8] sm:$0xff]
    %v1743 = vld [vmem:[#allocation19 + $0xd0] sm:$0xff]
    %v1744 = vld [vmem:[#allocation19 + $0xd8] sm:$0xff]
    %v1745 = vld [vmem:[#allocation19 + $0xe0] sm:$0xff]
    %v1746 = vld [vmem:[#allocation19 + $0xe8] sm:$0xff]
    %v1747 = vld [vmem:[#allocation19 + $0xf0] sm:$0xff]
    %v1748 = vld [vmem:[#allocation19 + $0xf8] sm:$0xff]
    %v1749 = vld [vmem:[#allocation19 + $0x100] sm:$0xff]
    %v1750 = vld [vmem:[#allocation19 + $0x108] sm:$0xff]
    %v1751 = vld [vmem:[#allocation19 + $0x110] sm:$0xff]
    %v1752 = vld [vmem:[#allocation19 + $0x118] sm:$0xff]
    %v1753 = vld [vmem:[#allocation19 + $0x120] sm:$0xff]
    %v1754 = vld [vmem:[#allocation19 + $0x128] sm:$0xff]
    %v1755 = vld [vmem:[#allocation19 + $0x130] sm:$0xff]
    %v1756 = vld [vmem:[#allocation19 + $0x138] sm:$0xff]
    %v1757 = vld [vmem:[#allocation19 + $0x140] sm:$0xff]
    %v1758 = vld [vmem:[#allocation19 + $0x148] sm:$0xff]
    %v1759 = vld [vmem:[#allocation19 + $0x150] sm:$0xff]
    %v1760 = vld [vmem:[#allocation19 + $0x158] sm:$0xff]
    %v1761 = vld [vmem:[#allocation19 + $0x160] sm:$0xff]
    %v1762 = vld [vmem:[#allocation19 + $0x168] sm:$0xff]
    %v1763 = vld [vmem:[#allocation19 + $0x170] sm:$0xff]
    %v1764 = vld [vmem:[#allocation19 + $0x178] sm:$0xff]
    %v1765 = vld [vmem:[#allocation19 + $0x180] sm:$0xff]
    %v1766 = vld [vmem:[#allocation19 + $0x188] sm:$0xff]
    %v1767 = vld [vmem:[#allocation19 + $0x190] sm:$0xff]
    %v1768 = vld [vmem:[#allocation19 + $0x198] sm:$0xff]
    %v1769 = vld [vmem:[#allocation19 + $0x1a0] sm:$0xff]
    %v1770 = vld [vmem:[#allocation19 + $0x1a8] sm:$0xff]
    %v1771 = vld [vmem:[#allocation19 + $0x1b0] sm:$0xff]
    %v1772 = vld [vmem:[#allocation19 + $0x1b8] sm:$0xff]
    %v1773 = vld [vmem:[#allocation19 + $0x1c0] sm:$0xff]
    %v1774 = vld [vmem:[#allocation19 + $0x1c8] sm:$0xff]
    %v1775 = vld [vmem:[#allocation19 + $0x1d0] sm:$0xff]
    %v1776 = vld [vmem:[#allocation19 + $0x1d8] sm:$0xff]
    %v1777 = vld [vmem:[#allocation19 + $0x1e0] sm:$0xff]
    %v1778 = vld [vmem:[#allocation19 + $0x1e8] sm:$0xff]
    %v1779 = vld [vmem:[#allocation19 + $0x1f0] sm:$0xff]
    %v1780 = vld [vmem:[#allocation19 + $0x1f8] sm:$0xff]
    %v1781 = vld [vmem:[#allocation19 + $0x200] sm:$0xff]
    %v1782 = vld [vmem:[#allocation19 + $0x208] sm:$0xff]
    %v1783 = vld [vmem:[#allocation19 + $0x210] sm:$0xff]
    %v1784 = vld [vmem:[#allocation19 + $0x218] sm:$0xff]
    %v1785 = vld [vmem:[#allocation19 + $0x220] sm:$0xff]
    %v1786 = vld [vmem:[#allocation19 + $0x228] sm:$0xff]
    %v1787 = vld [vmem:[#allocation19 + $0x230] sm:$0xff]
    %v1788 = vld [vmem:[#allocation19 + $0x238] sm:$0xff]
    %v1789 = vld [vmem:[#allocation19 + $0x240] sm:$0xff]
    %v1790 = vld [vmem:[#allocation19 + $0x248] sm:$0xff]
    %v1791 = vld [vmem:[#allocation19 + $0x250] sm:$0xff]
    %v1792 = vld [vmem:[#allocation19 + $0x258] sm:$0xff]
    %v1793 = vld [vmem:[#allocation19 + $0x260] sm:$0xff]
    %v1794 = vld [vmem:[#allocation19 + $0x268] sm:$0xff]
    %v1795 = vld [vmem:[#allocation19 + $0x270] sm:$0xff]
    %v1796 = vld [vmem:[#allocation19 + $0x278] sm:$0xff]
    %v1797 = vld [vmem:[#allocation19 + $0x280] sm:$0xff]
    %v1798 = vld [vmem:[#allocation19 + $0x288] sm:$0xff]
    %v1799 = vld [vmem:[#allocation19 + $0x290] sm:$0xff]
    %v1800 = vld [vmem:[#allocation19 + $0x298] sm:$0xff]
    %v1801 = vld [vmem:[#allocation19 + $0x2a0] sm:$0xff]
    %v1802 = vld [vmem:[#allocation19 + $0x2a8] sm:$0xff]
    %v1803 = vld [vmem:[#allocation19 + $0x2b0] sm:$0xff]
    %v1804 = vld [vmem:[#allocation19 + $0x2b8] sm:$0xff]
    %v1805 = vld [vmem:[#allocation19 + $0x2c0] sm:$0xff]
    %v1806 = vld [vmem:[#allocation19 + $0x2c8] sm:$0xff]
    %v1807 = vld [vmem:[#allocation19 + $0x2d0] sm:$0xff]
    %v1808 = vld [vmem:[#allocation19 + $0x2d8] sm:$0xff]
    %v1809 = vld [vmem:[#allocation19 + $0x2e0] sm:$0xff]
    %v1810 = vld [vmem:[#allocation19 + $0x2e8] sm:$0xff]
    %v1811 = vld [vmem:[#allocation19 + $0x2f0] sm:$0xff]
    %v1812 = vld [vmem:[#allocation19 + $0x2f8] sm:$0xff]
    %v1813 = vld [vmem:[#allocation19 + $0x300] sm:$0xff]
    %v1814 = vld [vmem:[#allocation19 + $0x308] sm:$0xff]
    %v1815 = vld [vmem:[#allocation19 + $0x310] sm:$0xff]
    %v1816 = vld [vmem:[#allocation19 + $0x318] sm:$0xff]
    %v1817 = vld [vmem:[#allocation19 + $0x320] sm:$0xff]
    %v1818 = vld [vmem:[#allocation19 + $0x328] sm:$0xff]
    %v1819 = vld [vmem:[#allocation19 + $0x330] sm:$0xff]
    %v1820 = vld [vmem:[#allocation19 + $0x338] sm:$0xff]
    %v1821 = vld [vmem:[#allocation19 + $0x340] sm:$0xff]
    %v1822 = vld [vmem:[#allocation19 + $0x348] sm:$0xff]
    %v1823 = vld [vmem:[#allocation19 + $0x350] sm:$0xff]
    %v1824 = vld [vmem:[#allocation19 + $0x358] sm:$0xff]
    %v1825 = vld [vmem:[#allocation19 + $0x360] sm:$0xff]
    %v1826 = vld [vmem:[#allocation19 + $0x368] sm:$0xff]
    %v1827 = vld [vmem:[#allocation19 + $0x370] sm:$0xff]
    %v1828 = vld [vmem:[#allocation19 + $0x378] sm:$0xff]
    %v1829 = vld [vmem:[#allocation19 + $0x380] sm:$0xff]
    %v1830 = vld [vmem:[#allocation19 + $0x388] sm:$0xff]
    %v1831 = vld [vmem:[#allocation19 + $0x390] sm:$0xff]
    %v1832 = vld [vmem:[#allocation19 + $0x398] sm:$0xff]
    %v1833 = vld [vmem:[#allocation19 + $0x3a0] sm:$0xff]
    %v1834 = vld [vmem:[#allocation19 + $0x3a8] sm:$0xff]
    %v1835 = vld [vmem:[#allocation19 + $0x3b0] sm:$0xff]
    %v1836 = vld [vmem:[#allocation19 + $0x3b8] sm:$0xff]
    %v1837 = vld [vmem:[#allocation19 + $0x3c0] sm:$0xff]
    %v1838 = vld [vmem:[#allocation19 + $0x3c8] sm:$0xff]
    %v1839 = vld [vmem:[#allocation19 + $0x3d0] sm:$0xff]
    %v1840 = vld [vmem:[#allocation19 + $0x3d8] sm:$0xff]
    %v1841 = vld [vmem:[#allocation19 + $0x3e0] sm:$0xff]
    %v1842 = vld [vmem:[#allocation19 + $0x3e8] sm:$0xff]
    %v1843 = vld [vmem:[#allocation19 + $0x3f0] sm:$0xff]
    %v1844 = vld [vmem:[#allocation19 + $0x3f8] sm:$0xff]
    %v1845 = vld [vmem:[#allocation19 + $0x400] sm:$0xff]
    %v1846 = vld [vmem:[#allocation19 + $0x408] sm:$0xff]
    %v1847 = vld [vmem:[#allocation19 + $0x410] sm:$0xff]
    %v1848 = vld [vmem:[#allocation19 + $0x418] sm:$0xff]
    %v1849 = vld [vmem:[#allocation19 + $0x420] sm:$0xff]
    %v1850 = vld [vmem:[#allocation19 + $0x428] sm:$0xff]
    %v1851 = vld [vmem:[#allocation19 + $0x430] sm:$0xff]
    %v1852 = vld [vmem:[#allocation19 + $0x438] sm:$0xff]
    %v1853 = vld [vmem:[#allocation19 + $0x440] sm:$0xff]
    %v1854 = vld [vmem:[#allocation19 + $0x448] sm:$0xff]
    %v1855 = vld [vmem:[#allocation19 + $0x450] sm:$0xff]
    %v1856 = vld [vmem:[#allocation19 + $0x458] sm:$0xff]
    %v1857 = vld [vmem:[#allocation19 + $0x460] sm:$0xff]
    %v1858 = vld [vmem:[#allocation19 + $0x468] sm:$0xff]
    %v1859 = vld [vmem:[#allocation19 + $0x470] sm:$0xff]
    %v1860 = vld [vmem:[#allocation19 + $0x478] sm:$0xff]
    %v1861 = vld [vmem:[#allocation19 + $0x480] sm:$0xff]
    %v1862 = vld [vmem:[#allocation19 + $0x488] sm:$0xff]
    %v1863 = vld [vmem:[#allocation19 + $0x490] sm:$0xff]
    %v1864 = vld [vmem:[#allocation19 + $0x498] sm:$0xff]
    %v1865 = vld [vmem:[#allocation19 + $0x4a0] sm:$0xff]
    %v1866 = vld [vmem:[#allocation19 + $0x4a8] sm:$0xff]
    %v1867 = vld [vmem:[#allocation19 + $0x4b0] sm:$0xff]
    %v1868 = vld [vmem:[#allocation19 + $0x4b8] sm:$0xff]
    %v1869 = vld [vmem:[#allocation19 + $0x4c0] sm:$0xff]
    %v1870 = vld [vmem:[#allocation19 + $0x4c8] sm:$0xff]
    %v1871 = vld [vmem:[#allocation19 + $0x4d0] sm:$0xff]
    %v1872 = vld [vmem:[#allocation19 + $0x4d8] sm:$0xff]
    %v1873 = vld [vmem:[#allocation19 + $0x4e0] sm:$0xff]
    %v1874 = vld [vmem:[#allocation19 + $0x4e8] sm:$0xff]
    %v1875 = vld [vmem:[#allocation19 + $0x4f0] sm:$0xff]
    %v1876 = vld [vmem:[#allocation19 + $0x4f8] sm:$0xff]
    %v1877 = vld [vmem:[#allocation19 + $0x500] sm:$0xff]
    %v1878 = vld [vmem:[#allocation19 + $0x508] sm:$0xff]
    %v1879 = vld [vmem:[#allocation19 + $0x510] sm:$0xff]
    %v1880 = vld [vmem:[#allocation19 + $0x518] sm:$0xff]
    %v1881 = vld [vmem:[#allocation19 + $0x520] sm:$0xff]
    %v1882 = vld [vmem:[#allocation19 + $0x528] sm:$0xff]
    %v1883 = vld [vmem:[#allocation19 + $0x530] sm:$0xff]
    %v1884 = vld [vmem:[#allocation19 + $0x538] sm:$0xff]
    %v1885 = vld [vmem:[#allocation19 + $0x540] sm:$0xff]
    %v1886 = vld [vmem:[#allocation19 + $0x548] sm:$0xff]
    %v1887 = vld [vmem:[#allocation19 + $0x550] sm:$0xff]
    %v1888 = vld [vmem:[#allocation19 + $0x558] sm:$0xff]
    %v1889 = vld [vmem:[#allocation19 + $0x560] sm:$0xff]
    %v1890 = vld [vmem:[#allocation19 + $0x568] sm:$0xff]
    %v1891 = vld [vmem:[#allocation19 + $0x570] sm:$0xff]
    %v1892 = vld [vmem:[#allocation19 + $0x578] sm:$0xff]
    %v1893 = vld [vmem:[#allocation19 + $0x580] sm:$0xff]
    %v1894 = vld [vmem:[#allocation19 + $0x588] sm:$0xff]
    %v1895 = vld [vmem:[#allocation19 + $0x590] sm:$0xff]
    %v1896 = vld [vmem:[#allocation19 + $0x598] sm:$0xff]
    %v1897 = vld [vmem:[#allocation19 + $0x5a0] sm:$0xff]
    %v1898 = vld [vmem:[#allocation19 + $0x5a8] sm:$0xff]
    %v1899 = vld [vmem:[#allocation19 + $0x5b0] sm:$0xff]
    %v1900 = vld [vmem:[#allocation19 + $0x5b8] sm:$0xff]
    %v1901 = vld [vmem:[#allocation19 + $0x5c0] sm:$0xff]
    %v1902 = vld [vmem:[#allocation19 + $0x5c8] sm:$0xff]
    %v1903 = vld [vmem:[#allocation19 + $0x5d0] sm:$0xff]
    %v1904 = vld [vmem:[#allocation19 + $0x5d8] sm:$0xff]
    %v1905 = vld [vmem:[#allocation19 + $0x5e0] sm:$0xff]
    %v1906 = vld [vmem:[#allocation19 + $0x5e8] sm:$0xff]
    %v1907 = vld [vmem:[#allocation19 + $0x5f0] sm:$0xff]
    %v1908 = vld [vmem:[#allocation19 + $0x5f8] sm:$0xff]
    %v1909 = vld [vmem:[#allocation19 + $0x600] sm:$0xff]
    %v1910 = vld [vmem:[#allocation19 + $0x608] sm:$0xff]
    %v1911 = vld [vmem:[#allocation19 + $0x610] sm:$0xff]
    %v1912 = vld [vmem:[#allocation19 + $0x618] sm:$0xff]
    %v1913 = vld [vmem:[#allocation19 + $0x620] sm:$0xff]
    %v1914 = vld [vmem:[#allocation19 + $0x628] sm:$0xff]
    %v1915 = vld [vmem:[#allocation19 + $0x630] sm:$0xff]
    %v1916 = vld [vmem:[#allocation19 + $0x638] sm:$0xff]
    %v1917 = vld [vmem:[#allocation19 + $0x640] sm:$0xff]
    %v1918 = vld [vmem:[#allocation19 + $0x648] sm:$0xff]
    %v1919 = vld [vmem:[#allocation19 + $0x650] sm:$0xff]
    %v1920 = vld [vmem:[#allocation19 + $0x658] sm:$0xff]
    %v1921 = vld [vmem:[#allocation19 + $0x660] sm:$0xff]
    %v1922 = vld [vmem:[#allocation19 + $0x668] sm:$0xff]
    %v1923 = vld [vmem:[#allocation19 + $0x670] sm:$0xff]
    %v1924 = vld [vmem:[#allocation19 + $0x678] sm:$0xff]
    %v1925 = vld [vmem:[#allocation19 + $0x680] sm:$0xff]
    %v1926 = vld [vmem:[#allocation19 + $0x688] sm:$0xff]
    %v1927 = vld [vmem:[#allocation19 + $0x690] sm:$0xff]
    %v1928 = vld [vmem:[#allocation19 + $0x698] sm:$0xff]
    %v1929 = vld [vmem:[#allocation19 + $0x6a0] sm:$0xff]
    %v1930 = vld [vmem:[#allocation19 + $0x6a8] sm:$0xff]
    %v1931 = vld [vmem:[#allocation19 + $0x6b0] sm:$0xff]
    %v1932 = vld [vmem:[#allocation19 + $0x6b8] sm:$0xff]
    %v1933 = vld [vmem:[#allocation19 + $0x6c0] sm:$0xff]
    %v1934 = vld [vmem:[#allocation19 + $0x6c8] sm:$0xff]
    %v1935 = vld [vmem:[#allocation19 + $0x6d0] sm:$0xff]
    %v1936 = vld [vmem:[#allocation19 + $0x6d8] sm:$0xff]
    %v1937 = vld [vmem:[#allocation19 + $0x6e0] sm:$0xff]
    %v1938 = vld [vmem:[#allocation19 + $0x6e8] sm:$0xff]
    %v1939 = vld [vmem:[#allocation19 + $0x6f0] sm:$0xff]
    %v1940 = vld [vmem:[#allocation19 + $0x6f8] sm:$0xff]
    %v1941 = vld [vmem:[#allocation19 + $0x700] sm:$0xff]
    %v1942 = vld [vmem:[#allocation19 + $0x708] sm:$0xff]
    %v1943 = vld [vmem:[#allocation19 + $0x710] sm:$0xff]
    %v1944 = vld [vmem:[#allocation19 + $0x718] sm:$0xff]
    %v1945 = vld [vmem:[#allocation19 + $0x720] sm:$0xff]
    %v1946 = vld [vmem:[#allocation19 + $0x728] sm:$0xff]
    %v1947 = vld [vmem:[#allocation19 + $0x730] sm:$0xff]
    %v1948 = vld [vmem:[#allocation19 + $0x738] sm:$0xff]
    %v1949 = vld [vmem:[#allocation19 + $0x740] sm:$0xff]
    %v1950 = vld [vmem:[#allocation19 + $0x748] sm:$0xff]
    %v1951 = vld [vmem:[#allocation19 + $0x750] sm:$0xff]
    %v1952 = vld [vmem:[#allocation19 + $0x758] sm:$0xff]
    %v1953 = vld [vmem:[#allocation19 + $0x760] sm:$0xff]
    %v1954 = vld [vmem:[#allocation19 + $0x768] sm:$0xff]
    %v1955 = vld [vmem:[#allocation19 + $0x770] sm:$0xff]
    %v1956 = vld [vmem:[#allocation19 + $0x778] sm:$0xff]
    %v1957 = vld [vmem:[#allocation19 + $0x780] sm:$0xff]
    %v1958 = vld [vmem:[#allocation19 + $0x788] sm:$0xff]
    %v1959 = vld [vmem:[#allocation19 + $0x790] sm:$0xff]
    %v1960 = vld [vmem:[#allocation19 + $0x798] sm:$0xff]
    %v1961 = vld [vmem:[#allocation19 + $0x7a0] sm:$0xff]
    %v1962 = vld [vmem:[#allocation19 + $0x7a8] sm:$0xff]
    %v1963 = vld [vmem:[#allocation19 + $0x7b0] sm:$0xff]
    %v1964 = vld [vmem:[#allocation19 + $0x7b8] sm:$0xff]
    %v1965 = vld [vmem:[#allocation19 + $0x7c0] sm:$0xff]
    %v1966 = vld [vmem:[#allocation19 + $0x7c8] sm:$0xff]
    %v1967 = vld [vmem:[#allocation19 + $0x7d0] sm:$0xff]
    %v1968 = vld [vmem:[#allocation19 + $0x7d8] sm:$0xff]
    %v1969 = vld [vmem:[#allocation19 + $0x7e0] sm:$0xff]
    %v1970 = vld [vmem:[#allocation19 + $0x7e8] sm:$0xff]
    %v1971 = vld [vmem:[#allocation19 + $0x7f0] sm:$0xff]
    %v1972 = vld [vmem:[#allocation19 + $0x7f8] sm:$0xff]
    %v1973 = vunpack.c.l.bf16 %v1717
    %v1974 = vunpack.c.h.bf16 %v1717
    %v1975 = vunpack.c.l.bf16 %v1718
    %v1976 = vunpack.c.h.bf16 %v1718
    %v1977 = vunpack.c.l.bf16 %v1719
    %v1978 = vunpack.c.h.bf16 %v1719
    %v1979 = vunpack.c.l.bf16 %v1720
    %v1980 = vunpack.c.h.bf16 %v1720
    %v1981 = vunpack.c.l.bf16 %v1721
    %v1982 = vunpack.c.h.bf16 %v1721
    %v1983 = vunpack.c.l.bf16 %v1722
    %v1984 = vunpack.c.h.bf16 %v1722
    %v1985 = vunpack.c.l.bf16 %v1723
    %v1986 = vunpack.c.h.bf16 %v1723
    %v1987 = vunpack.c.l.bf16 %v1724
    %v1988 = vunpack.c.h.bf16 %v1724
    %v1989 = vunpack.c.l.bf16 %v1725
    %v1990 = vunpack.c.h.bf16 %v1725
    %v1991 = vunpack.c.l.bf16 %v1726
    %v1992 = vunpack.c.h.bf16 %v1726
    %v1993 = vunpack.c.l.bf16 %v1727
    %v1994 = vunpack.c.h.bf16 %v1727
    %v1995 = vunpack.c.l.bf16 %v1728
    %v1996 = vunpack.c.h.bf16 %v1728
    %v1997 = vunpack.c.l.bf16 %v1729
    %v1998 = vunpack.c.h.bf16 %v1729
    %v1999 = vunpack.c.l.bf16 %v1730
    %v2000 = vunpack.c.h.bf16 %v1730
    %v2001 = vunpack.c.l.bf16 %v1731
    %v2002 = vunpack.c.h.bf16 %v1731
    %v2003 = vunpack.c.l.bf16 %v1732
    %v2004 = vunpack.c.h.bf16 %v1732
    %v2005 = vunpack.c.l.bf16 %v1733
    %v2006 = vunpack.c.h.bf16 %v1733
    %v2007 = vunpack.c.l.bf16 %v1734
    %v2008 = vunpack.c.h.bf16 %v1734
    %v2009 = vunpack.c.l.bf16 %v1735
    %v2010 = vunpack.c.h.bf16 %v1735
    %v2011 = vunpack.c.l.bf16 %v1736
    %v2012 = vunpack.c.h.bf16 %v1736
    %v2013 = vunpack.c.l.bf16 %v1737
    %v2014 = vunpack.c.h.bf16 %v1737
    %v2015 = vunpack.c.l.bf16 %v1738
    %v2016 = vunpack.c.h.bf16 %v1738
    %v2017 = vunpack.c.l.bf16 %v1739
    %v2018 = vunpack.c.h.bf16 %v1739
    %v2019 = vunpack.c.l.bf16 %v1740
    %v2020 = vunpack.c.h.bf16 %v1740
    %v2021 = vunpack.c.l.bf16 %v1741
    %v2022 = vunpack.c.h.bf16 %v1741
    %v2023 = vunpack.c.l.bf16 %v1742
    %v2024 = vunpack.c.h.bf16 %v1742
    %v2025 = vunpack.c.l.bf16 %v1743
    %v2026 = vunpack.c.h.bf16 %v1743
    %v2027 = vunpack.c.l.bf16 %v1744
    %v2028 = vunpack.c.h.bf16 %v1744
    %v2029 = vunpack.c.l.bf16 %v1745
    %v2030 = vunpack.c.h.bf16 %v1745
    %v2031 = vunpack.c.l.bf16 %v1746
    %v2032 = vunpack.c.h.bf16 %v1746
    %v2033 = vunpack.c.l.bf16 %v1747
    %v2034 = vunpack.c.h.bf16 %v1747
    %v2035 = vunpack.c.l.bf16 %v1748
    %v2036 = vunpack.c.h.bf16 %v1748
    %v2037 = vunpack.c.l.bf16 %v1749
    %v2038 = vunpack.c.h.bf16 %v1749
    %v2039 = vunpack.c.l.bf16 %v1750
    %v2040 = vunpack.c.h.bf16 %v1750
    %v2041 = vunpack.c.l.bf16 %v1751
    %v2042 = vunpack.c.h.bf16 %v1751
    %v2043 = vunpack.c.l.bf16 %v1752
    %v2044 = vunpack.c.h.bf16 %v1752
    %v2045 = vunpack.c.l.bf16 %v1753
    %v2046 = vunpack.c.h.bf16 %v1753
    %v2047 = vunpack.c.l.bf16 %v1754
    %v2048 = vunpack.c.h.bf16 %v1754
    %v2049 = vunpack.c.l.bf16 %v1755
    %v2050 = vunpack.c.h.bf16 %v1755
    %v2051 = vunpack.c.l.bf16 %v1756
    %v2052 = vunpack.c.h.bf16 %v1756
    %v2053 = vunpack.c.l.bf16 %v1757
    %v2054 = vunpack.c.h.bf16 %v1757
    %v2055 = vunpack.c.l.bf16 %v1758
    %v2056 = vunpack.c.h.bf16 %v1758
    %v2057 = vunpack.c.l.bf16 %v1759
    %v2058 = vunpack.c.h.bf16 %v1759
    %v2059 = vunpack.c.l.bf16 %v1760
    %v2060 = vunpack.c.h.bf16 %v1760
    %v2061 = vunpack.c.l.bf16 %v1761
    %v2062 = vunpack.c.h.bf16 %v1761
    %v2063 = vunpack.c.l.bf16 %v1762
    %v2064 = vunpack.c.h.bf16 %v1762
    %v2065 = vunpack.c.l.bf16 %v1763
    %v2066 = vunpack.c.h.bf16 %v1763
    %v2067 = vunpack.c.l.bf16 %v1764
    %v2068 = vunpack.c.h.bf16 %v1764
    %v2069 = vunpack.c.l.bf16 %v1765
    %v2070 = vunpack.c.h.bf16 %v1765
    %v2071 = vunpack.c.l.bf16 %v1766
    %v2072 = vunpack.c.h.bf16 %v1766
    %v2073 = vunpack.c.l.bf16 %v1767
    %v2074 = vunpack.c.h.bf16 %v1767
    %v2075 = vunpack.c.l.bf16 %v1768
    %v2076 = vunpack.c.h.bf16 %v1768
    %v2077 = vunpack.c.l.bf16 %v1769
    %v2078 = vunpack.c.h.bf16 %v1769
    %v2079 = vunpack.c.l.bf16 %v1770
    %v2080 = vunpack.c.h.bf16 %v1770
    %v2081 = vunpack.c.l.bf16 %v1771
    %v2082 = vunpack.c.h.bf16 %v1771
    %v2083 = vunpack.c.l.bf16 %v1772
    %v2084 = vunpack.c.h.bf16 %v1772
    %v2085 = vunpack.c.l.bf16 %v1773
    %v2086 = vunpack.c.h.bf16 %v1773
    %v2087 = vunpack.c.l.bf16 %v1774
    %v2088 = vunpack.c.h.bf16 %v1774
    %v2089 = vunpack.c.l.bf16 %v1775
    %v2090 = vunpack.c.h.bf16 %v1775
    %v2091 = vunpack.c.l.bf16 %v1776
    %v2092 = vunpack.c.h.bf16 %v1776
    %v2093 = vunpack.c.l.bf16 %v1777
    %v2094 = vunpack.c.h.bf16 %v1777
    %v2095 = vunpack.c.l.bf16 %v1778
    %v2096 = vunpack.c.h.bf16 %v1778
    %v2097 = vunpack.c.l.bf16 %v1779
    %v2098 = vunpack.c.h.bf16 %v1779
    %v2099 = vunpack.c.l.bf16 %v1780
    %v2100 = vunpack.c.h.bf16 %v1780
    %v2101 = vunpack.c.l.bf16 %v1781
    %v2102 = vunpack.c.h.bf16 %v1781
    %v2103 = vunpack.c.l.bf16 %v1782
    %v2104 = vunpack.c.h.bf16 %v1782
    %v2105 = vunpack.c.l.bf16 %v1783
    %v2106 = vunpack.c.h.bf16 %v1783
    %v2107 = vunpack.c.l.bf16 %v1784
    %v2108 = vunpack.c.h.bf16 %v1784
    %v2109 = vunpack.c.l.bf16 %v1785
    %v2110 = vunpack.c.h.bf16 %v1785
    %v2111 = vunpack.c.l.bf16 %v1786
    %v2112 = vunpack.c.h.bf16 %v1786
    %v2113 = vunpack.c.l.bf16 %v1787
    %v2114 = vunpack.c.h.bf16 %v1787
    %v2115 = vunpack.c.l.bf16 %v1788
    %v2116 = vunpack.c.h.bf16 %v1788
    %v2117 = vunpack.c.l.bf16 %v1789
    %v2118 = vunpack.c.h.bf16 %v1789
    %v2119 = vunpack.c.l.bf16 %v1790
    %v2120 = vunpack.c.h.bf16 %v1790
    %v2121 = vunpack.c.l.bf16 %v1791
    %v2122 = vunpack.c.h.bf16 %v1791
    %v2123 = vunpack.c.l.bf16 %v1792
    %v2124 = vunpack.c.h.bf16 %v1792
    %v2125 = vunpack.c.l.bf16 %v1793
    %v2126 = vunpack.c.h.bf16 %v1793
    %v2127 = vunpack.c.l.bf16 %v1794
    %v2128 = vunpack.c.h.bf16 %v1794
    %v2129 = vunpack.c.l.bf16 %v1795
    %v2130 = vunpack.c.h.bf16 %v1795
    %v2131 = vunpack.c.l.bf16 %v1796
    %v2132 = vunpack.c.h.bf16 %v1796
    %v2133 = vunpack.c.l.bf16 %v1797
    %v2134 = vunpack.c.h.bf16 %v1797
    %v2135 = vunpack.c.l.bf16 %v1798
    %v2136 = vunpack.c.h.bf16 %v1798
    %v2137 = vunpack.c.l.bf16 %v1799
    %v2138 = vunpack.c.h.bf16 %v1799
    %v2139 = vunpack.c.l.bf16 %v1800
    %v2140 = vunpack.c.h.bf16 %v1800
    %v2141 = vunpack.c.l.bf16 %v1801
    %v2142 = vunpack.c.h.bf16 %v1801
    %v2143 = vunpack.c.l.bf16 %v1802
    %v2144 = vunpack.c.h.bf16 %v1802
    %v2145 = vunpack.c.l.bf16 %v1803
    %v2146 = vunpack.c.h.bf16 %v1803
    %v2147 = vunpack.c.l.bf16 %v1804
    %v2148 = vunpack.c.h.bf16 %v1804
    %v2149 = vunpack.c.l.bf16 %v1805
    %v2150 = vunpack.c.h.bf16 %v1805
    %v2151 = vunpack.c.l.bf16 %v1806
    %v2152 = vunpack.c.h.bf16 %v1806
    %v2153 = vunpack.c.l.bf16 %v1807
    %v2154 = vunpack.c.h.bf16 %v1807
    %v2155 = vunpack.c.l.bf16 %v1808
    %v2156 = vunpack.c.h.bf16 %v1808
    %v2157 = vunpack.c.l.bf16 %v1809
    %v2158 = vunpack.c.h.bf16 %v1809
    %v2159 = vunpack.c.l.bf16 %v1810
    %v2160 = vunpack.c.h.bf16 %v1810
    %v2161 = vunpack.c.l.bf16 %v1811
    %v2162 = vunpack.c.h.bf16 %v1811
    %v2163 = vunpack.c.l.bf16 %v1812
    %v2164 = vunpack.c.h.bf16 %v1812
    %v2165 = vunpack.c.l.bf16 %v1813
    %v2166 = vunpack.c.h.bf16 %v1813
    %v2167 = vunpack.c.l.bf16 %v1814
    %v2168 = vunpack.c.h.bf16 %v1814
    %v2169 = vunpack.c.l.bf16 %v1815
    %v2170 = vunpack.c.h.bf16 %v1815
    %v2171 = vunpack.c.l.bf16 %v1816
    %v2172 = vunpack.c.h.bf16 %v1816
    %v2173 = vunpack.c.l.bf16 %v1817
    %v2174 = vunpack.c.h.bf16 %v1817
    %v2175 = vunpack.c.l.bf16 %v1818
    %v2176 = vunpack.c.h.bf16 %v1818
    %v2177 = vunpack.c.l.bf16 %v1819
    %v2178 = vunpack.c.h.bf16 %v1819
    %v2179 = vunpack.c.l.bf16 %v1820
    %v2180 = vunpack.c.h.bf16 %v1820
    %v2181 = vunpack.c.l.bf16 %v1821
    %v2182 = vunpack.c.h.bf16 %v1821
    %v2183 = vunpack.c.l.bf16 %v1822
    %v2184 = vunpack.c.h.bf16 %v1822
    %v2185 = vunpack.c.l.bf16 %v1823
    %v2186 = vunpack.c.h.bf16 %v1823
    %v2187 = vunpack.c.l.bf16 %v1824
    %v2188 = vunpack.c.h.bf16 %v1824
    %v2189 = vunpack.c.l.bf16 %v1825
    %v2190 = vunpack.c.h.bf16 %v1825
    %v2191 = vunpack.c.l.bf16 %v1826
    %v2192 = vunpack.c.h.bf16 %v1826
    %v2193 = vunpack.c.l.bf16 %v1827
    %v2194 = vunpack.c.h.bf16 %v1827
    %v2195 = vunpack.c.l.bf16 %v1828
    %v2196 = vunpack.c.h.bf16 %v1828
    %v2197 = vunpack.c.l.bf16 %v1829
    %v2198 = vunpack.c.h.bf16 %v1829
    %v2199 = vunpack.c.l.bf16 %v1830
    %v2200 = vunpack.c.h.bf16 %v1830
    %v2201 = vunpack.c.l.bf16 %v1831
    %v2202 = vunpack.c.h.bf16 %v1831
    %v2203 = vunpack.c.l.bf16 %v1832
    %v2204 = vunpack.c.h.bf16 %v1832
    %v2205 = vunpack.c.l.bf16 %v1833
    %v2206 = vunpack.c.h.bf16 %v1833
    %v2207 = vunpack.c.l.bf16 %v1834
    %v2208 = vunpack.c.h.bf16 %v1834
    %v2209 = vunpack.c.l.bf16 %v1835
    %v2210 = vunpack.c.h.bf16 %v1835
    %v2211 = vunpack.c.l.bf16 %v1836
    %v2212 = vunpack.c.h.bf16 %v1836
    %v2213 = vunpack.c.l.bf16 %v1837
    %v2214 = vunpack.c.h.bf16 %v1837
    %v2215 = vunpack.c.l.bf16 %v1838
    %v2216 = vunpack.c.h.bf16 %v1838
    %v2217 = vunpack.c.l.bf16 %v1839
    %v2218 = vunpack.c.h.bf16 %v1839
    %v2219 = vunpack.c.l.bf16 %v1840
    %v2220 = vunpack.c.h.bf16 %v1840
    %v2221 = vunpack.c.l.bf16 %v1841
    %v2222 = vunpack.c.h.bf16 %v1841
    %v2223 = vunpack.c.l.bf16 %v1842
    %v2224 = vunpack.c.h.bf16 %v1842
    %v2225 = vunpack.c.l.bf16 %v1843
    %v2226 = vunpack.c.h.bf16 %v1843
    %v2227 = vunpack.c.l.bf16 %v1844
    %v2228 = vunpack.c.h.bf16 %v1844
    %v2229 = vunpack.c.l.bf16 %v1845
    %v2230 = vunpack.c.h.bf16 %v1845
    %v2231 = vunpack.c.l.bf16 %v1846
    %v2232 = vunpack.c.h.bf16 %v1846
    %v2233 = vunpack.c.l.bf16 %v1847
    %v2234 = vunpack.c.h.bf16 %v1847
    %v2235 = vunpack.c.l.bf16 %v1848
    %v2236 = vunpack.c.h.bf16 %v1848
    %v2237 = vunpack.c.l.bf16 %v1849
    %v2238 = vunpack.c.h.bf16 %v1849
    %v2239 = vunpack.c.l.bf16 %v1850
    %v2240 = vunpack.c.h.bf16 %v1850
    %v2241 = vunpack.c.l.bf16 %v1851
    %v2242 = vunpack.c.h.bf16 %v1851
    %v2243 = vunpack.c.l.bf16 %v1852
    %v2244 = vunpack.c.h.bf16 %v1852
    %v2245 = vunpack.c.l.bf16 %v1853
    %v2246 = vunpack.c.h.bf16 %v1853
    %v2247 = vunpack.c.l.bf16 %v1854
    %v2248 = vunpack.c.h.bf16 %v1854
    %v2249 = vunpack.c.l.bf16 %v1855
    %v2250 = vunpack.c.h.bf16 %v1855
    %v2251 = vunpack.c.l.bf16 %v1856
    %v2252 = vunpack.c.h.bf16 %v1856
    %v2253 = vunpack.c.l.bf16 %v1857
    %v2254 = vunpack.c.h.bf16 %v1857
    %v2255 = vunpack.c.l.bf16 %v1858
    %v2256 = vunpack.c.h.bf16 %v1858
    %v2257 = vunpack.c.l.bf16 %v1859
    %v2258 = vunpack.c.h.bf16 %v1859
    %v2259 = vunpack.c.l.bf16 %v1860
    %v2260 = vunpack.c.h.bf16 %v1860
    %v2261 = vunpack.c.l.bf16 %v1861
    %v2262 = vunpack.c.h.bf16 %v1861
    %v2263 = vunpack.c.l.bf16 %v1862
    %v2264 = vunpack.c.h.bf16 %v1862
    %v2265 = vunpack.c.l.bf16 %v1863
    %v2266 = vunpack.c.h.bf16 %v1863
    %v2267 = vunpack.c.l.bf16 %v1864
    %v2268 = vunpack.c.h.bf16 %v1864
    %v2269 = vunpack.c.l.bf16 %v1865
    %v2270 = vunpack.c.h.bf16 %v1865
    %v2271 = vunpack.c.l.bf16 %v1866
    %v2272 = vunpack.c.h.bf16 %v1866
    %v2273 = vunpack.c.l.bf16 %v1867
    %v2274 = vunpack.c.h.bf16 %v1867
    %v2275 = vunpack.c.l.bf16 %v1868
    %v2276 = vunpack.c.h.bf16 %v1868
    %v2277 = vunpack.c.l.bf16 %v1869
    %v2278 = vunpack.c.h.bf16 %v1869
    %v2279 = vunpack.c.l.bf16 %v1870
    %v2280 = vunpack.c.h.bf16 %v1870
    %v2281 = vunpack.c.l.bf16 %v1871
    %v2282 = vunpack.c.h.bf16 %v1871
    %v2283 = vunpack.c.l.bf16 %v1872
    %v2284 = vunpack.c.h.bf16 %v1872
    %v2285 = vunpack.c.l.bf16 %v1873
    %v2286 = vunpack.c.h.bf16 %v1873
    %v2287 = vunpack.c.l.bf16 %v1874
    %v2288 = vunpack.c.h.bf16 %v1874
    %v2289 = vunpack.c.l.bf16 %v1875
    %v2290 = vunpack.c.h.bf16 %v1875
    %v2291 = vunpack.c.l.bf16 %v1876
    %v2292 = vunpack.c.h.bf16 %v1876
    %v2293 = vunpack.c.l.bf16 %v1877
    %v2294 = vunpack.c.h.bf16 %v1877
    %v2295 = vunpack.c.l.bf16 %v1878
    %v2296 = vunpack.c.h.bf16 %v1878
    %v2297 = vunpack.c.l.bf16 %v1879
    %v2298 = vunpack.c.h.bf16 %v1879
    %v2299 = vunpack.c.l.bf16 %v1880
    %v2300 = vunpack.c.h.bf16 %v1880
    %v2301 = vunpack.c.l.bf16 %v1881
    %v2302 = vunpack.c.h.bf16 %v1881
    %v2303 = vunpack.c.l.bf16 %v1882
    %v2304 = vunpack.c.h.bf16 %v1882
    %v2305 = vunpack.c.l.bf16 %v1883
    %v2306 = vunpack.c.h.bf16 %v1883
    %v2307 = vunpack.c.l.bf16 %v1884
    %v2308 = vunpack.c.h.bf16 %v1884
    %v2309 = vunpack.c.l.bf16 %v1885
    %v2310 = vunpack.c.h.bf16 %v1885
    %v2311 = vunpack.c.l.bf16 %v1886
    %v2312 = vunpack.c.h.bf16 %v1886
    %v2313 = vunpack.c.l.bf16 %v1887
    %v2314 = vunpack.c.h.bf16 %v1887
    %v2315 = vunpack.c.l.bf16 %v1888
    %v2316 = vunpack.c.h.bf16 %v1888
    %v2317 = vunpack.c.l.bf16 %v1889
    %v2318 = vunpack.c.h.bf16 %v1889
    %v2319 = vunpack.c.l.bf16 %v1890
    %v2320 = vunpack.c.h.bf16 %v1890
    %v2321 = vunpack.c.l.bf16 %v1891
    %v2322 = vunpack.c.h.bf16 %v1891
    %v2323 = vunpack.c.l.bf16 %v1892
    %v2324 = vunpack.c.h.bf16 %v1892
    %v2325 = vunpack.c.l.bf16 %v1893
    %v2326 = vunpack.c.h.bf16 %v1893
    %v2327 = vunpack.c.l.bf16 %v1894
    %v2328 = vunpack.c.h.bf16 %v1894
    %v2329 = vunpack.c.l.bf16 %v1895
    %v2330 = vunpack.c.h.bf16 %v1895
    %v2331 = vunpack.c.l.bf16 %v1896
    %v2332 = vunpack.c.h.bf16 %v1896
    %v2333 = vunpack.c.l.bf16 %v1897
    %v2334 = vunpack.c.h.bf16 %v1897
    %v2335 = vunpack.c.l.bf16 %v1898
    %v2336 = vunpack.c.h.bf16 %v1898
    %v2337 = vunpack.c.l.bf16 %v1899
    %v2338 = vunpack.c.h.bf16 %v1899
    %v2339 = vunpack.c.l.bf16 %v1900
    %v2340 = vunpack.c.h.bf16 %v1900
    %v2341 = vunpack.c.l.bf16 %v1901
    %v2342 = vunpack.c.h.bf16 %v1901
    %v2343 = vunpack.c.l.bf16 %v1902
    %v2344 = vunpack.c.h.bf16 %v1902
    %v2345 = vunpack.c.l.bf16 %v1903
    %v2346 = vunpack.c.h.bf16 %v1903
    %v2347 = vunpack.c.l.bf16 %v1904
    %v2348 = vunpack.c.h.bf16 %v1904
    %v2349 = vunpack.c.l.bf16 %v1905
    %v2350 = vunpack.c.h.bf16 %v1905
    %v2351 = vunpack.c.l.bf16 %v1906
    %v2352 = vunpack.c.h.bf16 %v1906
    %v2353 = vunpack.c.l.bf16 %v1907
    %v2354 = vunpack.c.h.bf16 %v1907
    %v2355 = vunpack.c.l.bf16 %v1908
    %v2356 = vunpack.c.h.bf16 %v1908
    %v2357 = vunpack.c.l.bf16 %v1909
    %v2358 = vunpack.c.h.bf16 %v1909
    %v2359 = vunpack.c.l.bf16 %v1910
    %v2360 = vunpack.c.h.bf16 %v1910
    %v2361 = vunpack.c.l.bf16 %v1911
    %v2362 = vunpack.c.h.bf16 %v1911
    %v2363 = vunpack.c.l.bf16 %v1912
    %v2364 = vunpack.c.h.bf16 %v1912
    %v2365 = vunpack.c.l.bf16 %v1913
    %v2366 = vunpack.c.h.bf16 %v1913
    %v2367 = vunpack.c.l.bf16 %v1914
    %v2368 = vunpack.c.h.bf16 %v1914
    %v2369 = vunpack.c.l.bf16 %v1915
    %v2370 = vunpack.c.h.bf16 %v1915
    %v2371 = vunpack.c.l.bf16 %v1916
    %v2372 = vunpack.c.h.bf16 %v1916
    %v2373 = vunpack.c.l.bf16 %v1917
    %v2374 = vunpack.c.h.bf16 %v1917
    %v2375 = vunpack.c.l.bf16 %v1918
    %v2376 = vunpack.c.h.bf16 %v1918
    %v2377 = vunpack.c.l.bf16 %v1919
    %v2378 = vunpack.c.h.bf16 %v1919
    %v2379 = vunpack.c.l.bf16 %v1920
    %v2380 = vunpack.c.h.bf16 %v1920
    %v2381 = vunpack.c.l.bf16 %v1921
    %v2382 = vunpack.c.h.bf16 %v1921
    %v2383 = vunpack.c.l.bf16 %v1922
    %v2384 = vunpack.c.h.bf16 %v1922
    %v2385 = vunpack.c.l.bf16 %v1923
    %v2386 = vunpack.c.h.bf16 %v1923
    %v2387 = vunpack.c.l.bf16 %v1924
    %v2388 = vunpack.c.h.bf16 %v1924
    %v2389 = vunpack.c.l.bf16 %v1925
    %v2390 = vunpack.c.h.bf16 %v1925
    %v2391 = vunpack.c.l.bf16 %v1926
    %v2392 = vunpack.c.h.bf16 %v1926
    %v2393 = vunpack.c.l.bf16 %v1927
    %v2394 = vunpack.c.h.bf16 %v1927
    %v2395 = vunpack.c.l.bf16 %v1928
    %v2396 = vunpack.c.h.bf16 %v1928
    %v2397 = vunpack.c.l.bf16 %v1929
    %v2398 = vunpack.c.h.bf16 %v1929
    %v2399 = vunpack.c.l.bf16 %v1930
    %v2400 = vunpack.c.h.bf16 %v1930
    %v2401 = vunpack.c.l.bf16 %v1931
    %v2402 = vunpack.c.h.bf16 %v1931
    %v2403 = vunpack.c.l.bf16 %v1932
    %v2404 = vunpack.c.h.bf16 %v1932
    %v2405 = vunpack.c.l.bf16 %v1933
    %v2406 = vunpack.c.h.bf16 %v1933
    %v2407 = vunpack.c.l.bf16 %v1934
    %v2408 = vunpack.c.h.bf16 %v1934
    %v2409 = vunpack.c.l.bf16 %v1935
    %v2410 = vunpack.c.h.bf16 %v1935
    %v2411 = vunpack.c.l.bf16 %v1936
    %v2412 = vunpack.c.h.bf16 %v1936
    %v2413 = vunpack.c.l.bf16 %v1937
    %v2414 = vunpack.c.h.bf16 %v1937
    %v2415 = vunpack.c.l.bf16 %v1938
    %v2416 = vunpack.c.h.bf16 %v1938
    %v2417 = vunpack.c.l.bf16 %v1939
    %v2418 = vunpack.c.h.bf16 %v1939
    %v2419 = vunpack.c.l.bf16 %v1940
    %v2420 = vunpack.c.h.bf16 %v1940
    %v2421 = vunpack.c.l.bf16 %v1941
    %v2422 = vunpack.c.h.bf16 %v1941
    %v2423 = vunpack.c.l.bf16 %v1942
    %v2424 = vunpack.c.h.bf16 %v1942
    %v2425 = vunpack.c.l.bf16 %v1943
    %v2426 = vunpack.c.h.bf16 %v1943
    %v2427 = vunpack.c.l.bf16 %v1944
    %v2428 = vunpack.c.h.bf16 %v1944
    %v2429 = vunpack.c.l.bf16 %v1945
    %v2430 = vunpack.c.h.bf16 %v1945
    %v2431 = vunpack.c.l.bf16 %v1946
    %v2432 = vunpack.c.h.bf16 %v1946
    %v2433 = vunpack.c.l.bf16 %v1947
    %v2434 = vunpack.c.h.bf16 %v1947
    %v2435 = vunpack.c.l.bf16 %v1948
    %v2436 = vunpack.c.h.bf16 %v1948
    %v2437 = vunpack.c.l.bf16 %v1949
    %v2438 = vunpack.c.h.bf16 %v1949
    %v2439 = vunpack.c.l.bf16 %v1950
    %v2440 = vunpack.c.h.bf16 %v1950
    %v2441 = vunpack.c.l.bf16 %v1951
    %v2442 = vunpack.c.h.bf16 %v1951
    %v2443 = vunpack.c.l.bf16 %v1952
    %v2444 = vunpack.c.h.bf16 %v1952
    %v2445 = vunpack.c.l.bf16 %v1953
    %v2446 = vunpack.c.h.bf16 %v1953
    %v2447 = vunpack.c.l.bf16 %v1954
    %v2448 = vunpack.c.h.bf16 %v1954
    %v2449 = vunpack.c.l.bf16 %v1955
    %v2450 = vunpack.c.h.bf16 %v1955
    %v2451 = vunpack.c.l.bf16 %v1956
    %v2452 = vunpack.c.h.bf16 %v1956
    %v2453 = vunpack.c.l.bf16 %v1957
    %v2454 = vunpack.c.h.bf16 %v1957
    %v2455 = vunpack.c.l.bf16 %v1958
    %v2456 = vunpack.c.h.bf16 %v1958
    %v2457 = vunpack.c.l.bf16 %v1959
    %v2458 = vunpack.c.h.bf16 %v1959
    %v2459 = vunpack.c.l.bf16 %v1960
    %v2460 = vunpack.c.h.bf16 %v1960
    %v2461 = vunpack.c.l.bf16 %v1961
    %v2462 = vunpack.c.h.bf16 %v1961
    %v2463 = vunpack.c.l.bf16 %v1962
    %v2464 = vunpack.c.h.bf16 %v1962
    %v2465 = vunpack.c.l.bf16 %v1963
    %v2466 = vunpack.c.h.bf16 %v1963
    %v2467 = vunpack.c.l.bf16 %v1964
    %v2468 = vunpack.c.h.bf16 %v1964
    %v2469 = vunpack.c.l.bf16 %v1965
    %v2470 = vunpack.c.h.bf16 %v1965
    %v2471 = vunpack.c.l.bf16 %v1966
    %v2472 = vunpack.c.h.bf16 %v1966
    %v2473 = vunpack.c.l.bf16 %v1967
    %v2474 = vunpack.c.h.bf16 %v1967
    %v2475 = vunpack.c.l.bf16 %v1968
    %v2476 = vunpack.c.h.bf16 %v1968
    %v2477 = vunpack.c.l.bf16 %v1969
    %v2478 = vunpack.c.h.bf16 %v1969
    %v2479 = vunpack.c.l.bf16 %v1970
    %v2480 = vunpack.c.h.bf16 %v1970
    %v2481 = vunpack.c.l.bf16 %v1971
    %v2482 = vunpack.c.h.bf16 %v1971
    %v2483 = vunpack.c.l.bf16 %v1972
    %v2484 = vunpack.c.h.bf16 %v1972
    %v2485 = vld [vmem:[#allocation20] sm:$0xff]
    %v2487 = vperm.slane %v2485, 0
    %v2488 = vperm.slane %v2485, 1
    %v2489 = vperm.slane %v2485, 2
    %v2490 = vperm.slane %v2485, 3
    %v2491 = vperm.slane %v2485, 4
    %v2492 = vperm.slane %v2485, 5
    %v2493 = vperm.slane %v2485, 6
    %v2494 = vperm.slane %v2485, 7
    %2503 = vmatpush.msra.mxu0 %v2093
    %2504 = vmatpush.msra.mxu0 %v2085
    %2505 = vmatpush.msra.mxu0 %v2077
    %2506 = vmatpush.msra.mxu0 %v2069
    %2507 = vmatpush.msra.mxu0 %v2061
    %2508 = vmatpush.msra.mxu0 %v2053
    %2509 = vmatpush.msra.mxu0 %v2045
    %2510 = vmatpush.msra.mxu0 %v2037
    %2511 = vmatpush.msra.mxu0 %v2029
    %2512 = vmatpush.msra.mxu0 %v2021
    %2513 = vmatpush.msra.mxu0 %v2013
    %2514 = vmatpush.msra.mxu0 %v2005
    %2515 = vmatpush.msra.mxu0 %v1997
    %2516 = vmatpush.msra.mxu0 %v1989
    %2517 = vmatpush.msra.mxu0 %v1981
    %2518 = vmatpush.msra.mxu0 %v1973
    %2519 = vmatmul.f32.gmra.mxu0 %v1685
    %v2520 = vpop.f32.mrf.mxu0
    %v2521 = vadd.f32 %v2487, %v2520
    %2522 = vmatmul.f32.gmra.mxu0 %v1689
    %v2523 = vpop.f32.mrf.mxu0
    %v2524 = vadd.f32 %v2487, %v2523
    %2525 = vmatmul.f32.gmra.mxu0 %v1693
    %v2526 = vpop.f32.mrf.mxu0
    %v2527 = vadd.f32 %v2487, %v2526
    %2528 = vmatmul.f32.gmra.mxu0 %v1697
    %v2529 = vpop.f32.mrf.mxu0
    %v2530 = vadd.f32 %v2487, %v2529
    %2531 = vmatmul.f32.gmra.mxu0 %v1701
    %v2532 = vpop.f32.mrf.mxu0
    %v2533 = vadd.f32 %v2487, %v2532
    %2534 = vmatmul.f32.gmra.mxu0 %v1705
    %v2535 = vpop.f32.mrf.mxu0
    %v2536 = vadd.f32 %v2487, %v2535
    %2537 = vmatmul.f32.gmra.mxu0 %v1709
    %v2538 = vpop.f32.mrf.mxu0
    %v2539 = vadd.f32 %v2487, %v2538
    %2540 = vmatmul.f32.gmra.mxu0 %v1713
    %v2541 = vpop.f32.mrf.mxu0
    %v2542 = vadd.f32 %v2487, %v2541
    %2543 = vdwg.mxu0
    %2544 = vmatpush.msra.mxu0 %v2221
    %2545 = vmatpush.msra.mxu0 %v2213
    %2546 = vmatpush.msra.mxu0 %v2205
    %2547 = vmatpush.msra.mxu0 %v2197
    %2548 = vmatpush.msra.mxu0 %v2189
    %2549 = vmatpush.msra.mxu0 %v2181
    %2550 = vmatpush.msra.mxu0 %v2173
    %2551 = vmatpush.msra.mxu0 %v2165
    %2552 = vmatpush.msra.mxu0 %v2157
    %2553 = vmatpush.msra.mxu0 %v2149
    %2554 = vmatpush.msra.mxu0 %v2141
    %2555 = vmatpush.msra.mxu0 %v2133
    %2556 = vmatpush.msra.mxu0 %v2125
    %2557 = vmatpush.msra.mxu0 %v2117
    %2558 = vmatpush.msra.mxu0 %v2109
    %2559 = vmatpush.msra.mxu0 %v2101
    %2560 = vmatmul.f32.gmra.mxu0 %v1686
    %v2561 = vpop.f32.mrf.mxu0
    %v2562 = vadd.f32 %v2521, %v2561
    %2563 = vmatmul.f32.gmra.mxu0 %v1690
    %v2564 = vpop.f32.mrf.mxu0
    %v2565 = vadd.f32 %v2524, %v2564
    %2566 = vmatmul.f32.gmra.mxu0 %v1694
    %v2567 = vpop.f32.mrf.mxu0
    %v2568 = vadd.f32 %v2527, %v2567
    %2569 = vmatmul.f32.gmra.mxu0 %v1698
    %v2570 = vpop.f32.mrf.mxu0
    %v2571 = vadd.f32 %v2530, %v2570
    %2572 = vmatmul.f32.gmra.mxu0 %v1702
    %v2573 = vpop.f32.mrf.mxu0
    %v2574 = vadd.f32 %v2533, %v2573
    %2575 = vmatmul.f32.gmra.mxu0 %v1706
    %v2576 = vpop.f32.mrf.mxu0
    %v2577 = vadd.f32 %v2536, %v2576
    %2578 = vmatmul.f32.gmra.mxu0 %v1710
    %v2579 = vpop.f32.mrf.mxu0
    %v2580 = vadd.f32 %v2539, %v2579
    %2581 = vmatmul.f32.gmra.mxu0 %v1714
    %v2582 = vpop.f32.mrf.mxu0
    %v2583 = vadd.f32 %v2542, %v2582
    %2584 = vdwg.mxu0
    %2585 = vmatpush.msra.mxu0 %v2349
    %2586 = vmatpush.msra.mxu0 %v2341
    %2587 = vmatpush.msra.mxu0 %v2333
    %2588 = vmatpush.msra.mxu0 %v2325
    %2589 = vmatpush.msra.mxu0 %v2317
    %2590 = vmatpush.msra.mxu0 %v2309
    %2591 = vmatpush.msra.mxu0 %v2301
    %2592 = vmatpush.msra.mxu0 %v2293
    %2593 = vmatpush.msra.mxu0 %v2285
    %2594 = vmatpush.msra.mxu0 %v2277
    %2595 = vmatpush.msra.mxu0 %v2269
    %2596 = vmatpush.msra.mxu0 %v2261
    %2597 = vmatpush.msra.mxu0 %v2253
    %2598 = vmatpush.msra.mxu0 %v2245
    %2599 = vmatpush.msra.mxu0 %v2237
    %2600 = vmatpush.msra.mxu0 %v2229
    %2601 = vmatmul.f32.gmra.mxu0 %v1687
    %v2602 = vpop.f32.mrf.mxu0
    %v2603 = vadd.f32 %v2562, %v2602
    %2604 = vmatmul.f32.gmra.mxu0 %v1691
    %v2605 = vpop.f32.mrf.mxu0
    %v2606 = vadd.f32 %v2565, %v2605
    %2607 = vmatmul.f32.gmra.mxu0 %v1695
    %v2608 = vpop.f32.mrf.mxu0
    %v2609 = vadd.f32 %v2568, %v2608
    %2610 = vmatmul.f32.gmra.mxu0 %v1699
    %v2611 = vpop.f32.mrf.mxu0
    %v2612 = vadd.f32 %v2571, %v2611
    %2613 = vmatmul.f32.gmra.mxu0 %v1703
    %v2614 = vpop.f32.mrf.mxu0
    %v2615 = vadd.f32 %v2574, %v2614
    %2616 = vmatmul.f32.gmra.mxu0 %v1707
    %v2617 = vpop.f32.mrf.mxu0
    %v2618 = vadd.f32 %v2577, %v2617
    %2619 = vmatmul.f32.gmra.mxu0 %v1711
    %v2620 = vpop.f32.mrf.mxu0
    %v2621 = vadd.f32 %v2580, %v2620
    %2622 = vmatmul.f32.gmra.mxu0 %v1715
    %v2623 = vpop.f32.mrf.mxu0
    %v2624 = vadd.f32 %v2583, %v2623
    %2625 = vdwg.mxu0
    %2626 = vmatpush.msra.mxu0 %v2477
    %2627 = vmatpush.msra.mxu0 %v2469
    %2628 = vmatpush.msra.mxu0 %v2461
    %2629 = vmatpush.msra.mxu0 %v2453
    %2630 = vmatpush.msra.mxu0 %v2445
    %2631 = vmatpush.msra.mxu0 %v2437
    %2632 = vmatpush.msra.mxu0 %v2429
    %2633 = vmatpush.msra.mxu0 %v2421
    %2634 = vmatpush.msra.mxu0 %v2413
    %2635 = vmatpush.msra.mxu0 %v2405
    %2636 = vmatpush.msra.mxu0 %v2397
    %2637 = vmatpush.msra.mxu0 %v2389
    %2638 = vmatpush.msra.mxu0 %v2381
    %2639 = vmatpush.msra.mxu0 %v2373
    %2640 = vmatpush.msra.mxu0 %v2365
    %2641 = vmatpush.msra.mxu0 %v2357
    %2642 = vmatmul.f32.gmra.mxu0 %v1688
    %v2643 = vpop.f32.mrf.mxu0
    %v2644 = vadd.f32 %v2603, %v2643
    %2645 = vmatmul.f32.gmra.mxu0 %v1692
    %v2646 = vpop.f32.mrf.mxu0
    %v2647 = vadd.f32 %v2606, %v2646
    %2648 = vmatmul.f32.gmra.mxu0 %v1696
    %v2649 = vpop.f32.mrf.mxu0
    %v2650 = vadd.f32 %v2609, %v2649
    %2651 = vmatmul.f32.gmra.mxu0 %v1700
    %v2652 = vpop.f32.mrf.mxu0
    %v2653 = vadd.f32 %v2612, %v2652
    %2654 = vmatmul.f32.gmra.mxu0 %v1704
    %v2655 = vpop.f32.mrf.mxu0
    %v2656 = vadd.f32 %v2615, %v2655
    %2657 = vmatmul.f32.gmra.mxu0 %v1708
    %v2658 = vpop.f32.mrf.mxu0
    %v2659 = vadd.f32 %v2618, %v2658
    %2660 = vmatmul.f32.gmra.mxu0 %v1712
    %v2661 = vpop.f32.mrf.mxu0
    %v2662 = vadd.f32 %v2621, %v2661
    %2663 = vmatmul.f32.gmra.mxu0 %v1716
    %v2664 = vpop.f32.mrf.mxu0
    %v2665 = vadd.f32 %v2624, %v2664
    %2666 = vdwg.mxu0
    %2667 = vmatpush.msra.mxu0 %v2094
    %2668 = vmatpush.msra.mxu0 %v2086
    %2669 = vmatpush.msra.mxu0 %v2078
    %2670 = vmatpush.msra.mxu0 %v2070
    %2671 = vmatpush.msra.mxu0 %v2062
    %2672 = vmatpush.msra.mxu0 %v2054
    %2673 = vmatpush.msra.mxu0 %v2046
    %2674 = vmatpush.msra.mxu0 %v2038
    %2675 = vmatpush.msra.mxu0 %v2030
    %2676 = vmatpush.msra.mxu0 %v2022
    %2677 = vmatpush.msra.mxu0 %v2014
    %2678 = vmatpush.msra.mxu0 %v2006
    %2679 = vmatpush.msra.mxu0 %v1998
    %2680 = vmatpush.msra.mxu0 %v1990
    %2681 = vmatpush.msra.mxu0 %v1982
    %2682 = vmatpush.msra.mxu0 %v1974
    %2683 = vmatmul.f32.gmra.mxu0 %v1685
    %v2684 = vpop.f32.mrf.mxu0
    %v2685 = vadd.f32 %v2488, %v2684
    %2686 = vmatmul.f32.gmra.mxu0 %v1689
    %v2687 = vpop.f32.mrf.mxu0
    %v2688 = vadd.f32 %v2488, %v2687
    %2689 = vmatmul.f32.gmra.mxu0 %v1693
    %v2690 = vpop.f32.mrf.mxu0
    %v2691 = vadd.f32 %v2488, %v2690
    %2692 = vmatmul.f32.gmra.mxu0 %v1697
    %v2693 = vpop.f32.mrf.mxu0
    %v2694 = vadd.f32 %v2488, %v2693
    %2695 = vmatmul.f32.gmra.mxu0 %v1701
    %v2696 = vpop.f32.mrf.mxu0
    %v2697 = vadd.f32 %v2488, %v2696
    %2698 = vmatmul.f32.gmra.mxu0 %v1705
    %v2699 = vpop.f32.mrf.mxu0
    %v2700 = vadd.f32 %v2488, %v2699
    %2701 = vmatmul.f32.gmra.mxu0 %v1709
    %v2702 = vpop.f32.mrf.mxu0
    %v2703 = vadd.f32 %v2488, %v2702
    %2704 = vmatmul.f32.gmra.mxu0 %v1713
    %v2705 = vpop.f32.mrf.mxu0
    %v2706 = vadd.f32 %v2488, %v2705
    %2707 = vdwg.mxu0
    %2708 = vmatpush.msra.mxu0 %v2222
    %2709 = vmatpush.msra.mxu0 %v2214
    %2710 = vmatpush.msra.mxu0 %v2206
    %2711 = vmatpush.msra.mxu0 %v2198
    %2712 = vmatpush.msra.mxu0 %v2190
    %2713 = vmatpush.msra.mxu0 %v2182
    %2714 = vmatpush.msra.mxu0 %v2174
    %2715 = vmatpush.msra.mxu0 %v2166
    %2716 = vmatpush.msra.mxu0 %v2158
    %2717 = vmatpush.msra.mxu0 %v2150
    %2718 = vmatpush.msra.mxu0 %v2142
    %2719 = vmatpush.msra.mxu0 %v2134
    %2720 = vmatpush.msra.mxu0 %v2126
    %2721 = vmatpush.msra.mxu0 %v2118
    %2722 = vmatpush.msra.mxu0 %v2110
    %2723 = vmatpush.msra.mxu0 %v2102
    %2724 = vmatmul.f32.gmra.mxu0 %v1686
    %v2725 = vpop.f32.mrf.mxu0
    %v2726 = vadd.f32 %v2685, %v2725
    %2727 = vmatmul.f32.gmra.mxu0 %v1690
    %v2728 = vpop.f32.mrf.mxu0
    %v2729 = vadd.f32 %v2688, %v2728
    %2730 = vmatmul.f32.gmra.mxu0 %v1694
    %v2731 = vpop.f32.mrf.mxu0
    %v2732 = vadd.f32 %v2691, %v2731
    %2733 = vmatmul.f32.gmra.mxu0 %v1698
    %v2734 = vpop.f32.mrf.mxu0
    %v2735 = vadd.f32 %v2694, %v2734
    %2736 = vmatmul.f32.gmra.mxu0 %v1702
    %v2737 = vpop.f32.mrf.mxu0
    %v2738 = vadd.f32 %v2697, %v2737
    %2739 = vmatmul.f32.gmra.mxu0 %v1706
    %v2740 = vpop.f32.mrf.mxu0
    %v2741 = vadd.f32 %v2700, %v2740
    %2742 = vmatmul.f32.gmra.mxu0 %v1710
    %v2743 = vpop.f32.mrf.mxu0
    %v2744 = vadd.f32 %v2703, %v2743
    %2745 = vmatmul.f32.gmra.mxu0 %v1714
    %v2746 = vpop.f32.mrf.mxu0
    %v2747 = vadd.f32 %v2706, %v2746
    %2748 = vdwg.mxu0
    %2749 = vmatpush.msra.mxu0 %v2350
    %2750 = vmatpush.msra.mxu0 %v2342
    %2751 = vmatpush.msra.mxu0 %v2334
    %2752 = vmatpush.msra.mxu0 %v2326
    %2753 = vmatpush.msra.mxu0 %v2318
    %2754 = vmatpush.msra.mxu0 %v2310
    %2755 = vmatpush.msra.mxu0 %v2302
    %2756 = vmatpush.msra.mxu0 %v2294
    %2757 = vmatpush.msra.mxu0 %v2286
    %2758 = vmatpush.msra.mxu0 %v2278
    %2759 = vmatpush.msra.mxu0 %v2270
    %2760 = vmatpush.msra.mxu0 %v2262
    %2761 = vmatpush.msra.mxu0 %v2254
    %2762 = vmatpush.msra.mxu0 %v2246
    %2763 = vmatpush.msra.mxu0 %v2238
    %2764 = vmatpush.msra.mxu0 %v2230
    %2765 = vmatmul.f32.gmra.mxu0 %v1687
    %v2766 = vpop.f32.mrf.mxu0
    %v2767 = vadd.f32 %v2726, %v2766
    %2768 = vmatmul.f32.gmra.mxu0 %v1691
    %v2769 = vpop.f32.mrf.mxu0
    %v2770 = vadd.f32 %v2729, %v2769
    %2771 = vmatmul.f32.gmra.mxu0 %v1695
    %v2772 = vpop.f32.mrf.mxu0
    %v2773 = vadd.f32 %v2732, %v2772
    %2774 = vmatmul.f32.gmra.mxu0 %v1699
    %v2775 = vpop.f32.mrf.mxu0
    %v2776 = vadd.f32 %v2735, %v2775
    %2777 = vmatmul.f32.gmra.mxu0 %v1703
    %v2778 = vpop.f32.mrf.mxu0
    %v2779 = vadd.f32 %v2738, %v2778
    %2780 = vmatmul.f32.gmra.mxu0 %v1707
    %v2781 = vpop.f32.mrf.mxu0
    %v2782 = vadd.f32 %v2741, %v2781
    %2783 = vmatmul.f32.gmra.mxu0 %v1711
    %v2784 = vpop.f32.mrf.mxu0
    %v2785 = vadd.f32 %v2744, %v2784
    %2786 = vmatmul.f32.gmra.mxu0 %v1715
    %v2787 = vpop.f32.mrf.mxu0
    %v2788 = vadd.f32 %v2747, %v2787
    %2789 = vdwg.mxu0
    %2790 = vmatpush.msra.mxu0 %v2478
    %2791 = vmatpush.msra.mxu0 %v2470
    %2792 = vmatpush.msra.mxu0 %v2462
    %2793 = vmatpush.msra.mxu0 %v2454
    %2794 = vmatpush.msra.mxu0 %v2446
    %2795 = vmatpush.msra.mxu0 %v2438
    %2796 = vmatpush.msra.mxu0 %v2430
    %2797 = vmatpush.msra.mxu0 %v2422
    %2798 = vmatpush.msra.mxu0 %v2414
    %2799 = vmatpush.msra.mxu0 %v2406
    %2800 = vmatpush.msra.mxu0 %v2398
    %2801 = vmatpush.msra.mxu0 %v2390
    %2802 = vmatpush.msra.mxu0 %v2382
    %2803 = vmatpush.msra.mxu0 %v2374
    %2804 = vmatpush.msra.mxu0 %v2366
    %2805 = vmatpush.msra.mxu0 %v2358
    %2806 = vmatmul.f32.gmra.mxu0 %v1688
    %v2807 = vpop.f32.mrf.mxu0
    %v2808 = vadd.f32 %v2767, %v2807
    %2809 = vmatmul.f32.gmra.mxu0 %v1692
    %v2810 = vpop.f32.mrf.mxu0
    %v2811 = vadd.f32 %v2770, %v2810
    %2812 = vmatmul.f32.gmra.mxu0 %v1696
    %v2813 = vpop.f32.mrf.mxu0
    %v2814 = vadd.f32 %v2773, %v2813
    %2815 = vmatmul.f32.gmra.mxu0 %v1700
    %v2816 = vpop.f32.mrf.mxu0
    %v2817 = vadd.f32 %v2776, %v2816
    %2818 = vmatmul.f32.gmra.mxu0 %v1704
    %v2819 = vpop.f32.mrf.mxu0
    %v2820 = vadd.f32 %v2779, %v2819
    %2821 = vmatmul.f32.gmra.mxu0 %v1708
    %v2822 = vpop.f32.mrf.mxu0
    %v2823 = vadd.f32 %v2782, %v2822
    %2824 = vmatmul.f32.gmra.mxu0 %v1712
    %v2825 = vpop.f32.mrf.mxu0
    %v2826 = vadd.f32 %v2785, %v2825
    %2827 = vmatmul.f32.gmra.mxu0 %v1716
    %v2828 = vpop.f32.mrf.mxu0
    %v2829 = vadd.f32 %v2788, %v2828
    %2830 = vdwg.mxu0
    %2831 = vmatpush.msra.mxu0 %v2095
    %2832 = vmatpush.msra.mxu0 %v2087
    %2833 = vmatpush.msra.mxu0 %v2079
    %2834 = vmatpush.msra.mxu0 %v2071
    %2835 = vmatpush.msra.mxu0 %v2063
    %2836 = vmatpush.msra.mxu0 %v2055
    %2837 = vmatpush.msra.mxu0 %v2047
    %2838 = vmatpush.msra.mxu0 %v2039
    %2839 = vmatpush.msra.mxu0 %v2031
    %2840 = vmatpush.msra.mxu0 %v2023
    %2841 = vmatpush.msra.mxu0 %v2015
    %2842 = vmatpush.msra.mxu0 %v2007
    %2843 = vmatpush.msra.mxu0 %v1999
    %2844 = vmatpush.msra.mxu0 %v1991
    %2845 = vmatpush.msra.mxu0 %v1983
    %2846 = vmatpush.msra.mxu0 %v1975
    %2847 = vmatmul.f32.gmra.mxu0 %v1685
    %v2848 = vpop.f32.mrf.mxu0
    %v2849 = vadd.f32 %v2489, %v2848
    %2850 = vmatmul.f32.gmra.mxu0 %v1689
    %v2851 = vpop.f32.mrf.mxu0
    %v2852 = vadd.f32 %v2489, %v2851
    %2853 = vmatmul.f32.gmra.mxu0 %v1693
    %v2854 = vpop.f32.mrf.mxu0
    %v2855 = vadd.f32 %v2489, %v2854
    %2856 = vmatmul.f32.gmra.mxu0 %v1697
    %v2857 = vpop.f32.mrf.mxu0
    %v2858 = vadd.f32 %v2489, %v2857
    %2859 = vmatmul.f32.gmra.mxu0 %v1701
    %v2860 = vpop.f32.mrf.mxu0
    %v2861 = vadd.f32 %v2489, %v2860
    %2862 = vmatmul.f32.gmra.mxu0 %v1705
    %v2863 = vpop.f32.mrf.mxu0
    %v2864 = vadd.f32 %v2489, %v2863
    %2865 = vmatmul.f32.gmra.mxu0 %v1709
    %v2866 = vpop.f32.mrf.mxu0
    %v2867 = vadd.f32 %v2489, %v2866
    %2868 = vmatmul.f32.gmra.mxu0 %v1713
    %v2869 = vpop.f32.mrf.mxu0
    %v2870 = vadd.f32 %v2489, %v2869
    %2871 = vdwg.mxu0
    %2872 = vmatpush.msra.mxu0 %v2223
    %2873 = vmatpush.msra.mxu0 %v2215
    %2874 = vmatpush.msra.mxu0 %v2207
    %2875 = vmatpush.msra.mxu0 %v2199
    %2876 = vmatpush.msra.mxu0 %v2191
    %2877 = vmatpush.msra.mxu0 %v2183
    %2878 = vmatpush.msra.mxu0 %v2175
    %2879 = vmatpush.msra.mxu0 %v2167
    %2880 = vmatpush.msra.mxu0 %v2159
    %2881 = vmatpush.msra.mxu0 %v2151
    %2882 = vmatpush.msra.mxu0 %v2143
    %2883 = vmatpush.msra.mxu0 %v2135
    %2884 = vmatpush.msra.mxu0 %v2127
    %2885 = vmatpush.msra.mxu0 %v2119
    %2886 = vmatpush.msra.mxu0 %v2111
    %2887 = vmatpush.msra.mxu0 %v2103
    %2888 = vmatmul.f32.gmra.mxu0 %v1686
    %v2889 = vpop.f32.mrf.mxu0
    %v2890 = vadd.f32 %v2849, %v2889
    %2891 = vmatmul.f32.gmra.mxu0 %v1690
    %v2892 = vpop.f32.mrf.mxu0
    %v2893 = vadd.f32 %v2852, %v2892
    %2894 = vmatmul.f32.gmra.mxu0 %v1694
    %v2895 = vpop.f32.mrf.mxu0
    %v2896 = vadd.f32 %v2855, %v2895
    %2897 = vmatmul.f32.gmra.mxu0 %v1698
    %v2898 = vpop.f32.mrf.mxu0
    %v2899 = vadd.f32 %v2858, %v2898
    %2900 = vmatmul.f32.gmra.mxu0 %v1702
    %v2901 = vpop.f32.mrf.mxu0
    %v2902 = vadd.f32 %v2861, %v2901
    %2903 = vmatmul.f32.gmra.mxu0 %v1706
    %v2904 = vpop.f32.mrf.mxu0
    %v2905 = vadd.f32 %v2864, %v2904
    %2906 = vmatmul.f32.gmra.mxu0 %v1710
    %v2907 = vpop.f32.mrf.mxu0
    %v2908 = vadd.f32 %v2867, %v2907
    %2909 = vmatmul.f32.gmra.mxu0 %v1714
    %v2910 = vpop.f32.mrf.mxu0
    %v2911 = vadd.f32 %v2870, %v2910
    %2912 = vdwg.mxu0
    %2913 = vmatpush.msra.mxu0 %v2351
    %2914 = vmatpush.msra.mxu0 %v2343
    %2915 = vmatpush.msra.mxu0 %v2335
    %2916 = vmatpush.msra.mxu0 %v2327
    %2917 = vmatpush.msra.mxu0 %v2319
    %2918 = vmatpush.msra.mxu0 %v2311
    %2919 = vmatpush.msra.mxu0 %v2303
    %2920 = vmatpush.msra.mxu0 %v2295
    %2921 = vmatpush.msra.mxu0 %v2287
    %2922 = vmatpush.msra.mxu0 %v2279
    %2923 = vmatpush.msra.mxu0 %v2271
    %2924 = vmatpush.msra.mxu0 %v2263
    %2925 = vmatpush.msra.mxu0 %v2255
    %2926 = vmatpush.msra.mxu0 %v2247
    %2927 = vmatpush.msra.mxu0 %v2239
    %2928 = vmatpush.msra.mxu0 %v2231
    %2929 = vmatmul.f32.gmra.mxu0 %v1687
    %v2930 = vpop.f32.mrf.mxu0
    %v2931 = vadd.f32 %v2890, %v2930
    %2932 = vmatmul.f32.gmra.mxu0 %v1691
    %v2933 = vpop.f32.mrf.mxu0
    %v2934 = vadd.f32 %v2893, %v2933
    %2935 = vmatmul.f32.gmra.mxu0 %v1695
    %v2936 = vpop.f32.mrf.mxu0
    %v2937 = vadd.f32 %v2896, %v2936
    %2938 = vmatmul.f32.gmra.mxu0 %v1699
    %v2939 = vpop.f32.mrf.mxu0
    %v2940 = vadd.f32 %v2899, %v2939
    %2941 = vmatmul.f32.gmra.mxu0 %v1703
    %v2942 = vpop.f32.mrf.mxu0
    %v2943 = vadd.f32 %v2902, %v2942
    %2944 = vmatmul.f32.gmra.mxu0 %v1707
    %v2945 = vpop.f32.mrf.mxu0
    %v2946 = vadd.f32 %v2905, %v2945
    %2947 = vmatmul.f32.gmra.mxu0 %v1711
    %v2948 = vpop.f32.mrf.mxu0
    %v2949 = vadd.f32 %v2908, %v2948
    %2950 = vmatmul.f32.gmra.mxu0 %v1715
    %v2951 = vpop.f32.mrf.mxu0
    %v2952 = vadd.f32 %v2911, %v2951
    %2953 = vdwg.mxu0
    %2954 = vmatpush.msra.mxu0 %v2479
    %2955 = vmatpush.msra.mxu0 %v2471
    %2956 = vmatpush.msra.mxu0 %v2463
    %2957 = vmatpush.msra.mxu0 %v2455
    %2958 = vmatpush.msra.mxu0 %v2447
    %2959 = vmatpush.msra.mxu0 %v2439
    %2960 = vmatpush.msra.mxu0 %v2431
    %2961 = vmatpush.msra.mxu0 %v2423
    %2962 = vmatpush.msra.mxu0 %v2415
    %2963 = vmatpush.msra.mxu0 %v2407
    %2964 = vmatpush.msra.mxu0 %v2399
    %2965 = vmatpush.msra.mxu0 %v2391
    %2966 = vmatpush.msra.mxu0 %v2383
    %2967 = vmatpush.msra.mxu0 %v2375
    %2968 = vmatpush.msra.mxu0 %v2367
    %2969 = vmatpush.msra.mxu0 %v2359
    %2970 = vmatmul.f32.gmra.mxu0 %v1688
    %v2971 = vpop.f32.mrf.mxu0
    %v2972 = vadd.f32 %v2931, %v2971
    %2973 = vmatmul.f32.gmra.mxu0 %v1692
    %v2974 = vpop.f32.mrf.mxu0
    %v2975 = vadd.f32 %v2934, %v2974
    %2976 = vmatmul.f32.gmra.mxu0 %v1696
    %v2977 = vpop.f32.mrf.mxu0
    %v2978 = vadd.f32 %v2937, %v2977
    %2979 = vmatmul.f32.gmra.mxu0 %v1700
    %v2980 = vpop.f32.mrf.mxu0
    %v2981 = vadd.f32 %v2940, %v2980
    %2982 = vmatmul.f32.gmra.mxu0 %v1704
    %v2983 = vpop.f32.mrf.mxu0
    %v2984 = vadd.f32 %v2943, %v2983
    %2985 = vmatmul.f32.gmra.mxu0 %v1708
    %v2986 = vpop.f32.mrf.mxu0
    %v2987 = vadd.f32 %v2946, %v2986
    %2988 = vmatmul.f32.gmra.mxu0 %v1712
    %v2989 = vpop.f32.mrf.mxu0
    %v2990 = vadd.f32 %v2949, %v2989
    %2991 = vmatmul.f32.gmra.mxu0 %v1716
    %v2992 = vpop.f32.mrf.mxu0
    %v2993 = vadd.f32 %v2952, %v2992
    %2994 = vdwg.mxu0
    %2995 = vmatpush.msra.mxu0 %v2096
    %2996 = vmatpush.msra.mxu0 %v2088
    %2997 = vmatpush.msra.mxu0 %v2080
    %2998 = vmatpush.msra.mxu0 %v2072
    %2999 = vmatpush.msra.mxu0 %v2064
    %3000 = vmatpush.msra.mxu0 %v2056
    %3001 = vmatpush.msra.mxu0 %v2048
    %3002 = vmatpush.msra.mxu0 %v2040
    %3003 = vmatpush.msra.mxu0 %v2032
    %3004 = vmatpush.msra.mxu0 %v2024
    %3005 = vmatpush.msra.mxu0 %v2016
    %3006 = vmatpush.msra.mxu0 %v2008
    %3007 = vmatpush.msra.mxu0 %v2000
    %3008 = vmatpush.msra.mxu0 %v1992
    %3009 = vmatpush.msra.mxu0 %v1984
    %3010 = vmatpush.msra.mxu0 %v1976
    %3011 = vmatmul.f32.gmra.mxu0 %v1685
    %v3012 = vpop.f32.mrf.mxu0
    %v3013 = vadd.f32 %v2490, %v3012
    %3014 = vmatmul.f32.gmra.mxu0 %v1689
    %v3015 = vpop.f32.mrf.mxu0
    %v3016 = vadd.f32 %v2490, %v3015
    %3017 = vmatmul.f32.gmra.mxu0 %v1693
    %v3018 = vpop.f32.mrf.mxu0
    %v3019 = vadd.f32 %v2490, %v3018
    %3020 = vmatmul.f32.gmra.mxu0 %v1697
    %v3021 = vpop.f32.mrf.mxu0
    %v3022 = vadd.f32 %v2490, %v3021
    %3023 = vmatmul.f32.gmra.mxu0 %v1701
    %v3024 = vpop.f32.mrf.mxu0
    %v3025 = vadd.f32 %v2490, %v3024
    %3026 = vmatmul.f32.gmra.mxu0 %v1705
    %v3027 = vpop.f32.mrf.mxu0
    %v3028 = vadd.f32 %v2490, %v3027
    %3029 = vmatmul.f32.gmra.mxu0 %v1709
    %v3030 = vpop.f32.mrf.mxu0
    %v3031 = vadd.f32 %v2490, %v3030
    %3032 = vmatmul.f32.gmra.mxu0 %v1713
    %v3033 = vpop.f32.mrf.mxu0
    %v3034 = vadd.f32 %v2490, %v3033
    %3035 = vdwg.mxu0
    %3036 = vmatpush.msra.mxu0 %v2224
    %3037 = vmatpush.msra.mxu0 %v2216
    %3038 = vmatpush.msra.mxu0 %v2208
    %3039 = vmatpush.msra.mxu0 %v2200
    %3040 = vmatpush.msra.mxu0 %v2192
    %3041 = vmatpush.msra.mxu0 %v2184
    %3042 = vmatpush.msra.mxu0 %v2176
    %3043 = vmatpush.msra.mxu0 %v2168
    %3044 = vmatpush.msra.mxu0 %v2160
    %3045 = vmatpush.msra.mxu0 %v2152
    %3046 = vmatpush.msra.mxu0 %v2144
    %3047 = vmatpush.msra.mxu0 %v2136
    %3048 = vmatpush.msra.mxu0 %v2128
    %3049 = vmatpush.msra.mxu0 %v2120
    %3050 = vmatpush.msra.mxu0 %v2112
    %3051 = vmatpush.msra.mxu0 %v2104
    %3052 = vmatmul.f32.gmra.mxu0 %v1686
    %v3053 = vpop.f32.mrf.mxu0
    %v3054 = vadd.f32 %v3013, %v3053
    %3055 = vmatmul.f32.gmra.mxu0 %v1690
    %v3056 = vpop.f32.mrf.mxu0
    %v3057 = vadd.f32 %v3016, %v3056
    %3058 = vmatmul.f32.gmra.mxu0 %v1694
    %v3059 = vpop.f32.mrf.mxu0
    %v3060 = vadd.f32 %v3019, %v3059
    %3061 = vmatmul.f32.gmra.mxu0 %v1698
    %v3062 = vpop.f32.mrf.mxu0
    %v3063 = vadd.f32 %v3022, %v3062
    %3064 = vmatmul.f32.gmra.mxu0 %v1702
    %v3065 = vpop.f32.mrf.mxu0
    %v3066 = vadd.f32 %v3025, %v3065
    %3067 = vmatmul.f32.gmra.mxu0 %v1706
    %v3068 = vpop.f32.mrf.mxu0
    %v3069 = vadd.f32 %v3028, %v3068
    %3070 = vmatmul.f32.gmra.mxu0 %v1710
    %v3071 = vpop.f32.mrf.mxu0
    %v3072 = vadd.f32 %v3031, %v3071
    %3073 = vmatmul.f32.gmra.mxu0 %v1714
    %v3074 = vpop.f32.mrf.mxu0
    %v3075 = vadd.f32 %v3034, %v3074
    %3076 = vdwg.mxu0
    %3077 = vmatpush.msra.mxu0 %v2352
    %3078 = vmatpush.msra.mxu0 %v2344
    %3079 = vmatpush.msra.mxu0 %v2336
    %3080 = vmatpush.msra.mxu0 %v2328
    %3081 = vmatpush.msra.mxu0 %v2320
    %3082 = vmatpush.msra.mxu0 %v2312
    %3083 = vmatpush.msra.mxu0 %v2304
    %3084 = vmatpush.msra.mxu0 %v2296
    %3085 = vmatpush.msra.mxu0 %v2288
    %3086 = vmatpush.msra.mxu0 %v2280
    %3087 = vmatpush.msra.mxu0 %v2272
    %3088 = vmatpush.msra.mxu0 %v2264
    %3089 = vmatpush.msra.mxu0 %v2256
    %3090 = vmatpush.msra.mxu0 %v2248
    %3091 = vmatpush.msra.mxu0 %v2240
    %3092 = vmatpush.msra.mxu0 %v2232
    %3093 = vmatmul.f32.gmra.mxu0 %v1687
    %v3094 = vpop.f32.mrf.mxu0
    %v3095 = vadd.f32 %v3054, %v3094
    %3096 = vmatmul.f32.gmra.mxu0 %v1691
    %v3097 = vpop.f32.mrf.mxu0
    %v3098 = vadd.f32 %v3057, %v3097
    %3099 = vmatmul.f32.gmra.mxu0 %v1695
    %v3100 = vpop.f32.mrf.mxu0
    %v3101 = vadd.f32 %v3060, %v3100
    %3102 = vmatmul.f32.gmra.mxu0 %v1699
    %v3103 = vpop.f32.mrf.mxu0
    %v3104 = vadd.f32 %v3063, %v3103
    %3105 = vmatmul.f32.gmra.mxu0 %v1703
    %v3106 = vpop.f32.mrf.mxu0
    %v3107 = vadd.f32 %v3066, %v3106
    %3108 = vmatmul.f32.gmra.mxu0 %v1707
    %v3109 = vpop.f32.mrf.mxu0
    %v3110 = vadd.f32 %v3069, %v3109
    %3111 = vmatmul.f32.gmra.mxu0 %v1711
    %v3112 = vpop.f32.mrf.mxu0
    %v3113 = vadd.f32 %v3072, %v3112
    %3114 = vmatmul.f32.gmra.mxu0 %v1715
    %v3115 = vpop.f32.mrf.mxu0
    %v3116 = vadd.f32 %v3075, %v3115
    %3117 = vdwg.mxu0
    %3118 = vmatpush.msra.mxu0 %v2480
    %3119 = vmatpush.msra.mxu0 %v2472
    %3120 = vmatpush.msra.mxu0 %v2464
    %3121 = vmatpush.msra.mxu0 %v2456
    %3122 = vmatpush.msra.mxu0 %v2448
    %3123 = vmatpush.msra.mxu0 %v2440
    %3124 = vmatpush.msra.mxu0 %v2432
    %3125 = vmatpush.msra.mxu0 %v2424
    %3126 = vmatpush.msra.mxu0 %v2416
    %3127 = vmatpush.msra.mxu0 %v2408
    %3128 = vmatpush.msra.mxu0 %v2400
    %3129 = vmatpush.msra.mxu0 %v2392
    %3130 = vmatpush.msra.mxu0 %v2384
    %3131 = vmatpush.msra.mxu0 %v2376
    %3132 = vmatpush.msra.mxu0 %v2368
    %3133 = vmatpush.msra.mxu0 %v2360
    %3134 = vmatmul.f32.gmra.mxu0 %v1688
    %v3135 = vpop.f32.mrf.mxu0
    %v3136 = vadd.f32 %v3095, %v3135
    %3137 = vmatmul.f32.gmra.mxu0 %v1692
    %v3138 = vpop.f32.mrf.mxu0
    %v3139 = vadd.f32 %v3098, %v3138
    %3140 = vmatmul.f32.gmra.mxu0 %v1696
    %v3141 = vpop.f32.mrf.mxu0
    %v3142 = vadd.f32 %v3101, %v3141
    %3143 = vmatmul.f32.gmra.mxu0 %v1700
    %v3144 = vpop.f32.mrf.mxu0
    %v3145 = vadd.f32 %v3104, %v3144
    %3146 = vmatmul.f32.gmra.mxu0 %v1704
    %v3147 = vpop.f32.mrf.mxu0
    %v3148 = vadd.f32 %v3107, %v3147
    %3149 = vmatmul.f32.gmra.mxu0 %v1708
    %v3150 = vpop.f32.mrf.mxu0
    %v3151 = vadd.f32 %v3110, %v3150
    %3152 = vmatmul.f32.gmra.mxu0 %v1712
    %v3153 = vpop.f32.mrf.mxu0
    %v3154 = vadd.f32 %v3113, %v3153
    %3155 = vmatmul.f32.gmra.mxu0 %v1716
    %v3156 = vpop.f32.mrf.mxu0
    %v3157 = vadd.f32 %v3116, %v3156
    %3158 = vdwg.mxu0
    %3159 = vmatpush.msra.mxu0 %v2097
    %3160 = vmatpush.msra.mxu0 %v2089
    %3161 = vmatpush.msra.mxu0 %v2081
    %3162 = vmatpush.msra.mxu0 %v2073
    %3163 = vmatpush.msra.mxu0 %v2065
    %3164 = vmatpush.msra.mxu0 %v2057
    %3165 = vmatpush.msra.mxu0 %v2049
    %3166 = vmatpush.msra.mxu0 %v2041
    %3167 = vmatpush.msra.mxu0 %v2033
    %3168 = vmatpush.msra.mxu0 %v2025
    %3169 = vmatpush.msra.mxu0 %v2017
    %3170 = vmatpush.msra.mxu0 %v2009
    %3171 = vmatpush.msra.mxu0 %v2001
    %3172 = vmatpush.msra.mxu0 %v1993
    %3173 = vmatpush.msra.mxu0 %v1985
    %3174 = vmatpush.msra.mxu0 %v1977
    %3175 = vmatmul.f32.gmra.mxu0 %v1685
    %v3176 = vpop.f32.mrf.mxu0
    %v3177 = vadd.f32 %v2491, %v3176
    %3178 = vmatmul.f32.gmra.mxu0 %v1689
    %v3179 = vpop.f32.mrf.mxu0
    %v3180 = vadd.f32 %v2491, %v3179
    %3181 = vmatmul.f32.gmra.mxu0 %v1693
    %v3182 = vpop.f32.mrf.mxu0
    %v3183 = vadd.f32 %v2491, %v3182
    %3184 = vmatmul.f32.gmra.mxu0 %v1697
    %v3185 = vpop.f32.mrf.mxu0
    %v3186 = vadd.f32 %v2491, %v3185
    %3187 = vmatmul.f32.gmra.mxu0 %v1701
    %v3188 = vpop.f32.mrf.mxu0
    %v3189 = vadd.f32 %v2491, %v3188
    %3190 = vmatmul.f32.gmra.mxu0 %v1705
    %v3191 = vpop.f32.mrf.mxu0
    %v3192 = vadd.f32 %v2491, %v3191
    %3193 = vmatmul.f32.gmra.mxu0 %v1709
    %v3194 = vpop.f32.mrf.mxu0
    %v3195 = vadd.f32 %v2491, %v3194
    %3196 = vmatmul.f32.gmra.mxu0 %v1713
    %v3197 = vpop.f32.mrf.mxu0
    %v3198 = vadd.f32 %v2491, %v3197
    %3199 = vdwg.mxu0
    %3200 = vmatpush.msra.mxu0 %v2225
    %3201 = vmatpush.msra.mxu0 %v2217
    %3202 = vmatpush.msra.mxu0 %v2209
    %3203 = vmatpush.msra.mxu0 %v2201
    %3204 = vmatpush.msra.mxu0 %v2193
    %3205 = vmatpush.msra.mxu0 %v2185
    %3206 = vmatpush.msra.mxu0 %v2177
    %3207 = vmatpush.msra.mxu0 %v2169
    %3208 = vmatpush.msra.mxu0 %v2161
    %3209 = vmatpush.msra.mxu0 %v2153
    %3210 = vmatpush.msra.mxu0 %v2145
    %3211 = vmatpush.msra.mxu0 %v2137
    %3212 = vmatpush.msra.mxu0 %v2129
    %3213 = vmatpush.msra.mxu0 %v2121
    %3214 = vmatpush.msra.mxu0 %v2113
    %3215 = vmatpush.msra.mxu0 %v2105
    %3216 = vmatmul.f32.gmra.mxu0 %v1686
    %v3217 = vpop.f32.mrf.mxu0
    %v3218 = vadd.f32 %v3177, %v3217
    %3219 = vmatmul.f32.gmra.mxu0 %v1690
    %v3220 = vpop.f32.mrf.mxu0
    %v3221 = vadd.f32 %v3180, %v3220
    %3222 = vmatmul.f32.gmra.mxu0 %v1694
    %v3223 = vpop.f32.mrf.mxu0
    %v3224 = vadd.f32 %v3183, %v3223
    %3225 = vmatmul.f32.gmra.mxu0 %v1698
    %v3226 = vpop.f32.mrf.mxu0
    %v3227 = vadd.f32 %v3186, %v3226
    %3228 = vmatmul.f32.gmra.mxu0 %v1702
    %v3229 = vpop.f32.mrf.mxu0
    %v3230 = vadd.f32 %v3189, %v3229
    %3231 = vmatmul.f32.gmra.mxu0 %v1706
    %v3232 = vpop.f32.mrf.mxu0
    %v3233 = vadd.f32 %v3192, %v3232
    %3234 = vmatmul.f32.gmra.mxu0 %v1710
    %v3235 = vpop.f32.mrf.mxu0
    %v3236 = vadd.f32 %v3195, %v3235
    %3237 = vmatmul.f32.gmra.mxu0 %v1714
    %v3238 = vpop.f32.mrf.mxu0
    %v3239 = vadd.f32 %v3198, %v3238
    %3240 = vdwg.mxu0
    %3241 = vmatpush.msra.mxu0 %v2353
    %3242 = vmatpush.msra.mxu0 %v2345
    %3243 = vmatpush.msra.mxu0 %v2337
    %3244 = vmatpush.msra.mxu0 %v2329
    %3245 = vmatpush.msra.mxu0 %v2321
    %3246 = vmatpush.msra.mxu0 %v2313
    %3247 = vmatpush.msra.mxu0 %v2305
    %3248 = vmatpush.msra.mxu0 %v2297
    %3249 = vmatpush.msra.mxu0 %v2289
    %3250 = vmatpush.msra.mxu0 %v2281
    %3251 = vmatpush.msra.mxu0 %v2273
    %3252 = vmatpush.msra.mxu0 %v2265
    %3253 = vmatpush.msra.mxu0 %v2257
    %3254 = vmatpush.msra.mxu0 %v2249
    %3255 = vmatpush.msra.mxu0 %v2241
    %3256 = vmatpush.msra.mxu0 %v2233
    %3257 = vmatmul.f32.gmra.mxu0 %v1687
    %v3258 = vpop.f32.mrf.mxu0
    %v3259 = vadd.f32 %v3218, %v3258
    %3260 = vmatmul.f32.gmra.mxu0 %v1691
    %v3261 = vpop.f32.mrf.mxu0
    %v3262 = vadd.f32 %v3221, %v3261
    %3263 = vmatmul.f32.gmra.mxu0 %v1695
    %v3264 = vpop.f32.mrf.mxu0
    %v3265 = vadd.f32 %v3224, %v3264
    %3266 = vmatmul.f32.gmra.mxu0 %v1699
    %v3267 = vpop.f32.mrf.mxu0
    %v3268 = vadd.f32 %v3227, %v3267
    %3269 = vmatmul.f32.gmra.mxu0 %v1703
    %v3270 = vpop.f32.mrf.mxu0
    %v3271 = vadd.f32 %v3230, %v3270
    %3272 = vmatmul.f32.gmra.mxu0 %v1707
    %v3273 = vpop.f32.mrf.mxu0
    %v3274 = vadd.f32 %v3233, %v3273
    %3275 = vmatmul.f32.gmra.mxu0 %v1711
    %v3276 = vpop.f32.mrf.mxu0
    %v3277 = vadd.f32 %v3236, %v3276
    %3278 = vmatmul.f32.gmra.mxu0 %v1715
    %v3279 = vpop.f32.mrf.mxu0
    %v3280 = vadd.f32 %v3239, %v3279
    %3281 = vdwg.mxu0
    %3282 = vmatpush.msra.mxu0 %v2481
    %3283 = vmatpush.msra.mxu0 %v2473
    %3284 = vmatpush.msra.mxu0 %v2465
    %3285 = vmatpush.msra.mxu0 %v2457
    %3286 = vmatpush.msra.mxu0 %v2449
    %3287 = vmatpush.msra.mxu0 %v2441
    %3288 = vmatpush.msra.mxu0 %v2433
    %3289 = vmatpush.msra.mxu0 %v2425
    %3290 = vmatpush.msra.mxu0 %v2417
    %3291 = vmatpush.msra.mxu0 %v2409
    %3292 = vmatpush.msra.mxu0 %v2401
    %3293 = vmatpush.msra.mxu0 %v2393
    %3294 = vmatpush.msra.mxu0 %v2385
    %3295 = vmatpush.msra.mxu0 %v2377
    %3296 = vmatpush.msra.mxu0 %v2369
    %3297 = vmatpush.msra.mxu0 %v2361
    %3298 = vmatmul.f32.gmra.mxu0 %v1688
    %v3299 = vpop.f32.mrf.mxu0
    %v3300 = vadd.f32 %v3259, %v3299
    %3301 = vmatmul.f32.gmra.mxu0 %v1692
    %v3302 = vpop.f32.mrf.mxu0
    %v3303 = vadd.f32 %v3262, %v3302
    %3304 = vmatmul.f32.gmra.mxu0 %v1696
    %v3305 = vpop.f32.mrf.mxu0
    %v3306 = vadd.f32 %v3265, %v3305
    %3307 = vmatmul.f32.gmra.mxu0 %v1700
    %v3308 = vpop.f32.mrf.mxu0
    %v3309 = vadd.f32 %v3268, %v3308
    %3310 = vmatmul.f32.gmra.mxu0 %v1704
    %v3311 = vpop.f32.mrf.mxu0
    %v3312 = vadd.f32 %v3271, %v3311
    %3313 = vmatmul.f32.gmra.mxu0 %v1708
    %v3314 = vpop.f32.mrf.mxu0
    %v3315 = vadd.f32 %v3274, %v3314
    %3316 = vmatmul.f32.gmra.mxu0 %v1712
    %v3317 = vpop.f32.mrf.mxu0
    %v3318 = vadd.f32 %v3277, %v3317
    %3319 = vmatmul.f32.gmra.mxu0 %v1716
    %v3320 = vpop.f32.mrf.mxu0
    %v3321 = vadd.f32 %v3280, %v3320
    %3322 = vdwg.mxu0
    %3323 = vmatpush.msra.mxu0 %v2098
    %3324 = vmatpush.msra.mxu0 %v2090
    %3325 = vmatpush.msra.mxu0 %v2082
    %3326 = vmatpush.msra.mxu0 %v2074
    %3327 = vmatpush.msra.mxu0 %v2066
    %3328 = vmatpush.msra.mxu0 %v2058
    %3329 = vmatpush.msra.mxu0 %v2050
    %3330 = vmatpush.msra.mxu0 %v2042
    %3331 = vmatpush.msra.mxu0 %v2034
    %3332 = vmatpush.msra.mxu0 %v2026
    %3333 = vmatpush.msra.mxu0 %v2018
    %3334 = vmatpush.msra.mxu0 %v2010
    %3335 = vmatpush.msra.mxu0 %v2002
    %3336 = vmatpush.msra.mxu0 %v1994
    %3337 = vmatpush.msra.mxu0 %v1986
    %3338 = vmatpush.msra.mxu0 %v1978
    %3339 = vmatmul.f32.gmra.mxu0 %v1685
    %v3340 = vpop.f32.mrf.mxu0
    %v3341 = vadd.f32 %v2492, %v3340
    %3342 = vmatmul.f32.gmra.mxu0 %v1689
    %v3343 = vpop.f32.mrf.mxu0
    %v3344 = vadd.f32 %v2492, %v3343
    %3345 = vmatmul.f32.gmra.mxu0 %v1693
    %v3346 = vpop.f32.mrf.mxu0
    %v3347 = vadd.f32 %v2492, %v3346
    %3348 = vmatmul.f32.gmra.mxu0 %v1697
    %v3349 = vpop.f32.mrf.mxu0
    %v3350 = vadd.f32 %v2492, %v3349
    %3351 = vmatmul.f32.gmra.mxu0 %v1701
    %v3352 = vpop.f32.mrf.mxu0
    %v3353 = vadd.f32 %v2492, %v3352
    %3354 = vmatmul.f32.gmra.mxu0 %v1705
    %v3355 = vpop.f32.mrf.mxu0
    %v3356 = vadd.f32 %v2492, %v3355
    %3357 = vmatmul.f32.gmra.mxu0 %v1709
    %v3358 = vpop.f32.mrf.mxu0
    %v3359 = vadd.f32 %v2492, %v3358
    %3360 = vmatmul.f32.gmra.mxu0 %v1713
    %v3361 = vpop.f32.mrf.mxu0
    %v3362 = vadd.f32 %v2492, %v3361
    %3363 = vdwg.mxu0
    %3364 = vmatpush.msra.mxu0 %v2226
    %3365 = vmatpush.msra.mxu0 %v2218
    %3366 = vmatpush.msra.mxu0 %v2210
    %3367 = vmatpush.msra.mxu0 %v2202
    %3368 = vmatpush.msra.mxu0 %v2194
    %3369 = vmatpush.msra.mxu0 %v2186
    %3370 = vmatpush.msra.mxu0 %v2178
    %3371 = vmatpush.msra.mxu0 %v2170
    %3372 = vmatpush.msra.mxu0 %v2162
    %3373 = vmatpush.msra.mxu0 %v2154
    %3374 = vmatpush.msra.mxu0 %v2146
    %3375 = vmatpush.msra.mxu0 %v2138
    %3376 = vmatpush.msra.mxu0 %v2130
    %3377 = vmatpush.msra.mxu0 %v2122
    %3378 = vmatpush.msra.mxu0 %v2114
    %3379 = vmatpush.msra.mxu0 %v2106
    %3380 = vmatmul.f32.gmra.mxu0 %v1686
    %v3381 = vpop.f32.mrf.mxu0
    %v3382 = vadd.f32 %v3341, %v3381
    %3383 = vmatmul.f32.gmra.mxu0 %v1690
    %v3384 = vpop.f32.mrf.mxu0
    %v3385 = vadd.f32 %v3344, %v3384
    %3386 = vmatmul.f32.gmra.mxu0 %v1694
    %v3387 = vpop.f32.mrf.mxu0
    %v3388 = vadd.f32 %v3347, %v3387
    %3389 = vmatmul.f32.gmra.mxu0 %v1698
    %v3390 = vpop.f32.mrf.mxu0
    %v3391 = vadd.f32 %v3350, %v3390
    %3392 = vmatmul.f32.gmra.mxu0 %v1702
    %v3393 = vpop.f32.mrf.mxu0
    %v3394 = vadd.f32 %v3353, %v3393
    %3395 = vmatmul.f32.gmra.mxu0 %v1706
    %v3396 = vpop.f32.mrf.mxu0
    %v3397 = vadd.f32 %v3356, %v3396
    %3398 = vmatmul.f32.gmra.mxu0 %v1710
    %v3399 = vpop.f32.mrf.mxu0
    %v3400 = vadd.f32 %v3359, %v3399
    %3401 = vmatmul.f32.gmra.mxu0 %v1714
    %v3402 = vpop.f32.mrf.mxu0
    %v3403 = vadd.f32 %v3362, %v3402
    %3404 = vdwg.mxu0
    %3405 = vmatpush.msra.mxu0 %v2354
    %3406 = vmatpush.msra.mxu0 %v2346
    %3407 = vmatpush.msra.mxu0 %v2338
    %3408 = vmatpush.msra.mxu0 %v2330
    %3409 = vmatpush.msra.mxu0 %v2322
    %3410 = vmatpush.msra.mxu0 %v2314
    %3411 = vmatpush.msra.mxu0 %v2306
    %3412 = vmatpush.msra.mxu0 %v2298
    %3413 = vmatpush.msra.mxu0 %v2290
    %3414 = vmatpush.msra.mxu0 %v2282
    %3415 = vmatpush.msra.mxu0 %v2274
    %3416 = vmatpush.msra.mxu0 %v2266
    %3417 = vmatpush.msra.mxu0 %v2258
    %3418 = vmatpush.msra.mxu0 %v2250
    %3419 = vmatpush.msra.mxu0 %v2242
    %3420 = vmatpush.msra.mxu0 %v2234
    %3421 = vmatmul.f32.gmra.mxu0 %v1687
    %v3422 = vpop.f32.mrf.mxu0
    %v3423 = vadd.f32 %v3382, %v3422
    %3424 = vmatmul.f32.gmra.mxu0 %v1691
    %v3425 = vpop.f32.mrf.mxu0
    %v3426 = vadd.f32 %v3385, %v3425
    %3427 = vmatmul.f32.gmra.mxu0 %v1695
    %v3428 = vpop.f32.mrf.mxu0
    %v3429 = vadd.f32 %v3388, %v3428
    %3430 = vmatmul.f32.gmra.mxu0 %v1699
    %v3431 = vpop.f32.mrf.mxu0
    %v3432 = vadd.f32 %v3391, %v3431
    %3433 = vmatmul.f32.gmra.mxu0 %v1703
    %v3434 = vpop.f32.mrf.mxu0
    %v3435 = vadd.f32 %v3394, %v3434
    %3436 = vmatmul.f32.gmra.mxu0 %v1707
    %v3437 = vpop.f32.mrf.mxu0
    %v3438 = vadd.f32 %v3397, %v3437
    %3439 = vmatmul.f32.gmra.mxu0 %v1711
    %v3440 = vpop.f32.mrf.mxu0
    %v3441 = vadd.f32 %v3400, %v3440
    %3442 = vmatmul.f32.gmra.mxu0 %v1715
    %v3443 = vpop.f32.mrf.mxu0
    %v3444 = vadd.f32 %v3403, %v3443
    %3445 = vdwg.mxu0
    %3446 = vmatpush.msra.mxu0 %v2482
    %3447 = vmatpush.msra.mxu0 %v2474
    %3448 = vmatpush.msra.mxu0 %v2466
    %3449 = vmatpush.msra.mxu0 %v2458
    %3450 = vmatpush.msra.mxu0 %v2450
    %3451 = vmatpush.msra.mxu0 %v2442
    %3452 = vmatpush.msra.mxu0 %v2434
    %3453 = vmatpush.msra.mxu0 %v2426
    %3454 = vmatpush.msra.mxu0 %v2418
    %3455 = vmatpush.msra.mxu0 %v2410
    %3456 = vmatpush.msra.mxu0 %v2402
    %3457 = vmatpush.msra.mxu0 %v2394
    %3458 = vmatpush.msra.mxu0 %v2386
    %3459 = vmatpush.msra.mxu0 %v2378
    %3460 = vmatpush.msra.mxu0 %v2370
    %3461 = vmatpush.msra.mxu0 %v2362
    %3462 = vmatmul.f32.gmra.mxu0 %v1688
    %v3463 = vpop.f32.mrf.mxu0
    %v3464 = vadd.f32 %v3423, %v3463
    %3465 = vmatmul.f32.gmra.mxu0 %v1692
    %v3466 = vpop.f32.mrf.mxu0
    %v3467 = vadd.f32 %v3426, %v3466
    %3468 = vmatmul.f32.gmra.mxu0 %v1696
    %v3469 = vpop.f32.mrf.mxu0
    %v3470 = vadd.f32 %v3429, %v3469
    %3471 = vmatmul.f32.gmra.mxu0 %v1700
    %v3472 = vpop.f32.mrf.mxu0
    %v3473 = vadd.f32 %v3432, %v3472
    %3474 = vmatmul.f32.gmra.mxu0 %v1704
    %v3475 = vpop.f32.mrf.mxu0
    %v3476 = vadd.f32 %v3435, %v3475
    %3477 = vmatmul.f32.gmra.mxu0 %v1708
    %v3478 = vpop.f32.mrf.mxu0
    %v3479 = vadd.f32 %v3438, %v3478
    %3480 = vmatmul.f32.gmra.mxu0 %v1712
    %v3481 = vpop.f32.mrf.mxu0
    %v3482 = vadd.f32 %v3441, %v3481
    %3483 = vmatmul.f32.gmra.mxu0 %v1716
    %v3484 = vpop.f32.mrf.mxu0
    %v3485 = vadd.f32 %v3444, %v3484
    %3486 = vdwg.mxu0
    %3487 = vmatpush.msra.mxu0 %v2099
    %3488 = vmatpush.msra.mxu0 %v2091
    %3489 = vmatpush.msra.mxu0 %v2083
    %3490 = vmatpush.msra.mxu0 %v2075
    %3491 = vmatpush.msra.mxu0 %v2067
    %3492 = vmatpush.msra.mxu0 %v2059
    %3493 = vmatpush.msra.mxu0 %v2051
    %3494 = vmatpush.msra.mxu0 %v2043
    %3495 = vmatpush.msra.mxu0 %v2035
    %3496 = vmatpush.msra.mxu0 %v2027
    %3497 = vmatpush.msra.mxu0 %v2019
    %3498 = vmatpush.msra.mxu0 %v2011
    %3499 = vmatpush.msra.mxu0 %v2003
    %3500 = vmatpush.msra.mxu0 %v1995
    %3501 = vmatpush.msra.mxu0 %v1987
    %3502 = vmatpush.msra.mxu0 %v1979
    %3503 = vmatmul.f32.gmra.mxu0 %v1685
    %v3504 = vpop.f32.mrf.mxu0
    %v3505 = vadd.f32 %v2493, %v3504
    %3506 = vmatmul.f32.gmra.mxu0 %v1689
    %v3507 = vpop.f32.mrf.mxu0
    %v3508 = vadd.f32 %v2493, %v3507
    %3509 = vmatmul.f32.gmra.mxu0 %v1693
    %v3510 = vpop.f32.mrf.mxu0
    %v3511 = vadd.f32 %v2493, %v3510
    %3512 = vmatmul.f32.gmra.mxu0 %v1697
    %v3513 = vpop.f32.mrf.mxu0
    %v3514 = vadd.f32 %v2493, %v3513
    %3515 = vmatmul.f32.gmra.mxu0 %v1701
    %v3516 = vpop.f32.mrf.mxu0
    %v3517 = vadd.f32 %v2493, %v3516
    %3518 = vmatmul.f32.gmra.mxu0 %v1705
    %v3519 = vpop.f32.mrf.mxu0
    %v3520 = vadd.f32 %v2493, %v3519
    %3521 = vmatmul.f32.gmra.mxu0 %v1709
    %v3522 = vpop.f32.mrf.mxu0
    %v3523 = vadd.f32 %v2493, %v3522
    %3524 = vmatmul.f32.gmra.mxu0 %v1713
    %v3525 = vpop.f32.mrf.mxu0
    %v3526 = vadd.f32 %v2493, %v3525
    %3527 = vdwg.mxu0
    %3528 = vmatpush.msra.mxu0 %v2227
    %3529 = vmatpush.msra.mxu0 %v2219
    %3530 = vmatpush.msra.mxu0 %v2211
    %3531 = vmatpush.msra.mxu0 %v2203
    %3532 = vmatpush.msra.mxu0 %v2195
    %3533 = vmatpush.msra.mxu0 %v2187
    %3534 = vmatpush.msra.mxu0 %v2179
    %3535 = vmatpush.msra.mxu0 %v2171
    %3536 = vmatpush.msra.mxu0 %v2163
    %3537 = vmatpush.msra.mxu0 %v2155
    %3538 = vmatpush.msra.mxu0 %v2147
    %3539 = vmatpush.msra.mxu0 %v2139
    %3540 = vmatpush.msra.mxu0 %v2131
    %3541 = vmatpush.msra.mxu0 %v2123
    %3542 = vmatpush.msra.mxu0 %v2115
    %3543 = vmatpush.msra.mxu0 %v2107
    %3544 = vmatmul.f32.gmra.mxu0 %v1686
    %v3545 = vpop.f32.mrf.mxu0
    %v3546 = vadd.f32 %v3505, %v3545
    %3547 = vmatmul.f32.gmra.mxu0 %v1690
    %v3548 = vpop.f32.mrf.mxu0
    %v3549 = vadd.f32 %v3508, %v3548
    %3550 = vmatmul.f32.gmra.mxu0 %v1694
    %v3551 = vpop.f32.mrf.mxu0
    %v3552 = vadd.f32 %v3511, %v3551
    %3553 = vmatmul.f32.gmra.mxu0 %v1698
    %v3554 = vpop.f32.mrf.mxu0
    %v3555 = vadd.f32 %v3514, %v3554
    %3556 = vmatmul.f32.gmra.mxu0 %v1702
    %v3557 = vpop.f32.mrf.mxu0
    %v3558 = vadd.f32 %v3517, %v3557
    %3559 = vmatmul.f32.gmra.mxu0 %v1706
    %v3560 = vpop.f32.mrf.mxu0
    %v3561 = vadd.f32 %v3520, %v3560
    %3562 = vmatmul.f32.gmra.mxu0 %v1710
    %v3563 = vpop.f32.mrf.mxu0
    %v3564 = vadd.f32 %v3523, %v3563
    %3565 = vmatmul.f32.gmra.mxu0 %v1714
    %v3566 = vpop.f32.mrf.mxu0
    %v3567 = vadd.f32 %v3526, %v3566
    %3568 = vdwg.mxu0
    %3569 = vmatpush.msra.mxu0 %v2355
    %3570 = vmatpush.msra.mxu0 %v2347
    %3571 = vmatpush.msra.mxu0 %v2339
    %3572 = vmatpush.msra.mxu0 %v2331
    %3573 = vmatpush.msra.mxu0 %v2323
    %3574 = vmatpush.msra.mxu0 %v2315
    %3575 = vmatpush.msra.mxu0 %v2307
    %3576 = vmatpush.msra.mxu0 %v2299
    %3577 = vmatpush.msra.mxu0 %v2291
    %3578 = vmatpush.msra.mxu0 %v2283
    %3579 = vmatpush.msra.mxu0 %v2275
    %3580 = vmatpush.msra.mxu0 %v2267
    %3581 = vmatpush.msra.mxu0 %v2259
    %3582 = vmatpush.msra.mxu0 %v2251
    %3583 = vmatpush.msra.mxu0 %v2243
    %3584 = vmatpush.msra.mxu0 %v2235
    %3585 = vmatmul.f32.gmra.mxu0 %v1687
    %v3586 = vpop.f32.mrf.mxu0
    %v3587 = vadd.f32 %v3546, %v3586
    %3588 = vmatmul.f32.gmra.mxu0 %v1691
    %v3589 = vpop.f32.mrf.mxu0
    %v3590 = vadd.f32 %v3549, %v3589
    %3591 = vmatmul.f32.gmra.mxu0 %v1695
    %v3592 = vpop.f32.mrf.mxu0
    %v3593 = vadd.f32 %v3552, %v3592
    %3594 = vmatmul.f32.gmra.mxu0 %v1699
    %v3595 = vpop.f32.mrf.mxu0
    %v3596 = vadd.f32 %v3555, %v3595
    %3597 = vmatmul.f32.gmra.mxu0 %v1703
    %v3598 = vpop.f32.mrf.mxu0
    %v3599 = vadd.f32 %v3558, %v3598
    %3600 = vmatmul.f32.gmra.mxu0 %v1707
    %v3601 = vpop.f32.mrf.mxu0
    %v3602 = vadd.f32 %v3561, %v3601
    %3603 = vmatmul.f32.gmra.mxu0 %v1711
    %v3604 = vpop.f32.mrf.mxu0
    %v3605 = vadd.f32 %v3564, %v3604
    %3606 = vmatmul.f32.gmra.mxu0 %v1715
    %v3607 = vpop.f32.mrf.mxu0
    %v3608 = vadd.f32 %v3567, %v3607
    %3609 = vdwg.mxu0
    %3610 = vmatpush.msra.mxu0 %v2483
    %3611 = vmatpush.msra.mxu0 %v2475
    %3612 = vmatpush.msra.mxu0 %v2467
    %3613 = vmatpush.msra.mxu0 %v2459
    %3614 = vmatpush.msra.mxu0 %v2451
    %3615 = vmatpush.msra.mxu0 %v2443
    %3616 = vmatpush.msra.mxu0 %v2435
    %3617 = vmatpush.msra.mxu0 %v2427
    %3618 = vmatpush.msra.mxu0 %v2419
    %3619 = vmatpush.msra.mxu0 %v2411
    %3620 = vmatpush.msra.mxu0 %v2403
    %3621 = vmatpush.msra.mxu0 %v2395
    %3622 = vmatpush.msra.mxu0 %v2387
    %3623 = vmatpush.msra.mxu0 %v2379
    %3624 = vmatpush.msra.mxu0 %v2371
    %3625 = vmatpush.msra.mxu0 %v2363
    %3626 = vmatmul.f32.gmra.mxu0 %v1688
    %v3627 = vpop.f32.mrf.mxu0
    %v3628 = vadd.f32 %v3587, %v3627
    %3629 = vmatmul.f32.gmra.mxu0 %v1692
    %v3630 = vpop.f32.mrf.mxu0
    %v3631 = vadd.f32 %v3590, %v3630
    %3632 = vmatmul.f32.gmra.mxu0 %v1696
    %v3633 = vpop.f32.mrf.mxu0
    %v3634 = vadd.f32 %v3593, %v3633
    %3635 = vmatmul.f32.gmra.mxu0 %v1700
    %v3636 = vpop.f32.mrf.mxu0
    %v3637 = vadd.f32 %v3596, %v3636
    %3638 = vmatmul.f32.gmra.mxu0 %v1704
    %v3639 = vpop.f32.mrf.mxu0
    %v3640 = vadd.f32 %v3599, %v3639
    %3641 = vmatmul.f32.gmra.mxu0 %v1708
    %v3642 = vpop.f32.mrf.mxu0
    %v3643 = vadd.f32 %v3602, %v3642
    %3644 = vmatmul.f32.gmra.mxu0 %v1712
    %v3645 = vpop.f32.mrf.mxu0
    %v3646 = vadd.f32 %v3605, %v3645
    %3647 = vmatmul.f32.gmra.mxu0 %v1716
    %v3648 = vpop.f32.mrf.mxu0
    %v3649 = vadd.f32 %v3608, %v3648
    %3650 = vdwg.mxu0
    %3651 = vmatpush.msra.mxu0 %v2100
    %3652 = vmatpush.msra.mxu0 %v2092
    %3653 = vmatpush.msra.mxu0 %v2084
    %3654 = vmatpush.msra.mxu0 %v2076
    %3655 = vmatpush.msra.mxu0 %v2068
    %3656 = vmatpush.msra.mxu0 %v2060
    %3657 = vmatpush.msra.mxu0 %v2052
    %3658 = vmatpush.msra.mxu0 %v2044
    %3659 = vmatpush.msra.mxu0 %v2036
    %3660 = vmatpush.msra.mxu0 %v2028
    %3661 = vmatpush.msra.mxu0 %v2020
    %3662 = vmatpush.msra.mxu0 %v2012
    %3663 = vmatpush.msra.mxu0 %v2004
    %3664 = vmatpush.msra.mxu0 %v1996
    %3665 = vmatpush.msra.mxu0 %v1988
    %3666 = vmatpush.msra.mxu0 %v1980
    %3667 = vmatmul.f32.gmra.mxu0 %v1685
    %v3668 = vpop.f32.mrf.mxu0
    %v3669 = vadd.f32 %v2494, %v3668
    %3670 = vmatmul.f32.gmra.mxu0 %v1689
    %v3671 = vpop.f32.mrf.mxu0
    %v3672 = vadd.f32 %v2494, %v3671
    %3673 = vmatmul.f32.gmra.mxu0 %v1693
    %v3674 = vpop.f32.mrf.mxu0
    %v3675 = vadd.f32 %v2494, %v3674
    %3676 = vmatmul.f32.gmra.mxu0 %v1697
    %v3677 = vpop.f32.mrf.mxu0
    %v3678 = vadd.f32 %v2494, %v3677
    %3679 = vmatmul.f32.gmra.mxu0 %v1701
    %v3680 = vpop.f32.mrf.mxu0
    %v3681 = vadd.f32 %v2494, %v3680
    %3682 = vmatmul.f32.gmra.mxu0 %v1705
    %v3683 = vpop.f32.mrf.mxu0
    %v3684 = vadd.f32 %v2494, %v3683
    %3685 = vmatmul.f32.gmra.mxu0 %v1709
    %v3686 = vpop.f32.mrf.mxu0
    %v3687 = vadd.f32 %v2494, %v3686
    %3688 = vmatmul.f32.gmra.mxu0 %v1713
    %v3689 = vpop.f32.mrf.mxu0
    %v3690 = vadd.f32 %v2494, %v3689
    %3691 = vdwg.mxu0
    %3692 = vmatpush.msra.mxu0 %v2228
    %3693 = vmatpush.msra.mxu0 %v2220
    %3694 = vmatpush.msra.mxu0 %v2212
    %3695 = vmatpush.msra.mxu0 %v2204
    %3696 = vmatpush.msra.mxu0 %v2196
    %3697 = vmatpush.msra.mxu0 %v2188
    %3698 = vmatpush.msra.mxu0 %v2180
    %3699 = vmatpush.msra.mxu0 %v2172
    %3700 = vmatpush.msra.mxu0 %v2164
    %3701 = vmatpush.msra.mxu0 %v2156
    %3702 = vmatpush.msra.mxu0 %v2148
    %3703 = vmatpush.msra.mxu0 %v2140
    %3704 = vmatpush.msra.mxu0 %v2132
    %3705 = vmatpush.msra.mxu0 %v2124
    %3706 = vmatpush.msra.mxu0 %v2116
    %3707 = vmatpush.msra.mxu0 %v2108
    %3708 = vmatmul.f32.gmra.mxu0 %v1686
    %v3709 = vpop.f32.mrf.mxu0
    %v3710 = vadd.f32 %v3669, %v3709
    %3711 = vmatmul.f32.gmra.mxu0 %v1690
    %v3712 = vpop.f32.mrf.mxu0
    %v3713 = vadd.f32 %v3672, %v3712
    %3714 = vmatmul.f32.gmra.mxu0 %v1694
    %v3715 = vpop.f32.mrf.mxu0
    %v3716 = vadd.f32 %v3675, %v3715
    %3717 = vmatmul.f32.gmra.mxu0 %v1698
    %v3718 = vpop.f32.mrf.mxu0
    %v3719 = vadd.f32 %v3678, %v3718
    %3720 = vmatmul.f32.gmra.mxu0 %v1702
    %v3721 = vpop.f32.mrf.mxu0
    %v3722 = vadd.f32 %v3681, %v3721
    %3723 = vmatmul.f32.gmra.mxu0 %v1706
    %v3724 = vpop.f32.mrf.mxu0
    %v3725 = vadd.f32 %v3684, %v3724
    %3726 = vmatmul.f32.gmra.mxu0 %v1710
    %v3727 = vpop.f32.mrf.mxu0
    %v3728 = vadd.f32 %v3687, %v3727
    %3729 = vmatmul.f32.gmra.mxu0 %v1714
    %v3730 = vpop.f32.mrf.mxu0
    %v3731 = vadd.f32 %v3690, %v3730
    %3732 = vdwg.mxu0
    %3733 = vmatpush.msra.mxu0 %v2356
    %3734 = vmatpush.msra.mxu0 %v2348
    %3735 = vmatpush.msra.mxu0 %v2340
    %3736 = vmatpush.msra.mxu0 %v2332
    %3737 = vmatpush.msra.mxu0 %v2324
    %3738 = vmatpush.msra.mxu0 %v2316
    %3739 = vmatpush.msra.mxu0 %v2308
    %3740 = vmatpush.msra.mxu0 %v2300
    %3741 = vmatpush.msra.mxu0 %v2292
    %3742 = vmatpush.msra.mxu0 %v2284
    %3743 = vmatpush.msra.mxu0 %v2276
    %3744 = vmatpush.msra.mxu0 %v2268
    %3745 = vmatpush.msra.mxu0 %v2260
    %3746 = vmatpush.msra.mxu0 %v2252
    %3747 = vmatpush.msra.mxu0 %v2244
    %3748 = vmatpush.msra.mxu0 %v2236
    %3749 = vmatmul.f32.gmra.mxu0 %v1687
    %v3750 = vpop.f32.mrf.mxu0
    %v3751 = vadd.f32 %v3710, %v3750
    %3752 = vmatmul.f32.gmra.mxu0 %v1691
    %v3753 = vpop.f32.mrf.mxu0
    %v3754 = vadd.f32 %v3713, %v3753
    %3755 = vmatmul.f32.gmra.mxu0 %v1695
    %v3756 = vpop.f32.mrf.mxu0
    %v3757 = vadd.f32 %v3716, %v3756
    %3758 = vmatmul.f32.gmra.mxu0 %v1699
    %v3759 = vpop.f32.mrf.mxu0
    %v3760 = vadd.f32 %v3719, %v3759
    %3761 = vmatmul.f32.gmra.mxu0 %v1703
    %v3762 = vpop.f32.mrf.mxu0
    %v3763 = vadd.f32 %v3722, %v3762
    %3764 = vmatmul.f32.gmra.mxu0 %v1707
    %v3765 = vpop.f32.mrf.mxu0
    %v3766 = vadd.f32 %v3725, %v3765
    %3767 = vmatmul.f32.gmra.mxu0 %v1711
    %v3768 = vpop.f32.mrf.mxu0
    %v3769 = vadd.f32 %v3728, %v3768
    %3770 = vmatmul.f32.gmra.mxu0 %v1715
    %v3771 = vpop.f32.mrf.mxu0
    %v3772 = vadd.f32 %v3731, %v3771
    %3773 = vdwg.mxu0
    %3774 = vmatpush.msra.mxu0 %v2484
    %3775 = vmatpush.msra.mxu0 %v2476
    %3776 = vmatpush.msra.mxu0 %v2468
    %3777 = vmatpush.msra.mxu0 %v2460
    %3778 = vmatpush.msra.mxu0 %v2452
    %3779 = vmatpush.msra.mxu0 %v2444
    %3780 = vmatpush.msra.mxu0 %v2436
    %3781 = vmatpush.msra.mxu0 %v2428
    %3782 = vmatpush.msra.mxu0 %v2420
    %3783 = vmatpush.msra.mxu0 %v2412
    %3784 = vmatpush.msra.mxu0 %v2404
    %3785 = vmatpush.msra.mxu0 %v2396
    %3786 = vmatpush.msra.mxu0 %v2388
    %3787 = vmatpush.msra.mxu0 %v2380
    %3788 = vmatpush.msra.mxu0 %v2372
    %3789 = vmatpush.msra.mxu0 %v2364
    %3790 = vmatmul.f32.gmra.mxu0 %v1688
    %v3791 = vpop.f32.mrf.mxu0
    %v3792 = vadd.f32 %v3751, %v3791
    %3793 = vmatmul.f32.gmra.mxu0 %v1692
    %v3794 = vpop.f32.mrf.mxu0
    %v3795 = vadd.f32 %v3754, %v3794
    %3796 = vmatmul.f32.gmra.mxu0 %v1696
    %v3797 = vpop.f32.mrf.mxu0
    %v3798 = vadd.f32 %v3757, %v3797
    %3799 = vmatmul.f32.gmra.mxu0 %v1700
    %v3800 = vpop.f32.mrf.mxu0
    %v3801 = vadd.f32 %v3760, %v3800
    %3802 = vmatmul.f32.gmra.mxu0 %v1704
    %v3803 = vpop.f32.mrf.mxu0
    %v3804 = vadd.f32 %v3763, %v3803
    %3805 = vmatmul.f32.gmra.mxu0 %v1708
    %v3806 = vpop.f32.mrf.mxu0
    %v3807 = vadd.f32 %v3766, %v3806
    %3808 = vmatmul.f32.gmra.mxu0 %v1712
    %v3809 = vpop.f32.mrf.mxu0
    %v3810 = vadd.f32 %v3769, %v3809
    %3811 = vmatmul.f32.gmra.mxu0 %v1716
    %v3812 = vpop.f32.mrf.mxu0
    %v3813 = vadd.f32 %v3772, %v3812
    %3814 = vdwg.mxu0
    %v3815 = vadd.f32 %v2644, %v2647
    %v3816 = vadd.f32 %v3815, %v2650
    %v3817 = vadd.f32 %v3816, %v2653
    %v3818 = vadd.f32 %v3817, %v2656
    %v3819 = vadd.f32 %v3818, %v2659
    %v3820 = vadd.f32 %v3819, %v2662
    %v3821 = vadd.f32 %v3820, %v2665
    %v3822 = vrot.slane %v3821, 4
    %v3823 = vadd.f32 %v3821, %v3822
    %v3824 = vrot.slane %v3823, 2
    %v3825 = vadd.f32 %v3823, %v3824
    %v3826 = vrot.slane %v3825, 1
    %v3827 = vadd.f32 %v3825, %v3826
    %v3828 = vadd.f32 %v2808, %v2811
    %v3829 = vadd.f32 %v3828, %v2814
    %v3830 = vadd.f32 %v3829, %v2817
    %v3831 = vadd.f32 %v3830, %v2820
    %v3832 = vadd.f32 %v3831, %v2823
    %v3833 = vadd.f32 %v3832, %v2826
    %v3834 = vadd.f32 %v3833, %v2829
    %v3835 = vrot.slane %v3834, 4
    %v3836 = vadd.f32 %v3834, %v3835
    %v3837 = vrot.slane %v3836, 2
    %v3838 = vadd.f32 %v3836, %v3837
    %v3839 = vrot.slane %v3838, 1
    %v3840 = vadd.f32 %v3838, %v3839
    %v3841 = vadd.f32 %v2972, %v2975
    %v3842 = vadd.f32 %v3841, %v2978
    %v3843 = vadd.f32 %v3842, %v2981
    %v3844 = vadd.f32 %v3843, %v2984
    %v3845 = vadd.f32 %v3844, %v2987
    %v3846 = vadd.f32 %v3845, %v2990
    %v3847 = vadd.f32 %v3846, %v2993
    %v3848 = vrot.slane %v3847, 4
    %v3849 = vadd.f32 %v3847, %v3848
    %v3850 = vrot.slane %v3849, 2
    %v3851 = vadd.f32 %v3849, %v3850
    %v3852 = vrot.slane %v3851, 1
    %v3853 = vadd.f32 %v3851, %v3852
    %v3854 = vadd.f32 %v3136, %v3139
    %v3855 = vadd.f32 %v3854, %v3142
    %v3856 = vadd.f32 %v3855, %v3145
    %v3857 = vadd.f32 %v3856, %v3148
    %v3858 = vadd.f32 %v3857, %v3151
    %v3859 = vadd.f32 %v3858, %v3154
    %v3860 = vadd.f32 %v3859, %v3157
    %v3861 = vrot.slane %v3860, 4
    %v3862 = vadd.f32 %v3860, %v3861
    %v3863 = vrot.slane %v3862, 2
    %v3864 = vadd.f32 %v3862, %v3863
    %v3865 = vrot.slane %v3864, 1
    %v3866 = vadd.f32 %v3864, %v3865
    %v3867 = vadd.f32 %v3300, %v3303
    %v3868 = vadd.f32 %v3867, %v3306
    %v3869 = vadd.f32 %v3868, %v3309
    %v3870 = vadd.f32 %v3869, %v3312
    %v3871 = vadd.f32 %v3870, %v3315
    %v3872 = vadd.f32 %v3871, %v3318
    %v3873 = vadd.f32 %v3872, %v3321
    %v3874 = vrot.slane %v3873, 4
    %v3875 = vadd.f32 %v3873, %v3874
    %v3876 = vrot.slane %v3875, 2
    %v3877 = vadd.f32 %v3875, %v3876
    %v3878 = vrot.slane %v3877, 1
    %v3879 = vadd.f32 %v3877, %v3878
    %v3880 = vadd.f32 %v3464, %v3467
    %v3881 = vadd.f32 %v3880, %v3470
    %v3882 = vadd.f32 %v3881, %v3473
    %v3883 = vadd.f32 %v3882, %v3476
    %v3884 = vadd.f32 %v3883, %v3479
    %v3885 = vadd.f32 %v3884, %v3482
    %v3886 = vadd.f32 %v3885, %v3485
    %v3887 = vrot.slane %v3886, 4
    %v3888 = vadd.f32 %v3886, %v3887
    %v3889 = vrot.slane %v3888, 2
    %v3890 = vadd.f32 %v3888, %v3889
    %v3891 = vrot.slane %v3890, 1
    %v3892 = vadd.f32 %v3890, %v3891
    %v3893 = vadd.f32 %v3628, %v3631
    %v3894 = vadd.f32 %v3893, %v3634
    %v3895 = vadd.f32 %v3894, %v3637
    %v3896 = vadd.f32 %v3895, %v3640
    %v3897 = vadd.f32 %v3896, %v3643
    %v3898 = vadd.f32 %v3897, %v3646
    %v3899 = vadd.f32 %v3898, %v3649
    %v3900 = vrot.slane %v3899, 4
    %v3901 = vadd.f32 %v3899, %v3900
    %v3902 = vrot.slane %v3901, 2
    %v3903 = vadd.f32 %v3901, %v3902
    %v3904 = vrot.slane %v3903, 1
    %v3905 = vadd.f32 %v3903, %v3904
    %v3906 = vadd.f32 %v3792, %v3795
    %v3907 = vadd.f32 %v3906, %v3798
    %v3908 = vadd.f32 %v3907, %v3801
    %v3909 = vadd.f32 %v3908, %v3804
    %v3910 = vadd.f32 %v3909, %v3807
    %v3911 = vadd.f32 %v3910, %v3810
    %v3912 = vadd.f32 %v3911, %v3813
    %v3913 = vrot.slane %v3912, 4
    %v3914 = vadd.f32 %v3912, %v3913
    %v3915 = vrot.slane %v3914, 2
    %v3916 = vadd.f32 %v3914, %v3915
    %v3917 = vrot.slane %v3916, 1
    %v3918 = vadd.f32 %v3916, %v3917
    %v3919 = vmul.f32 %v3827, %v562
    %v3920 = vmul.f32 %v3840, %v562
    %v3921 = vmul.f32 %v3853, %v562
    %v3922 = vmul.f32 %v3866, %v562
    %v3923 = vmul.f32 %v3879, %v562
    %v3924 = vmul.f32 %v3892, %v562
    %v3925 = vmul.f32 %v3905, %v562
    %v3926 = vmul.f32 %v3918, %v562
    %v3927 = vsub.f32 %v2644, %v3919
    %v3928 = vsub.f32 %v2808, %v3920
    %v3929 = vsub.f32 %v2972, %v3921
    %v3930 = vsub.f32 %v3136, %v3922
    %v3931 = vsub.f32 %v3300, %v3923
    %v3932 = vsub.f32 %v3464, %v3924
    %v3933 = vsub.f32 %v3628, %v3925
    %v3934 = vsub.f32 %v3792, %v3926
    %v3935 = vsub.f32 %v2647, %v3919
    %v3936 = vsub.f32 %v2811, %v3920
    %v3937 = vsub.f32 %v2975, %v3921
    %v3938 = vsub.f32 %v3139, %v3922
    %v3939 = vsub.f32 %v3303, %v3923
    %v3940 = vsub.f32 %v3467, %v3924
    %v3941 = vsub.f32 %v3631, %v3925
    %v3942 = vsub.f32 %v3795, %v3926
    %v3943 = vsub.f32 %v2650, %v3919
    %v3944 = vsub.f32 %v2814, %v3920
    %v3945 = vsub.f32 %v2978, %v3921
    %v3946 = vsub.f32 %v3142, %v3922
    %v3947 = vsub.f32 %v3306, %v3923
    %v3948 = vsub.f32 %v3470, %v3924
    %v3949 = vsub.f32 %v3634, %v3925
    %v3950 = vsub.f32 %v3798, %v3926
    %v3951 = vsub.f32 %v2653, %v3919
    %v3952 = vsub.f32 %v2817, %v3920
    %v3953 = vsub.f32 %v2981, %v3921
    %v3954 = vsub.f32 %v3145, %v3922
    %v3955 = vsub.f32 %v3309, %v3923
    %v3956 = vsub.f32 %v3473, %v3924
    %v3957 = vsub.f32 %v3637, %v3925
    %v3958 = vsub.f32 %v3801, %v3926
    %v3959 = vsub.f32 %v2656, %v3919
    %v3960 = vsub.f32 %v2820, %v3920
    %v3961 = vsub.f32 %v2984, %v3921
    %v3962 = vsub.f32 %v3148, %v3922
    %v3963 = vsub.f32 %v3312, %v3923
    %v3964 = vsub.f32 %v3476, %v3924
    %v3965 = vsub.f32 %v3640, %v3925
    %v3966 = vsub.f32 %v3804, %v3926
    %v3967 = vsub.f32 %v2659, %v3919
    %v3968 = vsub.f32 %v2823, %v3920
    %v3969 = vsub.f32 %v2987, %v3921
    %v3970 = vsub.f32 %v3151, %v3922
    %v3971 = vsub.f32 %v3315, %v3923
    %v3972 = vsub.f32 %v3479, %v3924
    %v3973 = vsub.f32 %v3643, %v3925
    %v3974 = vsub.f32 %v3807, %v3926
    %v3975 = vsub.f32 %v2662, %v3919
    %v3976 = vsub.f32 %v2826, %v3920
    %v3977 = vsub.f32 %v2990, %v3921
    %v3978 = vsub.f32 %v3154, %v3922
    %v3979 = vsub.f32 %v3318, %v3923
    %v3980 = vsub.f32 %v3482, %v3924
    %v3981 = vsub.f32 %v3646, %v3925
    %v3982 = vsub.f32 %v3810, %v3926
    %v3983 = vsub.f32 %v2665, %v3919
    %v3984 = vsub.f32 %v2829, %v3920
    %v3985 = vsub.f32 %v2993, %v3921
    %v3986 = vsub.f32 %v3157, %v3922
    %v3987 = vsub.f32 %v3321, %v3923
    %v3988 = vsub.f32 %v3485, %v3924
    %v3989 = vsub.f32 %v3649, %v3925
    %v3990 = vsub.f32 %v3813, %v3926
    %v3991 = vmul.f32 %v3927, %v3927
    %v3992 = vmul.f32 %v3928, %v3928
    %v3993 = vmul.f32 %v3929, %v3929
    %v3994 = vmul.f32 %v3930, %v3930
    %v3995 = vmul.f32 %v3931, %v3931
    %v3996 = vmul.f32 %v3932, %v3932
    %v3997 = vmul.f32 %v3933, %v3933
    %v3998 = vmul.f32 %v3934, %v3934
    %v3999 = vmul.f32 %v3935, %v3935
    %v4000 = vmul.f32 %v3936, %v3936
    %v4001 = vmul.f32 %v3937, %v3937
    %v4002 = vmul.f32 %v3938, %v3938
    %v4003 = vmul.f32 %v3939, %v3939
    %v4004 = vmul.f32 %v3940, %v3940
    %v4005 = vmul.f32 %v3941, %v3941
    %v4006 = vmul.f32 %v3942, %v3942
    %v4007 = vmul.f32 %v3943, %v3943
    %v4008 = vmul.f32 %v3944, %v3944
    %v4009 = vmul.f32 %v3945, %v3945
    %v4010 = vmul.f32 %v3946, %v3946
    %v4011 = vmul.f32 %v3947, %v3947
    %v4012 = vmul.f32 %v3948, %v3948
    %v4013 = vmul.f32 %v3949, %v3949
    %v4014 = vmul.f32 %v3950, %v3950
    %v4015 = vmul.f32 %v3951, %v3951
    %v4016 = vmul.f32 %v3952, %v3952
    %v4017 = vmul.f32 %v3953, %v3953
    %v4018 = vmul.f32 %v3954, %v3954
    %v4019 = vmul.f32 %v3955, %v3955
    %v4020 = vmul.f32 %v3956, %v3956
    %v4021 = vmul.f32 %v3957, %v3957
    %v4022 = vmul.f32 %v3958, %v3958
    %v4023 = vmul.f32 %v3959, %v3959
    %v4024 = vmul.f32 %v3960, %v3960
    %v4025 = vmul.f32 %v3961, %v3961
    %v4026 = vmul.f32 %v3962, %v3962
    %v4027 = vmul.f32 %v3963, %v3963
    %v4028 = vmul.f32 %v3964, %v3964
    %v4029 = vmul.f32 %v3965, %v3965
    %v4030 = vmul.f32 %v3966, %v3966
    %v4031 = vmul.f32 %v3967, %v3967
    %v4032 = vmul.f32 %v3968, %v3968
    %v4033 = vmul.f32 %v3969, %v3969
    %v4034 = vmul.f32 %v3970, %v3970
    %v4035 = vmul.f32 %v3971, %v3971
    %v4036 = vmul.f32 %v3972, %v3972
    %v4037 = vmul.f32 %v3973, %v3973
    %v4038 = vmul.f32 %v3974, %v3974
    %v4039 = vmul.f32 %v3975, %v3975
    %v4040 = vmul.f32 %v3976, %v3976
    %v4041 = vmul.f32 %v3977, %v3977
    %v4042 = vmul.f32 %v3978, %v3978
    %v4043 = vmul.f32 %v3979, %v3979
    %v4044 = vmul.f32 %v3980, %v3980
    %v4045 = vmul.f32 %v3981, %v3981
    %v4046 = vmul.f32 %v3982, %v3982
    %v4047 = vmul.f32 %v3983, %v3983
    %v4048 = vmul.f32 %v3984, %v3984
    %v4049 = vmul.f32 %v3985, %v3985
    %v4050 = vmul.f32 %v3986, %v3986
    %v4051 = vmul.f32 %v3987, %v3987
    %v4052 = vmul.f32 %v3988, %v3988
    %v4053 = vmul.f32 %v3989, %v3989
    %v4054 = vmul.f32 %v3990, %v3990
    %v4055 = vadd.f32 %v3991, %v3999
    %v4056 = vadd.f32 %v4055, %v4007
    %v4057 = vadd.f32 %v4056, %v4015
    %v4058 = vadd.f32 %v4057, %v4023
    %v4059 = vadd.f32 %v4058, %v4031
    %v4060 = vadd.f32 %v4059, %v4039
    %v4061 = vadd.f32 %v4060, %v4047
    %v4062 = vrot.slane %v4061, 4
    %v4063 = vadd.f32 %v4061, %v4062
    %v4064 = vrot.slane %v4063, 2
    %v4065 = vadd.f32 %v4063, %v4064
    %v4066 = vrot.slane %v4065, 1
    %v4067 = vadd.f32 %v4065, %v4066
    %v4068 = vadd.f32 %v3992, %v4000
    %v4069 = vadd.f32 %v4068, %v4008
    %v4070 = vadd.f32 %v4069, %v4016
    %v4071 = vadd.f32 %v4070, %v4024
    %v4072 = vadd.f32 %v4071, %v4032
    %v4073 = vadd.f32 %v4072, %v4040
    %v4074 = vadd.f32 %v4073, %v4048
    %v4075 = vrot.slane %v4074, 4
    %v4076 = vadd.f32 %v4074, %v4075
    %v4077 = vrot.slane %v4076, 2
    %v4078 = vadd.f32 %v4076, %v4077
    %v4079 = vrot.slane %v4078, 1
    %v4080 = vadd.f32 %v4078, %v4079
    %v4081 = vadd.f32 %v3993, %v4001
    %v4082 = vadd.f32 %v4081, %v4009
    %v4083 = vadd.f32 %v4082, %v4017
    %v4084 = vadd.f32 %v4083, %v4025
    %v4085 = vadd.f32 %v4084, %v4033
    %v4086 = vadd.f32 %v4085, %v4041
    %v4087 = vadd.f32 %v4086, %v4049
    %v4088 = vrot.slane %v4087, 4
    %v4089 = vadd.f32 %v4087, %v4088
    %v4090 = vrot.slane %v4089, 2
    %v4091 = vadd.f32 %v4089, %v4090
    %v4092 = vrot.slane %v4091, 1
    %v4093 = vadd.f32 %v4091, %v4092
    %v4094 = vadd.f32 %v3994, %v4002
    %v4095 = vadd.f32 %v4094, %v4010
    %v4096 = vadd.f32 %v4095, %v4018
    %v4097 = vadd.f32 %v4096, %v4026
    %v4098 = vadd.f32 %v4097, %v4034
    %v4099 = vadd.f32 %v4098, %v4042
    %v4100 = vadd.f32 %v4099, %v4050
    %v4101 = vrot.slane %v4100, 4
    %v4102 = vadd.f32 %v4100, %v4101
    %v4103 = vrot.slane %v4102, 2
    %v4104 = vadd.f32 %v4102, %v4103
    %v4105 = vrot.slane %v4104, 1
    %v4106 = vadd.f32 %v4104, %v4105
    %v4107 = vadd.f32 %v3995, %v4003
    %v4108 = vadd.f32 %v4107, %v4011
    %v4109 = vadd.f32 %v4108, %v4019
    %v4110 = vadd.f32 %v4109, %v4027
    %v4111 = vadd.f32 %v4110, %v4035
    %v4112 = vadd.f32 %v4111, %v4043
    %v4113 = vadd.f32 %v4112, %v4051
    %v4114 = vrot.slane %v4113, 4
    %v4115 = vadd.f32 %v4113, %v4114
    %v4116 = vrot.slane %v4115, 2
    %v4117 = vadd.f32 %v4115, %v4116
    %v4118 = vrot.slane %v4117, 1
    %v4119 = vadd.f32 %v4117, %v4118
    %v4120 = vadd.f32 %v3996, %v4004
    %v4121 = vadd.f32 %v4120, %v4012
    %v4122 = vadd.f32 %v4121, %v4020
    %v4123 = vadd.f32 %v4122, %v4028
    %v4124 = vadd.f32 %v4123, %v4036
    %v4125 = vadd.f32 %v4124, %v4044
    %v4126 = vadd.f32 %v4125, %v4052
    %v4127 = vrot.slane %v4126, 4
    %v4128 = vadd.f32 %v4126, %v4127
    %v4129 = vrot.slane %v4128, 2
    %v4130 = vadd.f32 %v4128, %v4129
    %v4131 = vrot.slane %v4130, 1
    %v4132 = vadd.f32 %v4130, %v4131
    %v4133 = vadd.f32 %v3997, %v4005
    %v4134 = vadd.f32 %v4133, %v4013
    %v4135 = vadd.f32 %v4134, %v4021
    %v4136 = vadd.f32 %v4135, %v4029
    %v4137 = vadd.f32 %v4136, %v4037
    %v4138 = vadd.f32 %v4137, %v4045
    %v4139 = vadd.f32 %v4138, %v4053
    %v4140 = vrot.slane %v4139, 4
    %v4141 = vadd.f32 %v4139, %v4140
    %v4142 = vrot.slane %v4141, 2
    %v4143 = vadd.f32 %v4141, %v4142
    %v4144 = vrot.slane %v4143, 1
    %v4145 = vadd.f32 %v4143, %v4144
    %v4146 = vadd.f32 %v3998, %v4006
    %v4147 = vadd.f32 %v4146, %v4014
    %v4148 = vadd.f32 %v4147, %v4022
    %v4149 = vadd.f32 %v4148, %v4030
    %v4150 = vadd.f32 %v4149, %v4038
    %v4151 = vadd.f32 %v4150, %v4046
    %v4152 = vadd.f32 %v4151, %v4054
    %v4153 = vrot.slane %v4152, 4
    %v4154 = vadd.f32 %v4152, %v4153
    %v4155 = vrot.slane %v4154, 2
    %v4156 = vadd.f32 %v4154, %v4155
    %v4157 = vrot.slane %v4156, 1
    %v4158 = vadd.f32 %v4156, %v4157
    %v4159 = vmul.f32 %v4067, %v562
    %v4160 = vmul.f32 %v4080, %v562
    %v4161 = vmul.f32 %v4093, %v562
    %v4162 = vmul.f32 %v4106, %v562
    %v4163 = vmul.f32 %v4119, %v562
    %v4164 = vmul.f32 %v4132, %v562
    %v4165 = vmul.f32 %v4145, %v562
    %v4166 = vmul.f32 %v4158, %v562
    %v4167 = vadd.f32 %v4159, 1e-05
    %v4168 = vadd.f32 %v4160, 1e-05
    %v4169 = vadd.f32 %v4161, 1e-05
    %v4170 = vadd.f32 %v4162, 1e-05
    %v4171 = vadd.f32 %v4163, 1e-05
    %v4172 = vadd.f32 %v4164, 1e-05
    %v4173 = vadd.f32 %v4165, 1e-05
    %v4174 = vadd.f32 %v4166, 1e-05
    %v4175 = vrsqrt.pop %v4167
    %v4176 = vmul.f32 %v4175, %v4167
    %v4177 = vmul.f32 %v4176, %v4175
    %v4178 = vmul.f32 0.5, %v4177
    %v4179 = vsub.f32 1.5, %v4178
    %v4180 = vmul.f32 %v4175, %v4179
    %vm4181 = vweird.f32 %v4167
    %vm4182 = vweird.f32 %v4175
    %vm4183 = vmor %vm4181, %vm4182
    %v4184 = vsel %vm4183, %v4175, %v4180
    %v4185 = vrsqrt.pop %v4168
    %v4186 = vmul.f32 %v4185, %v4168
    %v4187 = vmul.f32 %v4186, %v4185
    %v4188 = vmul.f32 0.5, %v4187
    %v4189 = vsub.f32 1.5, %v4188
    %v4190 = vmul.f32 %v4185, %v4189
    %vm4191 = vweird.f32 %v4168
    %vm4192 = vweird.f32 %v4185
    %vm4193 = vmor %vm4191, %vm4192
    %v4194 = vsel %vm4193, %v4185, %v4190
    %v4195 = vrsqrt.pop %v4169
    %v4196 = vmul.f32 %v4195, %v4169
    %v4197 = vmul.f32 %v4196, %v4195
    %v4198 = vmul.f32 0.5, %v4197
    %v4199 = vsub.f32 1.5, %v4198
    %v4200 = vmul.f32 %v4195, %v4199
    %vm4201 = vweird.f32 %v4169
    %vm4202 = vweird.f32 %v4195
    %vm4203 = vmor %vm4201, %vm4202
    %v4204 = vsel %vm4203, %v4195, %v4200
    %v4205 = vrsqrt.pop %v4170
    %v4206 = vmul.f32 %v4205, %v4170
    %v4207 = vmul.f32 %v4206, %v4205
    %v4208 = vmul.f32 0.5, %v4207
    %v4209 = vsub.f32 1.5, %v4208
    %v4210 = vmul.f32 %v4205, %v4209
    %vm4211 = vweird.f32 %v4170
    %vm4212 = vweird.f32 %v4205
    %vm4213 = vmor %vm4211, %vm4212
    %v4214 = vsel %vm4213, %v4205, %v4210
    %v4215 = vrsqrt.pop %v4171
    %v4216 = vmul.f32 %v4215, %v4171
    %v4217 = vmul.f32 %v4216, %v4215
    %v4218 = vmul.f32 0.5, %v4217
    %v4219 = vsub.f32 1.5, %v4218
    %v4220 = vmul.f32 %v4215, %v4219
    %vm4221 = vweird.f32 %v4171
    %vm4222 = vweird.f32 %v4215
    %vm4223 = vmor %vm4221, %vm4222
    %v4224 = vsel %vm4223, %v4215, %v4220
    %v4225 = vrsqrt.pop %v4172
    %v4226 = vmul.f32 %v4225, %v4172
    %v4227 = vmul.f32 %v4226, %v4225
    %v4228 = vmul.f32 0.5, %v4227
    %v4229 = vsub.f32 1.5, %v4228
    %v4230 = vmul.f32 %v4225, %v4229
    %vm4231 = vweird.f32 %v4172
    %vm4232 = vweird.f32 %v4225
    %vm4233 = vmor %vm4231, %vm4232
    %v4234 = vsel %vm4233, %v4225, %v4230
    %v4235 = vrsqrt.pop %v4173
    %v4236 = vmul.f32 %v4235, %v4173
    %v4237 = vmul.f32 %v4236, %v4235
    %v4238 = vmul.f32 0.5, %v4237
    %v4239 = vsub.f32 1.5, %v4238
    %v4240 = vmul.f32 %v4235, %v4239
    %vm4241 = vweird.f32 %v4173
    %vm4242 = vweird.f32 %v4235
    %vm4243 = vmor %vm4241, %vm4242
    %v4244 = vsel %vm4243, %v4235, %v4240
    %v4245 = vrsqrt.pop %v4174
    %v4246 = vmul.f32 %v4245, %v4174
    %v4247 = vmul.f32 %v4246, %v4245
    %v4248 = vmul.f32 0.5, %v4247
    %v4249 = vsub.f32 1.5, %v4248
    %v4250 = vmul.f32 %v4245, %v4249
    %vm4251 = vweird.f32 %v4174
    %vm4252 = vweird.f32 %v4245
    %vm4253 = vmor %vm4251, %vm4252
    %v4254 = vsel %vm4253, %v4245, %v4250
    %v4255 = vmul.f32 %v3927, %v4184
    %v4256 = vmul.f32 %v3928, %v4194
    %v4257 = vmul.f32 %v3929, %v4204
    %v4258 = vmul.f32 %v3930, %v4214
    %v4259 = vmul.f32 %v3931, %v4224
    %v4260 = vmul.f32 %v3932, %v4234
    %v4261 = vmul.f32 %v3933, %v4244
    %v4262 = vmul.f32 %v3934, %v4254
    %v4263 = vmul.f32 %v3935, %v4184
    %v4264 = vmul.f32 %v3936, %v4194
    %v4265 = vmul.f32 %v3937, %v4204
    %v4266 = vmul.f32 %v3938, %v4214
    %v4267 = vmul.f32 %v3939, %v4224
    %v4268 = vmul.f32 %v3940, %v4234
    %v4269 = vmul.f32 %v3941, %v4244
    %v4270 = vmul.f32 %v3942, %v4254
    %v4271 = vmul.f32 %v3943, %v4184
    %v4272 = vmul.f32 %v3944, %v4194
    %v4273 = vmul.f32 %v3945, %v4204
    %v4274 = vmul.f32 %v3946, %v4214
    %v4275 = vmul.f32 %v3947, %v4224
    %v4276 = vmul.f32 %v3948, %v4234
    %v4277 = vmul.f32 %v3949, %v4244
    %v4278 = vmul.f32 %v3950, %v4254
    %v4279 = vmul.f32 %v3951, %v4184
    %v4280 = vmul.f32 %v3952, %v4194
    %v4281 = vmul.f32 %v3953, %v4204
    %v4282 = vmul.f32 %v3954, %v4214
    %v4283 = vmul.f32 %v3955, %v4224
    %v4284 = vmul.f32 %v3956, %v4234
    %v4285 = vmul.f32 %v3957, %v4244
    %v4286 = vmul.f32 %v3958, %v4254
    %v4287 = vmul.f32 %v3959, %v4184
    %v4288 = vmul.f32 %v3960, %v4194
    %v4289 = vmul.f32 %v3961, %v4204
    %v4290 = vmul.f32 %v3962, %v4214
    %v4291 = vmul.f32 %v3963, %v4224
    %v4292 = vmul.f32 %v3964, %v4234
    %v4293 = vmul.f32 %v3965, %v4244
    %v4294 = vmul.f32 %v3966, %v4254
    %v4295 = vmul.f32 %v3967, %v4184
    %v4296 = vmul.f32 %v3968, %v4194
    %v4297 = vmul.f32 %v3969, %v4204
    %v4298 = vmul.f32 %v3970, %v4214
    %v4299 = vmul.f32 %v3971, %v4224
    %v4300 = vmul.f32 %v3972, %v4234
    %v4301 = vmul.f32 %v3973, %v4244
    %v4302 = vmul.f32 %v3974, %v4254
    %v4303 = vmul.f32 %v3975, %v4184
    %v4304 = vmul.f32 %v3976, %v4194
    %v4305 = vmul.f32 %v3977, %v4204
    %v4306 = vmul.f32 %v3978, %v4214
    %v4307 = vmul.f32 %v3979, %v4224
    %v4308 = vmul.f32 %v3980, %v4234
    %v4309 = vmul.f32 %v3981, %v4244
    %v4310 = vmul.f32 %v3982, %v4254
    %v4311 = vmul.f32 %v3983, %v4184
    %v4312 = vmul.f32 %v3984, %v4194
    %v4313 = vmul.f32 %v3985, %v4204
    %v4314 = vmul.f32 %v3986, %v4214
    %v4315 = vmul.f32 %v3987, %v4224
    %v4316 = vmul.f32 %v3988, %v4234
    %v4317 = vmul.f32 %v3989, %v4244
    %v4318 = vmul.f32 %v3990, %v4254
    %v4319 = vld [vmem:[#allocation22] sm:$0xff]
    %v4321 = vperm.slane %v4319, 0
    %v4322 = vperm.slane %v4319, 1
    %v4323 = vperm.slane %v4319, 2
    %v4324 = vperm.slane %v4319, 3
    %v4325 = vperm.slane %v4319, 4
    %v4326 = vperm.slane %v4319, 5
    %v4327 = vperm.slane %v4319, 6
    %v4328 = vperm.slane %v4319, 7
    %v4337 = vmul.f32 %v4255, %v4321
    %v4338 = vmul.f32 %v4256, %v4322
    %v4339 = vmul.f32 %v4257, %v4323
    %v4340 = vmul.f32 %v4258, %v4324
    %v4341 = vmul.f32 %v4259, %v4325
    %v4342 = vmul.f32 %v4260, %v4326
    %v4343 = vmul.f32 %v4261, %v4327
    %v4344 = vmul.f32 %v4262, %v4328
    %v4345 = vmul.f32 %v4263, %v4321
    %v4346 = vmul.f32 %v4264, %v4322
    %v4347 = vmul.f32 %v4265, %v4323
    %v4348 = vmul.f32 %v4266, %v4324
    %v4349 = vmul.f32 %v4267, %v4325
    %v4350 = vmul.f32 %v4268, %v4326
    %v4351 = vmul.f32 %v4269, %v4327
    %v4352 = vmul.f32 %v4270, %v4328
    %v4353 = vmul.f32 %v4271, %v4321
    %v4354 = vmul.f32 %v4272, %v4322
    %v4355 = vmul.f32 %v4273, %v4323
    %v4356 = vmul.f32 %v4274, %v4324
    %v4357 = vmul.f32 %v4275, %v4325
    %v4358 = vmul.f32 %v4276, %v4326
    %v4359 = vmul.f32 %v4277, %v4327
    %v4360 = vmul.f32 %v4278, %v4328
    %v4361 = vmul.f32 %v4279, %v4321
    %v4362 = vmul.f32 %v4280, %v4322
    %v4363 = vmul.f32 %v4281, %v4323
    %v4364 = vmul.f32 %v4282, %v4324
    %v4365 = vmul.f32 %v4283, %v4325
    %v4366 = vmul.f32 %v4284, %v4326
    %v4367 = vmul.f32 %v4285, %v4327
    %v4368 = vmul.f32 %v4286, %v4328
    %v4369 = vmul.f32 %v4287, %v4321
    %v4370 = vmul.f32 %v4288, %v4322
    %v4371 = vmul.f32 %v4289, %v4323
    %v4372 = vmul.f32 %v4290, %v4324
    %v4373 = vmul.f32 %v4291, %v4325
    %v4374 = vmul.f32 %v4292, %v4326
    %v4375 = vmul.f32 %v4293, %v4327
    %v4376 = vmul.f32 %v4294, %v4328
    %v4377 = vmul.f32 %v4295, %v4321
    %v4378 = vmul.f32 %v4296, %v4322
    %v4379 = vmul.f32 %v4297, %v4323
    %v4380 = vmul.f32 %v4298, %v4324
    %v4381 = vmul.f32 %v4299, %v4325
    %v4382 = vmul.f32 %v4300, %v4326
    %v4383 = vmul.f32 %v4301, %v4327
    %v4384 = vmul.f32 %v4302, %v4328
    %v4385 = vmul.f32 %v4303, %v4321
    %v4386 = vmul.f32 %v4304, %v4322
    %v4387 = vmul.f32 %v4305, %v4323
    %v4388 = vmul.f32 %v4306, %v4324
    %v4389 = vmul.f32 %v4307, %v4325
    %v4390 = vmul.f32 %v4308, %v4326
    %v4391 = vmul.f32 %v4309, %v4327
    %v4392 = vmul.f32 %v4310, %v4328
    %v4393 = vmul.f32 %v4311, %v4321
    %v4394 = vmul.f32 %v4312, %v4322
    %v4395 = vmul.f32 %v4313, %v4323
    %v4396 = vmul.f32 %v4314, %v4324
    %v4397 = vmul.f32 %v4315, %v4325
    %v4398 = vmul.f32 %v4316, %v4326
    %v4399 = vmul.f32 %v4317, %v4327
    %v4400 = vmul.f32 %v4318, %v4328
    %v4401 = vld [vmem:[#allocation23] sm:$0xff]
    %v4403 = vperm.slane %v4401, 0
    %v4404 = vperm.slane %v4401, 1
    %v4405 = vperm.slane %v4401, 2
    %v4406 = vperm.slane %v4401, 3
    %v4407 = vperm.slane %v4401, 4
    %v4408 = vperm.slane %v4401, 5
    %v4409 = vperm.slane %v4401, 6
    %v4410 = vperm.slane %v4401, 7
    %v4419 = vadd.f32 %v4337, %v4403
    %v4420 = vadd.f32 %v4338, %v4404
    %v4421 = vadd.f32 %v4339, %v4405
    %v4422 = vadd.f32 %v4340, %v4406
    %v4423 = vadd.f32 %v4341, %v4407
    %v4424 = vadd.f32 %v4342, %v4408
    %v4425 = vadd.f32 %v4343, %v4409
    %v4426 = vadd.f32 %v4344, %v4410
    %v4427 = vadd.f32 %v4345, %v4403
    %v4428 = vadd.f32 %v4346, %v4404
    %v4429 = vadd.f32 %v4347, %v4405
    %v4430 = vadd.f32 %v4348, %v4406
    %v4431 = vadd.f32 %v4349, %v4407
    %v4432 = vadd.f32 %v4350, %v4408
    %v4433 = vadd.f32 %v4351, %v4409
    %v4434 = vadd.f32 %v4352, %v4410
    %v4435 = vadd.f32 %v4353, %v4403
    %v4436 = vadd.f32 %v4354, %v4404
    %v4437 = vadd.f32 %v4355, %v4405
    %v4438 = vadd.f32 %v4356, %v4406
    %v4439 = vadd.f32 %v4357, %v4407
    %v4440 = vadd.f32 %v4358, %v4408
    %v4441 = vadd.f32 %v4359, %v4409
    %v4442 = vadd.f32 %v4360, %v4410
    %v4443 = vadd.f32 %v4361, %v4403
    %v4444 = vadd.f32 %v4362, %v4404
    %v4445 = vadd.f32 %v4363, %v4405
    %v4446 = vadd.f32 %v4364, %v4406
    %v4447 = vadd.f32 %v4365, %v4407
    %v4448 = vadd.f32 %v4366, %v4408
    %v4449 = vadd.f32 %v4367, %v4409
    %v4450 = vadd.f32 %v4368, %v4410
    %v4451 = vadd.f32 %v4369, %v4403
    %v4452 = vadd.f32 %v4370, %v4404
    %v4453 = vadd.f32 %v4371, %v4405
    %v4454 = vadd.f32 %v4372, %v4406
    %v4455 = vadd.f32 %v4373, %v4407
    %v4456 = vadd.f32 %v4374, %v4408
    %v4457 = vadd.f32 %v4375, %v4409
    %v4458 = vadd.f32 %v4376, %v4410
    %v4459 = vadd.f32 %v4377, %v4403
    %v4460 = vadd.f32 %v4378, %v4404
    %v4461 = vadd.f32 %v4379, %v4405
    %v4462 = vadd.f32 %v4380, %v4406
    %v4463 = vadd.f32 %v4381, %v4407
    %v4464 = vadd.f32 %v4382, %v4408
    %v4465 = vadd.f32 %v4383, %v4409
    %v4466 = vadd.f32 %v4384, %v4410
    %v4467 = vadd.f32 %v4385, %v4403
    %v4468 = vadd.f32 %v4386, %v4404
    %v4469 = vadd.f32 %v4387, %v4405
    %v4470 = vadd.f32 %v4388, %v4406
    %v4471 = vadd.f32 %v4389, %v4407
    %v4472 = vadd.f32 %v4390, %v4408
    %v4473 = vadd.f32 %v4391, %v4409
    %v4474 = vadd.f32 %v4392, %v4410
    %v4475 = vadd.f32 %v4393, %v4403
    %v4476 = vadd.f32 %v4394, %v4404
    %v4477 = vadd.f32 %v4395, %v4405
    %v4478 = vadd.f32 %v4396, %v4406
    %v4479 = vadd.f32 %v4397, %v4407
    %v4480 = vadd.f32 %v4398, %v4408
    %v4481 = vadd.f32 %v4399, %v4409
    %v4482 = vadd.f32 %v4400, %v4410
    %vm4483 = vcmp.gt.f32.partialorder %v4419, 0.0
    %vm4484 = vcmp.gt.f32.partialorder %v4420, 0.0
    %vm4485 = vcmp.gt.f32.partialorder %v4421, 0.0
    %vm4486 = vcmp.gt.f32.partialorder %v4422, 0.0
    %vm4487 = vcmp.gt.f32.partialorder %v4423, 0.0
    %vm4488 = vcmp.gt.f32.partialorder %v4424, 0.0
    %vm4489 = vcmp.gt.f32.partialorder %v4425, 0.0
    %vm4490 = vcmp.gt.f32.partialorder %v4426, 0.0
    %vm4491 = vcmp.gt.f32.partialorder %v4427, 0.0
    %vm4492 = vcmp.gt.f32.partialorder %v4428, 0.0
    %vm4493 = vcmp.gt.f32.partialorder %v4429, 0.0
    %vm4494 = vcmp.gt.f32.partialorder %v4430, 0.0
    %vm4495 = vcmp.gt.f32.partialorder %v4431, 0.0
    %vm4496 = vcmp.gt.f32.partialorder %v4432, 0.0
    %vm4497 = vcmp.gt.f32.partialorder %v4433, 0.0
    %vm4498 = vcmp.gt.f32.partialorder %v4434, 0.0
    %vm4499 = vcmp.gt.f32.partialorder %v4435, 0.0
    %vm4500 = vcmp.gt.f32.partialorder %v4436, 0.0
    %vm4501 = vcmp.gt.f32.partialorder %v4437, 0.0
    %vm4502 = vcmp.gt.f32.partialorder %v4438, 0.0
    %vm4503 = vcmp.gt.f32.partialorder %v4439, 0.0
    %vm4504 = vcmp.gt.f32.partialorder %v4440, 0.0
    %vm4505 = vcmp.gt.f32.partialorder %v4441, 0.0
    %vm4506 = vcmp.gt.f32.partialorder %v4442, 0.0
    %vm4507 = vcmp.gt.f32.partialorder %v4443, 0.0
    %vm4508 = vcmp.gt.f32.partialorder %v4444, 0.0
    %vm4509 = vcmp.gt.f32.partialorder %v4445, 0.0
    %vm4510 = vcmp.gt.f32.partialorder %v4446, 0.0
    %vm4511 = vcmp.gt.f32.partialorder %v4447, 0.0
    %vm4512 = vcmp.gt.f32.partialorder %v4448, 0.0
    %vm4513 = vcmp.gt.f32.partialorder %v4449, 0.0
    %vm4514 = vcmp.gt.f32.partialorder %v4450, 0.0
    %vm4515 = vcmp.gt.f32.partialorder %v4451, 0.0
    %vm4516 = vcmp.gt.f32.partialorder %v4452, 0.0
    %vm4517 = vcmp.gt.f32.partialorder %v4453, 0.0
    %vm4518 = vcmp.gt.f32.partialorder %v4454, 0.0
    %vm4519 = vcmp.gt.f32.partialorder %v4455, 0.0
    %vm4520 = vcmp.gt.f32.partialorder %v4456, 0.0
    %vm4521 = vcmp.gt.f32.partialorder %v4457, 0.0
    %vm4522 = vcmp.gt.f32.partialorder %v4458, 0.0
    %vm4523 = vcmp.gt.f32.partialorder %v4459, 0.0
    %vm4524 = vcmp.gt.f32.partialorder %v4460, 0.0
    %vm4525 = vcmp.gt.f32.partialorder %v4461, 0.0
    %vm4526 = vcmp.gt.f32.partialorder %v4462, 0.0
    %vm4527 = vcmp.gt.f32.partialorder %v4463, 0.0
    %vm4528 = vcmp.gt.f32.partialorder %v4464, 0.0
    %vm4529 = vcmp.gt.f32.partialorder %v4465, 0.0
    %vm4530 = vcmp.gt.f32.partialorder %v4466, 0.0
    %vm4531 = vcmp.gt.f32.partialorder %v4467, 0.0
    %vm4532 = vcmp.gt.f32.partialorder %v4468, 0.0
    %vm4533 = vcmp.gt.f32.partialorder %v4469, 0.0
    %vm4534 = vcmp.gt.f32.partialorder %v4470, 0.0
    %vm4535 = vcmp.gt.f32.partialorder %v4471, 0.0
    %vm4536 = vcmp.gt.f32.partialorder %v4472, 0.0
    %vm4537 = vcmp.gt.f32.partialorder %v4473, 0.0
    %vm4538 = vcmp.gt.f32.partialorder %v4474, 0.0
    %vm4539 = vcmp.gt.f32.partialorder %v4475, 0.0
    %vm4540 = vcmp.gt.f32.partialorder %v4476, 0.0
    %vm4541 = vcmp.gt.f32.partialorder %v4477, 0.0
    %vm4542 = vcmp.gt.f32.partialorder %v4478, 0.0
    %vm4543 = vcmp.gt.f32.partialorder %v4479, 0.0
    %vm4544 = vcmp.gt.f32.partialorder %v4480, 0.0
    %vm4545 = vcmp.gt.f32.partialorder %v4481, 0.0
    %vm4546 = vcmp.gt.f32.partialorder %v4482, 0.0
    %v4547 = vmul.f32 %v4419, 0.2
    %v4548 = vmul.f32 %v4420, 0.2
    %v4549 = vmul.f32 %v4421, 0.2
    %v4550 = vmul.f32 %v4422, 0.2
    %v4551 = vmul.f32 %v4423, 0.2
    %v4552 = vmul.f32 %v4424, 0.2
    %v4553 = vmul.f32 %v4425, 0.2
    %v4554 = vmul.f32 %v4426, 0.2
    %v4555 = vmul.f32 %v4427, 0.2
    %v4556 = vmul.f32 %v4428, 0.2
    %v4557 = vmul.f32 %v4429, 0.2
    %v4558 = vmul.f32 %v4430, 0.2
    %v4559 = vmul.f32 %v4431, 0.2
    %v4560 = vmul.f32 %v4432, 0.2
    %v4561 = vmul.f32 %v4433, 0.2
    %v4562 = vmul.f32 %v4434, 0.2
    %v4563 = vmul.f32 %v4435, 0.2
    %v4564 = vmul.f32 %v4436, 0.2
    %v4565 = vmul.f32 %v4437, 0.2
    %v4566 = vmul.f32 %v4438, 0.2
    %v4567 = vmul.f32 %v4439, 0.2
    %v4568 = vmul.f32 %v4440, 0.2
    %v4569 = vmul.f32 %v4441, 0.2
    %v4570 = vmul.f32 %v4442, 0.2
    %v4571 = vmul.f32 %v4443, 0.2
    %v4572 = vmul.f32 %v4444, 0.2
    %v4573 = vmul.f32 %v4445, 0.2
    %v4574 = vmul.f32 %v4446, 0.2
    %v4575 = vmul.f32 %v4447, 0.2
    %v4576 = vmul.f32 %v4448, 0.2
    %v4577 = vmul.f32 %v4449, 0.2
    %v4578 = vmul.f32 %v4450, 0.2
    %v4579 = vmul.f32 %v4451, 0.2
    %v4580 = vmul.f32 %v4452, 0.2
    %v4581 = vmul.f32 %v4453, 0.2
    %v4582 = vmul.f32 %v4454, 0.2
    %v4583 = vmul.f32 %v4455, 0.2
    %v4584 = vmul.f32 %v4456, 0.2
    %v4585 = vmul.f32 %v4457, 0.2
    %v4586 = vmul.f32 %v4458, 0.2
    %v4587 = vmul.f32 %v4459, 0.2
    %v4588 = vmul.f32 %v4460, 0.2
    %v4589 = vmul.f32 %v4461, 0.2
    %v4590 = vmul.f32 %v4462, 0.2
    %v4591 = vmul.f32 %v4463, 0.2
    %v4592 = vmul.f32 %v4464, 0.2
    %v4593 = vmul.f32 %v4465, 0.2
    %v4594 = vmul.f32 %v4466, 0.2
    %v4595 = vmul.f32 %v4467, 0.2
    %v4596 = vmul.f32 %v4468, 0.2
    %v4597 = vmul.f32 %v4469, 0.2
    %v4598 = vmul.f32 %v4470, 0.2
    %v4599 = vmul.f32 %v4471, 0.2
    %v4600 = vmul.f32 %v4472, 0.2
    %v4601 = vmul.f32 %v4473, 0.2
    %v4602 = vmul.f32 %v4474, 0.2
    %v4603 = vmul.f32 %v4475, 0.2
    %v4604 = vmul.f32 %v4476, 0.2
    %v4605 = vmul.f32 %v4477, 0.2
    %v4606 = vmul.f32 %v4478, 0.2
    %v4607 = vmul.f32 %v4479, 0.2
    %v4608 = vmul.f32 %v4480, 0.2
    %v4609 = vmul.f32 %v4481, 0.2
    %v4610 = vmul.f32 %v4482, 0.2
    %v4611 = vsel %vm4483, %v4419, %v4547
    %v4612 = vsel %vm4484, %v4420, %v4548
    %v4613 = vsel %vm4485, %v4421, %v4549
    %v4614 = vsel %vm4486, %v4422, %v4550
    %v4615 = vsel %vm4487, %v4423, %v4551
    %v4616 = vsel %vm4488, %v4424, %v4552
    %v4617 = vsel %vm4489, %v4425, %v4553
    %v4618 = vsel %vm4490, %v4426, %v4554
    %v4619 = vsel %vm4491, %v4427, %v4555
    %v4620 = vsel %vm4492, %v4428, %v4556
    %v4621 = vsel %vm4493, %v4429, %v4557
    %v4622 = vsel %vm4494, %v4430, %v4558
    %v4623 = vsel %vm4495, %v4431, %v4559
    %v4624 = vsel %vm4496, %v4432, %v4560
    %v4625 = vsel %vm4497, %v4433, %v4561
    %v4626 = vsel %vm4498, %v4434, %v4562
    %v4627 = vsel %vm4499, %v4435, %v4563
    %v4628 = vsel %vm4500, %v4436, %v4564
    %v4629 = vsel %vm4501, %v4437, %v4565
    %v4630 = vsel %vm4502, %v4438, %v4566
    %v4631 = vsel %vm4503, %v4439, %v4567
    %v4632 = vsel %vm4504, %v4440, %v4568
    %v4633 = vsel %vm4505, %v4441, %v4569
    %v4634 = vsel %vm4506, %v4442, %v4570
    %v4635 = vsel %vm4507, %v4443, %v4571
    %v4636 = vsel %vm4508, %v4444, %v4572
    %v4637 = vsel %vm4509, %v4445, %v4573
    %v4638 = vsel %vm4510, %v4446, %v4574
    %v4639 = vsel %vm4511, %v4447, %v4575
    %v4640 = vsel %vm4512, %v4448, %v4576
    %v4641 = vsel %vm4513, %v4449, %v4577
    %v4642 = vsel %vm4514, %v4450, %v4578
    %v4643 = vsel %vm4515, %v4451, %v4579
    %v4644 = vsel %vm4516, %v4452, %v4580
    %v4645 = vsel %vm4517, %v4453, %v4581
    %v4646 = vsel %vm4518, %v4454, %v4582
    %v4647 = vsel %vm4519, %v4455, %v4583
    %v4648 = vsel %vm4520, %v4456, %v4584
    %v4649 = vsel %vm4521, %v4457, %v4585
    %v4650 = vsel %vm4522, %v4458, %v4586
    %v4651 = vsel %vm4523, %v4459, %v4587
    %v4652 = vsel %vm4524, %v4460, %v4588
    %v4653 = vsel %vm4525, %v4461, %v4589
    %v4654 = vsel %vm4526, %v4462, %v4590
    %v4655 = vsel %vm4527, %v4463, %v4591
    %v4656 = vsel %vm4528, %v4464, %v4592
    %v4657 = vsel %vm4529, %v4465, %v4593
    %v4658 = vsel %vm4530, %v4466, %v4594
    %v4659 = vsel %vm4531, %v4467, %v4595
    %v4660 = vsel %vm4532, %v4468, %v4596
    %v4661 = vsel %vm4533, %v4469, %v4597
    %v4662 = vsel %vm4534, %v4470, %v4598
    %v4663 = vsel %vm4535, %v4471, %v4599
    %v4664 = vsel %vm4536, %v4472, %v4600
    %v4665 = vsel %vm4537, %v4473, %v4601
    %v4666 = vsel %vm4538, %v4474, %v4602
    %v4667 = vsel %vm4539, %v4475, %v4603
    %v4668 = vsel %vm4540, %v4476, %v4604
    %v4669 = vsel %vm4541, %v4477, %v4605
    %v4670 = vsel %vm4542, %v4478, %v4606
    %v4671 = vsel %vm4543, %v4479, %v4607
    %v4672 = vsel %vm4544, %v4480, %v4608
    %v4673 = vsel %vm4545, %v4481, %v4609
    %v4674 = vsel %vm4546, %v4482, %v4610
    %v4675 = vld [vmem:[#allocation25] sm:$0xff]
    %v4676 = vld [vmem:[#allocation25 + $0x8] sm:$0xff]
    %v4677 = vld [vmem:[#allocation25 + $0x10] sm:$0xff]
    %v4678 = vld [vmem:[#allocation25 + $0x18] sm:$0xf]
    %v4679 = vld [vmem:[#allocation25 + $0x1c] sm:$0xff]
    %v4680 = vld [vmem:[#allocation25 + $0x24] sm:$0xff]
    %v4681 = vld [vmem:[#allocation25 + $0x2c] sm:$0xff]
    %v4682 = vld [vmem:[#allocation25 + $0x34] sm:$0xf]
    %v4683 = vld [vmem:[#allocation25 + $0x38] sm:$0xff]
    %v4684 = vld [vmem:[#allocation25 + $0x40] sm:$0xff]
    %v4685 = vld [vmem:[#allocation25 + $0x48] sm:$0xff]
    %v4686 = vld [vmem:[#allocation25 + $0x50] sm:$0xf]
    %v4687 = vld [vmem:[#allocation25 + $0x54] sm:$0xff]
    %v4688 = vld [vmem:[#allocation25 + $0x5c] sm:$0xff]
    %v4689 = vld [vmem:[#allocation25 + $0x64] sm:$0xff]
    %v4690 = vld [vmem:[#allocation25 + $0x6c] sm:$0xf]
    %v4691 = vld [vmem:[#allocation25 + $0x70] sm:$0xff]
    %v4692 = vld [vmem:[#allocation25 + $0x78] sm:$0xff]
    %v4693 = vld [vmem:[#allocation25 + $0x80] sm:$0xff]
    %v4694 = vld [vmem:[#allocation25 + $0x88] sm:$0xf]
    %v4695 = vld [vmem:[#allocation25 + $0x8c] sm:$0xff]
    %v4696 = vld [vmem:[#allocation25 + $0x94] sm:$0xff]
    %v4697 = vld [vmem:[#allocation25 + $0x9c] sm:$0xff]
    %v4698 = vld [vmem:[#allocation25 + $0xa4] sm:$0xf]
    %v4699 = vld [vmem:[#allocation25 + $0xa8] sm:$0xff]
    %v4700 = vld [vmem:[#allocation25 + $0xb0] sm:$0xff]
    %v4701 = vld [vmem:[#allocation25 + $0xb8] sm:$0xff]
    %v4702 = vld [vmem:[#allocation25 + $0xc0] sm:$0xf]
    %v4703 = vld [vmem:[#allocation25 + $0xc4] sm:$0xff]
    %v4704 = vld [vmem:[#allocation25 + $0xcc] sm:$0xff]
    %v4705 = vld [vmem:[#allocation25 + $0xd4] sm:$0xff]
    %v4706 = vld [vmem:[#allocation25 + $0xdc] sm:$0xf]
    %v4707 = vld [vmem:[#allocation25 + $0xe0] sm:$0xff]
    %v4708 = vld [vmem:[#allocation25 + $0xe8] sm:$0xff]
    %v4709 = vld [vmem:[#allocation25 + $0xf0] sm:$0xff]
    %v4710 = vld [vmem:[#allocation25 + $0xf8] sm:$0xf]
    %v4711 = vld [vmem:[#allocation25 + $0xfc] sm:$0xff]
    %v4712 = vld [vmem:[#allocation25 + $0x104] sm:$0xff]
    %v4713 = vld [vmem:[#allocation25 + $0x10c] sm:$0xff]
    %v4714 = vld [vmem:[#allocation25 + $0x114] sm:$0xf]
    %v4715 = vld [vmem:[#allocation25 + $0x118] sm:$0xff]
    %v4716 = vld [vmem:[#allocation25 + $0x120] sm:$0xff]
    %v4717 = vld [vmem:[#allocation25 + $0x128] sm:$0xff]
    %v4718 = vld [vmem:[#allocation25 + $0x130] sm:$0xf]
    %v4719 = vld [vmem:[#allocation25 + $0x134] sm:$0xff]
    %v4720 = vld [vmem:[#allocation25 + $0x13c] sm:$0xff]
    %v4721 = vld [vmem:[#allocation25 + $0x144] sm:$0xff]
    %v4722 = vld [vmem:[#allocation25 + $0x14c] sm:$0xf]
    %v4723 = vld [vmem:[#allocation25 + $0x150] sm:$0xff]
    %v4724 = vld [vmem:[#allocation25 + $0x158] sm:$0xff]
    %v4725 = vld [vmem:[#allocation25 + $0x160] sm:$0xff]
    %v4726 = vld [vmem:[#allocation25 + $0x168] sm:$0xf]
    %v4727 = vld [vmem:[#allocation25 + $0x16c] sm:$0xff]
    %v4728 = vld [vmem:[#allocation25 + $0x174] sm:$0xff]
    %v4729 = vld [vmem:[#allocation25 + $0x17c] sm:$0xff]
    %v4730 = vld [vmem:[#allocation25 + $0x184] sm:$0xf]
    %v4731 = vld [vmem:[#allocation25 + $0x188] sm:$0xff]
    %v4732 = vld [vmem:[#allocation25 + $0x190] sm:$0xff]
    %v4733 = vld [vmem:[#allocation25 + $0x198] sm:$0xff]
    %v4734 = vld [vmem:[#allocation25 + $0x1a0] sm:$0xf]
    %v4735 = vld [vmem:[#allocation25 + $0x1a4] sm:$0xff]
    %v4736 = vld [vmem:[#allocation25 + $0x1ac] sm:$0xff]
    %v4737 = vld [vmem:[#allocation25 + $0x1b4] sm:$0xff]
    %v4738 = vld [vmem:[#allocation25 + $0x1bc] sm:$0xf]
    %v4739 = vld [vmem:[#allocation25 + $0x1c0] sm:$0xff]
    %v4740 = vld [vmem:[#allocation25 + $0x1c8] sm:$0xff]
    %v4741 = vld [vmem:[#allocation25 + $0x1d0] sm:$0xff]
    %v4742 = vld [vmem:[#allocation25 + $0x1d8] sm:$0xf]
    %v4743 = vld [vmem:[#allocation25 + $0x1dc] sm:$0xff]
    %v4744 = vld [vmem:[#allocation25 + $0x1e4] sm:$0xff]
    %v4745 = vld [vmem:[#allocation25 + $0x1ec] sm:$0xff]
    %v4746 = vld [vmem:[#allocation25 + $0x1f4] sm:$0xf]
    %v4747 = vld [vmem:[#allocation25 + $0x1f8] sm:$0xff]
    %v4748 = vld [vmem:[#allocation25 + $0x200] sm:$0xff]
    %v4749 = vld [vmem:[#allocation25 + $0x208] sm:$0xff]
    %v4750 = vld [vmem:[#allocation25 + $0x210] sm:$0xf]
    %v4751 = vld [vmem:[#allocation25 + $0x214] sm:$0xff]
    %v4752 = vld [vmem:[#allocation25 + $0x21c] sm:$0xff]
    %v4753 = vld [vmem:[#allocation25 + $0x224] sm:$0xff]
    %v4754 = vld [vmem:[#allocation25 + $0x22c] sm:$0xf]
    %v4755 = vld [vmem:[#allocation25 + $0x230] sm:$0xff]
    %v4756 = vld [vmem:[#allocation25 + $0x238] sm:$0xff]
    %v4757 = vld [vmem:[#allocation25 + $0x240] sm:$0xff]
    %v4758 = vld [vmem:[#allocation25 + $0x248] sm:$0xf]
    %v4759 = vld [vmem:[#allocation25 + $0x24c] sm:$0xff]
    %v4760 = vld [vmem:[#allocation25 + $0x254] sm:$0xff]
    %v4761 = vld [vmem:[#allocation25 + $0x25c] sm:$0xff]
    %v4762 = vld [vmem:[#allocation25 + $0x264] sm:$0xf]
    %v4763 = vld [vmem:[#allocation25 + $0x268] sm:$0xff]
    %v4764 = vld [vmem:[#allocation25 + $0x270] sm:$0xff]
    %v4765 = vld [vmem:[#allocation25 + $0x278] sm:$0xff]
    %v4766 = vld [vmem:[#allocation25 + $0x280] sm:$0xf]
    %v4767 = vld [vmem:[#allocation25 + $0x284] sm:$0xff]
    %v4768 = vld [vmem:[#allocation25 + $0x28c] sm:$0xff]
    %v4769 = vld [vmem:[#allocation25 + $0x294] sm:$0xff]
    %v4770 = vld [vmem:[#allocation25 + $0x29c] sm:$0xf]
    %v4771 = vld [vmem:[#allocation25 + $0x2a0] sm:$0xff]
    %v4772 = vld [vmem:[#allocation25 + $0x2a8] sm:$0xff]
    %v4773 = vld [vmem:[#allocation25 + $0x2b0] sm:$0xff]
    %v4774 = vld [vmem:[#allocation25 + $0x2b8] sm:$0xf]
    %v4775 = vld [vmem:[#allocation25 + $0x2bc] sm:$0xff]
    %v4776 = vld [vmem:[#allocation25 + $0x2c4] sm:$0xff]
    %v4777 = vld [vmem:[#allocation25 + $0x2cc] sm:$0xff]
    %v4778 = vld [vmem:[#allocation25 + $0x2d4] sm:$0xf]
    %v4779 = vld [vmem:[#allocation25 + $0x2d8] sm:$0xff]
    %v4780 = vld [vmem:[#allocation25 + $0x2e0] sm:$0xff]
    %v4781 = vld [vmem:[#allocation25 + $0x2e8] sm:$0xff]
    %v4782 = vld [vmem:[#allocation25 + $0x2f0] sm:$0xf]
    %v4783 = vld [vmem:[#allocation25 + $0x2f4] sm:$0xff]
    %v4784 = vld [vmem:[#allocation25 + $0x2fc] sm:$0xff]
    %v4785 = vld [vmem:[#allocation25 + $0x304] sm:$0xff]
    %v4786 = vld [vmem:[#allocation25 + $0x30c] sm:$0xf]
    %v4787 = vld [vmem:[#allocation25 + $0x310] sm:$0xff]
    %v4788 = vld [vmem:[#allocation25 + $0x318] sm:$0xff]
    %v4789 = vld [vmem:[#allocation25 + $0x320] sm:$0xff]
    %v4790 = vld [vmem:[#allocation25 + $0x328] sm:$0xf]
    %v4791 = vld [vmem:[#allocation25 + $0x32c] sm:$0xff]
    %v4792 = vld [vmem:[#allocation25 + $0x334] sm:$0xff]
    %v4793 = vld [vmem:[#allocation25 + $0x33c] sm:$0xff]
    %v4794 = vld [vmem:[#allocation25 + $0x344] sm:$0xf]
    %v4795 = vld [vmem:[#allocation25 + $0x348] sm:$0xff]
    %v4796 = vld [vmem:[#allocation25 + $0x350] sm:$0xff]
    %v4797 = vld [vmem:[#allocation25 + $0x358] sm:$0xff]
    %v4798 = vld [vmem:[#allocation25 + $0x360] sm:$0xf]
    %v4799 = vld [vmem:[#allocation25 + $0x364] sm:$0xff]
    %v4800 = vld [vmem:[#allocation25 + $0x36c] sm:$0xff]
    %v4801 = vld [vmem:[#allocation25 + $0x374] sm:$0xff]
    %v4802 = vld [vmem:[#allocation25 + $0x37c] sm:$0xf]
    %v4803 = vld [vmem:[#allocation25 + $0x380] sm:$0xff]
    %v4804 = vld [vmem:[#allocation25 + $0x388] sm:$0xff]
    %v4805 = vld [vmem:[#allocation25 + $0x390] sm:$0xff]
    %v4806 = vld [vmem:[#allocation25 + $0x398] sm:$0xf]
    %v4807 = vld [vmem:[#allocation25 + $0x39c] sm:$0xff]
    %v4808 = vld [vmem:[#allocation25 + $0x3a4] sm:$0xff]
    %v4809 = vld [vmem:[#allocation25 + $0x3ac] sm:$0xff]
    %v4810 = vld [vmem:[#allocation25 + $0x3b4] sm:$0xf]
    %v4811 = vld [vmem:[#allocation25 + $0x3b8] sm:$0xff]
    %v4812 = vld [vmem:[#allocation25 + $0x3c0] sm:$0xff]
    %v4813 = vld [vmem:[#allocation25 + $0x3c8] sm:$0xff]
    %v4814 = vld [vmem:[#allocation25 + $0x3d0] sm:$0xf]
    %v4815 = vld [vmem:[#allocation25 + $0x3d4] sm:$0xff]
    %v4816 = vld [vmem:[#allocation25 + $0x3dc] sm:$0xff]
    %v4817 = vld [vmem:[#allocation25 + $0x3e4] sm:$0xff]
    %v4818 = vld [vmem:[#allocation25 + $0x3ec] sm:$0xf]
    %v4819 = vld [vmem:[#allocation25 + $0x3f0] sm:$0xff]
    %v4820 = vld [vmem:[#allocation25 + $0x3f8] sm:$0xff]
    %v4821 = vld [vmem:[#allocation25 + $0x400] sm:$0xff]
    %v4822 = vld [vmem:[#allocation25 + $0x408] sm:$0xf]
    %v4823 = vld [vmem:[#allocation25 + $0x40c] sm:$0xff]
    %v4824 = vld [vmem:[#allocation25 + $0x414] sm:$0xff]
    %v4825 = vld [vmem:[#allocation25 + $0x41c] sm:$0xff]
    %v4826 = vld [vmem:[#allocation25 + $0x424] sm:$0xf]
    %v4827 = vld [vmem:[#allocation25 + $0x428] sm:$0xff]
    %v4828 = vld [vmem:[#allocation25 + $0x430] sm:$0xff]
    %v4829 = vld [vmem:[#allocation25 + $0x438] sm:$0xff]
    %v4830 = vld [vmem:[#allocation25 + $0x440] sm:$0xf]
    %v4831 = vld [vmem:[#allocation25 + $0x444] sm:$0xff]
    %v4832 = vld [vmem:[#allocation25 + $0x44c] sm:$0xff]
    %v4833 = vld [vmem:[#allocation25 + $0x454] sm:$0xff]
    %v4834 = vld [vmem:[#allocation25 + $0x45c] sm:$0xf]
    %v4835 = vld [vmem:[#allocation25 + $0x460] sm:$0xff]
    %v4836 = vld [vmem:[#allocation25 + $0x468] sm:$0xff]
    %v4837 = vld [vmem:[#allocation25 + $0x470] sm:$0xff]
    %v4838 = vld [vmem:[#allocation25 + $0x478] sm:$0xf]
    %v4839 = vld [vmem:[#allocation25 + $0x47c] sm:$0xff]
    %v4840 = vld [vmem:[#allocation25 + $0x484] sm:$0xff]
    %v4841 = vld [vmem:[#allocation25 + $0x48c] sm:$0xff]
    %v4842 = vld [vmem:[#allocation25 + $0x494] sm:$0xf]
    %v4843 = vld [vmem:[#allocation25 + $0x498] sm:$0xff]
    %v4844 = vld [vmem:[#allocation25 + $0x4a0] sm:$0xff]
    %v4845 = vld [vmem:[#allocation25 + $0x4a8] sm:$0xff]
    %v4846 = vld [vmem:[#allocation25 + $0x4b0] sm:$0xf]
    %v4847 = vld [vmem:[#allocation25 + $0x4b4] sm:$0xff]
    %v4848 = vld [vmem:[#allocation25 + $0x4bc] sm:$0xff]
    %v4849 = vld [vmem:[#allocation25 + $0x4c4] sm:$0xff]
    %v4850 = vld [vmem:[#allocation25 + $0x4cc] sm:$0xf]
    %v4851 = vld [vmem:[#allocation25 + $0x4d0] sm:$0xff]
    %v4852 = vld [vmem:[#allocation25 + $0x4d8] sm:$0xff]
    %v4853 = vld [vmem:[#allocation25 + $0x4e0] sm:$0xff]
    %v4854 = vld [vmem:[#allocation25 + $0x4e8] sm:$0xf]
    %v4855 = vld [vmem:[#allocation25 + $0x4ec] sm:$0xff]
    %v4856 = vld [vmem:[#allocation25 + $0x4f4] sm:$0xff]
    %v4857 = vld [vmem:[#allocation25 + $0x4fc] sm:$0xff]
    %v4858 = vld [vmem:[#allocation25 + $0x504] sm:$0xf]
    %v4859 = vld [vmem:[#allocation25 + $0x508] sm:$0xff]
    %v4860 = vld [vmem:[#allocation25 + $0x510] sm:$0xff]
    %v4861 = vld [vmem:[#allocation25 + $0x518] sm:$0xff]
    %v4862 = vld [vmem:[#allocation25 + $0x520] sm:$0xf]
    %v4863 = vld [vmem:[#allocation25 + $0x524] sm:$0xff]
    %v4864 = vld [vmem:[#allocation25 + $0x52c] sm:$0xff]
    %v4865 = vld [vmem:[#allocation25 + $0x534] sm:$0xff]
    %v4866 = vld [vmem:[#allocation25 + $0x53c] sm:$0xf]
    %v4867 = vld [vmem:[#allocation25 + $0x540] sm:$0xff]
    %v4868 = vld [vmem:[#allocation25 + $0x548] sm:$0xff]
    %v4869 = vld [vmem:[#allocation25 + $0x550] sm:$0xff]
    %v4870 = vld [vmem:[#allocation25 + $0x558] sm:$0xf]
    %v4871 = vld [vmem:[#allocation25 + $0x55c] sm:$0xff]
    %v4872 = vld [vmem:[#allocation25 + $0x564] sm:$0xff]
    %v4873 = vld [vmem:[#allocation25 + $0x56c] sm:$0xff]
    %v4874 = vld [vmem:[#allocation25 + $0x574] sm:$0xf]
    %v4875 = vld [vmem:[#allocation25 + $0x578] sm:$0xff]
    %v4876 = vld [vmem:[#allocation25 + $0x580] sm:$0xff]
    %v4877 = vld [vmem:[#allocation25 + $0x588] sm:$0xff]
    %v4878 = vld [vmem:[#allocation25 + $0x590] sm:$0xf]
    %v4879 = vld [vmem:[#allocation25 + $0x594] sm:$0xff]
    %v4880 = vld [vmem:[#allocation25 + $0x59c] sm:$0xff]
    %v4881 = vld [vmem:[#allocation25 + $0x5a4] sm:$0xff]
    %v4882 = vld [vmem:[#allocation25 + $0x5ac] sm:$0xf]
    %v4883 = vld [vmem:[#allocation25 + $0x5b0] sm:$0xff]
    %v4884 = vld [vmem:[#allocation25 + $0x5b8] sm:$0xff]
    %v4885 = vld [vmem:[#allocation25 + $0x5c0] sm:$0xff]
    %v4886 = vld [vmem:[#allocation25 + $0x5c8] sm:$0xf]
    %v4887 = vld [vmem:[#allocation25 + $0x5cc] sm:$0xff]
    %v4888 = vld [vmem:[#allocation25 + $0x5d4] sm:$0xff]
    %v4889 = vld [vmem:[#allocation25 + $0x5dc] sm:$0xff]
    %v4890 = vld [vmem:[#allocation25 + $0x5e4] sm:$0xf]
    %v4891 = vld [vmem:[#allocation25 + $0x5e8] sm:$0xff]
    %v4892 = vld [vmem:[#allocation25 + $0x5f0] sm:$0xff]
    %v4893 = vld [vmem:[#allocation25 + $0x5f8] sm:$0xff]
    %v4894 = vld [vmem:[#allocation25 + $0x600] sm:$0xf]
    %v4895 = vld [vmem:[#allocation25 + $0x604] sm:$0xff]
    %v4896 = vld [vmem:[#allocation25 + $0x60c] sm:$0xff]
    %v4897 = vld [vmem:[#allocation25 + $0x614] sm:$0xff]
    %v4898 = vld [vmem:[#allocation25 + $0x61c] sm:$0xf]
    %v4899 = vld [vmem:[#allocation25 + $0x620] sm:$0xff]
    %v4900 = vld [vmem:[#allocation25 + $0x628] sm:$0xff]
    %v4901 = vld [vmem:[#allocation25 + $0x630] sm:$0xff]
    %v4902 = vld [vmem:[#allocation25 + $0x638] sm:$0xf]
    %v4903 = vld [vmem:[#allocation25 + $0x63c] sm:$0xff]
    %v4904 = vld [vmem:[#allocation25 + $0x644] sm:$0xff]
    %v4905 = vld [vmem:[#allocation25 + $0x64c] sm:$0xff]
    %v4906 = vld [vmem:[#allocation25 + $0x654] sm:$0xf]
    %v4907 = vld [vmem:[#allocation25 + $0x658] sm:$0xff]
    %v4908 = vld [vmem:[#allocation25 + $0x660] sm:$0xff]
    %v4909 = vld [vmem:[#allocation25 + $0x668] sm:$0xff]
    %v4910 = vld [vmem:[#allocation25 + $0x670] sm:$0xf]
    %v4911 = vld [vmem:[#allocation25 + $0x674] sm:$0xff]
    %v4912 = vld [vmem:[#allocation25 + $0x67c] sm:$0xff]
    %v4913 = vld [vmem:[#allocation25 + $0x684] sm:$0xff]
    %v4914 = vld [vmem:[#allocation25 + $0x68c] sm:$0xf]
    %v4915 = vld [vmem:[#allocation25 + $0x690] sm:$0xff]
    %v4916 = vld [vmem:[#allocation25 + $0x698] sm:$0xff]
    %v4917 = vld [vmem:[#allocation25 + $0x6a0] sm:$0xff]
    %v4918 = vld [vmem:[#allocation25 + $0x6a8] sm:$0xf]
    %v4919 = vld [vmem:[#allocation25 + $0x6ac] sm:$0xff]
    %v4920 = vld [vmem:[#allocation25 + $0x6b4] sm:$0xff]
    %v4921 = vld [vmem:[#allocation25 + $0x6bc] sm:$0xff]
    %v4922 = vld [vmem:[#allocation25 + $0x6c4] sm:$0xf]
    %v4923 = vld [vmem:[#allocation25 + $0x6c8] sm:$0xff]
    %v4924 = vld [vmem:[#allocation25 + $0x6d0] sm:$0xff]
    %v4925 = vld [vmem:[#allocation25 + $0x6d8] sm:$0xff]
    %v4926 = vld [vmem:[#allocation25 + $0x6e0] sm:$0xf]
    %v4927 = vld [vmem:[#allocation25 + $0x6e4] sm:$0xff]
    %v4928 = vld [vmem:[#allocation25 + $0x6ec] sm:$0xff]
    %v4929 = vld [vmem:[#allocation25 + $0x6f4] sm:$0xff]
    %v4930 = vld [vmem:[#allocation25 + $0x6fc] sm:$0xf]
    %v4931 = vld [vmem:[#allocation25 + $0x700] sm:$0xff]
    %v4932 = vld [vmem:[#allocation25 + $0x708] sm:$0xff]
    %v4933 = vld [vmem:[#allocation25 + $0x710] sm:$0xff]
    %v4934 = vld [vmem:[#allocation25 + $0x718] sm:$0xf]
    %v4935 = vld [vmem:[#allocation25 + $0x71c] sm:$0xff]
    %v4936 = vld [vmem:[#allocation25 + $0x724] sm:$0xff]
    %v4937 = vld [vmem:[#allocation25 + $0x72c] sm:$0xff]
    %v4938 = vld [vmem:[#allocation25 + $0x734] sm:$0xf]
    %v4939 = vld [vmem:[#allocation25 + $0x738] sm:$0xff]
    %v4940 = vld [vmem:[#allocation25 + $0x740] sm:$0xff]
    %v4941 = vld [vmem:[#allocation25 + $0x748] sm:$0xff]
    %v4942 = vld [vmem:[#allocation25 + $0x750] sm:$0xf]
    %v4943 = vld [vmem:[#allocation25 + $0x754] sm:$0xff]
    %v4944 = vld [vmem:[#allocation25 + $0x75c] sm:$0xff]
    %v4945 = vld [vmem:[#allocation25 + $0x764] sm:$0xff]
    %v4946 = vld [vmem:[#allocation25 + $0x76c] sm:$0xf]
    %v4947 = vld [vmem:[#allocation25 + $0x770] sm:$0xff]
    %v4948 = vld [vmem:[#allocation25 + $0x778] sm:$0xff]
    %v4949 = vld [vmem:[#allocation25 + $0x780] sm:$0xff]
    %v4950 = vld [vmem:[#allocation25 + $0x788] sm:$0xf]
    %v4951 = vld [vmem:[#allocation25 + $0x78c] sm:$0xff]
    %v4952 = vld [vmem:[#allocation25 + $0x794] sm:$0xff]
    %v4953 = vld [vmem:[#allocation25 + $0x79c] sm:$0xff]
    %v4954 = vld [vmem:[#allocation25 + $0x7a4] sm:$0xf]
    %v4955 = vld [vmem:[#allocation25 + $0x7a8] sm:$0xff]
    %v4956 = vld [vmem:[#allocation25 + $0x7b0] sm:$0xff]
    %v4957 = vld [vmem:[#allocation25 + $0x7b8] sm:$0xff]
    %v4958 = vld [vmem:[#allocation25 + $0x7c0] sm:$0xf]
    %v4959 = vld [vmem:[#allocation25 + $0x7c4] sm:$0xff]
    %v4960 = vld [vmem:[#allocation25 + $0x7cc] sm:$0xff]
    %v4961 = vld [vmem:[#allocation25 + $0x7d4] sm:$0xff]
    %v4962 = vld [vmem:[#allocation25 + $0x7dc] sm:$0xf]
    %v4963 = vld [vmem:[#allocation25 + $0x7e0] sm:$0xff]
    %v4964 = vld [vmem:[#allocation25 + $0x7e8] sm:$0xff]
    %v4965 = vld [vmem:[#allocation25 + $0x7f0] sm:$0xff]
    %v4966 = vld [vmem:[#allocation25 + $0x7f8] sm:$0xf]
    %v4967 = vld [vmem:[#allocation25 + $0x7fc] sm:$0xff]
    %v4968 = vld [vmem:[#allocation25 + $0x804] sm:$0xff]
    %v4969 = vld [vmem:[#allocation25 + $0x80c] sm:$0xff]
    %v4970 = vld [vmem:[#allocation25 + $0x814] sm:$0xf]
    %v4971 = vld [vmem:[#allocation25 + $0x818] sm:$0xff]
    %v4972 = vld [vmem:[#allocation25 + $0x820] sm:$0xff]
    %v4973 = vld [vmem:[#allocation25 + $0x828] sm:$0xff]
    %v4974 = vld [vmem:[#allocation25 + $0x830] sm:$0xf]
    %v4975 = vld [vmem:[#allocation25 + $0x834] sm:$0xff]
    %v4976 = vld [vmem:[#allocation25 + $0x83c] sm:$0xff]
    %v4977 = vld [vmem:[#allocation25 + $0x844] sm:$0xff]
    %v4978 = vld [vmem:[#allocation25 + $0x84c] sm:$0xf]
    %v4979 = vld [vmem:[#allocation25 + $0x850] sm:$0xff]
    %v4980 = vld [vmem:[#allocation25 + $0x858] sm:$0xff]
    %v4981 = vld [vmem:[#allocation25 + $0x860] sm:$0xff]
    %v4982 = vld [vmem:[#allocation25 + $0x868] sm:$0xf]
    %v4983 = vld [vmem:[#allocation25 + $0x86c] sm:$0xff]
    %v4984 = vld [vmem:[#allocation25 + $0x874] sm:$0xff]
    %v4985 = vld [vmem:[#allocation25 + $0x87c] sm:$0xff]
    %v4986 = vld [vmem:[#allocation25 + $0x884] sm:$0xf]
    %v4987 = vld [vmem:[#allocation25 + $0x888] sm:$0xff]
    %v4988 = vld [vmem:[#allocation25 + $0x890] sm:$0xff]
    %v4989 = vld [vmem:[#allocation25 + $0x898] sm:$0xff]
    %v4990 = vld [vmem:[#allocation25 + $0x8a0] sm:$0xf]
    %v4991 = vld [vmem:[#allocation25 + $0x8a4] sm:$0xff]
    %v4992 = vld [vmem:[#allocation25 + $0x8ac] sm:$0xff]
    %v4993 = vld [vmem:[#allocation25 + $0x8b4] sm:$0xff]
    %v4994 = vld [vmem:[#allocation25 + $0x8bc] sm:$0xf]
    %v4995 = vld [vmem:[#allocation25 + $0x8c0] sm:$0xff]
    %v4996 = vld [vmem:[#allocation25 + $0x8c8] sm:$0xff]
    %v4997 = vld [vmem:[#allocation25 + $0x8d0] sm:$0xff]
    %v4998 = vld [vmem:[#allocation25 + $0x8d8] sm:$0xf]
    %v4999 = vld [vmem:[#allocation25 + $0x8dc] sm:$0xff]
    %v5000 = vld [vmem:[#allocation25 + $0x8e4] sm:$0xff]
    %v5001 = vld [vmem:[#allocation25 + $0x8ec] sm:$0xff]
    %v5002 = vld [vmem:[#allocation25 + $0x8f4] sm:$0xf]
    %v5003 = vld [vmem:[#allocation25 + $0x8f8] sm:$0xff]
    %v5004 = vld [vmem:[#allocation25 + $0x900] sm:$0xff]
    %v5005 = vld [vmem:[#allocation25 + $0x908] sm:$0xff]
    %v5006 = vld [vmem:[#allocation25 + $0x910] sm:$0xf]
    %v5007 = vld [vmem:[#allocation25 + $0x914] sm:$0xff]
    %v5008 = vld [vmem:[#allocation25 + $0x91c] sm:$0xff]
    %v5009 = vld [vmem:[#allocation25 + $0x924] sm:$0xff]
    %v5010 = vld [vmem:[#allocation25 + $0x92c] sm:$0xf]
    %v5011 = vld [vmem:[#allocation25 + $0x930] sm:$0xff]
    %v5012 = vld [vmem:[#allocation25 + $0x938] sm:$0xff]
    %v5013 = vld [vmem:[#allocation25 + $0x940] sm:$0xff]
    %v5014 = vld [vmem:[#allocation25 + $0x948] sm:$0xf]
    %v5015 = vld [vmem:[#allocation25 + $0x94c] sm:$0xff]
    %v5016 = vld [vmem:[#allocation25 + $0x954] sm:$0xff]
    %v5017 = vld [vmem:[#allocation25 + $0x95c] sm:$0xff]
    %v5018 = vld [vmem:[#allocation25 + $0x964] sm:$0xf]
    %v5019 = vld [vmem:[#allocation25 + $0x968] sm:$0xff]
    %v5020 = vld [vmem:[#allocation25 + $0x970] sm:$0xff]
    %v5021 = vld [vmem:[#allocation25 + $0x978] sm:$0xff]
    %v5022 = vld [vmem:[#allocation25 + $0x980] sm:$0xf]
    %v5023 = vld [vmem:[#allocation25 + $0x984] sm:$0xff]
    %v5024 = vld [vmem:[#allocation25 + $0x98c] sm:$0xff]
    %v5025 = vld [vmem:[#allocation25 + $0x994] sm:$0xff]
    %v5026 = vld [vmem:[#allocation25 + $0x99c] sm:$0xf]
    %v5027 = vld [vmem:[#allocation25 + $0x9a0] sm:$0xff]
    %v5028 = vld [vmem:[#allocation25 + $0x9a8] sm:$0xff]
    %v5029 = vld [vmem:[#allocation25 + $0x9b0] sm:$0xff]
    %v5030 = vld [vmem:[#allocation25 + $0x9b8] sm:$0xf]
    %v5031 = vld [vmem:[#allocation25 + $0x9bc] sm:$0xff]
    %v5032 = vld [vmem:[#allocation25 + $0x9c4] sm:$0xff]
    %v5033 = vld [vmem:[#allocation25 + $0x9cc] sm:$0xff]
    %v5034 = vld [vmem:[#allocation25 + $0x9d4] sm:$0xf]
    %v5035 = vld [vmem:[#allocation25 + $0x9d8] sm:$0xff]
    %v5036 = vld [vmem:[#allocation25 + $0x9e0] sm:$0xff]
    %v5037 = vld [vmem:[#allocation25 + $0x9e8] sm:$0xff]
    %v5038 = vld [vmem:[#allocation25 + $0x9f0] sm:$0xf]
    %v5039 = vld [vmem:[#allocation25 + $0x9f4] sm:$0xff]
    %v5040 = vld [vmem:[#allocation25 + $0x9fc] sm:$0xff]
    %v5041 = vld [vmem:[#allocation25 + $0xa04] sm:$0xff]
    %v5042 = vld [vmem:[#allocation25 + $0xa0c] sm:$0xf]
    %v5043 = vld [vmem:[#allocation25 + $0xa10] sm:$0xff]
    %v5044 = vld [vmem:[#allocation25 + $0xa18] sm:$0xff]
    %v5045 = vld [vmem:[#allocation25 + $0xa20] sm:$0xff]
    %v5046 = vld [vmem:[#allocation25 + $0xa28] sm:$0xf]
    %v5047 = vld [vmem:[#allocation25 + $0xa2c] sm:$0xff]
    %v5048 = vld [vmem:[#allocation25 + $0xa34] sm:$0xff]
    %v5049 = vld [vmem:[#allocation25 + $0xa3c] sm:$0xff]
    %v5050 = vld [vmem:[#allocation25 + $0xa44] sm:$0xf]
    %v5051 = vld [vmem:[#allocation25 + $0xa48] sm:$0xff]
    %v5052 = vld [vmem:[#allocation25 + $0xa50] sm:$0xff]
    %v5053 = vld [vmem:[#allocation25 + $0xa58] sm:$0xff]
    %v5054 = vld [vmem:[#allocation25 + $0xa60] sm:$0xf]
    %v5055 = vld [vmem:[#allocation25 + $0xa64] sm:$0xff]
    %v5056 = vld [vmem:[#allocation25 + $0xa6c] sm:$0xff]
    %v5057 = vld [vmem:[#allocation25 + $0xa74] sm:$0xff]
    %v5058 = vld [vmem:[#allocation25 + $0xa7c] sm:$0xf]
    %v5059 = vld [vmem:[#allocation25 + $0xa80] sm:$0xff]
    %v5060 = vld [vmem:[#allocation25 + $0xa88] sm:$0xff]
    %v5061 = vld [vmem:[#allocation25 + $0xa90] sm:$0xff]
    %v5062 = vld [vmem:[#allocation25 + $0xa98] sm:$0xf]
    %v5063 = vld [vmem:[#allocation25 + $0xa9c] sm:$0xff]
    %v5064 = vld [vmem:[#allocation25 + $0xaa4] sm:$0xff]
    %v5065 = vld [vmem:[#allocation25 + $0xaac] sm:$0xff]
    %v5066 = vld [vmem:[#allocation25 + $0xab4] sm:$0xf]
    %v5067 = vld [vmem:[#allocation25 + $0xab8] sm:$0xff]
    %v5068 = vld [vmem:[#allocation25 + $0xac0] sm:$0xff]
    %v5069 = vld [vmem:[#allocation25 + $0xac8] sm:$0xff]
    %v5070 = vld [vmem:[#allocation25 + $0xad0] sm:$0xf]
    %v5071 = vld [vmem:[#allocation25 + $0xad4] sm:$0xff]
    %v5072 = vld [vmem:[#allocation25 + $0xadc] sm:$0xff]
    %v5073 = vld [vmem:[#allocation25 + $0xae4] sm:$0xff]
    %v5074 = vld [vmem:[#allocation25 + $0xaec] sm:$0xf]
    %v5075 = vld [vmem:[#allocation25 + $0xaf0] sm:$0xff]
    %v5076 = vld [vmem:[#allocation25 + $0xaf8] sm:$0xff]
    %v5077 = vld [vmem:[#allocation25 + $0xb00] sm:$0xff]
    %v5078 = vld [vmem:[#allocation25 + $0xb08] sm:$0xf]
    %v5079 = vld [vmem:[#allocation25 + $0xb0c] sm:$0xff]
    %v5080 = vld [vmem:[#allocation25 + $0xb14] sm:$0xff]
    %v5081 = vld [vmem:[#allocation25 + $0xb1c] sm:$0xff]
    %v5082 = vld [vmem:[#allocation25 + $0xb24] sm:$0xf]
    %v5083 = vld [vmem:[#allocation25 + $0xb28] sm:$0xff]
    %v5084 = vld [vmem:[#allocation25 + $0xb30] sm:$0xff]
    %v5085 = vld [vmem:[#allocation25 + $0xb38] sm:$0xff]
    %v5086 = vld [vmem:[#allocation25 + $0xb40] sm:$0xf]
    %v5087 = vld [vmem:[#allocation25 + $0xb44] sm:$0xff]
    %v5088 = vld [vmem:[#allocation25 + $0xb4c] sm:$0xff]
    %v5089 = vld [vmem:[#allocation25 + $0xb54] sm:$0xff]
    %v5090 = vld [vmem:[#allocation25 + $0xb5c] sm:$0xf]
    %v5091 = vld [vmem:[#allocation25 + $0xb60] sm:$0xff]
    %v5092 = vld [vmem:[#allocation25 + $0xb68] sm:$0xff]
    %v5093 = vld [vmem:[#allocation25 + $0xb70] sm:$0xff]
    %v5094 = vld [vmem:[#allocation25 + $0xb78] sm:$0xf]
    %v5095 = vld [vmem:[#allocation25 + $0xb7c] sm:$0xff]
    %v5096 = vld [vmem:[#allocation25 + $0xb84] sm:$0xff]
    %v5097 = vld [vmem:[#allocation25 + $0xb8c] sm:$0xff]
    %v5098 = vld [vmem:[#allocation25 + $0xb94] sm:$0xf]
    %v5099 = vld [vmem:[#allocation25 + $0xb98] sm:$0xff]
    %v5100 = vld [vmem:[#allocation25 + $0xba0] sm:$0xff]
    %v5101 = vld [vmem:[#allocation25 + $0xba8] sm:$0xff]
    %v5102 = vld [vmem:[#allocation25 + $0xbb0] sm:$0xf]
    %v5103 = vld [vmem:[#allocation25 + $0xbb4] sm:$0xff]
    %v5104 = vld [vmem:[#allocation25 + $0xbbc] sm:$0xff]
    %v5105 = vld [vmem:[#allocation25 + $0xbc4] sm:$0xff]
    %v5106 = vld [vmem:[#allocation25 + $0xbcc] sm:$0xf]
    %v5107 = vld [vmem:[#allocation25 + $0xbd0] sm:$0xff]
    %v5108 = vld [vmem:[#allocation25 + $0xbd8] sm:$0xff]
    %v5109 = vld [vmem:[#allocation25 + $0xbe0] sm:$0xff]
    %v5110 = vld [vmem:[#allocation25 + $0xbe8] sm:$0xf]
    %v5111 = vld [vmem:[#allocation25 + $0xbec] sm:$0xff]
    %v5112 = vld [vmem:[#allocation25 + $0xbf4] sm:$0xff]
    %v5113 = vld [vmem:[#allocation25 + $0xbfc] sm:$0xff]
    %v5114 = vld [vmem:[#allocation25 + $0xc04] sm:$0xf]
    %v5115 = vld [vmem:[#allocation25 + $0xc08] sm:$0xff]
    %v5116 = vld [vmem:[#allocation25 + $0xc10] sm:$0xff]
    %v5117 = vld [vmem:[#allocation25 + $0xc18] sm:$0xff]
    %v5118 = vld [vmem:[#allocation25 + $0xc20] sm:$0xf]
    %v5119 = vld [vmem:[#allocation25 + $0xc24] sm:$0xff]
    %v5120 = vld [vmem:[#allocation25 + $0xc2c] sm:$0xff]
    %v5121 = vld [vmem:[#allocation25 + $0xc34] sm:$0xff]
    %v5122 = vld [vmem:[#allocation25 + $0xc3c] sm:$0xf]
    %v5123 = vld [vmem:[#allocation25 + $0xc40] sm:$0xff]
    %v5124 = vld [vmem:[#allocation25 + $0xc48] sm:$0xff]
    %v5125 = vld [vmem:[#allocation25 + $0xc50] sm:$0xff]
    %v5126 = vld [vmem:[#allocation25 + $0xc58] sm:$0xf]
    %v5127 = vld [vmem:[#allocation25 + $0xc5c] sm:$0xff]
    %v5128 = vld [vmem:[#allocation25 + $0xc64] sm:$0xff]
    %v5129 = vld [vmem:[#allocation25 + $0xc6c] sm:$0xff]
    %v5130 = vld [vmem:[#allocation25 + $0xc74] sm:$0xf]
    %v5131 = vld [vmem:[#allocation25 + $0xc78] sm:$0xff]
    %v5132 = vld [vmem:[#allocation25 + $0xc80] sm:$0xff]
    %v5133 = vld [vmem:[#allocation25 + $0xc88] sm:$0xff]
    %v5134 = vld [vmem:[#allocation25 + $0xc90] sm:$0xf]
    %v5135 = vld [vmem:[#allocation25 + $0xc94] sm:$0xff]
    %v5136 = vld [vmem:[#allocation25 + $0xc9c] sm:$0xff]
    %v5137 = vld [vmem:[#allocation25 + $0xca4] sm:$0xff]
    %v5138 = vld [vmem:[#allocation25 + $0xcac] sm:$0xf]
    %v5139 = vld [vmem:[#allocation25 + $0xcb0] sm:$0xff]
    %v5140 = vld [vmem:[#allocation25 + $0xcb8] sm:$0xff]
    %v5141 = vld [vmem:[#allocation25 + $0xcc0] sm:$0xff]
    %v5142 = vld [vmem:[#allocation25 + $0xcc8] sm:$0xf]
    %v5143 = vld [vmem:[#allocation25 + $0xccc] sm:$0xff]
    %v5144 = vld [vmem:[#allocation25 + $0xcd4] sm:$0xff]
    %v5145 = vld [vmem:[#allocation25 + $0xcdc] sm:$0xff]
    %v5146 = vld [vmem:[#allocation25 + $0xce4] sm:$0xf]
    %v5147 = vld [vmem:[#allocation25 + $0xce8] sm:$0xff]
    %v5148 = vld [vmem:[#allocation25 + $0xcf0] sm:$0xff]
    %v5149 = vld [vmem:[#allocation25 + $0xcf8] sm:$0xff]
    %v5150 = vld [vmem:[#allocation25 + $0xd00] sm:$0xf]
    %v5151 = vld [vmem:[#allocation25 + $0xd04] sm:$0xff]
    %v5152 = vld [vmem:[#allocation25 + $0xd0c] sm:$0xff]
    %v5153 = vld [vmem:[#allocation25 + $0xd14] sm:$0xff]
    %v5154 = vld [vmem:[#allocation25 + $0xd1c] sm:$0xf]
    %v5155 = vld [vmem:[#allocation25 + $0xd20] sm:$0xff]
    %v5156 = vld [vmem:[#allocation25 + $0xd28] sm:$0xff]
    %v5157 = vld [vmem:[#allocation25 + $0xd30] sm:$0xff]
    %v5158 = vld [vmem:[#allocation25 + $0xd38] sm:$0xf]
    %v5159 = vld [vmem:[#allocation25 + $0xd3c] sm:$0xff]
    %v5160 = vld [vmem:[#allocation25 + $0xd44] sm:$0xff]
    %v5161 = vld [vmem:[#allocation25 + $0xd4c] sm:$0xff]
    %v5162 = vld [vmem:[#allocation25 + $0xd54] sm:$0xf]
    %v5163 = vld [vmem:[#allocation25 + $0xd58] sm:$0xff]
    %v5164 = vld [vmem:[#allocation25 + $0xd60] sm:$0xff]
    %v5165 = vld [vmem:[#allocation25 + $0xd68] sm:$0xff]
    %v5166 = vld [vmem:[#allocation25 + $0xd70] sm:$0xf]
    %v5167 = vld [vmem:[#allocation25 + $0xd74] sm:$0xff]
    %v5168 = vld [vmem:[#allocation25 + $0xd7c] sm:$0xff]
    %v5169 = vld [vmem:[#allocation25 + $0xd84] sm:$0xff]
    %v5170 = vld [vmem:[#allocation25 + $0xd8c] sm:$0xf]
    %v5171 = vld [vmem:[#allocation25 + $0xd90] sm:$0xff]
    %v5172 = vld [vmem:[#allocation25 + $0xd98] sm:$0xff]
    %v5173 = vld [vmem:[#allocation25 + $0xda0] sm:$0xff]
    %v5174 = vld [vmem:[#allocation25 + $0xda8] sm:$0xf]
    %v5175 = vld [vmem:[#allocation25 + $0xdac] sm:$0xff]
    %v5176 = vld [vmem:[#allocation25 + $0xdb4] sm:$0xff]
    %v5177 = vld [vmem:[#allocation25 + $0xdbc] sm:$0xff]
    %v5178 = vld [vmem:[#allocation25 + $0xdc4] sm:$0xf]
    %v5179 = vld [vmem:[#allocation25 + $0xdc8] sm:$0xff]
    %v5180 = vld [vmem:[#allocation25 + $0xdd0] sm:$0xff]
    %v5181 = vld [vmem:[#allocation25 + $0xdd8] sm:$0xff]
    %v5182 = vld [vmem:[#allocation25 + $0xde0] sm:$0xf]
    %v5183 = vld [vmem:[#allocation25 + $0xde4] sm:$0xff]
    %v5184 = vld [vmem:[#allocation25 + $0xdec] sm:$0xff]
    %v5185 = vld [vmem:[#allocation25 + $0xdf4] sm:$0xff]
    %v5186 = vld [vmem:[#allocation25 + $0xdfc] sm:$0xf]
    %v5187 = vunpack.c.l.bf16 %v4675
    %v5188 = vunpack.c.h.bf16 %v4675
    %v5189 = vunpack.c.l.bf16 %v4676
    %v5190 = vunpack.c.h.bf16 %v4676
    %v5191 = vunpack.c.l.bf16 %v4677
    %v5192 = vunpack.c.h.bf16 %v4677
    %v5193 = vunpack.c.l.bf16 %v4678
    %v5194 = vunpack.c.l.bf16 %v4679
    %v5195 = vunpack.c.h.bf16 %v4679
    %v5196 = vunpack.c.l.bf16 %v4680
    %v5197 = vunpack.c.h.bf16 %v4680
    %v5198 = vunpack.c.l.bf16 %v4681
    %v5199 = vunpack.c.h.bf16 %v4681
    %v5200 = vunpack.c.l.bf16 %v4682
    %v5201 = vunpack.c.l.bf16 %v4683
    %v5202 = vunpack.c.h.bf16 %v4683
    %v5203 = vunpack.c.l.bf16 %v4684
    %v5204 = vunpack.c.h.bf16 %v4684
    %v5205 = vunpack.c.l.bf16 %v4685
    %v5206 = vunpack.c.h.bf16 %v4685
    %v5207 = vunpack.c.l.bf16 %v4686
    %v5208 = vunpack.c.l.bf16 %v4687
    %v5209 = vunpack.c.h.bf16 %v4687
    %v5210 = vunpack.c.l.bf16 %v4688
    %v5211 = vunpack.c.h.bf16 %v4688
    %v5212 = vunpack.c.l.bf16 %v4689
    %v5213 = vunpack.c.h.bf16 %v4689
    %v5214 = vunpack.c.l.bf16 %v4690
    %v5215 = vunpack.c.l.bf16 %v4691
    %v5216 = vunpack.c.h.bf16 %v4691
    %v5217 = vunpack.c.l.bf16 %v4692
    %v5218 = vunpack.c.h.bf16 %v4692
    %v5219 = vunpack.c.l.bf16 %v4693
    %v5220 = vunpack.c.h.bf16 %v4693
    %v5221 = vunpack.c.l.bf16 %v4694
    %v5222 = vunpack.c.l.bf16 %v4695
    %v5223 = vunpack.c.h.bf16 %v4695
    %v5224 = vunpack.c.l.bf16 %v4696
    %v5225 = vunpack.c.h.bf16 %v4696
    %v5226 = vunpack.c.l.bf16 %v4697
    %v5227 = vunpack.c.h.bf16 %v4697
    %v5228 = vunpack.c.l.bf16 %v4698
    %v5229 = vunpack.c.l.bf16 %v4699
    %v5230 = vunpack.c.h.bf16 %v4699
    %v5231 = vunpack.c.l.bf16 %v4700
    %v5232 = vunpack.c.h.bf16 %v4700
    %v5233 = vunpack.c.l.bf16 %v4701
    %v5234 = vunpack.c.h.bf16 %v4701
    %v5235 = vunpack.c.l.bf16 %v4702
    %v5236 = vunpack.c.l.bf16 %v4703
    %v5237 = vunpack.c.h.bf16 %v4703
    %v5238 = vunpack.c.l.bf16 %v4704
    %v5239 = vunpack.c.h.bf16 %v4704
    %v5240 = vunpack.c.l.bf16 %v4705
    %v5241 = vunpack.c.h.bf16 %v4705
    %v5242 = vunpack.c.l.bf16 %v4706
    %v5243 = vunpack.c.l.bf16 %v4707
    %v5244 = vunpack.c.h.bf16 %v4707
    %v5245 = vunpack.c.l.bf16 %v4708
    %v5246 = vunpack.c.h.bf16 %v4708
    %v5247 = vunpack.c.l.bf16 %v4709
    %v5248 = vunpack.c.h.bf16 %v4709
    %v5249 = vunpack.c.l.bf16 %v4710
    %v5250 = vunpack.c.l.bf16 %v4711
    %v5251 = vunpack.c.h.bf16 %v4711
    %v5252 = vunpack.c.l.bf16 %v4712
    %v5253 = vunpack.c.h.bf16 %v4712
    %v5254 = vunpack.c.l.bf16 %v4713
    %v5255 = vunpack.c.h.bf16 %v4713
    %v5256 = vunpack.c.l.bf16 %v4714
    %v5257 = vunpack.c.l.bf16 %v4715
    %v5258 = vunpack.c.h.bf16 %v4715
    %v5259 = vunpack.c.l.bf16 %v4716
    %v5260 = vunpack.c.h.bf16 %v4716
    %v5261 = vunpack.c.l.bf16 %v4717
    %v5262 = vunpack.c.h.bf16 %v4717
    %v5263 = vunpack.c.l.bf16 %v4718
    %v5264 = vunpack.c.l.bf16 %v4719
    %v5265 = vunpack.c.h.bf16 %v4719
    %v5266 = vunpack.c.l.bf16 %v4720
    %v5267 = vunpack.c.h.bf16 %v4720
    %v5268 = vunpack.c.l.bf16 %v4721
    %v5269 = vunpack.c.h.bf16 %v4721
    %v5270 = vunpack.c.l.bf16 %v4722
    %v5271 = vunpack.c.l.bf16 %v4723
    %v5272 = vunpack.c.h.bf16 %v4723
    %v5273 = vunpack.c.l.bf16 %v4724
    %v5274 = vunpack.c.h.bf16 %v4724
    %v5275 = vunpack.c.l.bf16 %v4725
    %v5276 = vunpack.c.h.bf16 %v4725
    %v5277 = vunpack.c.l.bf16 %v4726
    %v5278 = vunpack.c.l.bf16 %v4727
    %v5279 = vunpack.c.h.bf16 %v4727
    %v5280 = vunpack.c.l.bf16 %v4728
    %v5281 = vunpack.c.h.bf16 %v4728
    %v5282 = vunpack.c.l.bf16 %v4729
    %v5283 = vunpack.c.h.bf16 %v4729
    %v5284 = vunpack.c.l.bf16 %v4730
    %v5285 = vunpack.c.l.bf16 %v4731
    %v5286 = vunpack.c.h.bf16 %v4731
    %v5287 = vunpack.c.l.bf16 %v4732
    %v5288 = vunpack.c.h.bf16 %v4732
    %v5289 = vunpack.c.l.bf16 %v4733
    %v5290 = vunpack.c.h.bf16 %v4733
    %v5291 = vunpack.c.l.bf16 %v4734
    %v5292 = vunpack.c.l.bf16 %v4735
    %v5293 = vunpack.c.h.bf16 %v4735
    %v5294 = vunpack.c.l.bf16 %v4736
    %v5295 = vunpack.c.h.bf16 %v4736
    %v5296 = vunpack.c.l.bf16 %v4737
    %v5297 = vunpack.c.h.bf16 %v4737
    %v5298 = vunpack.c.l.bf16 %v4738
    %v5299 = vunpack.c.l.bf16 %v4739
    %v5300 = vunpack.c.h.bf16 %v4739
    %v5301 = vunpack.c.l.bf16 %v4740
    %v5302 = vunpack.c.h.bf16 %v4740
    %v5303 = vunpack.c.l.bf16 %v4741
    %v5304 = vunpack.c.h.bf16 %v4741
    %v5305 = vunpack.c.l.bf16 %v4742
    %v5306 = vunpack.c.l.bf16 %v4743
    %v5307 = vunpack.c.h.bf16 %v4743
    %v5308 = vunpack.c.l.bf16 %v4744
    %v5309 = vunpack.c.h.bf16 %v4744
    %v5310 = vunpack.c.l.bf16 %v4745
    %v5311 = vunpack.c.h.bf16 %v4745
    %v5312 = vunpack.c.l.bf16 %v4746
    %v5313 = vunpack.c.l.bf16 %v4747
    %v5314 = vunpack.c.h.bf16 %v4747
    %v5315 = vunpack.c.l.bf16 %v4748
    %v5316 = vunpack.c.h.bf16 %v4748
    %v5317 = vunpack.c.l.bf16 %v4749
    %v5318 = vunpack.c.h.bf16 %v4749
    %v5319 = vunpack.c.l.bf16 %v4750
    %v5320 = vunpack.c.l.bf16 %v4751
    %v5321 = vunpack.c.h.bf16 %v4751
    %v5322 = vunpack.c.l.bf16 %v4752
    %v5323 = vunpack.c.h.bf16 %v4752
    %v5324 = vunpack.c.l.bf16 %v4753
    %v5325 = vunpack.c.h.bf16 %v4753
    %v5326 = vunpack.c.l.bf16 %v4754
    %v5327 = vunpack.c.l.bf16 %v4755
    %v5328 = vunpack.c.h.bf16 %v4755
    %v5329 = vunpack.c.l.bf16 %v4756
    %v5330 = vunpack.c.h.bf16 %v4756
    %v5331 = vunpack.c.l.bf16 %v4757
    %v5332 = vunpack.c.h.bf16 %v4757
    %v5333 = vunpack.c.l.bf16 %v4758
    %v5334 = vunpack.c.l.bf16 %v4759
    %v5335 = vunpack.c.h.bf16 %v4759
    %v5336 = vunpack.c.l.bf16 %v4760
    %v5337 = vunpack.c.h.bf16 %v4760
    %v5338 = vunpack.c.l.bf16 %v4761
    %v5339 = vunpack.c.h.bf16 %v4761
    %v5340 = vunpack.c.l.bf16 %v4762
    %v5341 = vunpack.c.l.bf16 %v4763
    %v5342 = vunpack.c.h.bf16 %v4763
    %v5343 = vunpack.c.l.bf16 %v4764
    %v5344 = vunpack.c.h.bf16 %v4764
    %v5345 = vunpack.c.l.bf16 %v4765
    %v5346 = vunpack.c.h.bf16 %v4765
    %v5347 = vunpack.c.l.bf16 %v4766
    %v5348 = vunpack.c.l.bf16 %v4767
    %v5349 = vunpack.c.h.bf16 %v4767
    %v5350 = vunpack.c.l.bf16 %v4768
    %v5351 = vunpack.c.h.bf16 %v4768
    %v5352 = vunpack.c.l.bf16 %v4769
    %v5353 = vunpack.c.h.bf16 %v4769
    %v5354 = vunpack.c.l.bf16 %v4770
    %v5355 = vunpack.c.l.bf16 %v4771
    %v5356 = vunpack.c.h.bf16 %v4771
    %v5357 = vunpack.c.l.bf16 %v4772
    %v5358 = vunpack.c.h.bf16 %v4772
    %v5359 = vunpack.c.l.bf16 %v4773
    %v5360 = vunpack.c.h.bf16 %v4773
    %v5361 = vunpack.c.l.bf16 %v4774
    %v5362 = vunpack.c.l.bf16 %v4775
    %v5363 = vunpack.c.h.bf16 %v4775
    %v5364 = vunpack.c.l.bf16 %v4776
    %v5365 = vunpack.c.h.bf16 %v4776
    %v5366 = vunpack.c.l.bf16 %v4777
    %v5367 = vunpack.c.h.bf16 %v4777
    %v5368 = vunpack.c.l.bf16 %v4778
    %v5369 = vunpack.c.l.bf16 %v4779
    %v5370 = vunpack.c.h.bf16 %v4779
    %v5371 = vunpack.c.l.bf16 %v4780
    %v5372 = vunpack.c.h.bf16 %v4780
    %v5373 = vunpack.c.l.bf16 %v4781
    %v5374 = vunpack.c.h.bf16 %v4781
    %v5375 = vunpack.c.l.bf16 %v4782
    %v5376 = vunpack.c.l.bf16 %v4783
    %v5377 = vunpack.c.h.bf16 %v4783
    %v5378 = vunpack.c.l.bf16 %v4784
    %v5379 = vunpack.c.h.bf16 %v4784
    %v5380 = vunpack.c.l.bf16 %v4785
    %v5381 = vunpack.c.h.bf16 %v4785
    %v5382 = vunpack.c.l.bf16 %v4786
    %v5383 = vunpack.c.l.bf16 %v4787
    %v5384 = vunpack.c.h.bf16 %v4787
    %v5385 = vunpack.c.l.bf16 %v4788
    %v5386 = vunpack.c.h.bf16 %v4788
    %v5387 = vunpack.c.l.bf16 %v4789
    %v5388 = vunpack.c.h.bf16 %v4789
    %v5389 = vunpack.c.l.bf16 %v4790
    %v5390 = vunpack.c.l.bf16 %v4791
    %v5391 = vunpack.c.h.bf16 %v4791
    %v5392 = vunpack.c.l.bf16 %v4792
    %v5393 = vunpack.c.h.bf16 %v4792
    %v5394 = vunpack.c.l.bf16 %v4793
    %v5395 = vunpack.c.h.bf16 %v4793
    %v5396 = vunpack.c.l.bf16 %v4794
    %v5397 = vunpack.c.l.bf16 %v4795
    %v5398 = vunpack.c.h.bf16 %v4795
    %v5399 = vunpack.c.l.bf16 %v4796
    %v5400 = vunpack.c.h.bf16 %v4796
    %v5401 = vunpack.c.l.bf16 %v4797
    %v5402 = vunpack.c.h.bf16 %v4797
    %v5403 = vunpack.c.l.bf16 %v4798
    %v5404 = vunpack.c.l.bf16 %v4799
    %v5405 = vunpack.c.h.bf16 %v4799
    %v5406 = vunpack.c.l.bf16 %v4800
    %v5407 = vunpack.c.h.bf16 %v4800
    %v5408 = vunpack.c.l.bf16 %v4801
    %v5409 = vunpack.c.h.bf16 %v4801
    %v5410 = vunpack.c.l.bf16 %v4802
    %v5411 = vunpack.c.l.bf16 %v4803
    %v5412 = vunpack.c.h.bf16 %v4803
    %v5413 = vunpack.c.l.bf16 %v4804
    %v5414 = vunpack.c.h.bf16 %v4804
    %v5415 = vunpack.c.l.bf16 %v4805
    %v5416 = vunpack.c.h.bf16 %v4805
    %v5417 = vunpack.c.l.bf16 %v4806
    %v5418 = vunpack.c.l.bf16 %v4807
    %v5419 = vunpack.c.h.bf16 %v4807
    %v5420 = vunpack.c.l.bf16 %v4808
    %v5421 = vunpack.c.h.bf16 %v4808
    %v5422 = vunpack.c.l.bf16 %v4809
    %v5423 = vunpack.c.h.bf16 %v4809
    %v5424 = vunpack.c.l.bf16 %v4810
    %v5425 = vunpack.c.l.bf16 %v4811
    %v5426 = vunpack.c.h.bf16 %v4811
    %v5427 = vunpack.c.l.bf16 %v4812
    %v5428 = vunpack.c.h.bf16 %v4812
    %v5429 = vunpack.c.l.bf16 %v4813
    %v5430 = vunpack.c.h.bf16 %v4813
    %v5431 = vunpack.c.l.bf16 %v4814
    %v5432 = vunpack.c.l.bf16 %v4815
    %v5433 = vunpack.c.h.bf16 %v4815
    %v5434 = vunpack.c.l.bf16 %v4816
    %v5435 = vunpack.c.h.bf16 %v4816
    %v5436 = vunpack.c.l.bf16 %v4817
    %v5437 = vunpack.c.h.bf16 %v4817
    %v5438 = vunpack.c.l.bf16 %v4818
    %v5439 = vunpack.c.l.bf16 %v4819
    %v5440 = vunpack.c.h.bf16 %v4819
    %v5441 = vunpack.c.l.bf16 %v4820
    %v5442 = vunpack.c.h.bf16 %v4820
    %v5443 = vunpack.c.l.bf16 %v4821
    %v5444 = vunpack.c.h.bf16 %v4821
    %v5445 = vunpack.c.l.bf16 %v4822
    %v5446 = vunpack.c.l.bf16 %v4823
    %v5447 = vunpack.c.h.bf16 %v4823
    %v5448 = vunpack.c.l.bf16 %v4824
    %v5449 = vunpack.c.h.bf16 %v4824
    %v5450 = vunpack.c.l.bf16 %v4825
    %v5451 = vunpack.c.h.bf16 %v4825
    %v5452 = vunpack.c.l.bf16 %v4826
    %v5453 = vunpack.c.l.bf16 %v4827
    %v5454 = vunpack.c.h.bf16 %v4827
    %v5455 = vunpack.c.l.bf16 %v4828
    %v5456 = vunpack.c.h.bf16 %v4828
    %v5457 = vunpack.c.l.bf16 %v4829
    %v5458 = vunpack.c.h.bf16 %v4829
    %v5459 = vunpack.c.l.bf16 %v4830
    %v5460 = vunpack.c.l.bf16 %v4831
    %v5461 = vunpack.c.h.bf16 %v4831
    %v5462 = vunpack.c.l.bf16 %v4832
    %v5463 = vunpack.c.h.bf16 %v4832
    %v5464 = vunpack.c.l.bf16 %v4833
    %v5465 = vunpack.c.h.bf16 %v4833
    %v5466 = vunpack.c.l.bf16 %v4834
    %v5467 = vunpack.c.l.bf16 %v4835
    %v5468 = vunpack.c.h.bf16 %v4835
    %v5469 = vunpack.c.l.bf16 %v4836
    %v5470 = vunpack.c.h.bf16 %v4836
    %v5471 = vunpack.c.l.bf16 %v4837
    %v5472 = vunpack.c.h.bf16 %v4837
    %v5473 = vunpack.c.l.bf16 %v4838
    %v5474 = vunpack.c.l.bf16 %v4839
    %v5475 = vunpack.c.h.bf16 %v4839
    %v5476 = vunpack.c.l.bf16 %v4840
    %v5477 = vunpack.c.h.bf16 %v4840
    %v5478 = vunpack.c.l.bf16 %v4841
    %v5479 = vunpack.c.h.bf16 %v4841
    %v5480 = vunpack.c.l.bf16 %v4842
    %v5481 = vunpack.c.l.bf16 %v4843
    %v5482 = vunpack.c.h.bf16 %v4843
    %v5483 = vunpack.c.l.bf16 %v4844
    %v5484 = vunpack.c.h.bf16 %v4844
    %v5485 = vunpack.c.l.bf16 %v4845
    %v5486 = vunpack.c.h.bf16 %v4845
    %v5487 = vunpack.c.l.bf16 %v4846
    %v5488 = vunpack.c.l.bf16 %v4847
    %v5489 = vunpack.c.h.bf16 %v4847
    %v5490 = vunpack.c.l.bf16 %v4848
    %v5491 = vunpack.c.h.bf16 %v4848
    %v5492 = vunpack.c.l.bf16 %v4849
    %v5493 = vunpack.c.h.bf16 %v4849
    %v5494 = vunpack.c.l.bf16 %v4850
    %v5495 = vunpack.c.l.bf16 %v4851
    %v5496 = vunpack.c.h.bf16 %v4851
    %v5497 = vunpack.c.l.bf16 %v4852
    %v5498 = vunpack.c.h.bf16 %v4852
    %v5499 = vunpack.c.l.bf16 %v4853
    %v5500 = vunpack.c.h.bf16 %v4853
    %v5501 = vunpack.c.l.bf16 %v4854
    %v5502 = vunpack.c.l.bf16 %v4855
    %v5503 = vunpack.c.h.bf16 %v4855
    %v5504 = vunpack.c.l.bf16 %v4856
    %v5505 = vunpack.c.h.bf16 %v4856
    %v5506 = vunpack.c.l.bf16 %v4857
    %v5507 = vunpack.c.h.bf16 %v4857
    %v5508 = vunpack.c.l.bf16 %v4858
    %v5509 = vunpack.c.l.bf16 %v4859
    %v5510 = vunpack.c.h.bf16 %v4859
    %v5511 = vunpack.c.l.bf16 %v4860
    %v5512 = vunpack.c.h.bf16 %v4860
    %v5513 = vunpack.c.l.bf16 %v4861
    %v5514 = vunpack.c.h.bf16 %v4861
    %v5515 = vunpack.c.l.bf16 %v4862
    %v5516 = vunpack.c.l.bf16 %v4863
    %v5517 = vunpack.c.h.bf16 %v4863
    %v5518 = vunpack.c.l.bf16 %v4864
    %v5519 = vunpack.c.h.bf16 %v4864
    %v5520 = vunpack.c.l.bf16 %v4865
    %v5521 = vunpack.c.h.bf16 %v4865
    %v5522 = vunpack.c.l.bf16 %v4866
    %v5523 = vunpack.c.l.bf16 %v4867
    %v5524 = vunpack.c.h.bf16 %v4867
    %v5525 = vunpack.c.l.bf16 %v4868
    %v5526 = vunpack.c.h.bf16 %v4868
    %v5527 = vunpack.c.l.bf16 %v4869
    %v5528 = vunpack.c.h.bf16 %v4869
    %v5529 = vunpack.c.l.bf16 %v4870
    %v5530 = vunpack.c.l.bf16 %v4871
    %v5531 = vunpack.c.h.bf16 %v4871
    %v5532 = vunpack.c.l.bf16 %v4872
    %v5533 = vunpack.c.h.bf16 %v4872
    %v5534 = vunpack.c.l.bf16 %v4873
    %v5535 = vunpack.c.h.bf16 %v4873
    %v5536 = vunpack.c.l.bf16 %v4874
    %v5537 = vunpack.c.l.bf16 %v4875
    %v5538 = vunpack.c.h.bf16 %v4875
    %v5539 = vunpack.c.l.bf16 %v4876
    %v5540 = vunpack.c.h.bf16 %v4876
    %v5541 = vunpack.c.l.bf16 %v4877
    %v5542 = vunpack.c.h.bf16 %v4877
    %v5543 = vunpack.c.l.bf16 %v4878
    %v5544 = vunpack.c.l.bf16 %v4879
    %v5545 = vunpack.c.h.bf16 %v4879
    %v5546 = vunpack.c.l.bf16 %v4880
    %v5547 = vunpack.c.h.bf16 %v4880
    %v5548 = vunpack.c.l.bf16 %v4881
    %v5549 = vunpack.c.h.bf16 %v4881
    %v5550 = vunpack.c.l.bf16 %v4882
    %v5551 = vunpack.c.l.bf16 %v4883
    %v5552 = vunpack.c.h.bf16 %v4883
    %v5553 = vunpack.c.l.bf16 %v4884
    %v5554 = vunpack.c.h.bf16 %v4884
    %v5555 = vunpack.c.l.bf16 %v4885
    %v5556 = vunpack.c.h.bf16 %v4885
    %v5557 = vunpack.c.l.bf16 %v4886
    %v5558 = vunpack.c.l.bf16 %v4887
    %v5559 = vunpack.c.h.bf16 %v4887
    %v5560 = vunpack.c.l.bf16 %v4888
    %v5561 = vunpack.c.h.bf16 %v4888
    %v5562 = vunpack.c.l.bf16 %v4889
    %v5563 = vunpack.c.h.bf16 %v4889
    %v5564 = vunpack.c.l.bf16 %v4890
    %v5565 = vunpack.c.l.bf16 %v4891
    %v5566 = vunpack.c.h.bf16 %v4891
    %v5567 = vunpack.c.l.bf16 %v4892
    %v5568 = vunpack.c.h.bf16 %v4892
    %v5569 = vunpack.c.l.bf16 %v4893
    %v5570 = vunpack.c.h.bf16 %v4893
    %v5571 = vunpack.c.l.bf16 %v4894
    %v5572 = vunpack.c.l.bf16 %v4895
    %v5573 = vunpack.c.h.bf16 %v4895
    %v5574 = vunpack.c.l.bf16 %v4896
    %v5575 = vunpack.c.h.bf16 %v4896
    %v5576 = vunpack.c.l.bf16 %v4897
    %v5577 = vunpack.c.h.bf16 %v4897
    %v5578 = vunpack.c.l.bf16 %v4898
    %v5579 = vunpack.c.l.bf16 %v4899
    %v5580 = vunpack.c.h.bf16 %v4899
    %v5581 = vunpack.c.l.bf16 %v4900
    %v5582 = vunpack.c.h.bf16 %v4900
    %v5583 = vunpack.c.l.bf16 %v4901
    %v5584 = vunpack.c.h.bf16 %v4901
    %v5585 = vunpack.c.l.bf16 %v4902
    %v5586 = vunpack.c.l.bf16 %v4903
    %v5587 = vunpack.c.h.bf16 %v4903
    %v5588 = vunpack.c.l.bf16 %v4904
    %v5589 = vunpack.c.h.bf16 %v4904
    %v5590 = vunpack.c.l.bf16 %v4905
    %v5591 = vunpack.c.h.bf16 %v4905
    %v5592 = vunpack.c.l.bf16 %v4906
    %v5593 = vunpack.c.l.bf16 %v4907
    %v5594 = vunpack.c.h.bf16 %v4907
    %v5595 = vunpack.c.l.bf16 %v4908
    %v5596 = vunpack.c.h.bf16 %v4908
    %v5597 = vunpack.c.l.bf16 %v4909
    %v5598 = vunpack.c.h.bf16 %v4909
    %v5599 = vunpack.c.l.bf16 %v4910
    %v5600 = vunpack.c.l.bf16 %v4911
    %v5601 = vunpack.c.h.bf16 %v4911
    %v5602 = vunpack.c.l.bf16 %v4912
    %v5603 = vunpack.c.h.bf16 %v4912
    %v5604 = vunpack.c.l.bf16 %v4913
    %v5605 = vunpack.c.h.bf16 %v4913
    %v5606 = vunpack.c.l.bf16 %v4914
    %v5607 = vunpack.c.l.bf16 %v4915
    %v5608 = vunpack.c.h.bf16 %v4915
    %v5609 = vunpack.c.l.bf16 %v4916
    %v5610 = vunpack.c.h.bf16 %v4916
    %v5611 = vunpack.c.l.bf16 %v4917
    %v5612 = vunpack.c.h.bf16 %v4917
    %v5613 = vunpack.c.l.bf16 %v4918
    %v5614 = vunpack.c.l.bf16 %v4919
    %v5615 = vunpack.c.h.bf16 %v4919
    %v5616 = vunpack.c.l.bf16 %v4920
    %v5617 = vunpack.c.h.bf16 %v4920
    %v5618 = vunpack.c.l.bf16 %v4921
    %v5619 = vunpack.c.h.bf16 %v4921
    %v5620 = vunpack.c.l.bf16 %v4922
    %v5621 = vunpack.c.l.bf16 %v4923
    %v5622 = vunpack.c.h.bf16 %v4923
    %v5623 = vunpack.c.l.bf16 %v4924
    %v5624 = vunpack.c.h.bf16 %v4924
    %v5625 = vunpack.c.l.bf16 %v4925
    %v5626 = vunpack.c.h.bf16 %v4925
    %v5627 = vunpack.c.l.bf16 %v4926
    %v5628 = vunpack.c.l.bf16 %v4927
    %v5629 = vunpack.c.h.bf16 %v4927
    %v5630 = vunpack.c.l.bf16 %v4928
    %v5631 = vunpack.c.h.bf16 %v4928
    %v5632 = vunpack.c.l.bf16 %v4929
    %v5633 = vunpack.c.h.bf16 %v4929
    %v5634 = vunpack.c.l.bf16 %v4930
    %v5635 = vunpack.c.l.bf16 %v4931
    %v5636 = vunpack.c.h.bf16 %v4931
    %v5637 = vunpack.c.l.bf16 %v4932
    %v5638 = vunpack.c.h.bf16 %v4932
    %v5639 = vunpack.c.l.bf16 %v4933
    %v5640 = vunpack.c.h.bf16 %v4933
    %v5641 = vunpack.c.l.bf16 %v4934
    %v5642 = vunpack.c.l.bf16 %v4935
    %v5643 = vunpack.c.h.bf16 %v4935
    %v5644 = vunpack.c.l.bf16 %v4936
    %v5645 = vunpack.c.h.bf16 %v4936
    %v5646 = vunpack.c.l.bf16 %v4937
    %v5647 = vunpack.c.h.bf16 %v4937
    %v5648 = vunpack.c.l.bf16 %v4938
    %v5649 = vunpack.c.l.bf16 %v4939
    %v5650 = vunpack.c.h.bf16 %v4939
    %v5651 = vunpack.c.l.bf16 %v4940
    %v5652 = vunpack.c.h.bf16 %v4940
    %v5653 = vunpack.c.l.bf16 %v4941
    %v5654 = vunpack.c.h.bf16 %v4941
    %v5655 = vunpack.c.l.bf16 %v4942
    %v5656 = vunpack.c.l.bf16 %v4943
    %v5657 = vunpack.c.h.bf16 %v4943
    %v5658 = vunpack.c.l.bf16 %v4944
    %v5659 = vunpack.c.h.bf16 %v4944
    %v5660 = vunpack.c.l.bf16 %v4945
    %v5661 = vunpack.c.h.bf16 %v4945
    %v5662 = vunpack.c.l.bf16 %v4946
    %v5663 = vunpack.c.l.bf16 %v4947
    %v5664 = vunpack.c.h.bf16 %v4947
    %v5665 = vunpack.c.l.bf16 %v4948
    %v5666 = vunpack.c.h.bf16 %v4948
    %v5667 = vunpack.c.l.bf16 %v4949
    %v5668 = vunpack.c.h.bf16 %v4949
    %v5669 = vunpack.c.l.bf16 %v4950
    %v5670 = vunpack.c.l.bf16 %v4951
    %v5671 = vunpack.c.h.bf16 %v4951
    %v5672 = vunpack.c.l.bf16 %v4952
    %v5673 = vunpack.c.h.bf16 %v4952
    %v5674 = vunpack.c.l.bf16 %v4953
    %v5675 = vunpack.c.h.bf16 %v4953
    %v5676 = vunpack.c.l.bf16 %v4954
    %v5677 = vunpack.c.l.bf16 %v4955
    %v5678 = vunpack.c.h.bf16 %v4955
    %v5679 = vunpack.c.l.bf16 %v4956
    %v5680 = vunpack.c.h.bf16 %v4956
    %v5681 = vunpack.c.l.bf16 %v4957
    %v5682 = vunpack.c.h.bf16 %v4957
    %v5683 = vunpack.c.l.bf16 %v4958
    %v5684 = vunpack.c.l.bf16 %v4959
    %v5685 = vunpack.c.h.bf16 %v4959
    %v5686 = vunpack.c.l.bf16 %v4960
    %v5687 = vunpack.c.h.bf16 %v4960
    %v5688 = vunpack.c.l.bf16 %v4961
    %v5689 = vunpack.c.h.bf16 %v4961
    %v5690 = vunpack.c.l.bf16 %v4962
    %v5691 = vunpack.c.l.bf16 %v4963
    %v5692 = vunpack.c.h.bf16 %v4963
    %v5693 = vunpack.c.l.bf16 %v4964
    %v5694 = vunpack.c.h.bf16 %v4964
    %v5695 = vunpack.c.l.bf16 %v4965
    %v5696 = vunpack.c.h.bf16 %v4965
    %v5697 = vunpack.c.l.bf16 %v4966
    %v5698 = vunpack.c.l.bf16 %v4967
    %v5699 = vunpack.c.h.bf16 %v4967
    %v5700 = vunpack.c.l.bf16 %v4968
    %v5701 = vunpack.c.h.bf16 %v4968
    %v5702 = vunpack.c.l.bf16 %v4969
    %v5703 = vunpack.c.h.bf16 %v4969
    %v5704 = vunpack.c.l.bf16 %v4970
    %v5705 = vunpack.c.l.bf16 %v4971
    %v5706 = vunpack.c.h.bf16 %v4971
    %v5707 = vunpack.c.l.bf16 %v4972
    %v5708 = vunpack.c.h.bf16 %v4972
    %v5709 = vunpack.c.l.bf16 %v4973
    %v5710 = vunpack.c.h.bf16 %v4973
    %v5711 = vunpack.c.l.bf16 %v4974
    %v5712 = vunpack.c.l.bf16 %v4975
    %v5713 = vunpack.c.h.bf16 %v4975
    %v5714 = vunpack.c.l.bf16 %v4976
    %v5715 = vunpack.c.h.bf16 %v4976
    %v5716 = vunpack.c.l.bf16 %v4977
    %v5717 = vunpack.c.h.bf16 %v4977
    %v5718 = vunpack.c.l.bf16 %v4978
    %v5719 = vunpack.c.l.bf16 %v4979
    %v5720 = vunpack.c.h.bf16 %v4979
    %v5721 = vunpack.c.l.bf16 %v4980
    %v5722 = vunpack.c.h.bf16 %v4980
    %v5723 = vunpack.c.l.bf16 %v4981
    %v5724 = vunpack.c.h.bf16 %v4981
    %v5725 = vunpack.c.l.bf16 %v4982
    %v5726 = vunpack.c.l.bf16 %v4983
    %v5727 = vunpack.c.h.bf16 %v4983
    %v5728 = vunpack.c.l.bf16 %v4984
    %v5729 = vunpack.c.h.bf16 %v4984
    %v5730 = vunpack.c.l.bf16 %v4985
    %v5731 = vunpack.c.h.bf16 %v4985
    %v5732 = vunpack.c.l.bf16 %v4986
    %v5733 = vunpack.c.l.bf16 %v4987
    %v5734 = vunpack.c.h.bf16 %v4987
    %v5735 = vunpack.c.l.bf16 %v4988
    %v5736 = vunpack.c.h.bf16 %v4988
    %v5737 = vunpack.c.l.bf16 %v4989
    %v5738 = vunpack.c.h.bf16 %v4989
    %v5739 = vunpack.c.l.bf16 %v4990
    %v5740 = vunpack.c.l.bf16 %v4991
    %v5741 = vunpack.c.h.bf16 %v4991
    %v5742 = vunpack.c.l.bf16 %v4992
    %v5743 = vunpack.c.h.bf16 %v4992
    %v5744 = vunpack.c.l.bf16 %v4993
    %v5745 = vunpack.c.h.bf16 %v4993
    %v5746 = vunpack.c.l.bf16 %v4994
    %v5747 = vunpack.c.l.bf16 %v4995
    %v5748 = vunpack.c.h.bf16 %v4995
    %v5749 = vunpack.c.l.bf16 %v4996
    %v5750 = vunpack.c.h.bf16 %v4996
    %v5751 = vunpack.c.l.bf16 %v4997
    %v5752 = vunpack.c.h.bf16 %v4997
    %v5753 = vunpack.c.l.bf16 %v4998
    %v5754 = vunpack.c.l.bf16 %v4999
    %v5755 = vunpack.c.h.bf16 %v4999
    %v5756 = vunpack.c.l.bf16 %v5000
    %v5757 = vunpack.c.h.bf16 %v5000
    %v5758 = vunpack.c.l.bf16 %v5001
    %v5759 = vunpack.c.h.bf16 %v5001
    %v5760 = vunpack.c.l.bf16 %v5002
    %v5761 = vunpack.c.l.bf16 %v5003
    %v5762 = vunpack.c.h.bf16 %v5003
    %v5763 = vunpack.c.l.bf16 %v5004
    %v5764 = vunpack.c.h.bf16 %v5004
    %v5765 = vunpack.c.l.bf16 %v5005
    %v5766 = vunpack.c.h.bf16 %v5005
    %v5767 = vunpack.c.l.bf16 %v5006
    %v5768 = vunpack.c.l.bf16 %v5007
    %v5769 = vunpack.c.h.bf16 %v5007
    %v5770 = vunpack.c.l.bf16 %v5008
    %v5771 = vunpack.c.h.bf16 %v5008
    %v5772 = vunpack.c.l.bf16 %v5009
    %v5773 = vunpack.c.h.bf16 %v5009
    %v5774 = vunpack.c.l.bf16 %v5010
    %v5775 = vunpack.c.l.bf16 %v5011
    %v5776 = vunpack.c.h.bf16 %v5011
    %v5777 = vunpack.c.l.bf16 %v5012
    %v5778 = vunpack.c.h.bf16 %v5012
    %v5779 = vunpack.c.l.bf16 %v5013
    %v5780 = vunpack.c.h.bf16 %v5013
    %v5781 = vunpack.c.l.bf16 %v5014
    %v5782 = vunpack.c.l.bf16 %v5015
    %v5783 = vunpack.c.h.bf16 %v5015
    %v5784 = vunpack.c.l.bf16 %v5016
    %v5785 = vunpack.c.h.bf16 %v5016
    %v5786 = vunpack.c.l.bf16 %v5017
    %v5787 = vunpack.c.h.bf16 %v5017
    %v5788 = vunpack.c.l.bf16 %v5018
    %v5789 = vunpack.c.l.bf16 %v5019
    %v5790 = vunpack.c.h.bf16 %v5019
    %v5791 = vunpack.c.l.bf16 %v5020
    %v5792 = vunpack.c.h.bf16 %v5020
    %v5793 = vunpack.c.l.bf16 %v5021
    %v5794 = vunpack.c.h.bf16 %v5021
    %v5795 = vunpack.c.l.bf16 %v5022
    %v5796 = vunpack.c.l.bf16 %v5023
    %v5797 = vunpack.c.h.bf16 %v5023
    %v5798 = vunpack.c.l.bf16 %v5024
    %v5799 = vunpack.c.h.bf16 %v5024
    %v5800 = vunpack.c.l.bf16 %v5025
    %v5801 = vunpack.c.h.bf16 %v5025
    %v5802 = vunpack.c.l.bf16 %v5026
    %v5803 = vunpack.c.l.bf16 %v5027
    %v5804 = vunpack.c.h.bf16 %v5027
    %v5805 = vunpack.c.l.bf16 %v5028
    %v5806 = vunpack.c.h.bf16 %v5028
    %v5807 = vunpack.c.l.bf16 %v5029
    %v5808 = vunpack.c.h.bf16 %v5029
    %v5809 = vunpack.c.l.bf16 %v5030
    %v5810 = vunpack.c.l.bf16 %v5031
    %v5811 = vunpack.c.h.bf16 %v5031
    %v5812 = vunpack.c.l.bf16 %v5032
    %v5813 = vunpack.c.h.bf16 %v5032
    %v5814 = vunpack.c.l.bf16 %v5033
    %v5815 = vunpack.c.h.bf16 %v5033
    %v5816 = vunpack.c.l.bf16 %v5034
    %v5817 = vunpack.c.l.bf16 %v5035
    %v5818 = vunpack.c.h.bf16 %v5035
    %v5819 = vunpack.c.l.bf16 %v5036
    %v5820 = vunpack.c.h.bf16 %v5036
    %v5821 = vunpack.c.l.bf16 %v5037
    %v5822 = vunpack.c.h.bf16 %v5037
    %v5823 = vunpack.c.l.bf16 %v5038
    %v5824 = vunpack.c.l.bf16 %v5039
    %v5825 = vunpack.c.h.bf16 %v5039
    %v5826 = vunpack.c.l.bf16 %v5040
    %v5827 = vunpack.c.h.bf16 %v5040
    %v5828 = vunpack.c.l.bf16 %v5041
    %v5829 = vunpack.c.h.bf16 %v5041
    %v5830 = vunpack.c.l.bf16 %v5042
    %v5831 = vunpack.c.l.bf16 %v5043
    %v5832 = vunpack.c.h.bf16 %v5043
    %v5833 = vunpack.c.l.bf16 %v5044
    %v5834 = vunpack.c.h.bf16 %v5044
    %v5835 = vunpack.c.l.bf16 %v5045
    %v5836 = vunpack.c.h.bf16 %v5045
    %v5837 = vunpack.c.l.bf16 %v5046
    %v5838 = vunpack.c.l.bf16 %v5047
    %v5839 = vunpack.c.h.bf16 %v5047
    %v5840 = vunpack.c.l.bf16 %v5048
    %v5841 = vunpack.c.h.bf16 %v5048
    %v5842 = vunpack.c.l.bf16 %v5049
    %v5843 = vunpack.c.h.bf16 %v5049
    %v5844 = vunpack.c.l.bf16 %v5050
    %v5845 = vunpack.c.l.bf16 %v5051
    %v5846 = vunpack.c.h.bf16 %v5051
    %v5847 = vunpack.c.l.bf16 %v5052
    %v5848 = vunpack.c.h.bf16 %v5052
    %v5849 = vunpack.c.l.bf16 %v5053
    %v5850 = vunpack.c.h.bf16 %v5053
    %v5851 = vunpack.c.l.bf16 %v5054
    %v5852 = vunpack.c.l.bf16 %v5055
    %v5853 = vunpack.c.h.bf16 %v5055
    %v5854 = vunpack.c.l.bf16 %v5056
    %v5855 = vunpack.c.h.bf16 %v5056
    %v5856 = vunpack.c.l.bf16 %v5057
    %v5857 = vunpack.c.h.bf16 %v5057
    %v5858 = vunpack.c.l.bf16 %v5058
    %v5859 = vunpack.c.l.bf16 %v5059
    %v5860 = vunpack.c.h.bf16 %v5059
    %v5861 = vunpack.c.l.bf16 %v5060
    %v5862 = vunpack.c.h.bf16 %v5060
    %v5863 = vunpack.c.l.bf16 %v5061
    %v5864 = vunpack.c.h.bf16 %v5061
    %v5865 = vunpack.c.l.bf16 %v5062
    %v5866 = vunpack.c.l.bf16 %v5063
    %v5867 = vunpack.c.h.bf16 %v5063
    %v5868 = vunpack.c.l.bf16 %v5064
    %v5869 = vunpack.c.h.bf16 %v5064
    %v5870 = vunpack.c.l.bf16 %v5065
    %v5871 = vunpack.c.h.bf16 %v5065
    %v5872 = vunpack.c.l.bf16 %v5066
    %v5873 = vunpack.c.l.bf16 %v5067
    %v5874 = vunpack.c.h.bf16 %v5067
    %v5875 = vunpack.c.l.bf16 %v5068
    %v5876 = vunpack.c.h.bf16 %v5068
    %v5877 = vunpack.c.l.bf16 %v5069
    %v5878 = vunpack.c.h.bf16 %v5069
    %v5879 = vunpack.c.l.bf16 %v5070
    %v5880 = vunpack.c.l.bf16 %v5071
    %v5881 = vunpack.c.h.bf16 %v5071
    %v5882 = vunpack.c.l.bf16 %v5072
    %v5883 = vunpack.c.h.bf16 %v5072
    %v5884 = vunpack.c.l.bf16 %v5073
    %v5885 = vunpack.c.h.bf16 %v5073
    %v5886 = vunpack.c.l.bf16 %v5074
    %v5887 = vunpack.c.l.bf16 %v5075
    %v5888 = vunpack.c.h.bf16 %v5075
    %v5889 = vunpack.c.l.bf16 %v5076
    %v5890 = vunpack.c.h.bf16 %v5076
    %v5891 = vunpack.c.l.bf16 %v5077
    %v5892 = vunpack.c.h.bf16 %v5077
    %v5893 = vunpack.c.l.bf16 %v5078
    %v5894 = vunpack.c.l.bf16 %v5079
    %v5895 = vunpack.c.h.bf16 %v5079
    %v5896 = vunpack.c.l.bf16 %v5080
    %v5897 = vunpack.c.h.bf16 %v5080
    %v5898 = vunpack.c.l.bf16 %v5081
    %v5899 = vunpack.c.h.bf16 %v5081
    %v5900 = vunpack.c.l.bf16 %v5082
    %v5901 = vunpack.c.l.bf16 %v5083
    %v5902 = vunpack.c.h.bf16 %v5083
    %v5903 = vunpack.c.l.bf16 %v5084
    %v5904 = vunpack.c.h.bf16 %v5084
    %v5905 = vunpack.c.l.bf16 %v5085
    %v5906 = vunpack.c.h.bf16 %v5085
    %v5907 = vunpack.c.l.bf16 %v5086
    %v5908 = vunpack.c.l.bf16 %v5087
    %v5909 = vunpack.c.h.bf16 %v5087
    %v5910 = vunpack.c.l.bf16 %v5088
    %v5911 = vunpack.c.h.bf16 %v5088
    %v5912 = vunpack.c.l.bf16 %v5089
    %v5913 = vunpack.c.h.bf16 %v5089
    %v5914 = vunpack.c.l.bf16 %v5090
    %v5915 = vunpack.c.l.bf16 %v5091
    %v5916 = vunpack.c.h.bf16 %v5091
    %v5917 = vunpack.c.l.bf16 %v5092
    %v5918 = vunpack.c.h.bf16 %v5092
    %v5919 = vunpack.c.l.bf16 %v5093
    %v5920 = vunpack.c.h.bf16 %v5093
    %v5921 = vunpack.c.l.bf16 %v5094
    %v5922 = vunpack.c.l.bf16 %v5095
    %v5923 = vunpack.c.h.bf16 %v5095
    %v5924 = vunpack.c.l.bf16 %v5096
    %v5925 = vunpack.c.h.bf16 %v5096
    %v5926 = vunpack.c.l.bf16 %v5097
    %v5927 = vunpack.c.h.bf16 %v5097
    %v5928 = vunpack.c.l.bf16 %v5098
    %v5929 = vunpack.c.l.bf16 %v5099
    %v5930 = vunpack.c.h.bf16 %v5099
    %v5931 = vunpack.c.l.bf16 %v5100
    %v5932 = vunpack.c.h.bf16 %v5100
    %v5933 = vunpack.c.l.bf16 %v5101
    %v5934 = vunpack.c.h.bf16 %v5101
    %v5935 = vunpack.c.l.bf16 %v5102
    %v5936 = vunpack.c.l.bf16 %v5103
    %v5937 = vunpack.c.h.bf16 %v5103
    %v5938 = vunpack.c.l.bf16 %v5104
    %v5939 = vunpack.c.h.bf16 %v5104
    %v5940 = vunpack.c.l.bf16 %v5105
    %v5941 = vunpack.c.h.bf16 %v5105
    %v5942 = vunpack.c.l.bf16 %v5106
    %v5943 = vunpack.c.l.bf16 %v5107
    %v5944 = vunpack.c.h.bf16 %v5107
    %v5945 = vunpack.c.l.bf16 %v5108
    %v5946 = vunpack.c.h.bf16 %v5108
    %v5947 = vunpack.c.l.bf16 %v5109
    %v5948 = vunpack.c.h.bf16 %v5109
    %v5949 = vunpack.c.l.bf16 %v5110
    %v5950 = vunpack.c.l.bf16 %v5111
    %v5951 = vunpack.c.h.bf16 %v5111
    %v5952 = vunpack.c.l.bf16 %v5112
    %v5953 = vunpack.c.h.bf16 %v5112
    %v5954 = vunpack.c.l.bf16 %v5113
    %v5955 = vunpack.c.h.bf16 %v5113
    %v5956 = vunpack.c.l.bf16 %v5114
    %v5957 = vunpack.c.l.bf16 %v5115
    %v5958 = vunpack.c.h.bf16 %v5115
    %v5959 = vunpack.c.l.bf16 %v5116
    %v5960 = vunpack.c.h.bf16 %v5116
    %v5961 = vunpack.c.l.bf16 %v5117
    %v5962 = vunpack.c.h.bf16 %v5117
    %v5963 = vunpack.c.l.bf16 %v5118
    %v5964 = vunpack.c.l.bf16 %v5119
    %v5965 = vunpack.c.h.bf16 %v5119
    %v5966 = vunpack.c.l.bf16 %v5120
    %v5967 = vunpack.c.h.bf16 %v5120
    %v5968 = vunpack.c.l.bf16 %v5121
    %v5969 = vunpack.c.h.bf16 %v5121
    %v5970 = vunpack.c.l.bf16 %v5122
    %v5971 = vunpack.c.l.bf16 %v5123
    %v5972 = vunpack.c.h.bf16 %v5123
    %v5973 = vunpack.c.l.bf16 %v5124
    %v5974 = vunpack.c.h.bf16 %v5124
    %v5975 = vunpack.c.l.bf16 %v5125
    %v5976 = vunpack.c.h.bf16 %v5125
    %v5977 = vunpack.c.l.bf16 %v5126
    %v5978 = vunpack.c.l.bf16 %v5127
    %v5979 = vunpack.c.h.bf16 %v5127
    %v5980 = vunpack.c.l.bf16 %v5128
    %v5981 = vunpack.c.h.bf16 %v5128
    %v5982 = vunpack.c.l.bf16 %v5129
    %v5983 = vunpack.c.h.bf16 %v5129
    %v5984 = vunpack.c.l.bf16 %v5130
    %v5985 = vunpack.c.l.bf16 %v5131
    %v5986 = vunpack.c.h.bf16 %v5131
    %v5987 = vunpack.c.l.bf16 %v5132
    %v5988 = vunpack.c.h.bf16 %v5132
    %v5989 = vunpack.c.l.bf16 %v5133
    %v5990 = vunpack.c.h.bf16 %v5133
    %v5991 = vunpack.c.l.bf16 %v5134
    %v5992 = vunpack.c.l.bf16 %v5135
    %v5993 = vunpack.c.h.bf16 %v5135
    %v5994 = vunpack.c.l.bf16 %v5136
    %v5995 = vunpack.c.h.bf16 %v5136
    %v5996 = vunpack.c.l.bf16 %v5137
    %v5997 = vunpack.c.h.bf16 %v5137
    %v5998 = vunpack.c.l.bf16 %v5138
    %v5999 = vunpack.c.l.bf16 %v5139
    %v6000 = vunpack.c.h.bf16 %v5139
    %v6001 = vunpack.c.l.bf16 %v5140
    %v6002 = vunpack.c.h.bf16 %v5140
    %v6003 = vunpack.c.l.bf16 %v5141
    %v6004 = vunpack.c.h.bf16 %v5141
    %v6005 = vunpack.c.l.bf16 %v5142
    %v6006 = vunpack.c.l.bf16 %v5143
    %v6007 = vunpack.c.h.bf16 %v5143
    %v6008 = vunpack.c.l.bf16 %v5144
    %v6009 = vunpack.c.h.bf16 %v5144
    %v6010 = vunpack.c.l.bf16 %v5145
    %v6011 = vunpack.c.h.bf16 %v5145
    %v6012 = vunpack.c.l.bf16 %v5146
    %v6013 = vunpack.c.l.bf16 %v5147
    %v6014 = vunpack.c.h.bf16 %v5147
    %v6015 = vunpack.c.l.bf16 %v5148
    %v6016 = vunpack.c.h.bf16 %v5148
    %v6017 = vunpack.c.l.bf16 %v5149
    %v6018 = vunpack.c.h.bf16 %v5149
    %v6019 = vunpack.c.l.bf16 %v5150
    %v6020 = vunpack.c.l.bf16 %v5151
    %v6021 = vunpack.c.h.bf16 %v5151
    %v6022 = vunpack.c.l.bf16 %v5152
    %v6023 = vunpack.c.h.bf16 %v5152
    %v6024 = vunpack.c.l.bf16 %v5153
    %v6025 = vunpack.c.h.bf16 %v5153
    %v6026 = vunpack.c.l.bf16 %v5154
    %v6027 = vunpack.c.l.bf16 %v5155
    %v6028 = vunpack.c.h.bf16 %v5155
    %v6029 = vunpack.c.l.bf16 %v5156
    %v6030 = vunpack.c.h.bf16 %v5156
    %v6031 = vunpack.c.l.bf16 %v5157
    %v6032 = vunpack.c.h.bf16 %v5157
    %v6033 = vunpack.c.l.bf16 %v5158
    %v6034 = vunpack.c.l.bf16 %v5159
    %v6035 = vunpack.c.h.bf16 %v5159
    %v6036 = vunpack.c.l.bf16 %v5160
    %v6037 = vunpack.c.h.bf16 %v5160
    %v6038 = vunpack.c.l.bf16 %v5161
    %v6039 = vunpack.c.h.bf16 %v5161
    %v6040 = vunpack.c.l.bf16 %v5162
    %v6041 = vunpack.c.l.bf16 %v5163
    %v6042 = vunpack.c.h.bf16 %v5163
    %v6043 = vunpack.c.l.bf16 %v5164
    %v6044 = vunpack.c.h.bf16 %v5164
    %v6045 = vunpack.c.l.bf16 %v5165
    %v6046 = vunpack.c.h.bf16 %v5165
    %v6047 = vunpack.c.l.bf16 %v5166
    %v6048 = vunpack.c.l.bf16 %v5167
    %v6049 = vunpack.c.h.bf16 %v5167
    %v6050 = vunpack.c.l.bf16 %v5168
    %v6051 = vunpack.c.h.bf16 %v5168
    %v6052 = vunpack.c.l.bf16 %v5169
    %v6053 = vunpack.c.h.bf16 %v5169
    %v6054 = vunpack.c.l.bf16 %v5170
    %v6055 = vunpack.c.l.bf16 %v5171
    %v6056 = vunpack.c.h.bf16 %v5171
    %v6057 = vunpack.c.l.bf16 %v5172
    %v6058 = vunpack.c.h.bf16 %v5172
    %v6059 = vunpack.c.l.bf16 %v5173
    %v6060 = vunpack.c.h.bf16 %v5173
    %v6061 = vunpack.c.l.bf16 %v5174
    %v6062 = vunpack.c.l.bf16 %v5175
    %v6063 = vunpack.c.h.bf16 %v5175
    %v6064 = vunpack.c.l.bf16 %v5176
    %v6065 = vunpack.c.h.bf16 %v5176
    %v6066 = vunpack.c.l.bf16 %v5177
    %v6067 = vunpack.c.h.bf16 %v5177
    %v6068 = vunpack.c.l.bf16 %v5178
    %v6069 = vunpack.c.l.bf16 %v5179
    %v6070 = vunpack.c.h.bf16 %v5179
    %v6071 = vunpack.c.l.bf16 %v5180
    %v6072 = vunpack.c.h.bf16 %v5180
    %v6073 = vunpack.c.l.bf16 %v5181
    %v6074 = vunpack.c.h.bf16 %v5181
    %v6075 = vunpack.c.l.bf16 %v5182
    %v6076 = vunpack.c.l.bf16 %v5183
    %v6077 = vunpack.c.h.bf16 %v5183
    %v6078 = vunpack.c.l.bf16 %v5184
    %v6079 = vunpack.c.h.bf16 %v5184
    %v6080 = vunpack.c.l.bf16 %v5185
    %v6081 = vunpack.c.h.bf16 %v5185
    %v6082 = vunpack.c.l.bf16 %v5186
    %v6083 = vld [vmem:[#allocation26] sm:$0xff]
    %v6085 = vperm.slane %v6083, 0
    %v6086 = vperm.slane %v6083, 1
    %v6087 = vperm.slane %v6083, 2
    %v6088 = vperm.slane %v6083, 3
    %v6089 = vperm.slane %v6083, 4
    %v6090 = vperm.slane %v6083, 5
    %v6091 = vperm.slane %v6083, 6
    %6099 = vmatpush.msra.mxu0 %v5292
    %6100 = vmatpush.msra.mxu0 %v5285
    %6101 = vmatpush.msra.mxu0 %v5278
    %6102 = vmatpush.msra.mxu0 %v5271
    %6103 = vmatpush.msra.mxu0 %v5264
    %6104 = vmatpush.msra.mxu0 %v5257
    %6105 = vmatpush.msra.mxu0 %v5250
    %6106 = vmatpush.msra.mxu0 %v5243
    %6107 = vmatpush.msra.mxu0 %v5236
    %6108 = vmatpush.msra.mxu0 %v5229
    %6109 = vmatpush.msra.mxu0 %v5222
    %6110 = vmatpush.msra.mxu0 %v5215
    %6111 = vmatpush.msra.mxu0 %v5208
    %6112 = vmatpush.msra.mxu0 %v5201
    %6113 = vmatpush.msra.mxu0 %v5194
    %6114 = vmatpush.msra.mxu0 %v5187
    %6115 = vmatmul.f32.gmra.mxu0 %v4611
    %v6116 = vpop.f32.mrf.mxu0
    %v6117 = vadd.f32 %v6085, %v6116
    %6118 = vmatmul.f32.gmra.mxu0 %v4619
    %v6119 = vpop.f32.mrf.mxu0
    %v6120 = vadd.f32 %v6085, %v6119
    %6121 = vmatmul.f32.gmra.mxu0 %v4627
    %v6122 = vpop.f32.mrf.mxu0
    %v6123 = vadd.f32 %v6085, %v6122
    %6124 = vmatmul.f32.gmra.mxu0 %v4635
    %v6125 = vpop.f32.mrf.mxu0
    %v6126 = vadd.f32 %v6085, %v6125
    %6127 = vmatmul.f32.gmra.mxu0 %v4643
    %v6128 = vpop.f32.mrf.mxu0
    %v6129 = vadd.f32 %v6085, %v6128
    %6130 = vmatmul.f32.gmra.mxu0 %v4651
    %v6131 = vpop.f32.mrf.mxu0
    %v6132 = vadd.f32 %v6085, %v6131
    %6133 = vmatmul.f32.gmra.mxu0 %v4659
    %v6134 = vpop.f32.mrf.mxu0
    %v6135 = vadd.f32 %v6085, %v6134
    %6136 = vmatmul.f32.gmra.mxu0 %v4667
    %v6137 = vpop.f32.mrf.mxu0
    %v6138 = vadd.f32 %v6085, %v6137
    %6139 = vdwg.mxu0
    %6140 = vmatpush.msra.mxu0 %v5404
    %6141 = vmatpush.msra.mxu0 %v5397
    %6142 = vmatpush.msra.mxu0 %v5390
    %6143 = vmatpush.msra.mxu0 %v5383
    %6144 = vmatpush.msra.mxu0 %v5376
    %6145 = vmatpush.msra.mxu0 %v5369
    %6146 = vmatpush.msra.mxu0 %v5362
    %6147 = vmatpush.msra.mxu0 %v5355
    %6148 = vmatpush.msra.mxu0 %v5348
    %6149 = vmatpush.msra.mxu0 %v5341
    %6150 = vmatpush.msra.mxu0 %v5334
    %6151 = vmatpush.msra.mxu0 %v5327
    %6152 = vmatpush.msra.mxu0 %v5320
    %6153 = vmatpush.msra.mxu0 %v5313
    %6154 = vmatpush.msra.mxu0 %v5306
    %6155 = vmatpush.msra.mxu0 %v5299
    %6156 = vmatmul.f32.gmra.mxu0 %v4612
    %v6157 = vpop.f32.mrf.mxu0
    %v6158 = vadd.f32 %v6117, %v6157
    %6159 = vmatmul.f32.gmra.mxu0 %v4620
    %v6160 = vpop.f32.mrf.mxu0
    %v6161 = vadd.f32 %v6120, %v6160
    %6162 = vmatmul.f32.gmra.mxu0 %v4628
    %v6163 = vpop.f32.mrf.mxu0
    %v6164 = vadd.f32 %v6123, %v6163
    %6165 = vmatmul.f32.gmra.mxu0 %v4636
    %v6166 = vpop.f32.mrf.mxu0
    %v6167 = vadd.f32 %v6126, %v6166
    %6168 = vmatmul.f32.gmra.mxu0 %v4644
    %v6169 = vpop.f32.mrf.mxu0
    %v6170 = vadd.f32 %v6129, %v6169
    %6171 = vmatmul.f32.gmra.mxu0 %v4652
    %v6172 = vpop.f32.mrf.mxu0
    %v6173 = vadd.f32 %v6132, %v6172
    %6174 = vmatmul.f32.gmra.mxu0 %v4660
    %v6175 = vpop.f32.mrf.mxu0
    %v6176 = vadd.f32 %v6135, %v6175
    %6177 = vmatmul.f32.gmra.mxu0 %v4668
    %v6178 = vpop.f32.mrf.mxu0
    %v6179 = vadd.f32 %v6138, %v6178
    %6180 = vdwg.mxu0
    %6181 = vmatpush.msra.mxu0 %v5516
    %6182 = vmatpush.msra.mxu0 %v5509
    %6183 = vmatpush.msra.mxu0 %v5502
    %6184 = vmatpush.msra.mxu0 %v5495
    %6185 = vmatpush.msra.mxu0 %v5488
    %6186 = vmatpush.msra.mxu0 %v5481
    %6187 = vmatpush.msra.mxu0 %v5474
    %6188 = vmatpush.msra.mxu0 %v5467
    %6189 = vmatpush.msra.mxu0 %v5460
    %6190 = vmatpush.msra.mxu0 %v5453
    %6191 = vmatpush.msra.mxu0 %v5446
    %6192 = vmatpush.msra.mxu0 %v5439
    %6193 = vmatpush.msra.mxu0 %v5432
    %6194 = vmatpush.msra.mxu0 %v5425
    %6195 = vmatpush.msra.mxu0 %v5418
    %6196 = vmatpush.msra.mxu0 %v5411
    %6197 = vmatmul.f32.gmra.mxu0 %v4613
    %v6198 = vpop.f32.mrf.mxu0
    %v6199 = vadd.f32 %v6158, %v6198
    %6200 = vmatmul.f32.gmra.mxu0 %v4621
    %v6201 = vpop.f32.mrf.mxu0
    %v6202 = vadd.f32 %v6161, %v6201
    %6203 = vmatmul.f32.gmra.mxu0 %v4629
    %v6204 = vpop.f32.mrf.mxu0
    %v6205 = vadd.f32 %v6164, %v6204
    %6206 = vmatmul.f32.gmra.mxu0 %v4637
    %v6207 = vpop.f32.mrf.mxu0
    %v6208 = vadd.f32 %v6167, %v6207
    %6209 = vmatmul.f32.gmra.mxu0 %v4645
    %v6210 = vpop.f32.mrf.mxu0
    %v6211 = vadd.f32 %v6170, %v6210
    %6212 = vmatmul.f32.gmra.mxu0 %v4653
    %v6213 = vpop.f32.mrf.mxu0
    %v6214 = vadd.f32 %v6173, %v6213
    %6215 = vmatmul.f32.gmra.mxu0 %v4661
    %v6216 = vpop.f32.mrf.mxu0
    %v6217 = vadd.f32 %v6176, %v6216
    %6218 = vmatmul.f32.gmra.mxu0 %v4669
    %v6219 = vpop.f32.mrf.mxu0
    %v6220 = vadd.f32 %v6179, %v6219
    %6221 = vdwg.mxu0
    %6222 = vmatpush.msra.mxu0 %v5628
    %6223 = vmatpush.msra.mxu0 %v5621
    %6224 = vmatpush.msra.mxu0 %v5614
    %6225 = vmatpush.msra.mxu0 %v5607
    %6226 = vmatpush.msra.mxu0 %v5600
    %6227 = vmatpush.msra.mxu0 %v5593
    %6228 = vmatpush.msra.mxu0 %v5586
    %6229 = vmatpush.msra.mxu0 %v5579
    %6230 = vmatpush.msra.mxu0 %v5572
    %6231 = vmatpush.msra.mxu0 %v5565
    %6232 = vmatpush.msra.mxu0 %v5558
    %6233 = vmatpush.msra.mxu0 %v5551
    %6234 = vmatpush.msra.mxu0 %v5544
    %6235 = vmatpush.msra.mxu0 %v5537
    %6236 = vmatpush.msra.mxu0 %v5530
    %6237 = vmatpush.msra.mxu0 %v5523
    %6238 = vmatmul.f32.gmra.mxu0 %v4614
    %v6239 = vpop.f32.mrf.mxu0
    %v6240 = vadd.f32 %v6199, %v6239
    %6241 = vmatmul.f32.gmra.mxu0 %v4622
    %v6242 = vpop.f32.mrf.mxu0
    %v6243 = vadd.f32 %v6202, %v6242
    %6244 = vmatmul.f32.gmra.mxu0 %v4630
    %v6245 = vpop.f32.mrf.mxu0
    %v6246 = vadd.f32 %v6205, %v6245
    %6247 = vmatmul.f32.gmra.mxu0 %v4638
    %v6248 = vpop.f32.mrf.mxu0
    %v6249 = vadd.f32 %v6208, %v6248
    %6250 = vmatmul.f32.gmra.mxu0 %v4646
    %v6251 = vpop.f32.mrf.mxu0
    %v6252 = vadd.f32 %v6211, %v6251
    %6253 = vmatmul.f32.gmra.mxu0 %v4654
    %v6254 = vpop.f32.mrf.mxu0
    %v6255 = vadd.f32 %v6214, %v6254
    %6256 = vmatmul.f32.gmra.mxu0 %v4662
    %v6257 = vpop.f32.mrf.mxu0
    %v6258 = vadd.f32 %v6217, %v6257
    %6259 = vmatmul.f32.gmra.mxu0 %v4670
    %v6260 = vpop.f32.mrf.mxu0
    %v6261 = vadd.f32 %v6220, %v6260
    %6262 = vdwg.mxu0
    %6263 = vmatpush.msra.mxu0 %v5740
    %6264 = vmatpush.msra.mxu0 %v5733
    %6265 = vmatpush.msra.mxu0 %v5726
    %6266 = vmatpush.msra.mxu0 %v5719
    %6267 = vmatpush.msra.mxu0 %v5712
    %6268 = vmatpush.msra.mxu0 %v5705
    %6269 = vmatpush.msra.mxu0 %v5698
    %6270 = vmatpush.msra.mxu0 %v5691
    %6271 = vmatpush.msra.mxu0 %v5684
    %6272 = vmatpush.msra.mxu0 %v5677
    %6273 = vmatpush.msra.mxu0 %v5670
    %6274 = vmatpush.msra.mxu0 %v5663
    %6275 = vmatpush.msra.mxu0 %v5656
    %6276 = vmatpush.msra.mxu0 %v5649
    %6277 = vmatpush.msra.mxu0 %v5642
    %6278 = vmatpush.msra.mxu0 %v5635
    %6279 = vmatmul.f32.gmra.mxu0 %v4615
    %v6280 = vpop.f32.mrf.mxu0
    %v6281 = vadd.f32 %v6240, %v6280
    %6282 = vmatmul.f32.gmra.mxu0 %v4623
    %v6283 = vpop.f32.mrf.mxu0
    %v6284 = vadd.f32 %v6243, %v6283
    %6285 = vmatmul.f32.gmra.mxu0 %v4631
    %v6286 = vpop.f32.mrf.mxu0
    %v6287 = vadd.f32 %v6246, %v6286
    %6288 = vmatmul.f32.gmra.mxu0 %v4639
    %v6289 = vpop.f32.mrf.mxu0
    %v6290 = vadd.f32 %v6249, %v6289
    %6291 = vmatmul.f32.gmra.mxu0 %v4647
    %v6292 = vpop.f32.mrf.mxu0
    %v6293 = vadd.f32 %v6252, %v6292
    %6294 = vmatmul.f32.gmra.mxu0 %v4655
    %v6295 = vpop.f32.mrf.mxu0
    %v6296 = vadd.f32 %v6255, %v6295
    %6297 = vmatmul.f32.gmra.mxu0 %v4663
    %v6298 = vpop.f32.mrf.mxu0
    %v6299 = vadd.f32 %v6258, %v6298
    %6300 = vmatmul.f32.gmra.mxu0 %v4671
    %v6301 = vpop.f32.mrf.mxu0
    %v6302 = vadd.f32 %v6261, %v6301
    %6303 = vdwg.mxu0
    %6304 = vmatpush.msra.mxu0 %v5852
    %6305 = vmatpush.msra.mxu0 %v5845
    %6306 = vmatpush.msra.mxu0 %v5838
    %6307 = vmatpush.msra.mxu0 %v5831
    %6308 = vmatpush.msra.mxu0 %v5824
    %6309 = vmatpush.msra.mxu0 %v5817
    %6310 = vmatpush.msra.mxu0 %v5810
    %6311 = vmatpush.msra.mxu0 %v5803
    %6312 = vmatpush.msra.mxu0 %v5796
    %6313 = vmatpush.msra.mxu0 %v5789
    %6314 = vmatpush.msra.mxu0 %v5782
    %6315 = vmatpush.msra.mxu0 %v5775
    %6316 = vmatpush.msra.mxu0 %v5768
    %6317 = vmatpush.msra.mxu0 %v5761
    %6318 = vmatpush.msra.mxu0 %v5754
    %6319 = vmatpush.msra.mxu0 %v5747
    %6320 = vmatmul.f32.gmra.mxu0 %v4616
    %v6321 = vpop.f32.mrf.mxu0
    %v6322 = vadd.f32 %v6281, %v6321
    %6323 = vmatmul.f32.gmra.mxu0 %v4624
    %v6324 = vpop.f32.mrf.mxu0
    %v6325 = vadd.f32 %v6284, %v6324
    %6326 = vmatmul.f32.gmra.mxu0 %v4632
    %v6327 = vpop.f32.mrf.mxu0
    %v6328 = vadd.f32 %v6287, %v6327
    %6329 = vmatmul.f32.gmra.mxu0 %v4640
    %v6330 = vpop.f32.mrf.mxu0
    %v6331 = vadd.f32 %v6290, %v6330
    %6332 = vmatmul.f32.gmra.mxu0 %v4648
    %v6333 = vpop.f32.mrf.mxu0
    %v6334 = vadd.f32 %v6293, %v6333
    %6335 = vmatmul.f32.gmra.mxu0 %v4656
    %v6336 = vpop.f32.mrf.mxu0
    %v6337 = vadd.f32 %v6296, %v6336
    %6338 = vmatmul.f32.gmra.mxu0 %v4664
    %v6339 = vpop.f32.mrf.mxu0
    %v6340 = vadd.f32 %v6299, %v6339
    %6341 = vmatmul.f32.gmra.mxu0 %v4672
    %v6342 = vpop.f32.mrf.mxu0
    %v6343 = vadd.f32 %v6302, %v6342
    %6344 = vdwg.mxu0
    %6345 = vmatpush.msra.mxu0 %v5964
    %6346 = vmatpush.msra.mxu0 %v5957
    %6347 = vmatpush.msra.mxu0 %v5950
    %6348 = vmatpush.msra.mxu0 %v5943
    %6349 = vmatpush.msra.mxu0 %v5936
    %6350 = vmatpush.msra.mxu0 %v5929
    %6351 = vmatpush.msra.mxu0 %v5922
    %6352 = vmatpush.msra.mxu0 %v5915
    %6353 = vmatpush.msra.mxu0 %v5908
    %6354 = vmatpush.msra.mxu0 %v5901
    %6355 = vmatpush.msra.mxu0 %v5894
    %6356 = vmatpush.msra.mxu0 %v5887
    %6357 = vmatpush.msra.mxu0 %v5880
    %6358 = vmatpush.msra.mxu0 %v5873
    %6359 = vmatpush.msra.mxu0 %v5866
    %6360 = vmatpush.msra.mxu0 %v5859
    %6361 = vmatmul.f32.gmra.mxu0 %v4617
    %v6362 = vpop.f32.mrf.mxu0
    %v6363 = vadd.f32 %v6322, %v6362
    %6364 = vmatmul.f32.gmra.mxu0 %v4625
    %v6365 = vpop.f32.mrf.mxu0
    %v6366 = vadd.f32 %v6325, %v6365
    %6367 = vmatmul.f32.gmra.mxu0 %v4633
    %v6368 = vpop.f32.mrf.mxu0
    %v6369 = vadd.f32 %v6328, %v6368
    %6370 = vmatmul.f32.gmra.mxu0 %v4641
    %v6371 = vpop.f32.mrf.mxu0
    %v6372 = vadd.f32 %v6331, %v6371
    %6373 = vmatmul.f32.gmra.mxu0 %v4649
    %v6374 = vpop.f32.mrf.mxu0
    %v6375 = vadd.f32 %v6334, %v6374
    %6376 = vmatmul.f32.gmra.mxu0 %v4657
    %v6377 = vpop.f32.mrf.mxu0
    %v6378 = vadd.f32 %v6337, %v6377
    %6379 = vmatmul.f32.gmra.mxu0 %v4665
    %v6380 = vpop.f32.mrf.mxu0
    %v6381 = vadd.f32 %v6340, %v6380
    %6382 = vmatmul.f32.gmra.mxu0 %v4673
    %v6383 = vpop.f32.mrf.mxu0
    %v6384 = vadd.f32 %v6343, %v6383
    %6385 = vdwg.mxu0
    %6386 = vmatpush.msra.mxu0 %v6076
    %6387 = vmatpush.msra.mxu0 %v6069
    %6388 = vmatpush.msra.mxu0 %v6062
    %6389 = vmatpush.msra.mxu0 %v6055
    %6390 = vmatpush.msra.mxu0 %v6048
    %6391 = vmatpush.msra.mxu0 %v6041
    %6392 = vmatpush.msra.mxu0 %v6034
    %6393 = vmatpush.msra.mxu0 %v6027
    %6394 = vmatpush.msra.mxu0 %v6020
    %6395 = vmatpush.msra.mxu0 %v6013
    %6396 = vmatpush.msra.mxu0 %v6006
    %6397 = vmatpush.msra.mxu0 %v5999
    %6398 = vmatpush.msra.mxu0 %v5992
    %6399 = vmatpush.msra.mxu0 %v5985
    %6400 = vmatpush.msra.mxu0 %v5978
    %6401 = vmatpush.msra.mxu0 %v5971
    %6402 = vmatmul.f32.gmra.mxu0 %v4618
    %v6403 = vpop.f32.mrf.mxu0
    %v6404 = vadd.f32 %v6363, %v6403
    %6405 = vmatmul.f32.gmra.mxu0 %v4626
    %v6406 = vpop.f32.mrf.mxu0
    %v6407 = vadd.f32 %v6366, %v6406
    %6408 = vmatmul.f32.gmra.mxu0 %v4634
    %v6409 = vpop.f32.mrf.mxu0
    %v6410 = vadd.f32 %v6369, %v6409
    %6411 = vmatmul.f32.gmra.mxu0 %v4642
    %v6412 = vpop.f32.mrf.mxu0
    %v6413 = vadd.f32 %v6372, %v6412
    %6414 = vmatmul.f32.gmra.mxu0 %v4650
    %v6415 = vpop.f32.mrf.mxu0
    %v6416 = vadd.f32 %v6375, %v6415
    %6417 = vmatmul.f32.gmra.mxu0 %v4658
    %v6418 = vpop.f32.mrf.mxu0
    %v6419 = vadd.f32 %v6378, %v6418
    %6420 = vmatmul.f32.gmra.mxu0 %v4666
    %v6421 = vpop.f32.mrf.mxu0
    %v6422 = vadd.f32 %v6381, %v6421
    %6423 = vmatmul.f32.gmra.mxu0 %v4674
    %v6424 = vpop.f32.mrf.mxu0
    %v6425 = vadd.f32 %v6384, %v6424
    %6426 = vdwg.mxu0
    %6427 = vmatpush.msra.mxu0 %v5293
    %6428 = vmatpush.msra.mxu0 %v5286
    %6429 = vmatpush.msra.mxu0 %v5279
    %6430 = vmatpush.msra.mxu0 %v5272
    %6431 = vmatpush.msra.mxu0 %v5265
    %6432 = vmatpush.msra.mxu0 %v5258
    %6433 = vmatpush.msra.mxu0 %v5251
    %6434 = vmatpush.msra.mxu0 %v5244
    %6435 = vmatpush.msra.mxu0 %v5237
    %6436 = vmatpush.msra.mxu0 %v5230
    %6437 = vmatpush.msra.mxu0 %v5223
    %6438 = vmatpush.msra.mxu0 %v5216
    %6439 = vmatpush.msra.mxu0 %v5209
    %6440 = vmatpush.msra.mxu0 %v5202
    %6441 = vmatpush.msra.mxu0 %v5195
    %6442 = vmatpush.msra.mxu0 %v5188
    %6443 = vmatmul.f32.gmra.mxu0 %v4611
    %v6444 = vpop.f32.mrf.mxu0
    %v6445 = vadd.f32 %v6086, %v6444
    %6446 = vmatmul.f32.gmra.mxu0 %v4619
    %v6447 = vpop.f32.mrf.mxu0
    %v6448 = vadd.f32 %v6086, %v6447
    %6449 = vmatmul.f32.gmra.mxu0 %v4627
    %v6450 = vpop.f32.mrf.mxu0
    %v6451 = vadd.f32 %v6086, %v6450
    %6452 = vmatmul.f32.gmra.mxu0 %v4635
    %v6453 = vpop.f32.mrf.mxu0
    %v6454 = vadd.f32 %v6086, %v6453
    %6455 = vmatmul.f32.gmra.mxu0 %v4643
    %v6456 = vpop.f32.mrf.mxu0
    %v6457 = vadd.f32 %v6086, %v6456
    %6458 = vmatmul.f32.gmra.mxu0 %v4651
    %v6459 = vpop.f32.mrf.mxu0
    %v6460 = vadd.f32 %v6086, %v6459
    %6461 = vmatmul.f32.gmra.mxu0 %v4659
    %v6462 = vpop.f32.mrf.mxu0
    %v6463 = vadd.f32 %v6086, %v6462
    %6464 = vmatmul.f32.gmra.mxu0 %v4667
    %v6465 = vpop.f32.mrf.mxu0
    %v6466 = vadd.f32 %v6086, %v6465
    %6467 = vdwg.mxu0
    %6468 = vmatpush.msra.mxu0 %v5405
    %6469 = vmatpush.msra.mxu0 %v5398
    %6470 = vmatpush.msra.mxu0 %v5391
    %6471 = vmatpush.msra.mxu0 %v5384
    %6472 = vmatpush.msra.mxu0 %v5377
    %6473 = vmatpush.msra.mxu0 %v5370
    %6474 = vmatpush.msra.mxu0 %v5363
    %6475 = vmatpush.msra.mxu0 %v5356
    %6476 = vmatpush.msra.mxu0 %v5349
    %6477 = vmatpush.msra.mxu0 %v5342
    %6478 = vmatpush.msra.mxu0 %v5335
    %6479 = vmatpush.msra.mxu0 %v5328
    %6480 = vmatpush.msra.mxu0 %v5321
    %6481 = vmatpush.msra.mxu0 %v5314
    %6482 = vmatpush.msra.mxu0 %v5307
    %6483 = vmatpush.msra.mxu0 %v5300
    %6484 = vmatmul.f32.gmra.mxu0 %v4612
    %v6485 = vpop.f32.mrf.mxu0
    %v6486 = vadd.f32 %v6445, %v6485
    %6487 = vmatmul.f32.gmra.mxu0 %v4620
    %v6488 = vpop.f32.mrf.mxu0
    %v6489 = vadd.f32 %v6448, %v6488
    %6490 = vmatmul.f32.gmra.mxu0 %v4628
    %v6491 = vpop.f32.mrf.mxu0
    %v6492 = vadd.f32 %v6451, %v6491
    %6493 = vmatmul.f32.gmra.mxu0 %v4636
    %v6494 = vpop.f32.mrf.mxu0
    %v6495 = vadd.f32 %v6454, %v6494
    %6496 = vmatmul.f32.gmra.mxu0 %v4644
    %v6497 = vpop.f32.mrf.mxu0
    %v6498 = vadd.f32 %v6457, %v6497
    %6499 = vmatmul.f32.gmra.mxu0 %v4652
    %v6500 = vpop.f32.mrf.mxu0
    %v6501 = vadd.f32 %v6460, %v6500
    %6502 = vmatmul.f32.gmra.mxu0 %v4660
    %v6503 = vpop.f32.mrf.mxu0
    %v6504 = vadd.f32 %v6463, %v6503
    %6505 = vmatmul.f32.gmra.mxu0 %v4668
    %v6506 = vpop.f32.mrf.mxu0
    %v6507 = vadd.f32 %v6466, %v6506
    %6508 = vdwg.mxu0
    %6509 = vmatpush.msra.mxu0 %v5517
    %6510 = vmatpush.msra.mxu0 %v5510
    %6511 = vmatpush.msra.mxu0 %v5503
    %6512 = vmatpush.msra.mxu0 %v5496
    %6513 = vmatpush.msra.mxu0 %v5489
    %6514 = vmatpush.msra.mxu0 %v5482
    %6515 = vmatpush.msra.mxu0 %v5475
    %6516 = vmatpush.msra.mxu0 %v5468
    %6517 = vmatpush.msra.mxu0 %v5461
    %6518 = vmatpush.msra.mxu0 %v5454
    %6519 = vmatpush.msra.mxu0 %v5447
    %6520 = vmatpush.msra.mxu0 %v5440
    %6521 = vmatpush.msra.mxu0 %v5433
    %6522 = vmatpush.msra.mxu0 %v5426
    %6523 = vmatpush.msra.mxu0 %v5419
    %6524 = vmatpush.msra.mxu0 %v5412
    %6525 = vmatmul.f32.gmra.mxu0 %v4613
    %v6526 = vpop.f32.mrf.mxu0
    %v6527 = vadd.f32 %v6486, %v6526
    %6528 = vmatmul.f32.gmra.mxu0 %v4621
    %v6529 = vpop.f32.mrf.mxu0
    %v6530 = vadd.f32 %v6489, %v6529
    %6531 = vmatmul.f32.gmra.mxu0 %v4629
    %v6532 = vpop.f32.mrf.mxu0
    %v6533 = vadd.f32 %v6492, %v6532
    %6534 = vmatmul.f32.gmra.mxu0 %v4637
    %v6535 = vpop.f32.mrf.mxu0
    %v6536 = vadd.f32 %v6495, %v6535
    %6537 = vmatmul.f32.gmra.mxu0 %v4645
    %v6538 = vpop.f32.mrf.mxu0
    %v6539 = vadd.f32 %v6498, %v6538
    %6540 = vmatmul.f32.gmra.mxu0 %v4653
    %v6541 = vpop.f32.mrf.mxu0
    %v6542 = vadd.f32 %v6501, %v6541
    %6543 = vmatmul.f32.gmra.mxu0 %v4661
    %v6544 = vpop.f32.mrf.mxu0
    %v6545 = vadd.f32 %v6504, %v6544
    %6546 = vmatmul.f32.gmra.mxu0 %v4669
    %v6547 = vpop.f32.mrf.mxu0
    %v6548 = vadd.f32 %v6507, %v6547
    %6549 = vdwg.mxu0
    %6550 = vmatpush.msra.mxu0 %v5629
    %6551 = vmatpush.msra.mxu0 %v5622
    %6552 = vmatpush.msra.mxu0 %v5615
    %6553 = vmatpush.msra.mxu0 %v5608
    %6554 = vmatpush.msra.mxu0 %v5601
    %6555 = vmatpush.msra.mxu0 %v5594
    %6556 = vmatpush.msra.mxu0 %v5587
    %6557 = vmatpush.msra.mxu0 %v5580
    %6558 = vmatpush.msra.mxu0 %v5573
    %6559 = vmatpush.msra.mxu0 %v5566
    %6560 = vmatpush.msra.mxu0 %v5559
    %6561 = vmatpush.msra.mxu0 %v5552
    %6562 = vmatpush.msra.mxu0 %v5545
    %6563 = vmatpush.msra.mxu0 %v5538
    %6564 = vmatpush.msra.mxu0 %v5531
    %6565 = vmatpush.msra.mxu0 %v5524
    %6566 = vmatmul.f32.gmra.mxu0 %v4614
    %v6567 = vpop.f32.mrf.mxu0
    %v6568 = vadd.f32 %v6527, %v6567
    %6569 = vmatmul.f32.gmra.mxu0 %v4622
    %v6570 = vpop.f32.mrf.mxu0
    %v6571 = vadd.f32 %v6530, %v6570
    %6572 = vmatmul.f32.gmra.mxu0 %v4630
    %v6573 = vpop.f32.mrf.mxu0
    %v6574 = vadd.f32 %v6533, %v6573
    %6575 = vmatmul.f32.gmra.mxu0 %v4638
    %v6576 = vpop.f32.mrf.mxu0
    %v6577 = vadd.f32 %v6536, %v6576
    %6578 = vmatmul.f32.gmra.mxu0 %v4646
    %v6579 = vpop.f32.mrf.mxu0
    %v6580 = vadd.f32 %v6539, %v6579
    %6581 = vmatmul.f32.gmra.mxu0 %v4654
    %v6582 = vpop.f32.mrf.mxu0
    %v6583 = vadd.f32 %v6542, %v6582
    %6584 = vmatmul.f32.gmra.mxu0 %v4662
    %v6585 = vpop.f32.mrf.mxu0
    %v6586 = vadd.f32 %v6545, %v6585
    %6587 = vmatmul.f32.gmra.mxu0 %v4670
    %v6588 = vpop.f32.mrf.mxu0
    %v6589 = vadd.f32 %v6548, %v6588
    %6590 = vdwg.mxu0
    %6591 = vmatpush.msra.mxu0 %v5741
    %6592 = vmatpush.msra.mxu0 %v5734
    %6593 = vmatpush.msra.mxu0 %v5727
    %6594 = vmatpush.msra.mxu0 %v5720
    %6595 = vmatpush.msra.mxu0 %v5713
    %6596 = vmatpush.msra.mxu0 %v5706
    %6597 = vmatpush.msra.mxu0 %v5699
    %6598 = vmatpush.msra.mxu0 %v5692
    %6599 = vmatpush.msra.mxu0 %v5685
    %6600 = vmatpush.msra.mxu0 %v5678
    %6601 = vmatpush.msra.mxu0 %v5671
    %6602 = vmatpush.msra.mxu0 %v5664
    %6603 = vmatpush.msra.mxu0 %v5657
    %6604 = vmatpush.msra.mxu0 %v5650
    %6605 = vmatpush.msra.mxu0 %v5643
    %6606 = vmatpush.msra.mxu0 %v5636
    %6607 = vmatmul.f32.gmra.mxu0 %v4615
    %v6608 = vpop.f32.mrf.mxu0
    %v6609 = vadd.f32 %v6568, %v6608
    %6610 = vmatmul.f32.gmra.mxu0 %v4623
    %v6611 = vpop.f32.mrf.mxu0
    %v6612 = vadd.f32 %v6571, %v6611
    %6613 = vmatmul.f32.gmra.mxu0 %v4631
    %v6614 = vpop.f32.mrf.mxu0
    %v6615 = vadd.f32 %v6574, %v6614
    %6616 = vmatmul.f32.gmra.mxu0 %v4639
    %v6617 = vpop.f32.mrf.mxu0
    %v6618 = vadd.f32 %v6577, %v6617
    %6619 = vmatmul.f32.gmra.mxu0 %v4647
    %v6620 = vpop.f32.mrf.mxu0
    %v6621 = vadd.f32 %v6580, %v6620
    %6622 = vmatmul.f32.gmra.mxu0 %v4655
    %v6623 = vpop.f32.mrf.mxu0
    %v6624 = vadd.f32 %v6583, %v6623
    %6625 = vmatmul.f32.gmra.mxu0 %v4663
    %v6626 = vpop.f32.mrf.mxu0
    %v6627 = vadd.f32 %v6586, %v6626
    %6628 = vmatmul.f32.gmra.mxu0 %v4671
    %v6629 = vpop.f32.mrf.mxu0
    %v6630 = vadd.f32 %v6589, %v6629
    %6631 = vdwg.mxu0
    %6632 = vmatpush.msra.mxu0 %v5853
    %6633 = vmatpush.msra.mxu0 %v5846
    %6634 = vmatpush.msra.mxu0 %v5839
    %6635 = vmatpush.msra.mxu0 %v5832
    %6636 = vmatpush.msra.mxu0 %v5825
    %6637 = vmatpush.msra.mxu0 %v5818
    %6638 = vmatpush.msra.mxu0 %v5811
    %6639 = vmatpush.msra.mxu0 %v5804
    %6640 = vmatpush.msra.mxu0 %v5797
    %6641 = vmatpush.msra.mxu0 %v5790
    %6642 = vmatpush.msra.mxu0 %v5783
    %6643 = vmatpush.msra.mxu0 %v5776
    %6644 = vmatpush.msra.mxu0 %v5769
    %6645 = vmatpush.msra.mxu0 %v5762
    %6646 = vmatpush.msra.mxu0 %v5755
    %6647 = vmatpush.msra.mxu0 %v5748
    %6648 = vmatmul.f32.gmra.mxu0 %v4616
    %v6649 = vpop.f32.mrf.mxu0
    %v6650 = vadd.f32 %v6609, %v6649
    %6651 = vmatmul.f32.gmra.mxu0 %v4624
    %v6652 = vpop.f32.mrf.mxu0
    %v6653 = vadd.f32 %v6612, %v6652
    %6654 = vmatmul.f32.gmra.mxu0 %v4632
    %v6655 = vpop.f32.mrf.mxu0
    %v6656 = vadd.f32 %v6615, %v6655
    %6657 = vmatmul.f32.gmra.mxu0 %v4640
    %v6658 = vpop.f32.mrf.mxu0
    %v6659 = vadd.f32 %v6618, %v6658
    %6660 = vmatmul.f32.gmra.mxu0 %v4648
    %v6661 = vpop.f32.mrf.mxu0
    %v6662 = vadd.f32 %v6621, %v6661
    %6663 = vmatmul.f32.gmra.mxu0 %v4656
    %v6664 = vpop.f32.mrf.mxu0
    %v6665 = vadd.f32 %v6624, %v6664
    %6666 = vmatmul.f32.gmra.mxu0 %v4664
    %v6667 = vpop.f32.mrf.mxu0
    %v6668 = vadd.f32 %v6627, %v6667
    %6669 = vmatmul.f32.gmra.mxu0 %v4672
    %v6670 = vpop.f32.mrf.mxu0
    %v6671 = vadd.f32 %v6630, %v6670
    %6672 = vdwg.mxu0
    %6673 = vmatpush.msra.mxu0 %v5965
    %6674 = vmatpush.msra.mxu0 %v5958
    %6675 = vmatpush.msra.mxu0 %v5951
    %6676 = vmatpush.msra.mxu0 %v5944
    %6677 = vmatpush.msra.mxu0 %v5937
    %6678 = vmatpush.msra.mxu0 %v5930
    %6679 = vmatpush.msra.mxu0 %v5923
    %6680 = vmatpush.msra.mxu0 %v5916
    %6681 = vmatpush.msra.mxu0 %v5909
    %6682 = vmatpush.msra.mxu0 %v5902
    %6683 = vmatpush.msra.mxu0 %v5895
    %6684 = vmatpush.msra.mxu0 %v5888
    %6685 = vmatpush.msra.mxu0 %v5881
    %6686 = vmatpush.msra.mxu0 %v5874
    %6687 = vmatpush.msra.mxu0 %v5867
    %6688 = vmatpush.msra.mxu0 %v5860
    %6689 = vmatmul.f32.gmra.mxu0 %v4617
    %v6690 = vpop.f32.mrf.mxu0
    %v6691 = vadd.f32 %v6650, %v6690
    %6692 = vmatmul.f32.gmra.mxu0 %v4625
    %v6693 = vpop.f32.mrf.mxu0
    %v6694 = vadd.f32 %v6653, %v6693
    %6695 = vmatmul.f32.gmra.mxu0 %v4633
    %v6696 = vpop.f32.mrf.mxu0
    %v6697 = vadd.f32 %v6656, %v6696
    %6698 = vmatmul.f32.gmra.mxu0 %v4641
    %v6699 = vpop.f32.mrf.mxu0
    %v6700 = vadd.f32 %v6659, %v6699
    %6701 = vmatmul.f32.gmra.mxu0 %v4649
    %v6702 = vpop.f32.mrf.mxu0
    %v6703 = vadd.f32 %v6662, %v6702
    %6704 = vmatmul.f32.gmra.mxu0 %v4657
    %v6705 = vpop.f32.mrf.mxu0
    %v6706 = vadd.f32 %v6665, %v6705
    %6707 = vmatmul.f32.gmra.mxu0 %v4665
    %v6708 = vpop.f32.mrf.mxu0
    %v6709 = vadd.f32 %v6668, %v6708
    %6710 = vmatmul.f32.gmra.mxu0 %v4673
    %v6711 = vpop.f32.mrf.mxu0
    %v6712 = vadd.f32 %v6671, %v6711
    %6713 = vdwg.mxu0
    %6714 = vmatpush.msra.mxu0 %v6077
    %6715 = vmatpush.msra.mxu0 %v6070
    %6716 = vmatpush.msra.mxu0 %v6063
    %6717 = vmatpush.msra.mxu0 %v6056
    %6718 = vmatpush.msra.mxu0 %v6049
    %6719 = vmatpush.msra.mxu0 %v6042
    %6720 = vmatpush.msra.mxu0 %v6035
    %6721 = vmatpush.msra.mxu0 %v6028
    %6722 = vmatpush.msra.mxu0 %v6021
    %6723 = vmatpush.msra.mxu0 %v6014
    %6724 = vmatpush.msra.mxu0 %v6007
    %6725 = vmatpush.msra.mxu0 %v6000
    %6726 = vmatpush.msra.mxu0 %v5993
    %6727 = vmatpush.msra.mxu0 %v5986
    %6728 = vmatpush.msra.mxu0 %v5979
    %6729 = vmatpush.msra.mxu0 %v5972
    %6730 = vmatmul.f32.gmra.mxu0 %v4618
    %v6731 = vpop.f32.mrf.mxu0
    %v6732 = vadd.f32 %v6691, %v6731
    %6733 = vmatmul.f32.gmra.mxu0 %v4626
    %v6734 = vpop.f32.mrf.mxu0
    %v6735 = vadd.f32 %v6694, %v6734
    %6736 = vmatmul.f32.gmra.mxu0 %v4634
    %v6737 = vpop.f32.mrf.mxu0
    %v6738 = vadd.f32 %v6697, %v6737
    %6739 = vmatmul.f32.gmra.mxu0 %v4642
    %v6740 = vpop.f32.mrf.mxu0
    %v6741 = vadd.f32 %v6700, %v6740
    %6742 = vmatmul.f32.gmra.mxu0 %v4650
    %v6743 = vpop.f32.mrf.mxu0
    %v6744 = vadd.f32 %v6703, %v6743
    %6745 = vmatmul.f32.gmra.mxu0 %v4658
    %v6746 = vpop.f32.mrf.mxu0
    %v6747 = vadd.f32 %v6706, %v6746
    %6748 = vmatmul.f32.gmra.mxu0 %v4666
    %v6749 = vpop.f32.mrf.mxu0
    %v6750 = vadd.f32 %v6709, %v6749
    %6751 = vmatmul.f32.gmra.mxu0 %v4674
    %v6752 = vpop.f32.mrf.mxu0
    %v6753 = vadd.f32 %v6712, %v6752
    %6754 = vdwg.mxu0
    %6755 = vmatpush.msra.mxu0 %v5294
    %6756 = vmatpush.msra.mxu0 %v5287
    %6757 = vmatpush.msra.mxu0 %v5280
    %6758 = vmatpush.msra.mxu0 %v5273
    %6759 = vmatpush.msra.mxu0 %v5266
    %6760 = vmatpush.msra.mxu0 %v5259
    %6761 = vmatpush.msra.mxu0 %v5252
    %6762 = vmatpush.msra.mxu0 %v5245
    %6763 = vmatpush.msra.mxu0 %v5238
    %6764 = vmatpush.msra.mxu0 %v5231
    %6765 = vmatpush.msra.mxu0 %v5224
    %6766 = vmatpush.msra.mxu0 %v5217
    %6767 = vmatpush.msra.mxu0 %v5210
    %6768 = vmatpush.msra.mxu0 %v5203
    %6769 = vmatpush.msra.mxu0 %v5196
    %6770 = vmatpush.msra.mxu0 %v5189
    %6771 = vmatmul.f32.gmra.mxu0 %v4611
    %v6772 = vpop.f32.mrf.mxu0
    %v6773 = vadd.f32 %v6087, %v6772
    %6774 = vmatmul.f32.gmra.mxu0 %v4619
    %v6775 = vpop.f32.mrf.mxu0
    %v6776 = vadd.f32 %v6087, %v6775
    %6777 = vmatmul.f32.gmra.mxu0 %v4627
    %v6778 = vpop.f32.mrf.mxu0
    %v6779 = vadd.f32 %v6087, %v6778
    %6780 = vmatmul.f32.gmra.mxu0 %v4635
    %v6781 = vpop.f32.mrf.mxu0
    %v6782 = vadd.f32 %v6087, %v6781
    %6783 = vmatmul.f32.gmra.mxu0 %v4643
    %v6784 = vpop.f32.mrf.mxu0
    %v6785 = vadd.f32 %v6087, %v6784
    %6786 = vmatmul.f32.gmra.mxu0 %v4651
    %v6787 = vpop.f32.mrf.mxu0
    %v6788 = vadd.f32 %v6087, %v6787
    %6789 = vmatmul.f32.gmra.mxu0 %v4659
    %v6790 = vpop.f32.mrf.mxu0
    %v6791 = vadd.f32 %v6087, %v6790
    %6792 = vmatmul.f32.gmra.mxu0 %v4667
    %v6793 = vpop.f32.mrf.mxu0
    %v6794 = vadd.f32 %v6087, %v6793
    %6795 = vdwg.mxu0
    %6796 = vmatpush.msra.mxu0 %v5406
    %6797 = vmatpush.msra.mxu0 %v5399
    %6798 = vmatpush.msra.mxu0 %v5392
    %6799 = vmatpush.msra.mxu0 %v5385
    %6800 = vmatpush.msra.mxu0 %v5378
    %6801 = vmatpush.msra.mxu0 %v5371
    %6802 = vmatpush.msra.mxu0 %v5364
    %6803 = vmatpush.msra.mxu0 %v5357
    %6804 = vmatpush.msra.mxu0 %v5350
    %6805 = vmatpush.msra.mxu0 %v5343
    %6806 = vmatpush.msra.mxu0 %v5336
    %6807 = vmatpush.msra.mxu0 %v5329
    %6808 = vmatpush.msra.mxu0 %v5322
    %6809 = vmatpush.msra.mxu0 %v5315
    %6810 = vmatpush.msra.mxu0 %v5308
    %6811 = vmatpush.msra.mxu0 %v5301
    %6812 = vmatmul.f32.gmra.mxu0 %v4612
    %v6813 = vpop.f32.mrf.mxu0
    %v6814 = vadd.f32 %v6773, %v6813
    %6815 = vmatmul.f32.gmra.mxu0 %v4620
    %v6816 = vpop.f32.mrf.mxu0
    %v6817 = vadd.f32 %v6776, %v6816
    %6818 = vmatmul.f32.gmra.mxu0 %v4628
    %v6819 = vpop.f32.mrf.mxu0
    %v6820 = vadd.f32 %v6779, %v6819
    %6821 = vmatmul.f32.gmra.mxu0 %v4636
    %v6822 = vpop.f32.mrf.mxu0
    %v6823 = vadd.f32 %v6782, %v6822
    %6824 = vmatmul.f32.gmra.mxu0 %v4644
    %v6825 = vpop.f32.mrf.mxu0
    %v6826 = vadd.f32 %v6785, %v6825
    %6827 = vmatmul.f32.gmra.mxu0 %v4652
    %v6828 = vpop.f32.mrf.mxu0
    %v6829 = vadd.f32 %v6788, %v6828
    %6830 = vmatmul.f32.gmra.mxu0 %v4660
    %v6831 = vpop.f32.mrf.mxu0
    %v6832 = vadd.f32 %v6791, %v6831
    %6833 = vmatmul.f32.gmra.mxu0 %v4668
    %v6834 = vpop.f32.mrf.mxu0
    %v6835 = vadd.f32 %v6794, %v6834
    %6836 = vdwg.mxu0
    %6837 = vmatpush.msra.mxu0 %v5518
    %6838 = vmatpush.msra.mxu0 %v5511
    %6839 = vmatpush.msra.mxu0 %v5504
    %6840 = vmatpush.msra.mxu0 %v5497
    %6841 = vmatpush.msra.mxu0 %v5490
    %6842 = vmatpush.msra.mxu0 %v5483
    %6843 = vmatpush.msra.mxu0 %v5476
    %6844 = vmatpush.msra.mxu0 %v5469
    %6845 = vmatpush.msra.mxu0 %v5462
    %6846 = vmatpush.msra.mxu0 %v5455
    %6847 = vmatpush.msra.mxu0 %v5448
    %6848 = vmatpush.msra.mxu0 %v5441
    %6849 = vmatpush.msra.mxu0 %v5434
    %6850 = vmatpush.msra.mxu0 %v5427
    %6851 = vmatpush.msra.mxu0 %v5420
    %6852 = vmatpush.msra.mxu0 %v5413
    %6853 = vmatmul.f32.gmra.mxu0 %v4613
    %v6854 = vpop.f32.mrf.mxu0
    %v6855 = vadd.f32 %v6814, %v6854
    %6856 = vmatmul.f32.gmra.mxu0 %v4621
    %v6857 = vpop.f32.mrf.mxu0
    %v6858 = vadd.f32 %v6817, %v6857
    %6859 = vmatmul.f32.gmra.mxu0 %v4629
    %v6860 = vpop.f32.mrf.mxu0
    %v6861 = vadd.f32 %v6820, %v6860
    %6862 = vmatmul.f32.gmra.mxu0 %v4637
    %v6863 = vpop.f32.mrf.mxu0
    %v6864 = vadd.f32 %v6823, %v6863
    %6865 = vmatmul.f32.gmra.mxu0 %v4645
    %v6866 = vpop.f32.mrf.mxu0
    %v6867 = vadd.f32 %v6826, %v6866
    %6868 = vmatmul.f32.gmra.mxu0 %v4653
    %v6869 = vpop.f32.mrf.mxu0
    %v6870 = vadd.f32 %v6829, %v6869
    %6871 = vmatmul.f32.gmra.mxu0 %v4661
    %v6872 = vpop.f32.mrf.mxu0
    %v6873 = vadd.f32 %v6832, %v6872
    %6874 = vmatmul.f32.gmra.mxu0 %v4669
    %v6875 = vpop.f32.mrf.mxu0
    %v6876 = vadd.f32 %v6835, %v6875
    %6877 = vdwg.mxu0
    %6878 = vmatpush.msra.mxu0 %v5630
    %6879 = vmatpush.msra.mxu0 %v5623
    %6880 = vmatpush.msra.mxu0 %v5616
    %6881 = vmatpush.msra.mxu0 %v5609
    %6882 = vmatpush.msra.mxu0 %v5602
    %6883 = vmatpush.msra.mxu0 %v5595
    %6884 = vmatpush.msra.mxu0 %v5588
    %6885 = vmatpush.msra.mxu0 %v5581
    %6886 = vmatpush.msra.mxu0 %v5574
    %6887 = vmatpush.msra.mxu0 %v5567
    %6888 = vmatpush.msra.mxu0 %v5560
    %6889 = vmatpush.msra.mxu0 %v5553
    %6890 = vmatpush.msra.mxu0 %v5546
    %6891 = vmatpush.msra.mxu0 %v5539
    %6892 = vmatpush.msra.mxu0 %v5532
    %6893 = vmatpush.msra.mxu0 %v5525
    %6894 = vmatmul.f32.gmra.mxu0 %v4614
    %v6895 = vpop.f32.mrf.mxu0
    %v6896 = vadd.f32 %v6855, %v6895
    %6897 = vmatmul.f32.gmra.mxu0 %v4622
    %v6898 = vpop.f32.mrf.mxu0
    %v6899 = vadd.f32 %v6858, %v6898
    %6900 = vmatmul.f32.gmra.mxu0 %v4630
    %v6901 = vpop.f32.mrf.mxu0
    %v6902 = vadd.f32 %v6861, %v6901
    %6903 = vmatmul.f32.gmra.mxu0 %v4638
    %v6904 = vpop.f32.mrf.mxu0
    %v6905 = vadd.f32 %v6864, %v6904
    %6906 = vmatmul.f32.gmra.mxu0 %v4646
    %v6907 = vpop.f32.mrf.mxu0
    %v6908 = vadd.f32 %v6867, %v6907
    %6909 = vmatmul.f32.gmra.mxu0 %v4654
    %v6910 = vpop.f32.mrf.mxu0
    %v6911 = vadd.f32 %v6870, %v6910
    %6912 = vmatmul.f32.gmra.mxu0 %v4662
    %v6913 = vpop.f32.mrf.mxu0
    %v6914 = vadd.f32 %v6873, %v6913
    %6915 = vmatmul.f32.gmra.mxu0 %v4670
    %v6916 = vpop.f32.mrf.mxu0
    %v6917 = vadd.f32 %v6876, %v6916
    %6918 = vdwg.mxu0
    %6919 = vmatpush.msra.mxu0 %v5742
    %6920 = vmatpush.msra.mxu0 %v5735
    %6921 = vmatpush.msra.mxu0 %v5728
    %6922 = vmatpush.msra.mxu0 %v5721
    %6923 = vmatpush.msra.mxu0 %v5714
    %6924 = vmatpush.msra.mxu0 %v5707
    %6925 = vmatpush.msra.mxu0 %v5700
    %6926 = vmatpush.msra.mxu0 %v5693
    %6927 = vmatpush.msra.mxu0 %v5686
    %6928 = vmatpush.msra.mxu0 %v5679
    %6929 = vmatpush.msra.mxu0 %v5672
    %6930 = vmatpush.msra.mxu0 %v5665
    %6931 = vmatpush.msra.mxu0 %v5658
    %6932 = vmatpush.msra.mxu0 %v5651
    %6933 = vmatpush.msra.mxu0 %v5644
    %6934 = vmatpush.msra.mxu0 %v5637
    %6935 = vmatmul.f32.gmra.mxu0 %v4615
    %v6936 = vpop.f32.mrf.mxu0
    %v6937 = vadd.f32 %v6896, %v6936
    %6938 = vmatmul.f32.gmra.mxu0 %v4623
    %v6939 = vpop.f32.mrf.mxu0
    %v6940 = vadd.f32 %v6899, %v6939
    %6941 = vmatmul.f32.gmra.mxu0 %v4631
    %v6942 = vpop.f32.mrf.mxu0
    %v6943 = vadd.f32 %v6902, %v6942
    %6944 = vmatmul.f32.gmra.mxu0 %v4639
    %v6945 = vpop.f32.mrf.mxu0
    %v6946 = vadd.f32 %v6905, %v6945
    %6947 = vmatmul.f32.gmra.mxu0 %v4647
    %v6948 = vpop.f32.mrf.mxu0
    %v6949 = vadd.f32 %v6908, %v6948
    %6950 = vmatmul.f32.gmra.mxu0 %v4655
    %v6951 = vpop.f32.mrf.mxu0
    %v6952 = vadd.f32 %v6911, %v6951
    %6953 = vmatmul.f32.gmra.mxu0 %v4663
    %v6954 = vpop.f32.mrf.mxu0
    %v6955 = vadd.f32 %v6914, %v6954
    %6956 = vmatmul.f32.gmra.mxu0 %v4671
    %v6957 = vpop.f32.mrf.mxu0
    %v6958 = vadd.f32 %v6917, %v6957
    %6959 = vdwg.mxu0
    %6960 = vmatpush.msra.mxu0 %v5854
    %6961 = vmatpush.msra.mxu0 %v5847
    %6962 = vmatpush.msra.mxu0 %v5840
    %6963 = vmatpush.msra.mxu0 %v5833
    %6964 = vmatpush.msra.mxu0 %v5826
    %6965 = vmatpush.msra.mxu0 %v5819
    %6966 = vmatpush.msra.mxu0 %v5812
    %6967 = vmatpush.msra.mxu0 %v5805
    %6968 = vmatpush.msra.mxu0 %v5798
    %6969 = vmatpush.msra.mxu0 %v5791
    %6970 = vmatpush.msra.mxu0 %v5784
    %6971 = vmatpush.msra.mxu0 %v5777
    %6972 = vmatpush.msra.mxu0 %v5770
    %6973 = vmatpush.msra.mxu0 %v5763
    %6974 = vmatpush.msra.mxu0 %v5756
    %6975 = vmatpush.msra.mxu0 %v5749
    %6976 = vmatmul.f32.gmra.mxu0 %v4616
    %v6977 = vpop.f32.mrf.mxu0
    %v6978 = vadd.f32 %v6937, %v6977
    %6979 = vmatmul.f32.gmra.mxu0 %v4624
    %v6980 = vpop.f32.mrf.mxu0
    %v6981 = vadd.f32 %v6940, %v6980
    %6982 = vmatmul.f32.gmra.mxu0 %v4632
    %v6983 = vpop.f32.mrf.mxu0
    %v6984 = vadd.f32 %v6943, %v6983
    %6985 = vmatmul.f32.gmra.mxu0 %v4640
    %v6986 = vpop.f32.mrf.mxu0
    %v6987 = vadd.f32 %v6946, %v6986
    %6988 = vmatmul.f32.gmra.mxu0 %v4648
    %v6989 = vpop.f32.mrf.mxu0
    %v6990 = vadd.f32 %v6949, %v6989
    %6991 = vmatmul.f32.gmra.mxu0 %v4656
    %v6992 = vpop.f32.mrf.mxu0
    %v6993 = vadd.f32 %v6952, %v6992
    %6994 = vmatmul.f32.gmra.mxu0 %v4664
    %v6995 = vpop.f32.mrf.mxu0
    %v6996 = vadd.f32 %v6955, %v6995
    %6997 = vmatmul.f32.gmra.mxu0 %v4672
    %v6998 = vpop.f32.mrf.mxu0
    %v6999 = vadd.f32 %v6958, %v6998
    %7000 = vdwg.mxu0
    %7001 = vmatpush.msra.mxu0 %v5966
    %7002 = vmatpush.msra.mxu0 %v5959
    %7003 = vmatpush.msra.mxu0 %v5952
    %7004 = vmatpush.msra.mxu0 %v5945
    %7005 = vmatpush.msra.mxu0 %v5938
    %7006 = vmatpush.msra.mxu0 %v5931
    %7007 = vmatpush.msra.mxu0 %v5924
    %7008 = vmatpush.msra.mxu0 %v5917
    %7009 = vmatpush.msra.mxu0 %v5910
    %7010 = vmatpush.msra.mxu0 %v5903
    %7011 = vmatpush.msra.mxu0 %v5896
    %7012 = vmatpush.msra.mxu0 %v5889
    %7013 = vmatpush.msra.mxu0 %v5882
    %7014 = vmatpush.msra.mxu0 %v5875
    %7015 = vmatpush.msra.mxu0 %v5868
    %7016 = vmatpush.msra.mxu0 %v5861
    %7017 = vmatmul.f32.gmra.mxu0 %v4617
    %v7018 = vpop.f32.mrf.mxu0
    %v7019 = vadd.f32 %v6978, %v7018
    %7020 = vmatmul.f32.gmra.mxu0 %v4625
    %v7021 = vpop.f32.mrf.mxu0
    %v7022 = vadd.f32 %v6981, %v7021
    %7023 = vmatmul.f32.gmra.mxu0 %v4633
    %v7024 = vpop.f32.mrf.mxu0
    %v7025 = vadd.f32 %v6984, %v7024
    %7026 = vmatmul.f32.gmra.mxu0 %v4641
    %v7027 = vpop.f32.mrf.mxu0
    %v7028 = vadd.f32 %v6987, %v7027
    %7029 = vmatmul.f32.gmra.mxu0 %v4649
    %v7030 = vpop.f32.mrf.mxu0
    %v7031 = vadd.f32 %v6990, %v7030
    %7032 = vmatmul.f32.gmra.mxu0 %v4657
    %v7033 = vpop.f32.mrf.mxu0
    %v7034 = vadd.f32 %v6993, %v7033
    %7035 = vmatmul.f32.gmra.mxu0 %v4665
    %v7036 = vpop.f32.mrf.mxu0
    %v7037 = vadd.f32 %v6996, %v7036
    %7038 = vmatmul.f32.gmra.mxu0 %v4673
    %v7039 = vpop.f32.mrf.mxu0
    %v7040 = vadd.f32 %v6999, %v7039
    %7041 = vdwg.mxu0
    %7042 = vmatpush.msra.mxu0 %v6078
    %7043 = vmatpush.msra.mxu0 %v6071
    %7044 = vmatpush.msra.mxu0 %v6064
    %7045 = vmatpush.msra.mxu0 %v6057
    %7046 = vmatpush.msra.mxu0 %v6050
    %7047 = vmatpush.msra.mxu0 %v6043
    %7048 = vmatpush.msra.mxu0 %v6036
    %7049 = vmatpush.msra.mxu0 %v6029
    %7050 = vmatpush.msra.mxu0 %v6022
    %7051 = vmatpush.msra.mxu0 %v6015
    %7052 = vmatpush.msra.mxu0 %v6008
    %7053 = vmatpush.msra.mxu0 %v6001
    %7054 = vmatpush.msra.mxu0 %v5994
    %7055 = vmatpush.msra.mxu0 %v5987
    %7056 = vmatpush.msra.mxu0 %v5980
    %7057 = vmatpush.msra.mxu0 %v5973
    %7058 = vmatmul.f32.gmra.mxu0 %v4618
    %v7059 = vpop.f32.mrf.mxu0
    %v7060 = vadd.f32 %v7019, %v7059
    %7061 = vmatmul.f32.gmra.mxu0 %v4626
    %v7062 = vpop.f32.mrf.mxu0
    %v7063 = vadd.f32 %v7022, %v7062
    %7064 = vmatmul.f32.gmra.mxu0 %v4634
    %v7065 = vpop.f32.mrf.mxu0
    %v7066 = vadd.f32 %v7025, %v7065
    %7067 = vmatmul.f32.gmra.mxu0 %v4642
    %v7068 = vpop.f32.mrf.mxu0
    %v7069 = vadd.f32 %v7028, %v7068
    %7070 = vmatmul.f32.gmra.mxu0 %v4650
    %v7071 = vpop.f32.mrf.mxu0
    %v7072 = vadd.f32 %v7031, %v7071
    %7073 = vmatmul.f32.gmra.mxu0 %v4658
    %v7074 = vpop.f32.mrf.mxu0
    %v7075 = vadd.f32 %v7034, %v7074
    %7076 = vmatmul.f32.gmra.mxu0 %v4666
    %v7077 = vpop.f32.mrf.mxu0
    %v7078 = vadd.f32 %v7037, %v7077
    %7079 = vmatmul.f32.gmra.mxu0 %v4674
    %v7080 = vpop.f32.mrf.mxu0
    %v7081 = vadd.f32 %v7040, %v7080
    %7082 = vdwg.mxu0
    %7083 = vmatpush.msra.mxu0 %v5295
    %7084 = vmatpush.msra.mxu0 %v5288
    %7085 = vmatpush.msra.mxu0 %v5281
    %7086 = vmatpush.msra.mxu0 %v5274
    %7087 = vmatpush.msra.mxu0 %v5267
    %7088 = vmatpush.msra.mxu0 %v5260
    %7089 = vmatpush.msra.mxu0 %v5253
    %7090 = vmatpush.msra.mxu0 %v5246
    %7091 = vmatpush.msra.mxu0 %v5239
    %7092 = vmatpush.msra.mxu0 %v5232
    %7093 = vmatpush.msra.mxu0 %v5225
    %7094 = vmatpush.msra.mxu0 %v5218
    %7095 = vmatpush.msra.mxu0 %v5211
    %7096 = vmatpush.msra.mxu0 %v5204
    %7097 = vmatpush.msra.mxu0 %v5197
    %7098 = vmatpush.msra.mxu0 %v5190
    %7099 = vmatmul.f32.gmra.mxu0 %v4611
    %v7100 = vpop.f32.mrf.mxu0
    %v7101 = vadd.f32 %v6088, %v7100
    %7102 = vmatmul.f32.gmra.mxu0 %v4619
    %v7103 = vpop.f32.mrf.mxu0
    %v7104 = vadd.f32 %v6088, %v7103
    %7105 = vmatmul.f32.gmra.mxu0 %v4627
    %v7106 = vpop.f32.mrf.mxu0
    %v7107 = vadd.f32 %v6088, %v7106
    %7108 = vmatmul.f32.gmra.mxu0 %v4635
    %v7109 = vpop.f32.mrf.mxu0
    %v7110 = vadd.f32 %v6088, %v7109
    %7111 = vmatmul.f32.gmra.mxu0 %v4643
    %v7112 = vpop.f32.mrf.mxu0
    %v7113 = vadd.f32 %v6088, %v7112
    %7114 = vmatmul.f32.gmra.mxu0 %v4651
    %v7115 = vpop.f32.mrf.mxu0
    %v7116 = vadd.f32 %v6088, %v7115
    %7117 = vmatmul.f32.gmra.mxu0 %v4659
    %v7118 = vpop.f32.mrf.mxu0
    %v7119 = vadd.f32 %v6088, %v7118
    %7120 = vmatmul.f32.gmra.mxu0 %v4667
    %v7121 = vpop.f32.mrf.mxu0
    %v7122 = vadd.f32 %v6088, %v7121
    %7123 = vdwg.mxu0
    %7124 = vmatpush.msra.mxu0 %v5407
    %7125 = vmatpush.msra.mxu0 %v5400
    %7126 = vmatpush.msra.mxu0 %v5393
    %7127 = vmatpush.msra.mxu0 %v5386
    %7128 = vmatpush.msra.mxu0 %v5379
    %7129 = vmatpush.msra.mxu0 %v5372
    %7130 = vmatpush.msra.mxu0 %v5365
    %7131 = vmatpush.msra.mxu0 %v5358
    %7132 = vmatpush.msra.mxu0 %v5351
    %7133 = vmatpush.msra.mxu0 %v5344
    %7134 = vmatpush.msra.mxu0 %v5337
    %7135 = vmatpush.msra.mxu0 %v5330
    %7136 = vmatpush.msra.mxu0 %v5323
    %7137 = vmatpush.msra.mxu0 %v5316
    %7138 = vmatpush.msra.mxu0 %v5309
    %7139 = vmatpush.msra.mxu0 %v5302
    %7140 = vmatmul.f32.gmra.mxu0 %v4612
    %v7141 = vpop.f32.mrf.mxu0
    %v7142 = vadd.f32 %v7101, %v7141
    %7143 = vmatmul.f32.gmra.mxu0 %v4620
    %v7144 = vpop.f32.mrf.mxu0
    %v7145 = vadd.f32 %v7104, %v7144
    %7146 = vmatmul.f32.gmra.mxu0 %v4628
    %v7147 = vpop.f32.mrf.mxu0
    %v7148 = vadd.f32 %v7107, %v7147
    %7149 = vmatmul.f32.gmra.mxu0 %v4636
    %v7150 = vpop.f32.mrf.mxu0
    %v7151 = vadd.f32 %v7110, %v7150
    %7152 = vmatmul.f32.gmra.mxu0 %v4644
    %v7153 = vpop.f32.mrf.mxu0
    %v7154 = vadd.f32 %v7113, %v7153
    %7155 = vmatmul.f32.gmra.mxu0 %v4652
    %v7156 = vpop.f32.mrf.mxu0
    %v7157 = vadd.f32 %v7116, %v7156
    %7158 = vmatmul.f32.gmra.mxu0 %v4660
    %v7159 = vpop.f32.mrf.mxu0
    %v7160 = vadd.f32 %v7119, %v7159
    %7161 = vmatmul.f32.gmra.mxu0 %v4668
    %v7162 = vpop.f32.mrf.mxu0
    %v7163 = vadd.f32 %v7122, %v7162
    %7164 = vdwg.mxu0
    %7165 = vmatpush.msra.mxu0 %v5519
    %7166 = vmatpush.msra.mxu0 %v5512
    %7167 = vmatpush.msra.mxu0 %v5505
    %7168 = vmatpush.msra.mxu0 %v5498
    %7169 = vmatpush.msra.mxu0 %v5491
    %7170 = vmatpush.msra.mxu0 %v5484
    %7171 = vmatpush.msra.mxu0 %v5477
    %7172 = vmatpush.msra.mxu0 %v5470
    %7173 = vmatpush.msra.mxu0 %v5463
    %7174 = vmatpush.msra.mxu0 %v5456
    %7175 = vmatpush.msra.mxu0 %v5449
    %7176 = vmatpush.msra.mxu0 %v5442
    %7177 = vmatpush.msra.mxu0 %v5435
    %7178 = vmatpush.msra.mxu0 %v5428
    %7179 = vmatpush.msra.mxu0 %v5421
    %7180 = vmatpush.msra.mxu0 %v5414
    %7181 = vmatmul.f32.gmra.mxu0 %v4613
    %v7182 = vpop.f32.mrf.mxu0
    %v7183 = vadd.f32 %v7142, %v7182
    %7184 = vmatmul.f32.gmra.mxu0 %v4621
    %v7185 = vpop.f32.mrf.mxu0
    %v7186 = vadd.f32 %v7145, %v7185
    %7187 = vmatmul.f32.gmra.mxu0 %v4629
    %v7188 = vpop.f32.mrf.mxu0
    %v7189 = vadd.f32 %v7148, %v7188
    %7190 = vmatmul.f32.gmra.mxu0 %v4637
    %v7191 = vpop.f32.mrf.mxu0
    %v7192 = vadd.f32 %v7151, %v7191
    %7193 = vmatmul.f32.gmra.mxu0 %v4645
    %v7194 = vpop.f32.mrf.mxu0
    %v7195 = vadd.f32 %v7154, %v7194
    %7196 = vmatmul.f32.gmra.mxu0 %v4653
    %v7197 = vpop.f32.mrf.mxu0
    %v7198 = vadd.f32 %v7157, %v7197
    %7199 = vmatmul.f32.gmra.mxu0 %v4661
    %v7200 = vpop.f32.mrf.mxu0
    %v7201 = vadd.f32 %v7160, %v7200
    %7202 = vmatmul.f32.gmra.mxu0 %v4669
    %v7203 = vpop.f32.mrf.mxu0
    %v7204 = vadd.f32 %v7163, %v7203
    %7205 = vdwg.mxu0
    %7206 = vmatpush.msra.mxu0 %v5631
    %7207 = vmatpush.msra.mxu0 %v5624
    %7208 = vmatpush.msra.mxu0 %v5617
    %7209 = vmatpush.msra.mxu0 %v5610
    %7210 = vmatpush.msra.mxu0 %v5603
    %7211 = vmatpush.msra.mxu0 %v5596
    %7212 = vmatpush.msra.mxu0 %v5589
    %7213 = vmatpush.msra.mxu0 %v5582
    %7214 = vmatpush.msra.mxu0 %v5575
    %7215 = vmatpush.msra.mxu0 %v5568
    %7216 = vmatpush.msra.mxu0 %v5561
    %7217 = vmatpush.msra.mxu0 %v5554
    %7218 = vmatpush.msra.mxu0 %v5547
    %7219 = vmatpush.msra.mxu0 %v5540
    %7220 = vmatpush.msra.mxu0 %v5533
    %7221 = vmatpush.msra.mxu0 %v5526
    %7222 = vmatmul.f32.gmra.mxu0 %v4614
    %v7223 = vpop.f32.mrf.mxu0
    %v7224 = vadd.f32 %v7183, %v7223
    %7225 = vmatmul.f32.gmra.mxu0 %v4622
    %v7226 = vpop.f32.mrf.mxu0
    %v7227 = vadd.f32 %v7186, %v7226
    %7228 = vmatmul.f32.gmra.mxu0 %v4630
    %v7229 = vpop.f32.mrf.mxu0
    %v7230 = vadd.f32 %v7189, %v7229
    %7231 = vmatmul.f32.gmra.mxu0 %v4638
    %v7232 = vpop.f32.mrf.mxu0
    %v7233 = vadd.f32 %v7192, %v7232
    %7234 = vmatmul.f32.gmra.mxu0 %v4646
    %v7235 = vpop.f32.mrf.mxu0
    %v7236 = vadd.f32 %v7195, %v7235
    %7237 = vmatmul.f32.gmra.mxu0 %v4654
    %v7238 = vpop.f32.mrf.mxu0
    %v7239 = vadd.f32 %v7198, %v7238
    %7240 = vmatmul.f32.gmra.mxu0 %v4662
    %v7241 = vpop.f32.mrf.mxu0
    %v7242 = vadd.f32 %v7201, %v7241
    %7243 = vmatmul.f32.gmra.mxu0 %v4670
    %v7244 = vpop.f32.mrf.mxu0
    %v7245 = vadd.f32 %v7204, %v7244
    %7246 = vdwg.mxu0
    %7247 = vmatpush.msra.mxu0 %v5743
    %7248 = vmatpush.msra.mxu0 %v5736
    %7249 = vmatpush.msra.mxu0 %v5729
    %7250 = vmatpush.msra.mxu0 %v5722
    %7251 = vmatpush.msra.mxu0 %v5715
    %7252 = vmatpush.msra.mxu0 %v5708
    %7253 = vmatpush.msra.mxu0 %v5701
    %7254 = vmatpush.msra.mxu0 %v5694
    %7255 = vmatpush.msra.mxu0 %v5687
    %7256 = vmatpush.msra.mxu0 %v5680
    %7257 = vmatpush.msra.mxu0 %v5673
    %7258 = vmatpush.msra.mxu0 %v5666
    %7259 = vmatpush.msra.mxu0 %v5659
    %7260 = vmatpush.msra.mxu0 %v5652
    %7261 = vmatpush.msra.mxu0 %v5645
    %7262 = vmatpush.msra.mxu0 %v5638
    %7263 = vmatmul.f32.gmra.mxu0 %v4615
    %v7264 = vpop.f32.mrf.mxu0
    %v7265 = vadd.f32 %v7224, %v7264
    %7266 = vmatmul.f32.gmra.mxu0 %v4623
    %v7267 = vpop.f32.mrf.mxu0
    %v7268 = vadd.f32 %v7227, %v7267
    %7269 = vmatmul.f32.gmra.mxu0 %v4631
    %v7270 = vpop.f32.mrf.mxu0
    %v7271 = vadd.f32 %v7230, %v7270
    %7272 = vmatmul.f32.gmra.mxu0 %v4639
    %v7273 = vpop.f32.mrf.mxu0
    %v7274 = vadd.f32 %v7233, %v7273
    %7275 = vmatmul.f32.gmra.mxu0 %v4647
    %v7276 = vpop.f32.mrf.mxu0
    %v7277 = vadd.f32 %v7236, %v7276
    %7278 = vmatmul.f32.gmra.mxu0 %v4655
    %v7279 = vpop.f32.mrf.mxu0
    %v7280 = vadd.f32 %v7239, %v7279
    %7281 = vmatmul.f32.gmra.mxu0 %v4663
    %v7282 = vpop.f32.mrf.mxu0
    %v7283 = vadd.f32 %v7242, %v7282
    %7284 = vmatmul.f32.gmra.mxu0 %v4671
    %v7285 = vpop.f32.mrf.mxu0
    %v7286 = vadd.f32 %v7245, %v7285
    %7287 = vdwg.mxu0
    %7288 = vmatpush.msra.mxu0 %v5855
    %7289 = vmatpush.msra.mxu0 %v5848
    %7290 = vmatpush.msra.mxu0 %v5841
    %7291 = vmatpush.msra.mxu0 %v5834
    %7292 = vmatpush.msra.mxu0 %v5827
    %7293 = vmatpush.msra.mxu0 %v5820
    %7294 = vmatpush.msra.mxu0 %v5813
    %7295 = vmatpush.msra.mxu0 %v5806
    %7296 = vmatpush.msra.mxu0 %v5799
    %7297 = vmatpush.msra.mxu0 %v5792
    %7298 = vmatpush.msra.mxu0 %v5785
    %7299 = vmatpush.msra.mxu0 %v5778
    %7300 = vmatpush.msra.mxu0 %v5771
    %7301 = vmatpush.msra.mxu0 %v5764
    %7302 = vmatpush.msra.mxu0 %v5757
    %7303 = vmatpush.msra.mxu0 %v5750
    %7304 = vmatmul.f32.gmra.mxu0 %v4616
    %v7305 = vpop.f32.mrf.mxu0
    %v7306 = vadd.f32 %v7265, %v7305
    %7307 = vmatmul.f32.gmra.mxu0 %v4624
    %v7308 = vpop.f32.mrf.mxu0
    %v7309 = vadd.f32 %v7268, %v7308
    %7310 = vmatmul.f32.gmra.mxu0 %v4632
    %v7311 = vpop.f32.mrf.mxu0
    %v7312 = vadd.f32 %v7271, %v7311
    %7313 = vmatmul.f32.gmra.mxu0 %v4640
    %v7314 = vpop.f32.mrf.mxu0
    %v7315 = vadd.f32 %v7274, %v7314
    %7316 = vmatmul.f32.gmra.mxu0 %v4648
    %v7317 = vpop.f32.mrf.mxu0
    %v7318 = vadd.f32 %v7277, %v7317
    %7319 = vmatmul.f32.gmra.mxu0 %v4656
    %v7320 = vpop.f32.mrf.mxu0
    %v7321 = vadd.f32 %v7280, %v7320
    %7322 = vmatmul.f32.gmra.mxu0 %v4664
    %v7323 = vpop.f32.mrf.mxu0
    %v7324 = vadd.f32 %v7283, %v7323
    %7325 = vmatmul.f32.gmra.mxu0 %v4672
    %v7326 = vpop.f32.mrf.mxu0
    %v7327 = vadd.f32 %v7286, %v7326
    %7328 = vdwg.mxu0
    %7329 = vmatpush.msra.mxu0 %v5967
    %7330 = vmatpush.msra.mxu0 %v5960
    %7331 = vmatpush.msra.mxu0 %v5953
    %7332 = vmatpush.msra.mxu0 %v5946
    %7333 = vmatpush.msra.mxu0 %v5939
    %7334 = vmatpush.msra.mxu0 %v5932
    %7335 = vmatpush.msra.mxu0 %v5925
    %7336 = vmatpush.msra.mxu0 %v5918
    %7337 = vmatpush.msra.mxu0 %v5911
    %7338 = vmatpush.msra.mxu0 %v5904
    %7339 = vmatpush.msra.mxu0 %v5897
    %7340 = vmatpush.msra.mxu0 %v5890
    %7341 = vmatpush.msra.mxu0 %v5883
    %7342 = vmatpush.msra.mxu0 %v5876
    %7343 = vmatpush.msra.mxu0 %v5869
    %7344 = vmatpush.msra.mxu0 %v5862
    %7345 = vmatmul.f32.gmra.mxu0 %v4617
    %v7346 = vpop.f32.mrf.mxu0
    %v7347 = vadd.f32 %v7306, %v7346
    %7348 = vmatmul.f32.gmra.mxu0 %v4625
    %v7349 = vpop.f32.mrf.mxu0
    %v7350 = vadd.f32 %v7309, %v7349
    %7351 = vmatmul.f32.gmra.mxu0 %v4633
    %v7352 = vpop.f32.mrf.mxu0
    %v7353 = vadd.f32 %v7312, %v7352
    %7354 = vmatmul.f32.gmra.mxu0 %v4641
    %v7355 = vpop.f32.mrf.mxu0
    %v7356 = vadd.f32 %v7315, %v7355
    %7357 = vmatmul.f32.gmra.mxu0 %v4649
    %v7358 = vpop.f32.mrf.mxu0
    %v7359 = vadd.f32 %v7318, %v7358
    %7360 = vmatmul.f32.gmra.mxu0 %v4657
    %v7361 = vpop.f32.mrf.mxu0
    %v7362 = vadd.f32 %v7321, %v7361
    %7363 = vmatmul.f32.gmra.mxu0 %v4665
    %v7364 = vpop.f32.mrf.mxu0
    %v7365 = vadd.f32 %v7324, %v7364
    %7366 = vmatmul.f32.gmra.mxu0 %v4673
    %v7367 = vpop.f32.mrf.mxu0
    %v7368 = vadd.f32 %v7327, %v7367
    %7369 = vdwg.mxu0
    %7370 = vmatpush.msra.mxu0 %v6079
    %7371 = vmatpush.msra.mxu0 %v6072
    %7372 = vmatpush.msra.mxu0 %v6065
    %7373 = vmatpush.msra.mxu0 %v6058
    %7374 = vmatpush.msra.mxu0 %v6051
    %7375 = vmatpush.msra.mxu0 %v6044
    %7376 = vmatpush.msra.mxu0 %v6037
    %7377 = vmatpush.msra.mxu0 %v6030
    %7378 = vmatpush.msra.mxu0 %v6023
    %7379 = vmatpush.msra.mxu0 %v6016
    %7380 = vmatpush.msra.mxu0 %v6009
    %7381 = vmatpush.msra.mxu0 %v6002
    %7382 = vmatpush.msra.mxu0 %v5995
    %7383 = vmatpush.msra.mxu0 %v5988
    %7384 = vmatpush.msra.mxu0 %v5981
    %7385 = vmatpush.msra.mxu0 %v5974
    %7386 = vmatmul.f32.gmra.mxu0 %v4618
    %v7387 = vpop.f32.mrf.mxu0
    %v7388 = vadd.f32 %v7347, %v7387
    %7389 = vmatmul.f32.gmra.mxu0 %v4626
    %v7390 = vpop.f32.mrf.mxu0
    %v7391 = vadd.f32 %v7350, %v7390
    %7392 = vmatmul.f32.gmra.mxu0 %v4634
    %v7393 = vpop.f32.mrf.mxu0
    %v7394 = vadd.f32 %v7353, %v7393
    %7395 = vmatmul.f32.gmra.mxu0 %v4642
    %v7396 = vpop.f32.mrf.mxu0
    %v7397 = vadd.f32 %v7356, %v7396
    %7398 = vmatmul.f32.gmra.mxu0 %v4650
    %v7399 = vpop.f32.mrf.mxu0
    %v7400 = vadd.f32 %v7359, %v7399
    %7401 = vmatmul.f32.gmra.mxu0 %v4658
    %v7402 = vpop.f32.mrf.mxu0
    %v7403 = vadd.f32 %v7362, %v7402
    %7404 = vmatmul.f32.gmra.mxu0 %v4666
    %v7405 = vpop.f32.mrf.mxu0
    %v7406 = vadd.f32 %v7365, %v7405
    %7407 = vmatmul.f32.gmra.mxu0 %v4674
    %v7408 = vpop.f32.mrf.mxu0
    %v7409 = vadd.f32 %v7368, %v7408
    %7410 = vdwg.mxu0
    %7411 = vmatpush.msra.mxu0 %v5296
    %7412 = vmatpush.msra.mxu0 %v5289
    %7413 = vmatpush.msra.mxu0 %v5282
    %7414 = vmatpush.msra.mxu0 %v5275
    %7415 = vmatpush.msra.mxu0 %v5268
    %7416 = vmatpush.msra.mxu0 %v5261
    %7417 = vmatpush.msra.mxu0 %v5254
    %7418 = vmatpush.msra.mxu0 %v5247
    %7419 = vmatpush.msra.mxu0 %v5240
    %7420 = vmatpush.msra.mxu0 %v5233
    %7421 = vmatpush.msra.mxu0 %v5226
    %7422 = vmatpush.msra.mxu0 %v5219
    %7423 = vmatpush.msra.mxu0 %v5212
    %7424 = vmatpush.msra.mxu0 %v5205
    %7425 = vmatpush.msra.mxu0 %v5198
    %7426 = vmatpush.msra.mxu0 %v5191
    %7427 = vmatmul.f32.gmra.mxu0 %v4611
    %v7428 = vpop.f32.mrf.mxu0
    %v7429 = vadd.f32 %v6089, %v7428
    %7430 = vmatmul.f32.gmra.mxu0 %v4619
    %v7431 = vpop.f32.mrf.mxu0
    %v7432 = vadd.f32 %v6089, %v7431
    %7433 = vmatmul.f32.gmra.mxu0 %v4627
    %v7434 = vpop.f32.mrf.mxu0
    %v7435 = vadd.f32 %v6089, %v7434
    %7436 = vmatmul.f32.gmra.mxu0 %v4635
    %v7437 = vpop.f32.mrf.mxu0
    %v7438 = vadd.f32 %v6089, %v7437
    %7439 = vmatmul.f32.gmra.mxu0 %v4643
    %v7440 = vpop.f32.mrf.mxu0
    %v7441 = vadd.f32 %v6089, %v7440
    %7442 = vmatmul.f32.gmra.mxu0 %v4651
    %v7443 = vpop.f32.mrf.mxu0
    %v7444 = vadd.f32 %v6089, %v7443
    %7445 = vmatmul.f32.gmra.mxu0 %v4659
    %v7446 = vpop.f32.mrf.mxu0
    %v7447 = vadd.f32 %v6089, %v7446
    %7448 = vmatmul.f32.gmra.mxu0 %v4667
    %v7449 = vpop.f32.mrf.mxu0
    %v7450 = vadd.f32 %v6089, %v7449
    %7451 = vdwg.mxu0
    %7452 = vmatpush.msra.mxu0 %v5408
    %7453 = vmatpush.msra.mxu0 %v5401
    %7454 = vmatpush.msra.mxu0 %v5394
    %7455 = vmatpush.msra.mxu0 %v5387
    %7456 = vmatpush.msra.mxu0 %v5380
    %7457 = vmatpush.msra.mxu0 %v5373
    %7458 = vmatpush.msra.mxu0 %v5366
    %7459 = vmatpush.msra.mxu0 %v5359
    %7460 = vmatpush.msra.mxu0 %v5352
    %7461 = vmatpush.msra.mxu0 %v5345
    %7462 = vmatpush.msra.mxu0 %v5338
    %7463 = vmatpush.msra.mxu0 %v5331
    %7464 = vmatpush.msra.mxu0 %v5324
    %7465 = vmatpush.msra.mxu0 %v5317
    %7466 = vmatpush.msra.mxu0 %v5310
    %7467 = vmatpush.msra.mxu0 %v5303
    %7468 = vmatmul.f32.gmra.mxu0 %v4612
    %v7469 = vpop.f32.mrf.mxu0
    %v7470 = vadd.f32 %v7429, %v7469
    %7471 = vmatmul.f32.gmra.mxu0 %v4620
    %v7472 = vpop.f32.mrf.mxu0
    %v7473 = vadd.f32 %v7432, %v7472
    %7474 = vmatmul.f32.gmra.mxu0 %v4628
    %v7475 = vpop.f32.mrf.mxu0
    %v7476 = vadd.f32 %v7435, %v7475
    %7477 = vmatmul.f32.gmra.mxu0 %v4636
    %v7478 = vpop.f32.mrf.mxu0
    %v7479 = vadd.f32 %v7438, %v7478
    %7480 = vmatmul.f32.gmra.mxu0 %v4644
    %v7481 = vpop.f32.mrf.mxu0
    %v7482 = vadd.f32 %v7441, %v7481
    %7483 = vmatmul.f32.gmra.mxu0 %v4652
    %v7484 = vpop.f32.mrf.mxu0
    %v7485 = vadd.f32 %v7444, %v7484
    %7486 = vmatmul.f32.gmra.mxu0 %v4660
    %v7487 = vpop.f32.mrf.mxu0
    %v7488 = vadd.f32 %v7447, %v7487
    %7489 = vmatmul.f32.gmra.mxu0 %v4668
    %v7490 = vpop.f32.mrf.mxu0
    %v7491 = vadd.f32 %v7450, %v7490
    %7492 = vdwg.mxu0
    %7493 = vmatpush.msra.mxu0 %v5520
    %7494 = vmatpush.msra.mxu0 %v5513
    %7495 = vmatpush.msra.mxu0 %v5506
    %7496 = vmatpush.msra.mxu0 %v5499
    %7497 = vmatpush.msra.mxu0 %v5492
    %7498 = vmatpush.msra.mxu0 %v5485
    %7499 = vmatpush.msra.mxu0 %v5478
    %7500 = vmatpush.msra.mxu0 %v5471
    %7501 = vmatpush.msra.mxu0 %v5464
    %7502 = vmatpush.msra.mxu0 %v5457
    %7503 = vmatpush.msra.mxu0 %v5450
    %7504 = vmatpush.msra.mxu0 %v5443
    %7505 = vmatpush.msra.mxu0 %v5436
    %7506 = vmatpush.msra.mxu0 %v5429
    %7507 = vmatpush.msra.mxu0 %v5422
    %7508 = vmatpush.msra.mxu0 %v5415
    %7509 = vmatmul.f32.gmra.mxu0 %v4613
    %v7510 = vpop.f32.mrf.mxu0
    %v7511 = vadd.f32 %v7470, %v7510
    %7512 = vmatmul.f32.gmra.mxu0 %v4621
    %v7513 = vpop.f32.mrf.mxu0
    %v7514 = vadd.f32 %v7473, %v7513
    %7515 = vmatmul.f32.gmra.mxu0 %v4629
    %v7516 = vpop.f32.mrf.mxu0
    %v7517 = vadd.f32 %v7476, %v7516
    %7518 = vmatmul.f32.gmra.mxu0 %v4637
    %v7519 = vpop.f32.mrf.mxu0
    %v7520 = vadd.f32 %v7479, %v7519
    %7521 = vmatmul.f32.gmra.mxu0 %v4645
    %v7522 = vpop.f32.mrf.mxu0
    %v7523 = vadd.f32 %v7482, %v7522
    %7524 = vmatmul.f32.gmra.mxu0 %v4653
    %v7525 = vpop.f32.mrf.mxu0
    %v7526 = vadd.f32 %v7485, %v7525
    %7527 = vmatmul.f32.gmra.mxu0 %v4661
    %v7528 = vpop.f32.mrf.mxu0
    %v7529 = vadd.f32 %v7488, %v7528
    %7530 = vmatmul.f32.gmra.mxu0 %v4669
    %v7531 = vpop.f32.mrf.mxu0
    %v7532 = vadd.f32 %v7491, %v7531
    %7533 = vdwg.mxu0
    %7534 = vmatpush.msra.mxu0 %v5632
    %7535 = vmatpush.msra.mxu0 %v5625
    %7536 = vmatpush.msra.mxu0 %v5618
    %7537 = vmatpush.msra.mxu0 %v5611
    %7538 = vmatpush.msra.mxu0 %v5604
    %7539 = vmatpush.msra.mxu0 %v5597
    %7540 = vmatpush.msra.mxu0 %v5590
    %7541 = vmatpush.msra.mxu0 %v5583
    %7542 = vmatpush.msra.mxu0 %v5576
    %7543 = vmatpush.msra.mxu0 %v5569
    %7544 = vmatpush.msra.mxu0 %v5562
    %7545 = vmatpush.msra.mxu0 %v5555
    %7546 = vmatpush.msra.mxu0 %v5548
    %7547 = vmatpush.msra.mxu0 %v5541
    %7548 = vmatpush.msra.mxu0 %v5534
    %7549 = vmatpush.msra.mxu0 %v5527
    %7550 = vmatmul.f32.gmra.mxu0 %v4614
    %v7551 = vpop.f32.mrf.mxu0
    %v7552 = vadd.f32 %v7511, %v7551
    %7553 = vmatmul.f32.gmra.mxu0 %v4622
    %v7554 = vpop.f32.mrf.mxu0
    %v7555 = vadd.f32 %v7514, %v7554
    %7556 = vmatmul.f32.gmra.mxu0 %v4630
    %v7557 = vpop.f32.mrf.mxu0
    %v7558 = vadd.f32 %v7517, %v7557
    %7559 = vmatmul.f32.gmra.mxu0 %v4638
    %v7560 = vpop.f32.mrf.mxu0
    %v7561 = vadd.f32 %v7520, %v7560
    %7562 = vmatmul.f32.gmra.mxu0 %v4646
    %v7563 = vpop.f32.mrf.mxu0
    %v7564 = vadd.f32 %v7523, %v7563
    %7565 = vmatmul.f32.gmra.mxu0 %v4654
    %v7566 = vpop.f32.mrf.mxu0
    %v7567 = vadd.f32 %v7526, %v7566
    %7568 = vmatmul.f32.gmra.mxu0 %v4662
    %v7569 = vpop.f32.mrf.mxu0
    %v7570 = vadd.f32 %v7529, %v7569
    %7571 = vmatmul.f32.gmra.mxu0 %v4670
    %v7572 = vpop.f32.mrf.mxu0
    %v7573 = vadd.f32 %v7532, %v7572
    %7574 = vdwg.mxu0
    %7575 = vmatpush.msra.mxu0 %v5744
    %7576 = vmatpush.msra.mxu0 %v5737
    %7577 = vmatpush.msra.mxu0 %v5730
    %7578 = vmatpush.msra.mxu0 %v5723
    %7579 = vmatpush.msra.mxu0 %v5716
    %7580 = vmatpush.msra.mxu0 %v5709
    %7581 = vmatpush.msra.mxu0 %v5702
    %7582 = vmatpush.msra.mxu0 %v5695
    %7583 = vmatpush.msra.mxu0 %v5688
    %7584 = vmatpush.msra.mxu0 %v5681
    %7585 = vmatpush.msra.mxu0 %v5674
    %7586 = vmatpush.msra.mxu0 %v5667
    %7587 = vmatpush.msra.mxu0 %v5660
    %7588 = vmatpush.msra.mxu0 %v5653
    %7589 = vmatpush.msra.mxu0 %v5646
    %7590 = vmatpush.msra.mxu0 %v5639
    %7591 = vmatmul.f32.gmra.mxu0 %v4615
    %v7592 = vpop.f32.mrf.mxu0
    %v7593 = vadd.f32 %v7552, %v7592
    %7594 = vmatmul.f32.gmra.mxu0 %v4623
    %v7595 = vpop.f32.mrf.mxu0
    %v7596 = vadd.f32 %v7555, %v7595
    %7597 = vmatmul.f32.gmra.mxu0 %v4631
    %v7598 = vpop.f32.mrf.mxu0
    %v7599 = vadd.f32 %v7558, %v7598
    %7600 = vmatmul.f32.gmra.mxu0 %v4639
    %v7601 = vpop.f32.mrf.mxu0
    %v7602 = vadd.f32 %v7561, %v7601
    %7603 = vmatmul.f32.gmra.mxu0 %v4647
    %v7604 = vpop.f32.mrf.mxu0
    %v7605 = vadd.f32 %v7564, %v7604
    %7606 = vmatmul.f32.gmra.mxu0 %v4655
    %v7607 = vpop.f32.mrf.mxu0
    %v7608 = vadd.f32 %v7567, %v7607
    %7609 = vmatmul.f32.gmra.mxu0 %v4663
    %v7610 = vpop.f32.mrf.mxu0
    %v7611 = vadd.f32 %v7570, %v7610
    %7612 = vmatmul.f32.gmra.mxu0 %v4671
    %v7613 = vpop.f32.mrf.mxu0
    %v7614 = vadd.f32 %v7573, %v7613
    %7615 = vdwg.mxu0
    %7616 = vmatpush.msra.mxu0 %v5856
    %7617 = vmatpush.msra.mxu0 %v5849
    %7618 = vmatpush.msra.mxu0 %v5842
    %7619 = vmatpush.msra.mxu0 %v5835
    %7620 = vmatpush.msra.mxu0 %v5828
    %7621 = vmatpush.msra.mxu0 %v5821
    %7622 = vmatpush.msra.mxu0 %v5814
    %7623 = vmatpush.msra.mxu0 %v5807
    %7624 = vmatpush.msra.mxu0 %v5800
    %7625 = vmatpush.msra.mxu0 %v5793
    %7626 = vmatpush.msra.mxu0 %v5786
    %7627 = vmatpush.msra.mxu0 %v5779
    %7628 = vmatpush.msra.mxu0 %v5772
    %7629 = vmatpush.msra.mxu0 %v5765
    %7630 = vmatpush.msra.mxu0 %v5758
    %7631 = vmatpush.msra.mxu0 %v5751
    %7632 = vmatmul.f32.gmra.mxu0 %v4616
    %v7633 = vpop.f32.mrf.mxu0
    %v7634 = vadd.f32 %v7593, %v7633
    %7635 = vmatmul.f32.gmra.mxu0 %v4624
    %v7636 = vpop.f32.mrf.mxu0
    %v7637 = vadd.f32 %v7596, %v7636
    %7638 = vmatmul.f32.gmra.mxu0 %v4632
    %v7639 = vpop.f32.mrf.mxu0
    %v7640 = vadd.f32 %v7599, %v7639
    %7641 = vmatmul.f32.gmra.mxu0 %v4640
    %v7642 = vpop.f32.mrf.mxu0
    %v7643 = vadd.f32 %v7602, %v7642
    %7644 = vmatmul.f32.gmra.mxu0 %v4648
    %v7645 = vpop.f32.mrf.mxu0
    %v7646 = vadd.f32 %v7605, %v7645
    %7647 = vmatmul.f32.gmra.mxu0 %v4656
    %v7648 = vpop.f32.mrf.mxu0
    %v7649 = vadd.f32 %v7608, %v7648
    %7650 = vmatmul.f32.gmra.mxu0 %v4664
    %v7651 = vpop.f32.mrf.mxu0
    %v7652 = vadd.f32 %v7611, %v7651
    %7653 = vmatmul.f32.gmra.mxu0 %v4672
    %v7654 = vpop.f32.mrf.mxu0
    %v7655 = vadd.f32 %v7614, %v7654
    %7656 = vdwg.mxu0
    %7657 = vmatpush.msra.mxu0 %v5968
    %7658 = vmatpush.msra.mxu0 %v5961
    %7659 = vmatpush.msra.mxu0 %v5954
    %7660 = vmatpush.msra.mxu0 %v5947
    %7661 = vmatpush.msra.mxu0 %v5940
    %7662 = vmatpush.msra.mxu0 %v5933
    %7663 = vmatpush.msra.mxu0 %v5926
    %7664 = vmatpush.msra.mxu0 %v5919
    %7665 = vmatpush.msra.mxu0 %v5912
    %7666 = vmatpush.msra.mxu0 %v5905
    %7667 = vmatpush.msra.mxu0 %v5898
    %7668 = vmatpush.msra.mxu0 %v5891
    %7669 = vmatpush.msra.mxu0 %v5884
    %7670 = vmatpush.msra.mxu0 %v5877
    %7671 = vmatpush.msra.mxu0 %v5870
    %7672 = vmatpush.msra.mxu0 %v5863
    %7673 = vmatmul.f32.gmra.mxu0 %v4617
    %v7674 = vpop.f32.mrf.mxu0
    %v7675 = vadd.f32 %v7634, %v7674
    %7676 = vmatmul.f32.gmra.mxu0 %v4625
    %v7677 = vpop.f32.mrf.mxu0
    %v7678 = vadd.f32 %v7637, %v7677
    %7679 = vmatmul.f32.gmra.mxu0 %v4633
    %v7680 = vpop.f32.mrf.mxu0
    %v7681 = vadd.f32 %v7640, %v7680
    %7682 = vmatmul.f32.gmra.mxu0 %v4641
    %v7683 = vpop.f32.mrf.mxu0
    %v7684 = vadd.f32 %v7643, %v7683
    %7685 = vmatmul.f32.gmra.mxu0 %v4649
    %v7686 = vpop.f32.mrf.mxu0
    %v7687 = vadd.f32 %v7646, %v7686
    %7688 = vmatmul.f32.gmra.mxu0 %v4657
    %v7689 = vpop.f32.mrf.mxu0
    %v7690 = vadd.f32 %v7649, %v7689
    %7691 = vmatmul.f32.gmra.mxu0 %v4665
    %v7692 = vpop.f32.mrf.mxu0
    %v7693 = vadd.f32 %v7652, %v7692
    %7694 = vmatmul.f32.gmra.mxu0 %v4673
    %v7695 = vpop.f32.mrf.mxu0
    %v7696 = vadd.f32 %v7655, %v7695
    %7697 = vdwg.mxu0
    %7698 = vmatpush.msra.mxu0 %v6080
    %7699 = vmatpush.msra.mxu0 %v6073
    %7700 = vmatpush.msra.mxu0 %v6066
    %7701 = vmatpush.msra.mxu0 %v6059
    %7702 = vmatpush.msra.mxu0 %v6052
    %7703 = vmatpush.msra.mxu0 %v6045
    %7704 = vmatpush.msra.mxu0 %v6038
    %7705 = vmatpush.msra.mxu0 %v6031
    %7706 = vmatpush.msra.mxu0 %v6024
    %7707 = vmatpush.msra.mxu0 %v6017
    %7708 = vmatpush.msra.mxu0 %v6010
    %7709 = vmatpush.msra.mxu0 %v6003
    %7710 = vmatpush.msra.mxu0 %v5996
    %7711 = vmatpush.msra.mxu0 %v5989
    %7712 = vmatpush.msra.mxu0 %v5982
    %7713 = vmatpush.msra.mxu0 %v5975
    %7714 = vmatmul.f32.gmra.mxu0 %v4618
    %v7715 = vpop.f32.mrf.mxu0
    %v7716 = vadd.f32 %v7675, %v7715
    %7717 = vmatmul.f32.gmra.mxu0 %v4626
    %v7718 = vpop.f32.mrf.mxu0
    %v7719 = vadd.f32 %v7678, %v7718
    %7720 = vmatmul.f32.gmra.mxu0 %v4634
    %v7721 = vpop.f32.mrf.mxu0
    %v7722 = vadd.f32 %v7681, %v7721
    %7723 = vmatmul.f32.gmra.mxu0 %v4642
    %v7724 = vpop.f32.mrf.mxu0
    %v7725 = vadd.f32 %v7684, %v7724
    %7726 = vmatmul.f32.gmra.mxu0 %v4650
    %v7727 = vpop.f32.mrf.mxu0
    %v7728 = vadd.f32 %v7687, %v7727
    %7729 = vmatmul.f32.gmra.mxu0 %v4658
    %v7730 = vpop.f32.mrf.mxu0
    %v7731 = vadd.f32 %v7690, %v7730
    %7732 = vmatmul.f32.gmra.mxu0 %v4666
    %v7733 = vpop.f32.mrf.mxu0
    %v7734 = vadd.f32 %v7693, %v7733
    %7735 = vmatmul.f32.gmra.mxu0 %v4674
    %v7736 = vpop.f32.mrf.mxu0
    %v7737 = vadd.f32 %v7696, %v7736
    %7738 = vdwg.mxu0
    %7739 = vmatpush.msra.mxu0 %v5297
    %7740 = vmatpush.msra.mxu0 %v5290
    %7741 = vmatpush.msra.mxu0 %v5283
    %7742 = vmatpush.msra.mxu0 %v5276
    %7743 = vmatpush.msra.mxu0 %v5269
    %7744 = vmatpush.msra.mxu0 %v5262
    %7745 = vmatpush.msra.mxu0 %v5255
    %7746 = vmatpush.msra.mxu0 %v5248
    %7747 = vmatpush.msra.mxu0 %v5241
    %7748 = vmatpush.msra.mxu0 %v5234
    %7749 = vmatpush.msra.mxu0 %v5227
    %7750 = vmatpush.msra.mxu0 %v5220
    %7751 = vmatpush.msra.mxu0 %v5213
    %7752 = vmatpush.msra.mxu0 %v5206
    %7753 = vmatpush.msra.mxu0 %v5199
    %7754 = vmatpush.msra.mxu0 %v5192
    %7755 = vmatmul.f32.gmra.mxu0 %v4611
    %v7756 = vpop.f32.mrf.mxu0
    %v7757 = vadd.f32 %v6090, %v7756
    %7758 = vmatmul.f32.gmra.mxu0 %v4619
    %v7759 = vpop.f32.mrf.mxu0
    %v7760 = vadd.f32 %v6090, %v7759
    %7761 = vmatmul.f32.gmra.mxu0 %v4627
    %v7762 = vpop.f32.mrf.mxu0
    %v7763 = vadd.f32 %v6090, %v7762
    %7764 = vmatmul.f32.gmra.mxu0 %v4635
    %v7765 = vpop.f32.mrf.mxu0
    %v7766 = vadd.f32 %v6090, %v7765
    %7767 = vmatmul.f32.gmra.mxu0 %v4643
    %v7768 = vpop.f32.mrf.mxu0
    %v7769 = vadd.f32 %v6090, %v7768
    %7770 = vmatmul.f32.gmra.mxu0 %v4651
    %v7771 = vpop.f32.mrf.mxu0
    %v7772 = vadd.f32 %v6090, %v7771
    %7773 = vmatmul.f32.gmra.mxu0 %v4659
    %v7774 = vpop.f32.mrf.mxu0
    %v7775 = vadd.f32 %v6090, %v7774
    %7776 = vmatmul.f32.gmra.mxu0 %v4667
    %v7777 = vpop.f32.mrf.mxu0
    %v7778 = vadd.f32 %v6090, %v7777
    %7779 = vdwg.mxu0
    %7780 = vmatpush.msra.mxu0 %v5409
    %7781 = vmatpush.msra.mxu0 %v5402
    %7782 = vmatpush.msra.mxu0 %v5395
    %7783 = vmatpush.msra.mxu0 %v5388
    %7784 = vmatpush.msra.mxu0 %v5381
    %7785 = vmatpush.msra.mxu0 %v5374
    %7786 = vmatpush.msra.mxu0 %v5367
    %7787 = vmatpush.msra.mxu0 %v5360
    %7788 = vmatpush.msra.mxu0 %v5353
    %7789 = vmatpush.msra.mxu0 %v5346
    %7790 = vmatpush.msra.mxu0 %v5339
    %7791 = vmatpush.msra.mxu0 %v5332
    %7792 = vmatpush.msra.mxu0 %v5325
    %7793 = vmatpush.msra.mxu0 %v5318
    %7794 = vmatpush.msra.mxu0 %v5311
    %7795 = vmatpush.msra.mxu0 %v5304
    %7796 = vmatmul.f32.gmra.mxu0 %v4612
    %v7797 = vpop.f32.mrf.mxu0
    %v7798 = vadd.f32 %v7757, %v7797
    %7799 = vmatmul.f32.gmra.mxu0 %v4620
    %v7800 = vpop.f32.mrf.mxu0
    %v7801 = vadd.f32 %v7760, %v7800
    %7802 = vmatmul.f32.gmra.mxu0 %v4628
    %v7803 = vpop.f32.mrf.mxu0
    %v7804 = vadd.f32 %v7763, %v7803
    %7805 = vmatmul.f32.gmra.mxu0 %v4636
    %v7806 = vpop.f32.mrf.mxu0
    %v7807 = vadd.f32 %v7766, %v7806
    %7808 = vmatmul.f32.gmra.mxu0 %v4644
    %v7809 = vpop.f32.mrf.mxu0
    %v7810 = vadd.f32 %v7769, %v7809
    %7811 = vmatmul.f32.gmra.mxu0 %v4652
    %v7812 = vpop.f32.mrf.mxu0
    %v7813 = vadd.f32 %v7772, %v7812
    %7814 = vmatmul.f32.gmra.mxu0 %v4660
    %v7815 = vpop.f32.mrf.mxu0
    %v7816 = vadd.f32 %v7775, %v7815
    %7817 = vmatmul.f32.gmra.mxu0 %v4668
    %v7818 = vpop.f32.mrf.mxu0
    %v7819 = vadd.f32 %v7778, %v7818
    %7820 = vdwg.mxu0
    %7821 = vmatpush.msra.mxu0 %v5521
    %7822 = vmatpush.msra.mxu0 %v5514
    %7823 = vmatpush.msra.mxu0 %v5507
    %7824 = vmatpush.msra.mxu0 %v5500
    %7825 = vmatpush.msra.mxu0 %v5493
    %7826 = vmatpush.msra.mxu0 %v5486
    %7827 = vmatpush.msra.mxu0 %v5479
    %7828 = vmatpush.msra.mxu0 %v5472
    %7829 = vmatpush.msra.mxu0 %v5465
    %7830 = vmatpush.msra.mxu0 %v5458
    %7831 = vmatpush.msra.mxu0 %v5451
    %7832 = vmatpush.msra.mxu0 %v5444
    %7833 = vmatpush.msra.mxu0 %v5437
    %7834 = vmatpush.msra.mxu0 %v5430
    %7835 = vmatpush.msra.mxu0 %v5423
    %7836 = vmatpush.msra.mxu0 %v5416
    %7837 = vmatmul.f32.gmra.mxu0 %v4613
    %v7838 = vpop.f32.mrf.mxu0
    %v7839 = vadd.f32 %v7798, %v7838
    %7840 = vmatmul.f32.gmra.mxu0 %v4621
    %v7841 = vpop.f32.mrf.mxu0
    %v7842 = vadd.f32 %v7801, %v7841
    %7843 = vmatmul.f32.gmra.mxu0 %v4629
    %v7844 = vpop.f32.mrf.mxu0
    %v7845 = vadd.f32 %v7804, %v7844
    %7846 = vmatmul.f32.gmra.mxu0 %v4637
    %v7847 = vpop.f32.mrf.mxu0
    %v7848 = vadd.f32 %v7807, %v7847
    %7849 = vmatmul.f32.gmra.mxu0 %v4645
    %v7850 = vpop.f32.mrf.mxu0
    %v7851 = vadd.f32 %v7810, %v7850
    %7852 = vmatmul.f32.gmra.mxu0 %v4653
    %v7853 = vpop.f32.mrf.mxu0
    %v7854 = vadd.f32 %v7813, %v7853
    %7855 = vmatmul.f32.gmra.mxu0 %v4661
    %v7856 = vpop.f32.mrf.mxu0
    %v7857 = vadd.f32 %v7816, %v7856
    %7858 = vmatmul.f32.gmra.mxu0 %v4669
    %v7859 = vpop.f32.mrf.mxu0
    %v7860 = vadd.f32 %v7819, %v7859
    %7861 = vdwg.mxu0
    %7862 = vmatpush.msra.mxu0 %v5633
    %7863 = vmatpush.msra.mxu0 %v5626
    %7864 = vmatpush.msra.mxu0 %v5619
    %7865 = vmatpush.msra.mxu0 %v5612
    %7866 = vmatpush.msra.mxu0 %v5605
    %7867 = vmatpush.msra.mxu0 %v5598
    %7868 = vmatpush.msra.mxu0 %v5591
    %7869 = vmatpush.msra.mxu0 %v5584
    %7870 = vmatpush.msra.mxu0 %v5577
    %7871 = vmatpush.msra.mxu0 %v5570
    %7872 = vmatpush.msra.mxu0 %v5563
    %7873 = vmatpush.msra.mxu0 %v5556
    %7874 = vmatpush.msra.mxu0 %v5549
    %7875 = vmatpush.msra.mxu0 %v5542
    %7876 = vmatpush.msra.mxu0 %v5535
    %7877 = vmatpush.msra.mxu0 %v5528
    %7878 = vmatmul.f32.gmra.mxu0 %v4614
    %v7879 = vpop.f32.mrf.mxu0
    %v7880 = vadd.f32 %v7839, %v7879
    %7881 = vmatmul.f32.gmra.mxu0 %v4622
    %v7882 = vpop.f32.mrf.mxu0
    %v7883 = vadd.f32 %v7842, %v7882
    %7884 = vmatmul.f32.gmra.mxu0 %v4630
    %v7885 = vpop.f32.mrf.mxu0
    %v7886 = vadd.f32 %v7845, %v7885
    %7887 = vmatmul.f32.gmra.mxu0 %v4638
    %v7888 = vpop.f32.mrf.mxu0
    %v7889 = vadd.f32 %v7848, %v7888
    %7890 = vmatmul.f32.gmra.mxu0 %v4646
    %v7891 = vpop.f32.mrf.mxu0
    %v7892 = vadd.f32 %v7851, %v7891
    %7893 = vmatmul.f32.gmra.mxu0 %v4654
    %v7894 = vpop.f32.mrf.mxu0
    %v7895 = vadd.f32 %v7854, %v7894
    %7896 = vmatmul.f32.gmra.mxu0 %v4662
    %v7897 = vpop.f32.mrf.mxu0
    %v7898 = vadd.f32 %v7857, %v7897
    %7899 = vmatmul.f32.gmra.mxu0 %v4670
    %v7900 = vpop.f32.mrf.mxu0
    %v7901 = vadd.f32 %v7860, %v7900
    %7902 = vdwg.mxu0
    %7903 = vmatpush.msra.mxu0 %v5745
    %7904 = vmatpush.msra.mxu0 %v5738
    %7905 = vmatpush.msra.mxu0 %v5731
    %7906 = vmatpush.msra.mxu0 %v5724
    %7907 = vmatpush.msra.mxu0 %v5717
    %7908 = vmatpush.msra.mxu0 %v5710
    %7909 = vmatpush.msra.mxu0 %v5703
    %7910 = vmatpush.msra.mxu0 %v5696
    %7911 = vmatpush.msra.mxu0 %v5689
    %7912 = vmatpush.msra.mxu0 %v5682
    %7913 = vmatpush.msra.mxu0 %v5675
    %7914 = vmatpush.msra.mxu0 %v5668
    %7915 = vmatpush.msra.mxu0 %v5661
    %7916 = vmatpush.msra.mxu0 %v5654
    %7917 = vmatpush.msra.mxu0 %v5647
    %7918 = vmatpush.msra.mxu0 %v5640
    %7919 = vmatmul.f32.gmra.mxu0 %v4615
    %v7920 = vpop.f32.mrf.mxu0
    %v7921 = vadd.f32 %v7880, %v7920
    %7922 = vmatmul.f32.gmra.mxu0 %v4623
    %v7923 = vpop.f32.mrf.mxu0
    %v7924 = vadd.f32 %v7883, %v7923
    %7925 = vmatmul.f32.gmra.mxu0 %v4631
    %v7926 = vpop.f32.mrf.mxu0
    %v7927 = vadd.f32 %v7886, %v7926
    %7928 = vmatmul.f32.gmra.mxu0 %v4639
    %v7929 = vpop.f32.mrf.mxu0
    %v7930 = vadd.f32 %v7889, %v7929
    %7931 = vmatmul.f32.gmra.mxu0 %v4647
    %v7932 = vpop.f32.mrf.mxu0
    %v7933 = vadd.f32 %v7892, %v7932
    %7934 = vmatmul.f32.gmra.mxu0 %v4655
    %v7935 = vpop.f32.mrf.mxu0
    %v7936 = vadd.f32 %v7895, %v7935
    %7937 = vmatmul.f32.gmra.mxu0 %v4663
    %v7938 = vpop.f32.mrf.mxu0
    %v7939 = vadd.f32 %v7898, %v7938
    %7940 = vmatmul.f32.gmra.mxu0 %v4671
    %v7941 = vpop.f32.mrf.mxu0
    %v7942 = vadd.f32 %v7901, %v7941
    %7943 = vdwg.mxu0
    %7944 = vmatpush.msra.mxu0 %v5857
    %7945 = vmatpush.msra.mxu0 %v5850
    %7946 = vmatpush.msra.mxu0 %v5843
    %7947 = vmatpush.msra.mxu0 %v5836
    %7948 = vmatpush.msra.mxu0 %v5829
    %7949 = vmatpush.msra.mxu0 %v5822
    %7950 = vmatpush.msra.mxu0 %v5815
    %7951 = vmatpush.msra.mxu0 %v5808
    %7952 = vmatpush.msra.mxu0 %v5801
    %7953 = vmatpush.msra.mxu0 %v5794
    %7954 = vmatpush.msra.mxu0 %v5787
    %7955 = vmatpush.msra.mxu0 %v5780
    %7956 = vmatpush.msra.mxu0 %v5773
    %7957 = vmatpush.msra.mxu0 %v5766
    %7958 = vmatpush.msra.mxu0 %v5759
    %7959 = vmatpush.msra.mxu0 %v5752
    %7960 = vmatmul.f32.gmra.mxu0 %v4616
    %v7961 = vpop.f32.mrf.mxu0
    %v7962 = vadd.f32 %v7921, %v7961
    %7963 = vmatmul.f32.gmra.mxu0 %v4624
    %v7964 = vpop.f32.mrf.mxu0
    %v7965 = vadd.f32 %v7924, %v7964
    %7966 = vmatmul.f32.gmra.mxu0 %v4632
    %v7967 = vpop.f32.mrf.mxu0
    %v7968 = vadd.f32 %v7927, %v7967
    %7969 = vmatmul.f32.gmra.mxu0 %v4640
    %v7970 = vpop.f32.mrf.mxu0
    %v7971 = vadd.f32 %v7930, %v7970
    %7972 = vmatmul.f32.gmra.mxu0 %v4648
    %v7973 = vpop.f32.mrf.mxu0
    %v7974 = vadd.f32 %v7933, %v7973
    %7975 = vmatmul.f32.gmra.mxu0 %v4656
    %v7976 = vpop.f32.mrf.mxu0
    %v7977 = vadd.f32 %v7936, %v7976
    %7978 = vmatmul.f32.gmra.mxu0 %v4664
    %v7979 = vpop.f32.mrf.mxu0
    %v7980 = vadd.f32 %v7939, %v7979
    %7981 = vmatmul.f32.gmra.mxu0 %v4672
    %v7982 = vpop.f32.mrf.mxu0
    %v7983 = vadd.f32 %v7942, %v7982
    %7984 = vdwg.mxu0
    %7985 = vmatpush.msra.mxu0 %v5969
    %7986 = vmatpush.msra.mxu0 %v5962
    %7987 = vmatpush.msra.mxu0 %v5955
    %7988 = vmatpush.msra.mxu0 %v5948
    %7989 = vmatpush.msra.mxu0 %v5941
    %7990 = vmatpush.msra.mxu0 %v5934
    %7991 = vmatpush.msra.mxu0 %v5927
    %7992 = vmatpush.msra.mxu0 %v5920
    %7993 = vmatpush.msra.mxu0 %v5913
    %7994 = vmatpush.msra.mxu0 %v5906
    %7995 = vmatpush.msra.mxu0 %v5899
    %7996 = vmatpush.msra.mxu0 %v5892
    %7997 = vmatpush.msra.mxu0 %v5885
    %7998 = vmatpush.msra.mxu0 %v5878
    %7999 = vmatpush.msra.mxu0 %v5871
    %8000 = vmatpush.msra.mxu0 %v5864
    %8001 = vmatmul.f32.gmra.mxu0 %v4617
    %v8002 = vpop.f32.mrf.mxu0
    %v8003 = vadd.f32 %v7962, %v8002
    %8004 = vmatmul.f32.gmra.mxu0 %v4625
    %v8005 = vpop.f32.mrf.mxu0
    %v8006 = vadd.f32 %v7965, %v8005
    %8007 = vmatmul.f32.gmra.mxu0 %v4633
    %v8008 = vpop.f32.mrf.mxu0
    %v8009 = vadd.f32 %v7968, %v8008
    %8010 = vmatmul.f32.gmra.mxu0 %v4641
    %v8011 = vpop.f32.mrf.mxu0
    %v8012 = vadd.f32 %v7971, %v8011
    %8013 = vmatmul.f32.gmra.mxu0 %v4649
    %v8014 = vpop.f32.mrf.mxu0
    %v8015 = vadd.f32 %v7974, %v8014
    %8016 = vmatmul.f32.gmra.mxu0 %v4657
    %v8017 = vpop.f32.mrf.mxu0
    %v8018 = vadd.f32 %v7977, %v8017
    %8019 = vmatmul.f32.gmra.mxu0 %v4665
    %v8020 = vpop.f32.mrf.mxu0
    %v8021 = vadd.f32 %v7980, %v8020
    %8022 = vmatmul.f32.gmra.mxu0 %v4673
    %v8023 = vpop.f32.mrf.mxu0
    %v8024 = vadd.f32 %v7983, %v8023
    %8025 = vdwg.mxu0
    %8026 = vmatpush.msra.mxu0 %v6081
    %8027 = vmatpush.msra.mxu0 %v6074
    %8028 = vmatpush.msra.mxu0 %v6067
    %8029 = vmatpush.msra.mxu0 %v6060
    %8030 = vmatpush.msra.mxu0 %v6053
    %8031 = vmatpush.msra.mxu0 %v6046
    %8032 = vmatpush.msra.mxu0 %v6039
    %8033 = vmatpush.msra.mxu0 %v6032
    %8034 = vmatpush.msra.mxu0 %v6025
    %8035 = vmatpush.msra.mxu0 %v6018
    %8036 = vmatpush.msra.mxu0 %v6011
    %8037 = vmatpush.msra.mxu0 %v6004
    %8038 = vmatpush.msra.mxu0 %v5997
    %8039 = vmatpush.msra.mxu0 %v5990
    %8040 = vmatpush.msra.mxu0 %v5983
    %8041 = vmatpush.msra.mxu0 %v5976
    %8042 = vmatmul.f32.gmra.mxu0 %v4618
    %v8043 = vpop.f32.mrf.mxu0
    %v8044 = vadd.f32 %v8003, %v8043
    %8045 = vmatmul.f32.gmra.mxu0 %v4626
    %v8046 = vpop.f32.mrf.mxu0
    %v8047 = vadd.f32 %v8006, %v8046
    %8048 = vmatmul.f32.gmra.mxu0 %v4634
    %v8049 = vpop.f32.mrf.mxu0
    %v8050 = vadd.f32 %v8009, %v8049
    %8051 = vmatmul.f32.gmra.mxu0 %v4642
    %v8052 = vpop.f32.mrf.mxu0
    %v8053 = vadd.f32 %v8012, %v8052
    %8054 = vmatmul.f32.gmra.mxu0 %v4650
    %v8055 = vpop.f32.mrf.mxu0
    %v8056 = vadd.f32 %v8015, %v8055
    %8057 = vmatmul.f32.gmra.mxu0 %v4658
    %v8058 = vpop.f32.mrf.mxu0
    %v8059 = vadd.f32 %v8018, %v8058
    %8060 = vmatmul.f32.gmra.mxu0 %v4666
    %v8061 = vpop.f32.mrf.mxu0
    %v8062 = vadd.f32 %v8021, %v8061
    %8063 = vmatmul.f32.gmra.mxu0 %v4674
    %v8064 = vpop.f32.mrf.mxu0
    %v8065 = vadd.f32 %v8024, %v8064
    %8066 = vdwg.mxu0
    %8067 = vmatpush.msra.mxu0 %v5298
    %8068 = vmatpush.msra.mxu0 %v5291
    %8069 = vmatpush.msra.mxu0 %v5284
    %8070 = vmatpush.msra.mxu0 %v5277
    %8071 = vmatpush.msra.mxu0 %v5270
    %8072 = vmatpush.msra.mxu0 %v5263
    %8073 = vmatpush.msra.mxu0 %v5256
    %8074 = vmatpush.msra.mxu0 %v5249
    %8075 = vmatpush.msra.mxu0 %v5242
    %8076 = vmatpush.msra.mxu0 %v5235
    %8077 = vmatpush.msra.mxu0 %v5228
    %8078 = vmatpush.msra.mxu0 %v5221
    %8079 = vmatpush.msra.mxu0 %v5214
    %8080 = vmatpush.msra.mxu0 %v5207
    %8081 = vmatpush.msra.mxu0 %v5200
    %8082 = vmatpush.msra.mxu0 %v5193
    %8083 = vmatmul.f32.gmra.mxu0 %v4611
    %v8084 = vpop.f32.mrf.mxu0
    %v8085 = vadd.f32 %v6091, %v8084
    %8086 = vmatmul.f32.gmra.mxu0 %v4619
    %v8087 = vpop.f32.mrf.mxu0
    %v8088 = vadd.f32 %v6091, %v8087
    %8089 = vmatmul.f32.gmra.mxu0 %v4627
    %v8090 = vpop.f32.mrf.mxu0
    %v8091 = vadd.f32 %v6091, %v8090
    %8092 = vmatmul.f32.gmra.mxu0 %v4635
    %v8093 = vpop.f32.mrf.mxu0
    %v8094 = vadd.f32 %v6091, %v8093
    %8095 = vmatmul.f32.gmra.mxu0 %v4643
    %v8096 = vpop.f32.mrf.mxu0
    %v8097 = vadd.f32 %v6091, %v8096
    %8098 = vmatmul.f32.gmra.mxu0 %v4651
    %v8099 = vpop.f32.mrf.mxu0
    %v8100 = vadd.f32 %v6091, %v8099
    %8101 = vmatmul.f32.gmra.mxu0 %v4659
    %v8102 = vpop.f32.mrf.mxu0
    %v8103 = vadd.f32 %v6091, %v8102
    %8104 = vmatmul.f32.gmra.mxu0 %v4667
    %v8105 = vpop.f32.mrf.mxu0
    %v8106 = vadd.f32 %v6091, %v8105
    %8107 = vdwg.mxu0
    %8108 = vmatpush.msra.mxu0 %v5410
    %8109 = vmatpush.msra.mxu0 %v5403
    %8110 = vmatpush.msra.mxu0 %v5396
    %8111 = vmatpush.msra.mxu0 %v5389
    %8112 = vmatpush.msra.mxu0 %v5382
    %8113 = vmatpush.msra.mxu0 %v5375
    %8114 = vmatpush.msra.mxu0 %v5368
    %8115 = vmatpush.msra.mxu0 %v5361
    %8116 = vmatpush.msra.mxu0 %v5354
    %8117 = vmatpush.msra.mxu0 %v5347
    %8118 = vmatpush.msra.mxu0 %v5340
    %8119 = vmatpush.msra.mxu0 %v5333
    %8120 = vmatpush.msra.mxu0 %v5326
    %8121 = vmatpush.msra.mxu0 %v5319
    %8122 = vmatpush.msra.mxu0 %v5312
    %8123 = vmatpush.msra.mxu0 %v5305
    %8124 = vmatmul.f32.gmra.mxu0 %v4612
    %v8125 = vpop.f32.mrf.mxu0
    %v8126 = vadd.f32 %v8085, %v8125
    %8127 = vmatmul.f32.gmra.mxu0 %v4620
    %v8128 = vpop.f32.mrf.mxu0
    %v8129 = vadd.f32 %v8088, %v8128
    %8130 = vmatmul.f32.gmra.mxu0 %v4628
    %v8131 = vpop.f32.mrf.mxu0
    %v8132 = vadd.f32 %v8091, %v8131
    %8133 = vmatmul.f32.gmra.mxu0 %v4636
    %v8134 = vpop.f32.mrf.mxu0
    %v8135 = vadd.f32 %v8094, %v8134
    %8136 = vmatmul.f32.gmra.mxu0 %v4644
    %v8137 = vpop.f32.mrf.mxu0
    %v8138 = vadd.f32 %v8097, %v8137
    %8139 = vmatmul.f32.gmra.mxu0 %v4652
    %v8140 = vpop.f32.mrf.mxu0
    %v8141 = vadd.f32 %v8100, %v8140
    %8142 = vmatmul.f32.gmra.mxu0 %v4660
    %v8143 = vpop.f32.mrf.mxu0
    %v8144 = vadd.f32 %v8103, %v8143
    %8145 = vmatmul.f32.gmra.mxu0 %v4668
    %v8146 = vpop.f32.mrf.mxu0
    %v8147 = vadd.f32 %v8106, %v8146
    %8148 = vdwg.mxu0
    %8149 = vmatpush.msra.mxu0 %v5522
    %8150 = vmatpush.msra.mxu0 %v5515
    %8151 = vmatpush.msra.mxu0 %v5508
    %8152 = vmatpush.msra.mxu0 %v5501
    %8153 = vmatpush.msra.mxu0 %v5494
    %8154 = vmatpush.msra.mxu0 %v5487
    %8155 = vmatpush.msra.mxu0 %v5480
    %8156 = vmatpush.msra.mxu0 %v5473
    %8157 = vmatpush.msra.mxu0 %v5466
    %8158 = vmatpush.msra.mxu0 %v5459
    %8159 = vmatpush.msra.mxu0 %v5452
    %8160 = vmatpush.msra.mxu0 %v5445
    %8161 = vmatpush.msra.mxu0 %v5438
    %8162 = vmatpush.msra.mxu0 %v5431
    %8163 = vmatpush.msra.mxu0 %v5424
    %8164 = vmatpush.msra.mxu0 %v5417
    %8165 = vmatmul.f32.gmra.mxu0 %v4613
    %v8166 = vpop.f32.mrf.mxu0
    %v8167 = vadd.f32 %v8126, %v8166
    %8168 = vmatmul.f32.gmra.mxu0 %v4621
    %v8169 = vpop.f32.mrf.mxu0
    %v8170 = vadd.f32 %v8129, %v8169
    %8171 = vmatmul.f32.gmra.mxu0 %v4629
    %v8172 = vpop.f32.mrf.mxu0
    %v8173 = vadd.f32 %v8132, %v8172
    %8174 = vmatmul.f32.gmra.mxu0 %v4637
    %v8175 = vpop.f32.mrf.mxu0
    %v8176 = vadd.f32 %v8135, %v8175
    %8177 = vmatmul.f32.gmra.mxu0 %v4645
    %v8178 = vpop.f32.mrf.mxu0
    %v8179 = vadd.f32 %v8138, %v8178
    %8180 = vmatmul.f32.gmra.mxu0 %v4653
    %v8181 = vpop.f32.mrf.mxu0
    %v8182 = vadd.f32 %v8141, %v8181
    %8183 = vmatmul.f32.gmra.mxu0 %v4661
    %v8184 = vpop.f32.mrf.mxu0
    %v8185 = vadd.f32 %v8144, %v8184
    %8186 = vmatmul.f32.gmra.mxu0 %v4669
    %v8187 = vpop.f32.mrf.mxu0
    %v8188 = vadd.f32 %v8147, %v8187
    %8189 = vdwg.mxu0
    %8190 = vmatpush.msra.mxu0 %v5634
    %8191 = vmatpush.msra.mxu0 %v5627
    %8192 = vmatpush.msra.mxu0 %v5620
    %8193 = vmatpush.msra.mxu0 %v5613
    %8194 = vmatpush.msra.mxu0 %v5606
    %8195 = vmatpush.msra.mxu0 %v5599
    %8196 = vmatpush.msra.mxu0 %v5592
    %8197 = vmatpush.msra.mxu0 %v5585
    %8198 = vmatpush.msra.mxu0 %v5578
    %8199 = vmatpush.msra.mxu0 %v5571
    %8200 = vmatpush.msra.mxu0 %v5564
    %8201 = vmatpush.msra.mxu0 %v5557
    %8202 = vmatpush.msra.mxu0 %v5550
    %8203 = vmatpush.msra.mxu0 %v5543
    %8204 = vmatpush.msra.mxu0 %v5536
    %8205 = vmatpush.msra.mxu0 %v5529
    %8206 = vmatmul.f32.gmra.mxu0 %v4614
    %v8207 = vpop.f32.mrf.mxu0
    %v8208 = vadd.f32 %v8167, %v8207
    %8209 = vmatmul.f32.gmra.mxu0 %v4622
    %v8210 = vpop.f32.mrf.mxu0
    %v8211 = vadd.f32 %v8170, %v8210
    %8212 = vmatmul.f32.gmra.mxu0 %v4630
    %v8213 = vpop.f32.mrf.mxu0
    %v8214 = vadd.f32 %v8173, %v8213
    %8215 = vmatmul.f32.gmra.mxu0 %v4638
    %v8216 = vpop.f32.mrf.mxu0
    %v8217 = vadd.f32 %v8176, %v8216
    %8218 = vmatmul.f32.gmra.mxu0 %v4646
    %v8219 = vpop.f32.mrf.mxu0
    %v8220 = vadd.f32 %v8179, %v8219
    %8221 = vmatmul.f32.gmra.mxu0 %v4654
    %v8222 = vpop.f32.mrf.mxu0
    %v8223 = vadd.f32 %v8182, %v8222
    %8224 = vmatmul.f32.gmra.mxu0 %v4662
    %v8225 = vpop.f32.mrf.mxu0
    %v8226 = vadd.f32 %v8185, %v8225
    %8227 = vmatmul.f32.gmra.mxu0 %v4670
    %v8228 = vpop.f32.mrf.mxu0
    %v8229 = vadd.f32 %v8188, %v8228
    %8230 = vdwg.mxu0
    %8231 = vmatpush.msra.mxu0 %v5746
    %8232 = vmatpush.msra.mxu0 %v5739
    %8233 = vmatpush.msra.mxu0 %v5732
    %8234 = vmatpush.msra.mxu0 %v5725
    %8235 = vmatpush.msra.mxu0 %v5718
    %8236 = vmatpush.msra.mxu0 %v5711
    %8237 = vmatpush.msra.mxu0 %v5704
    %8238 = vmatpush.msra.mxu0 %v5697
    %8239 = vmatpush.msra.mxu0 %v5690
    %8240 = vmatpush.msra.mxu0 %v5683
    %8241 = vmatpush.msra.mxu0 %v5676
    %8242 = vmatpush.msra.mxu0 %v5669
    %8243 = vmatpush.msra.mxu0 %v5662
    %8244 = vmatpush.msra.mxu0 %v5655
    %8245 = vmatpush.msra.mxu0 %v5648
    %8246 = vmatpush.msra.mxu0 %v5641
    %8247 = vmatmul.f32.gmra.mxu0 %v4615
    %v8248 = vpop.f32.mrf.mxu0
    %v8249 = vadd.f32 %v8208, %v8248
    %8250 = vmatmul.f32.gmra.mxu0 %v4623
    %v8251 = vpop.f32.mrf.mxu0
    %v8252 = vadd.f32 %v8211, %v8251
    %8253 = vmatmul.f32.gmra.mxu0 %v4631
    %v8254 = vpop.f32.mrf.mxu0
    %v8255 = vadd.f32 %v8214, %v8254
    %8256 = vmatmul.f32.gmra.mxu0 %v4639
    %v8257 = vpop.f32.mrf.mxu0
    %v8258 = vadd.f32 %v8217, %v8257
    %8259 = vmatmul.f32.gmra.mxu0 %v4647
    %v8260 = vpop.f32.mrf.mxu0
    %v8261 = vadd.f32 %v8220, %v8260
    %8262 = vmatmul.f32.gmra.mxu0 %v4655
    %v8263 = vpop.f32.mrf.mxu0
    %v8264 = vadd.f32 %v8223, %v8263
    %8265 = vmatmul.f32.gmra.mxu0 %v4663
    %v8266 = vpop.f32.mrf.mxu0
    %v8267 = vadd.f32 %v8226, %v8266
    %8268 = vmatmul.f32.gmra.mxu0 %v4671
    %v8269 = vpop.f32.mrf.mxu0
    %v8270 = vadd.f32 %v8229, %v8269
    %8271 = vdwg.mxu0
    %8272 = vmatpush.msra.mxu0 %v5858
    %8273 = vmatpush.msra.mxu0 %v5851
    %8274 = vmatpush.msra.mxu0 %v5844
    %8275 = vmatpush.msra.mxu0 %v5837
    %8276 = vmatpush.msra.mxu0 %v5830
    %8277 = vmatpush.msra.mxu0 %v5823
    %8278 = vmatpush.msra.mxu0 %v5816
    %8279 = vmatpush.msra.mxu0 %v5809
    %8280 = vmatpush.msra.mxu0 %v5802
    %8281 = vmatpush.msra.mxu0 %v5795
    %8282 = vmatpush.msra.mxu0 %v5788
    %8283 = vmatpush.msra.mxu0 %v5781
    %8284 = vmatpush.msra.mxu0 %v5774
    %8285 = vmatpush.msra.mxu0 %v5767
    %8286 = vmatpush.msra.mxu0 %v5760
    %8287 = vmatpush.msra.mxu0 %v5753
    %8288 = vmatmul.f32.gmra.mxu0 %v4616
    %v8289 = vpop.f32.mrf.mxu0
    %v8290 = vadd.f32 %v8249, %v8289
    %8291 = vmatmul.f32.gmra.mxu0 %v4624
    %v8292 = vpop.f32.mrf.mxu0
    %v8293 = vadd.f32 %v8252, %v8292
    %8294 = vmatmul.f32.gmra.mxu0 %v4632
    %v8295 = vpop.f32.mrf.mxu0
    %v8296 = vadd.f32 %v8255, %v8295
    %8297 = vmatmul.f32.gmra.mxu0 %v4640
    %v8298 = vpop.f32.mrf.mxu0
    %v8299 = vadd.f32 %v8258, %v8298
    %8300 = vmatmul.f32.gmra.mxu0 %v4648
    %v8301 = vpop.f32.mrf.mxu0
    %v8302 = vadd.f32 %v8261, %v8301
    %8303 = vmatmul.f32.gmra.mxu0 %v4656
    %v8304 = vpop.f32.mrf.mxu0
    %v8305 = vadd.f32 %v8264, %v8304
    %8306 = vmatmul.f32.gmra.mxu0 %v4664
    %v8307 = vpop.f32.mrf.mxu0
    %v8308 = vadd.f32 %v8267, %v8307
    %8309 = vmatmul.f32.gmra.mxu0 %v4672
    %v8310 = vpop.f32.mrf.mxu0
    %v8311 = vadd.f32 %v8270, %v8310
    %8312 = vdwg.mxu0
    %8313 = vmatpush.msra.mxu0 %v5970
    %8314 = vmatpush.msra.mxu0 %v5963
    %8315 = vmatpush.msra.mxu0 %v5956
    %8316 = vmatpush.msra.mxu0 %v5949
    %8317 = vmatpush.msra.mxu0 %v5942
    %8318 = vmatpush.msra.mxu0 %v5935
    %8319 = vmatpush.msra.mxu0 %v5928
    %8320 = vmatpush.msra.mxu0 %v5921
    %8321 = vmatpush.msra.mxu0 %v5914
    %8322 = vmatpush.msra.mxu0 %v5907
    %8323 = vmatpush.msra.mxu0 %v5900
    %8324 = vmatpush.msra.mxu0 %v5893
    %8325 = vmatpush.msra.mxu0 %v5886
    %8326 = vmatpush.msra.mxu0 %v5879
    %8327 = vmatpush.msra.mxu0 %v5872
    %8328 = vmatpush.msra.mxu0 %v5865
    %8329 = vmatmul.f32.gmra.mxu0 %v4617
    %v8330 = vpop.f32.mrf.mxu0
    %v8331 = vadd.f32 %v8290, %v8330
    %8332 = vmatmul.f32.gmra.mxu0 %v4625
    %v8333 = vpop.f32.mrf.mxu0
    %v8334 = vadd.f32 %v8293, %v8333
    %8335 = vmatmul.f32.gmra.mxu0 %v4633
    %v8336 = vpop.f32.mrf.mxu0
    %v8337 = vadd.f32 %v8296, %v8336
    %8338 = vmatmul.f32.gmra.mxu0 %v4641
    %v8339 = vpop.f32.mrf.mxu0
    %v8340 = vadd.f32 %v8299, %v8339
    %8341 = vmatmul.f32.gmra.mxu0 %v4649
    %v8342 = vpop.f32.mrf.mxu0
    %v8343 = vadd.f32 %v8302, %v8342
    %8344 = vmatmul.f32.gmra.mxu0 %v4657
    %v8345 = vpop.f32.mrf.mxu0
    %v8346 = vadd.f32 %v8305, %v8345
    %8347 = vmatmul.f32.gmra.mxu0 %v4665
    %v8348 = vpop.f32.mrf.mxu0
    %v8349 = vadd.f32 %v8308, %v8348
    %8350 = vmatmul.f32.gmra.mxu0 %v4673
    %v8351 = vpop.f32.mrf.mxu0
    %v8352 = vadd.f32 %v8311, %v8351
    %8353 = vdwg.mxu0
    %8354 = vmatpush.msra.mxu0 %v6082
    %8355 = vmatpush.msra.mxu0 %v6075
    %8356 = vmatpush.msra.mxu0 %v6068
    %8357 = vmatpush.msra.mxu0 %v6061
    %8358 = vmatpush.msra.mxu0 %v6054
    %8359 = vmatpush.msra.mxu0 %v6047
    %8360 = vmatpush.msra.mxu0 %v6040
    %8361 = vmatpush.msra.mxu0 %v6033
    %8362 = vmatpush.msra.mxu0 %v6026
    %8363 = vmatpush.msra.mxu0 %v6019
    %8364 = vmatpush.msra.mxu0 %v6012
    %8365 = vmatpush.msra.mxu0 %v6005
    %8366 = vmatpush.msra.mxu0 %v5998
    %8367 = vmatpush.msra.mxu0 %v5991
    %8368 = vmatpush.msra.mxu0 %v5984
    %8369 = vmatpush.msra.mxu0 %v5977
    %8370 = vmatmul.f32.gmra.mxu0 %v4618
    %v8371 = vpop.f32.mrf.mxu0
    %v8372 = vadd.f32 %v8331, %v8371
    %8373 = vmatmul.f32.gmra.mxu0 %v4626
    %v8374 = vpop.f32.mrf.mxu0
    %v8375 = vadd.f32 %v8334, %v8374
    %8376 = vmatmul.f32.gmra.mxu0 %v4634
    %v8377 = vpop.f32.mrf.mxu0
    %v8378 = vadd.f32 %v8337, %v8377
    %8379 = vmatmul.f32.gmra.mxu0 %v4642
    %v8380 = vpop.f32.mrf.mxu0
    %v8381 = vadd.f32 %v8340, %v8380
    %8382 = vmatmul.f32.gmra.mxu0 %v4650
    %v8383 = vpop.f32.mrf.mxu0
    %v8384 = vadd.f32 %v8343, %v8383
    %8385 = vmatmul.f32.gmra.mxu0 %v4658
    %v8386 = vpop.f32.mrf.mxu0
    %v8387 = vadd.f32 %v8346, %v8386
    %8388 = vmatmul.f32.gmra.mxu0 %v4666
    %v8389 = vpop.f32.mrf.mxu0
    %v8390 = vadd.f32 %v8349, %v8389
    %8391 = vmatmul.f32.gmra.mxu0 %v4674
    %v8392 = vpop.f32.mrf.mxu0
    %v8393 = vadd.f32 %v8352, %v8392
    %8394 = vdwg.mxu0
    %v8395 = vtanh.pop %v6404
    %v8396 = vtanh.pop %v6732
    %v8397 = vtanh.pop %v7060
    %v8398 = vtanh.pop %v7388
    %v8399 = vtanh.pop %v7716
    %v8400 = vtanh.pop %v8044
    %v8401 = vtanh.pop %v8372
    %v8402 = vtanh.pop %v6407
    %v8403 = vtanh.pop %v6735
    %v8404 = vtanh.pop %v7063
    %v8405 = vtanh.pop %v7391
    %v8406 = vtanh.pop %v7719
    %v8407 = vtanh.pop %v8047
    %v8408 = vtanh.pop %v8375
    %v8409 = vtanh.pop %v6410
    %v8410 = vtanh.pop %v6738
    %v8411 = vtanh.pop %v7066
    %v8412 = vtanh.pop %v7394
    %v8413 = vtanh.pop %v7722
    %v8414 = vtanh.pop %v8050
    %v8415 = vtanh.pop %v8378
    %v8416 = vtanh.pop %v6413
    %v8417 = vtanh.pop %v6741
    %v8418 = vtanh.pop %v7069
    %v8419 = vtanh.pop %v7397
    %v8420 = vtanh.pop %v7725
    %v8421 = vtanh.pop %v8053
    %v8422 = vtanh.pop %v8381
    %v8423 = vtanh.pop %v6416
    %v8424 = vtanh.pop %v6744
    %v8425 = vtanh.pop %v7072
    %v8426 = vtanh.pop %v7400
    %v8427 = vtanh.pop %v7728
    %v8428 = vtanh.pop %v8056
    %v8429 = vtanh.pop %v8384
    %v8430 = vtanh.pop %v6419
    %v8431 = vtanh.pop %v6747
    %v8432 = vtanh.pop %v7075
    %v8433 = vtanh.pop %v7403
    %v8434 = vtanh.pop %v7731
    %v8435 = vtanh.pop %v8059
    %v8436 = vtanh.pop %v8387
    %v8437 = vtanh.pop %v6422
    %v8438 = vtanh.pop %v6750
    %v8439 = vtanh.pop %v7078
    %v8440 = vtanh.pop %v7406
    %v8441 = vtanh.pop %v7734
    %v8442 = vtanh.pop %v8062
    %v8443 = vtanh.pop %v8390
    %v8444 = vtanh.pop %v6425
    %v8445 = vtanh.pop %v6753
    %v8446 = vtanh.pop %v7081
    %v8447 = vtanh.pop %v7409
    %v8448 = vtanh.pop %v7737
    %v8449 = vtanh.pop %v8065
    %v8450 = vtanh.pop %v8393
    %8451 = vst [vmem:[#allocation28] sm:$0xff] %v8395
    %8452 = vst [vmem:[#allocation28 + $0x8] sm:$0xff] %v8396
    %8453 = vst [vmem:[#allocation28 + $0x10] sm:$0xff] %v8397
    %8454 = vst [vmem:[#allocation28 + $0x18] sm:$0xff] %v8398
    %8455 = vst [vmem:[#allocation28 + $0x20] sm:$0xff] %v8399
    %8456 = vst [vmem:[#allocation28 + $0x28] sm:$0xff] %v8400
    %8457 = vst [vmem:[#allocation28 + $0x30] sm:$0xff] %v8401
    %8458 = vst [vmem:[#allocation28 + $0x38] sm:$0xff] %v8402
    %8459 = vst [vmem:[#allocation28 + $0x40] sm:$0xff] %v8403
    %8460 = vst [vmem:[#allocation28 + $0x48] sm:$0xff] %v8404
    %8461 = vst [vmem:[#allocation28 + $0x50] sm:$0xff] %v8405
    %8462 = vst [vmem:[#allocation28 + $0x58] sm:$0xff] %v8406
    %8463 = vst [vmem:[#allocation28 + $0x60] sm:$0xff] %v8407
    %8464 = vst [vmem:[#allocation28 + $0x68] sm:$0xff] %v8408
    %8465 = vst [vmem:[#allocation28 + $0x70] sm:$0xff] %v8409
    %8466 = vst [vmem:[#allocation28 + $0x78] sm:$0xff] %v8410
    %8467 = vst [vmem:[#allocation28 + $0x80] sm:$0xff] %v8411
    %8468 = vst [vmem:[#allocation28 + $0x88] sm:$0xff] %v8412
    %8469 = vst [vmem:[#allocation28 + $0x90] sm:$0xff] %v8413
    %8470 = vst [vmem:[#allocation28 + $0x98] sm:$0xff] %v8414
    %8471 = vst [vmem:[#allocation28 + $0xa0] sm:$0xff] %v8415
    %8472 = vst [vmem:[#allocation28 + $0xa8] sm:$0xff] %v8416
    %8473 = vst [vmem:[#allocation28 + $0xb0] sm:$0xff] %v8417
    %8474 = vst [vmem:[#allocation28 + $0xb8] sm:$0xff] %v8418
    %8475 = vst [vmem:[#allocation28 + $0xc0] sm:$0xff] %v8419
    %8476 = vst [vmem:[#allocation28 + $0xc8] sm:$0xff] %v8420
    %8477 = vst [vmem:[#allocation28 + $0xd0] sm:$0xff] %v8421
    %8478 = vst [vmem:[#allocation28 + $0xd8] sm:$0xff] %v8422
    %8479 = vst [vmem:[#allocation28 + $0xe0] sm:$0xff] %v8423
    %8480 = vst [vmem:[#allocation28 + $0xe8] sm:$0xff] %v8424
    %8481 = vst [vmem:[#allocation28 + $0xf0] sm:$0xff] %v8425
    %8482 = vst [vmem:[#allocation28 + $0xf8] sm:$0xff] %v8426
    %8483 = vst [vmem:[#allocation28 + $0x100] sm:$0xff] %v8427
    %8484 = vst [vmem:[#allocation28 + $0x108] sm:$0xff] %v8428
    %8485 = vst [vmem:[#allocation28 + $0x110] sm:$0xff] %v8429
    %8486 = vst [vmem:[#allocation28 + $0x118] sm:$0xff] %v8430
    %8487 = vst [vmem:[#allocation28 + $0x120] sm:$0xff] %v8431
    %8488 = vst [vmem:[#allocation28 + $0x128] sm:$0xff] %v8432
    %8489 = vst [vmem:[#allocation28 + $0x130] sm:$0xff] %v8433
    %8490 = vst [vmem:[#allocation28 + $0x138] sm:$0xff] %v8434
    %8491 = vst [vmem:[#allocation28 + $0x140] sm:$0xff] %v8435
    %8492 = vst [vmem:[#allocation28 + $0x148] sm:$0xff] %v8436
    %8493 = vst [vmem:[#allocation28 + $0x150] sm:$0xff] %v8437
    %8494 = vst [vmem:[#allocation28 + $0x158] sm:$0xff] %v8438
    %8495 = vst [vmem:[#allocation28 + $0x160] sm:$0xff] %v8439
    %8496 = vst [vmem:[#allocation28 + $0x168] sm:$0xff] %v8440
    %8497 = vst [vmem:[#allocation28 + $0x170] sm:$0xff] %v8441
    %8498 = vst [vmem:[#allocation28 + $0x178] sm:$0xff] %v8442
    %8499 = vst [vmem:[#allocation28 + $0x180] sm:$0xff] %v8443
    %8500 = vst [vmem:[#allocation28 + $0x188] sm:$0xff] %v8444
    %8501 = vst [vmem:[#allocation28 + $0x190] sm:$0xff] %v8445
    %8502 = vst [vmem:[#allocation28 + $0x198] sm:$0xff] %v8446
    %8503 = vst [vmem:[#allocation28 + $0x1a0] sm:$0xff] %v8447
    %8504 = vst [vmem:[#allocation28 + $0x1a8] sm:$0xff] %v8448
    %8505 = vst [vmem:[#allocation28 + $0x1b0] sm:$0xff] %v8449
    %8506 = vst [vmem:[#allocation28 + $0x1b8] sm:$0xff] %v8450
    // Predicated region
    $region134: #{tpu_custom_call.1} parent=1 // pred_check
      _
    $region135: #{tpu_custom_call.1} parent=1 // pred_check_branch
      %8508 = sbr.rel (0) target = $region137
    $region136: #{tpu_custom_call.1} parent=1 // pred_region
      %8510 = vsyncadd [#allocation4], 0
      %s8511 = sshll.u32 [#allocation28], 4
      %s8512 = int_to_ptr.vmem [resolvable:$true] %s8511
      %s8513 = sshll.u32 %s17, 4
      %s8514 = int_to_ptr.hbm [resolvable:$true] %s8513
      %8519 = dma.vmem_to_hbm [thread:$0]  %s8512, 7168, %s8514, [#allocation4], 896, 896, 56
    $region137: #{tpu_custom_call.1} parent=1 // pred_fallthru
      _
    // Predicated region
    $region138: #{tpu_custom_call.1} parent=1 // pred_check
      _
    $region139: #{tpu_custom_call.1} parent=1 // pred_check_branch
      %8521 = sbr.rel (0) target = $region141
    $region140: #{tpu_custom_call.1} parent=1 // pred_region
      %8523 = dma.done [#allocation4], 7168
    $region141: #{tpu_custom_call.1} parent=1 // pred_fallthru
      _
    %8524 = vsyncpa [#allocation3], 1
    %8525 = vsyncpa [#allocation6], 1
    %8526 = vsyncpa [#allocation9], 1
    %8527 = vsyncpa [#allocation12], 1
    %8528 = vsyncpa [#allocation15], 1
    %8529 = vsyncpa [#allocation18], 1
    %8530 = vsyncpa [#allocation21], 1
    %8531 = vsyncpa [#allocation24], 1
    %8532 = vsyncpa [#allocation27], 1
    %8533 = vsyncpa [#allocation4], 1

</llo_original>
